<compile_context>
chip_gen: v5e
topology: v5e:2x2
jax: 0.10.0
libtpu: 0.0.40
codegen_flags: <defaults>
</compile_context>

<pallas_src>
import functools
import math

import jax
import jax.numpy as jnp
from jax import lax
from jax.experimental import pallas as pl
from jax.experimental.pallas import tpu as pltpu


def _erf(x):
    # Abramowitz & Stegun 7.1.26 rational approximation of erf, |abs err| <= 1.5e-7.
    a1, a2, a3, a4, a5 = 0.254829592, -0.284496736, 1.421413741, -1.453152027, 1.061405429
    p = 0.3275911
    sign = jnp.where(x >= 0.0, 1.0, -1.0)
    ax = jnp.abs(x)
    t = 1.0 / (1.0 + p * ax)
    poly = ((((a5 * t + a4) * t + a3) * t + a2) * t + a1) * t
    return sign * (1.0 - poly * jnp.exp(-ax * ax))


def _gelu_exact(x):
    # Matches torch.nn.functional.gelu default (erf formulation).
    return 0.5 * x * (1.0 + _erf(x * (1.0 / math.sqrt(2.0))))


def _layernorm(v, g, b, eps=1e-5):
    mu = jnp.mean(v, axis=-1, keepdims=True)
    var = jnp.mean((v - mu) ** 2, axis=-1, keepdims=True)
    return (v - mu) * lax.rsqrt(var + eps) * g + b


def _encoder_layer_kernel(
    x_ref, pad_ref,
    ln1_g_ref, ln1_b_ref,
    wq_ref, wkv_ref, wo_ref,
    ln2_g_ref, ln2_b_ref,
    w1_ref, b1_ref, w2_ref, b2_ref,
    o_ref,
    attn_buf,
    *, num_heads, q_tile,
):
    bf16 = jnp.bfloat16
    x = x_ref[0]                       # (S, E) f32  (S already padded to q_tile mult.)
    S, E = x.shape
    D = E // num_heads
    scale = 1.0 / math.sqrt(E)         # module divides by sqrt(embed_dim)

    # ---- attn_norm (shared by q/k/v and by the attention residual) ----
    xn = _layernorm(x, ln1_g_ref[...], ln1_b_ref[...])                 # (S, E) f32
    xn_bf = xn.astype(bf16)                                            # MXU operand

    # ---- fused k/v projection (bf16 MXU, f32 accumulation) ----
    kv = jnp.dot(xn_bf, wkv_ref[...], preferred_element_type=jnp.float32)  # (S, 2E)
    k_bf = kv[:, :E].astype(bf16)
    v_bf = kv[:, E:].astype(bf16)

    # ---- loop-invariant mask pieces (hoisted: JAX does not CSE broadcasts) ----
    pad = pad_ref[0]                                                   # (1, S) f32
    pad_neg = jnp.where(pad > 0.5, -1e20, 0.0)                         # (1, S) f32
    col = lax.broadcasted_iota(jnp.int32, (q_tile, S), 1)
    row = lax.broadcasted_iota(jnp.int32, (q_tile, S), 0)

    wq = wq_ref[...]
    wo = wo_ref[...]
    ln2_g = ln2_g_ref[...]
    ln2_b = ln2_b_ref[...]
    w1 = w1_ref[...]
    b1 = b1_ref[...]
    w2 = w2_ref[...]
    b2 = b2_ref[...]

    dn_qk = (((1,), (1,)), ((), ()))   # contract last dims: (TQ,D) x (K,D) -> (TQ,K)
    n_tiles = S // q_tile

    # Static loop over query tiles: intermediates bounded at (TQ, kv_len); the whole
    # post-attention epilogue (residual, ff_norm, FFN, residual) is also per-tile.
    # TODO(synk): for very long sequences move this loop onto a grid axis (or a
    # fori_loop with flash-style online softmax) so live ranges stay bounded and
    # v7x's second TensorCore can pick up query tiles when B is small.
    for t in range(n_tiles):
        r0 = t * q_tile
        # Causal truncation: keys at positions >= r0 + q_tile are masked for every
        # row of this tile, so skip them entirely (static slice, lane-aligned).
        kv_len = r0 + q_tile

        # Additive mask bias: causal (key col > query row) OR padded key -> -1e20.
        causal_neg = jnp.where(col[:, :kv_len] > (row[:, :kv_len] + r0), -1e20, 0.0)
        bias = pad_neg[:, :kv_len] + causal_neg                        # (TQ, kv_len)

        xn_t = xn[r0:r0 + q_tile, :]                                   # f32 residual base
        # q projection per tile (scale folded into q once, in f32, then bf16 for MXU)
        q_t = jnp.dot(xn_bf[r0:r0 + q_tile, :], wq,
                      preferred_element_type=jnp.float32) * scale
        q_bf = q_t.astype(bf16)                                        # (TQ, E)

        for h in range(num_heads):
            qh = q_bf[:, h * D:(h + 1) * D]                            # (TQ, D)
            kh = k_bf[:kv_len, h * D:(h + 1) * D]                      # (K,  D)
            vh = v_bf[:kv_len, h * D:(h + 1) * D]                      # (K,  D)
            s = lax.dot_general(qh, kh, dn_qk,
                                preferred_element_type=jnp.float32) + bias
            m = jnp.max(s, axis=-1, keepdims=True)
            e = jnp.exp(s - m)
            p = e * pl.reciprocal(jnp.sum(e, axis=-1, keepdims=True), approx=True)
            # dropout(p=0.0) -> identity
            pv = jnp.dot(p.astype(bf16), vh,
                         preferred_element_type=jnp.float32)           # (TQ, D) f32
            # stash per-head output into its lane slice; one full-K Wo matmul below
            attn_buf[:, h * D:(h + 1) * D] = pv

        # ---- single output projection over all heads (K = E fills the MXU) ----
        attn = jnp.dot(attn_buf[...].astype(bf16), wo,
                       preferred_element_type=jnp.float32)             # (TQ, E)

        # ---- residual around attention (base = attn_norm output, per the module) ----
        x2 = xn_t + attn
        # ---- ff_norm ----
        xn2 = _layernorm(x2, ln2_g, ln2_b)
        # ---- position-wise feed forward (bf16 MXU inputs, f32 elementwise) ----
        h1 = _gelu_exact(jnp.dot(xn2.astype(bf16), w1,
                                 preferred_element_type=jnp.float32) + b1)
        ff = jnp.dot(h1.astype(bf16), w2, preferred_element_type=jnp.float32) + b2
        # ---- residual around FFN (base = ff_norm output, per the module) ----
        o_ref[0, pl.ds(r0, q_tile), :] = xn2 + ff
    # TODO(synk): self.post_norm exists in __init__ but is never applied in forward().


def _vmem_limit_bytes():
    # v7x has 64 MiB VMEM per TensorCore -> leave headroom; v5e/v6e have 128 MiB.
    try:
        kind = jax.devices()[0].device_kind.lower()
    except Exception:
        return 64 * 1024 * 1024
    if "v7" in kind or "7x" in kind:
        return 48 * 1024 * 1024
    return 100 * 1024 * 1024


def transformer_causal_encoder_layer(x, pad_mask, causal_mask, params, num_heads):
    B, S, E = x.shape
    hidden = params["w1"].shape[1]

    # The standard upper-triangular causal mask is regenerated in-kernel from iota
    # compares, so the (S, S) array never leaves HBM / occupies VMEM.
    del causal_mask

    # Pad the sequence up to a multiple of the query tile; padded positions are
    # marked as padded keys so they never influence real rows, and are sliced off
    # the output.  This avoids the (S, S) intermediate cliff for ragged S.
    TQ = 128
    S_pad = ((S + TQ - 1) // TQ) * TQ
    if S_pad != S:
        x = jnp.pad(x, ((0, 0), (0, S_pad - S), (0, 0)))
        pad_mask = jnp.pad(pad_mask, ((0, 0), (0, S_pad - S)), constant_values=True)

    pad_f = pad_mask.astype(jnp.float32).reshape(B, 1, S_pad)

    # Weights shipped to the kernel in bf16 (halves weight DMA + resident VMEM);
    # Wk/Wv fused into one (E, 2E) weight.  Biases / norm params stay f32.
    bf16 = jnp.bfloat16
    wq = params["wq"].astype(bf16)
    wkv = jnp.concatenate([params["wk"], params["wv"]], axis=1).astype(bf16)
    wo = params["wo"].astype(bf16)
    w1 = params["w1"].astype(bf16)
    w2 = params["w2"].astype(bf16)

    kernel = functools.partial(_encoder_layer_kernel, num_heads=num_heads, q_tile=TQ)

    def build_call(single_buffer_weights):
        def const_spec(shape):
            # Constant-index blocks (weights / norm params): their block index never
            # changes, so a single buffer is enough (halves their VMEM footprint).
            if single_buffer_weights:
                return pl.BlockSpec(shape, lambda b: (0, 0),
                                    pipeline_mode=pl.Buffered(1))
            return pl.BlockSpec(shape, lambda b: (0, 0))

        in_specs = [
            pl.BlockSpec((1, S_pad, E), lambda b: (b, 0, 0)),   # x (per batch element)
            pl.BlockSpec((1, 1, S_pad), lambda b: (b, 0, 0)),   # pad mask
            const_spec((1, E)), const_spec((1, E)),             # attn_norm gamma / beta
            const_spec((E, E)),                                 # Wq^T (bf16)
            const_spec((E, 2 * E)),                             # [Wk^T | Wv^T] (bf16)
            const_spec((E, E)),                                 # Wo^T (bf16)
            const_spec((1, E)), const_spec((1, E)),             # ff_norm gamma / beta
            const_spec((E, hidden)), const_spec((1, hidden)),   # fc1 W^T (bf16), b
            const_spec((hidden, E)), const_spec((1, E)),        # fc2 W^T (bf16), b
        ]
        return pl.pallas_call(
            kernel,
            out_shape=jax.ShapeDtypeStruct((B, S_pad, E), jnp.float32),
            grid=(B,),
            in_specs=in_specs,
            out_specs=pl.BlockSpec((1, S_pad, E), lambda b: (b, 0, 0)),
            scratch_shapes=[pltpu.VMEM((TQ, E), jnp.float32)],  # per-tile attn buffer
            compiler_params=pltpu.CompilerParams(
                dimension_semantics=("parallel",),
                vmem_limit_bytes=_vmem_limit_bytes(),
            ),
        )

    args = (
        x, pad_f,
        params["ln1_g"], params["ln1_b"],
        wq, wkv, wo,
        params["ln2_g"], params["ln2_b"],
        w1, params["b1"], w2, params["b2"],
    )
    try:
        out = build_call(single_buffer_weights=True)(*args)
    except Exception:
        # Fallback for Pallas versions that reject Buffered(1) on the main pipeline.
        out = build_call(single_buffer_weights=False)(*args)

    return out[:, :S, :]


def reference(x, pad_mask, causal_mask, params, num_heads):
    """Pure-JAX replica of the PyTorch forward, used only as a correctness check."""
    B, S, E = x.shape
    D = E // num_heads

    def ln(v, g, b):
        mu = v.mean(-1, keepdims=True)
        var = ((v - mu) ** 2).mean(-1, keepdims=True)
        return (v - mu) / jnp.sqrt(var + 1e-5) * g[0] + b[0]

    xn = ln(x, params["ln1_g"], params["ln1_b"])
    q = xn @ params["wq"]
    k = xn @ params["wk"]
    v = xn @ params["wv"]
    q = q.reshape(B, S, num_heads, D).transpose(0, 2, 1, 3)
    k = k.reshape(B, S, num_heads, D).transpose(0, 2, 1, 3)
    v = v.reshape(B, S, num_heads, D).transpose(0, 2, 1, 3)
    score = jnp.einsum("bhqd,bhkd->bhqk", q, k) / math.sqrt(E)
    score = jnp.where(causal_mask[None, None], -1e20, score)
    score = jnp.where(pad_mask[:, None, None, :], -1e20, score)
    w = jax.nn.softmax(score, axis=-1)
    o = jnp.einsum("bhqk,bhkd->bhqd", w, v)
    o = o.transpose(0, 2, 1, 3).reshape(B, S, E) @ params["wo"]
    x2 = xn + o
    xn2 = ln(x2, params["ln2_g"], params["ln2_b"])
    h = jax.nn.gelu(xn2 @ params["w1"] + params["b1"][0], approximate=False)
    ff = h @ params["w2"] + params["b2"][0]
    return xn2 + ff


if __name__ == "__main__":
    B, S, E, H, HIDDEN = 2, 8, 32, 4, 64

    key = jax.random.PRNGKey(0)
    ks = jax.random.split(key, 16)

    def nrm(k, shape, scale=0.05):
        return jax.random.normal(k, shape, jnp.float32) * scale

    # Deterministic synthetic parameters. Linear weights stored pre-transposed (in, out),
    # i.e. these arrays equal (PyTorch weight).T .
    params = dict(
        ln1_g=(1.0 + 0.1 * jax.random.normal(ks[1], (1, E), jnp.float32)),
        ln1_b=nrm(ks[2], (1, E), 0.1),
        wq=nrm(ks[3], (E, E)),
        wk=nrm(ks[4], (E, E)),
        wv=nrm(ks[5], (E, E)),
        wo=nrm(ks[6], (E, E)),
        ln2_g=(1.0 + 0.1 * jax.random.normal(ks[7], (1, E), jnp.float32)),
        ln2_b=nrm(ks[8], (1, E), 0.1),
        w1=nrm(ks[9], (E, HIDDEN)),
        b1=nrm(ks[10], (1, HIDDEN), 0.1),
        w2=nrm(ks[11], (HIDDEN, E)),
        b2=nrm(ks[12], (1, E), 0.1),
    )

    x = jax.random.normal(ks[0], (B, S, E), jnp.float32)
    # pad_mask: True = padded key position (batch 1 has its last two positions padded).
    pad_mask = jnp.zeros((B, S), dtype=bool).at[1, S - 1].set(True).at[1, S - 2].set(True)
    # causal_mask: True above the diagonal (mask future positions).
    causal_mask = jnp.triu(jnp.ones((S, S), dtype=bool), k=1)

    out = transformer_causal_encoder_layer(x, pad_mask, causal_mask, params, H)
    out = jax.block_until_ready(out)

    ref = jax.block_until_ready(reference(x, pad_mask, causal_mask, params, H))

    assert out.shape == (B, S, E)
    if not jnp.allclose(out, ref, rtol=1e-2, atol=1e-2):
        raise AssertionError(
            f"kernel/reference mismatch, max abs diff = {float(jnp.max(jnp.abs(out - ref)))}"
        )
    print("KERNEL_OK")
</pallas_src>

<mosaic_0001>
module attributes {stable_mosaic.version = 11 : i64} {
  func.func @_encoder_layer_kernel(%arg0: i32, %arg1: memref<1x128x32xf32, #tpu.memory_space<vmem>>, %arg2: memref<1x1x128xf32, #tpu.memory_space<vmem>>, %arg3: memref<1x32xf32, #tpu.memory_space<vmem>>, %arg4: memref<1x32xf32, #tpu.memory_space<vmem>>, %arg5: memref<32x32xbf16, #tpu.memory_space<vmem>>, %arg6: memref<32x64xbf16, #tpu.memory_space<vmem>>, %arg7: memref<32x32xbf16, #tpu.memory_space<vmem>>, %arg8: memref<1x32xf32, #tpu.memory_space<vmem>>, %arg9: memref<1x32xf32, #tpu.memory_space<vmem>>, %arg10: memref<32x64xbf16, #tpu.memory_space<vmem>>, %arg11: memref<1x64xf32, #tpu.memory_space<vmem>>, %arg12: memref<64x32xbf16, #tpu.memory_space<vmem>>, %arg13: memref<1x32xf32, #tpu.memory_space<vmem>>, %arg14: memref<1x128x32xf32, #tpu.memory_space<vmem>>, %arg15: memref<128x32xf32, #tpu.memory_space<vmem>>) attributes {dimension_semantics = [#tpu.dimension_semantics<parallel>], iteration_bounds = array<i64: 2>, scalar_prefetch = 0 : i64, scratch_operands = 1 : i64, tpu.core_type = #tpu.core_type<tc>, window_params = [{transform_indices = @transform_0, window_bounds = array<i64: 1, 128, 32>}, {transform_indices = @transform_1, window_bounds = array<i64: 1, 1, 128>}, {pipeline_mode = #tpu.pipeline_mode<synchronous>, transform_indices = @transform_2, window_bounds = array<i64: 1, 32>}, {pipeline_mode = #tpu.pipeline_mode<synchronous>, transform_indices = @transform_3, window_bounds = array<i64: 1, 32>}, {pipeline_mode = #tpu.pipeline_mode<synchronous>, transform_indices = @transform_4, window_bounds = array<i64: 32, 32>}, {pipeline_mode = #tpu.pipeline_mode<synchronous>, transform_indices = @transform_5, window_bounds = array<i64: 32, 64>}, {pipeline_mode = #tpu.pipeline_mode<synchronous>, transform_indices = @transform_6, window_bounds = array<i64: 32, 32>}, {pipeline_mode = #tpu.pipeline_mode<synchronous>, transform_indices = @transform_7, window_bounds = array<i64: 1, 32>}, {pipeline_mode = #tpu.pipeline_mode<synchronous>, transform_indices = @transform_8, window_bounds = array<i64: 1, 32>}, {pipeline_mode = #tpu.pipeline_mode<synchronous>, transform_indices = @transform_9, window_bounds = array<i64: 32, 64>}, {pipeline_mode = #tpu.pipeline_mode<synchronous>, transform_indices = @transform_10, window_bounds = array<i64: 1, 64>}, {pipeline_mode = #tpu.pipeline_mode<synchronous>, transform_indices = @transform_11, window_bounds = array<i64: 64, 32>}, {pipeline_mode = #tpu.pipeline_mode<synchronous>, transform_indices = @transform_12, window_bounds = array<i64: 1, 32>}, {transform_indices = @transform_13, window_bounds = array<i64: 1, 128, 32>}]} {
    %c0 = arith.constant 0 : index
    %c0_0 = arith.constant 0 : index
    %c0_1 = arith.constant 0 : index
    %0 = vector.load %arg1[%c0, %c0_0, %c0_1] : memref<1x128x32xf32, #tpu.memory_space<vmem>>, vector<1x128x32xf32>
    %1 = vector.shape_cast %0 : vector<1x128x32xf32> to vector<128x32xf32>
    %c0_2 = arith.constant 0 : index
    %c0_3 = arith.constant 0 : index
    %2 = vector.load %arg3[%c0_2, %c0_3] : memref<1x32xf32, #tpu.memory_space<vmem>>, vector<1x32xf32>
    %c0_4 = arith.constant 0 : index
    %c0_5 = arith.constant 0 : index
    %3 = vector.load %arg4[%c0_4, %c0_5] : memref<1x32xf32, #tpu.memory_space<vmem>>, vector<1x32xf32>
    %cst = arith.constant dense<0.000000e+00> : vector<128xf32>
    %4 = vector.multi_reduction <add>, %1, %cst [1] : vector<128x32xf32> to vector<128xf32>
    %5 = vector.shape_cast %4 : vector<128xf32> to vector<128x1xf32>
    %cst_6 = arith.constant 3.200000e+01 : f32
    %6 = vector.broadcast %cst_6 : f32 to vector<128x1xf32>
    %7 = arith.divf %5, %6 : vector<128x1xf32>
    %8 = vector.broadcast %7 : vector<128x1xf32> to vector<128x32xf32>
    %9 = arith.subf %1, %8 : vector<128x32xf32>
    %10 = arith.mulf %9, %9 : vector<128x32xf32>
    %cst_7 = arith.constant dense<0.000000e+00> : vector<128xf32>
    %11 = vector.multi_reduction <add>, %10, %cst_7 [1] : vector<128x32xf32> to vector<128xf32>
    %12 = vector.shape_cast %11 : vector<128xf32> to vector<128x1xf32>
    %cst_8 = arith.constant 3.200000e+01 : f32
    %13 = vector.broadcast %cst_8 : f32 to vector<128x1xf32>
    %14 = arith.divf %12, %13 : vector<128x1xf32>
    %15 = vector.broadcast %7 : vector<128x1xf32> to vector<128x32xf32>
    %16 = arith.subf %1, %15 : vector<128x32xf32>
    %cst_9 = arith.constant 9.99999974E-6 : f32
    %17 = vector.broadcast %cst_9 : f32 to vector<128x1xf32>
    %18 = arith.addf %14, %17 : vector<128x1xf32>
    %19 = math.rsqrt %18 : vector<128x1xf32>
    %20 = vector.broadcast %19 : vector<128x1xf32> to vector<128x32xf32>
    %21 = arith.mulf %16, %20 : vector<128x32xf32>
    %22 = vector.broadcast %2 : vector<1x32xf32> to vector<128x32xf32>
    %23 = arith.mulf %21, %22 : vector<128x32xf32>
    %24 = vector.broadcast %3 : vector<1x32xf32> to vector<128x32xf32>
    %25 = arith.addf %23, %24 : vector<128x32xf32>
    %26 = arith.truncf %25 : vector<128x32xf32> to vector<128x32xbf16>
    %c0_10 = arith.constant 0 : index
    %c0_11 = arith.constant 0 : index
    %27 = vector.load %arg6[%c0_10, %c0_11] : memref<32x64xbf16, #tpu.memory_space<vmem>>, vector<32x64xbf16>
    %cst_12 = arith.constant dense<0.000000e+00> : vector<128x64xf32>
    %28 = tpu.matmul %26, %27, %cst_12 {dimension_numbers = #tpu.dot_dimension_numbers<[1], [0], [0], [1], [0, 0, 1, 1], [], []>} : vector<128x32xbf16>, vector<32x64xbf16>, vector<128x64xf32> -> vector<128x64xf32>
    %29 = vector.extract_strided_slice %28 {offsets = [0, 0], sizes = [128, 32], strides = [1, 1]} : vector<128x64xf32> to vector<128x32xf32>
    %30 = arith.truncf %29 : vector<128x32xf32> to vector<128x32xbf16>
    %31 = vector.extract_strided_slice %28 {offsets = [0, 32], sizes = [128, 32], strides = [1, 1]} : vector<128x64xf32> to vector<128x32xf32>
    %32 = arith.truncf %31 : vector<128x32xf32> to vector<128x32xbf16>
    %c0_13 = arith.constant 0 : index
    %c0_14 = arith.constant 0 : index
    %c0_15 = arith.constant 0 : index
    %33 = vector.load %arg2[%c0_13, %c0_14, %c0_15] : memref<1x1x128xf32, #tpu.memory_space<vmem>>, vector<1x1x128xf32>
    %34 = vector.shape_cast %33 : vector<1x1x128xf32> to vector<1x128xf32>
    %cst_16 = arith.constant 5.000000e-01 : f32
    %35 = vector.broadcast %cst_16 : f32 to vector<1x128xf32>
    %36 = arith.cmpf ogt, %34, %35 : vector<1x128xf32>
    %cst_17 = arith.constant -1.000000e+20 : f32
    %cst_18 = arith.constant 0.000000e+00 : f32
    %37 = vector.broadcast %cst_17 : f32 to vector<1x128xf32>
    %38 = vector.broadcast %cst_18 : f32 to vector<1x128xf32>
    %39 = arith.select %36, %37, %38 : vector<1x128xi1>, vector<1x128xf32>
    %40 = tpu.iota {dimensions = array<i32: 1>} : vector<128x128xi32>
    %41 = tpu.iota {dimensions = array<i32: 0>} : vector<128x128xi32>
    %c0_19 = arith.constant 0 : index
    %c0_20 = arith.constant 0 : index
    %42 = vector.load %arg5[%c0_19, %c0_20] : memref<32x32xbf16, #tpu.memory_space<vmem>>, vector<32x32xbf16>
    %c0_21 = arith.constant 0 : index
    %c0_22 = arith.constant 0 : index
    %43 = vector.load %arg7[%c0_21, %c0_22] : memref<32x32xbf16, #tpu.memory_space<vmem>>, vector<32x32xbf16>
    %c0_23 = arith.constant 0 : index
    %c0_24 = arith.constant 0 : index
    %44 = vector.load %arg8[%c0_23, %c0_24] : memref<1x32xf32, #tpu.memory_space<vmem>>, vector<1x32xf32>
    %c0_25 = arith.constant 0 : index
    %c0_26 = arith.constant 0 : index
    %45 = vector.load %arg9[%c0_25, %c0_26] : memref<1x32xf32, #tpu.memory_space<vmem>>, vector<1x32xf32>
    %c0_27 = arith.constant 0 : index
    %c0_28 = arith.constant 0 : index
    %46 = vector.load %arg10[%c0_27, %c0_28] : memref<32x64xbf16, #tpu.memory_space<vmem>>, vector<32x64xbf16>
    %c0_29 = arith.constant 0 : index
    %c0_30 = arith.constant 0 : index
    %47 = vector.load %arg11[%c0_29, %c0_30] : memref<1x64xf32, #tpu.memory_space<vmem>>, vector<1x64xf32>
    %c0_31 = arith.constant 0 : index
    %c0_32 = arith.constant 0 : index
    %48 = vector.load %arg12[%c0_31, %c0_32] : memref<64x32xbf16, #tpu.memory_space<vmem>>, vector<64x32xbf16>
    %c0_33 = arith.constant 0 : index
    %c0_34 = arith.constant 0 : index
    %49 = vector.load %arg13[%c0_33, %c0_34] : memref<1x32xf32, #tpu.memory_space<vmem>>, vector<1x32xf32>
    %c0_i32 = arith.constant 0 : i32
    %50 = vector.broadcast %c0_i32 : i32 to vector<128x128xi32>
    %51 = arith.addi %41, %50 : vector<128x128xi32>
    %52 = arith.cmpi sgt, %40, %51 : vector<128x128xi32>
    %cst_35 = arith.constant -1.000000e+20 : f32
    %cst_36 = arith.constant 0.000000e+00 : f32
    %53 = vector.broadcast %cst_35 : f32 to vector<128x128xf32>
    %54 = vector.broadcast %cst_36 : f32 to vector<128x128xf32>
    %55 = arith.select %52, %53, %54 : vector<128x128xi1>, vector<128x128xf32>
    %56 = vector.broadcast %39 : vector<1x128xf32> to vector<128x128xf32>
    %57 = arith.addf %56, %55 : vector<128x128xf32>
    %cst_37 = arith.constant dense<0.000000e+00> : vector<128x32xf32>
    %58 = tpu.matmul %26, %42, %cst_37 {dimension_numbers = #tpu.dot_dimension_numbers<[1], [0], [0], [1], [0, 0, 1, 1], [], []>} : vector<128x32xbf16>, vector<32x32xbf16>, vector<128x32xf32> -> vector<128x32xf32>
    %cst_38 = arith.constant 0.176776692 : f32
    %59 = vector.broadcast %cst_38 : f32 to vector<128x32xf32>
    %60 = arith.mulf %58, %59 : vector<128x32xf32>
    %61 = arith.truncf %60 : vector<128x32xf32> to vector<128x32xbf16>
    %62 = vector.extract_strided_slice %61 {offsets = [0, 0], sizes = [128, 8], strides = [1, 1]} : vector<128x32xbf16> to vector<128x8xbf16>
    %63 = vector.extract_strided_slice %30 {offsets = [0, 0], sizes = [128, 8], strides = [1, 1]} : vector<128x32xbf16> to vector<128x8xbf16>
    %64 = vector.extract_strided_slice %32 {offsets = [0, 0], sizes = [128, 8], strides = [1, 1]} : vector<128x32xbf16> to vector<128x8xbf16>
    %cst_39 = arith.constant dense<0.000000e+00> : vector<128x128xf32>
    %65 = tpu.matmul %62, %63, %cst_39 {dimension_numbers = #tpu.dot_dimension_numbers<[1], [1], [0], [0], [0, 0, 1, 0], [], []>} : vector<128x8xbf16>, vector<128x8xbf16>, vector<128x128xf32> -> vector<128x128xf32>
    %66 = arith.addf %65, %57 : vector<128x128xf32>
    %cst_40 = arith.constant dense<0xFF800000> : vector<128xf32>
    %67 = vector.multi_reduction <maximumf>, %66, %cst_40 [1] : vector<128x128xf32> to vector<128xf32>
    %68 = vector.shape_cast %67 : vector<128xf32> to vector<128x1xf32>
    %69 = vector.broadcast %68 : vector<128x1xf32> to vector<128x128xf32>
    %70 = arith.subf %66, %69 : vector<128x128xf32>
    %71 = math.exp %70 : vector<128x128xf32>
    %cst_41 = arith.constant dense<0.000000e+00> : vector<128xf32>
    %72 = vector.multi_reduction <add>, %71, %cst_41 [1] : vector<128x128xf32> to vector<128xf32>
    %73 = vector.shape_cast %72 : vector<128xf32> to vector<128x1xf32>
    %74 = tpu.reciprocal %73 {approx = true} : vector<128x1xf32> -> vector<128x1xf32>
    %75 = vector.broadcast %74 : vector<128x1xf32> to vector<128x128xf32>
    %76 = arith.mulf %71, %75 : vector<128x128xf32>
    %77 = arith.truncf %76 : vector<128x128xf32> to vector<128x128xbf16>
    %cst_42 = arith.constant dense<0.000000e+00> : vector<128x8xf32>
    %78 = tpu.matmul %77, %64, %cst_42 {dimension_numbers = #tpu.dot_dimension_numbers<[1], [0], [0], [1], [0, 0, 1, 1], [], []>} : vector<128x128xbf16>, vector<128x8xbf16>, vector<128x8xf32> -> vector<128x8xf32>
    %c0_43 = arith.constant 0 : index
    %c0_44 = arith.constant 0 : index
    %79 = vector.load %arg15[%c0_43, %c0_44] : memref<128x32xf32, #tpu.memory_space<vmem>>, vector<128x8xf32>
    tpu.vector_store %arg15[%c0_43, %c0_44], %78 {strides = array<i32>} : memref<128x32xf32, #tpu.memory_space<vmem>>, vector<128x8xf32>,
    %80 = vector.extract_strided_slice %61 {offsets = [0, 8], sizes = [128, 8], strides = [1, 1]} : vector<128x32xbf16> to vector<128x8xbf16>
    %81 = vector.extract_strided_slice %30 {offsets = [0, 8], sizes = [128, 8], strides = [1, 1]} : vector<128x32xbf16> to vector<128x8xbf16>
    %82 = vector.extract_strided_slice %32 {offsets = [0, 8], sizes = [128, 8], strides = [1, 1]} : vector<128x32xbf16> to vector<128x8xbf16>
    %cst_45 = arith.constant dense<0.000000e+00> : vector<128x128xf32>
    %83 = tpu.matmul %80, %81, %cst_45 {dimension_numbers = #tpu.dot_dimension_numbers<[1], [1], [0], [0], [0, 0, 1, 0], [], []>} : vector<128x8xbf16>, vector<128x8xbf16>, vector<128x128xf32> -> vector<128x128xf32>
    %84 = arith.addf %83, %57 : vector<128x128xf32>
    %cst_46 = arith.constant dense<0xFF800000> : vector<128xf32>
    %85 = vector.multi_reduction <maximumf>, %84, %cst_46 [1] : vector<128x128xf32> to vector<128xf32>
    %86 = vector.shape_cast %85 : vector<128xf32> to vector<128x1xf32>
    %87 = vector.broadcast %86 : vector<128x1xf32> to vector<128x128xf32>
    %88 = arith.subf %84, %87 : vector<128x128xf32>
    %89 = math.exp %88 : vector<128x128xf32>
    %cst_47 = arith.constant dense<0.000000e+00> : vector<128xf32>
    %90 = vector.multi_reduction <add>, %89, %cst_47 [1] : vector<128x128xf32> to vector<128xf32>
    %91 = vector.shape_cast %90 : vector<128xf32> to vector<128x1xf32>
    %92 = tpu.reciprocal %91 {approx = true} : vector<128x1xf32> -> vector<128x1xf32>
    %93 = vector.broadcast %92 : vector<128x1xf32> to vector<128x128xf32>
    %94 = arith.mulf %89, %93 : vector<128x128xf32>
    %95 = arith.truncf %94 : vector<128x128xf32> to vector<128x128xbf16>
    %cst_48 = arith.constant dense<0.000000e+00> : vector<128x8xf32>
    %96 = tpu.matmul %95, %82, %cst_48 {dimension_numbers = #tpu.dot_dimension_numbers<[1], [0], [0], [1], [0, 0, 1, 1], [], []>} : vector<128x128xbf16>, vector<128x8xbf16>, vector<128x8xf32> -> vector<128x8xf32>
    %c0_49 = arith.constant 0 : index
    %c8 = arith.constant 8 : index
    %97 = vector.load %arg15[%c0_49, %c8] : memref<128x32xf32, #tpu.memory_space<vmem>>, vector<128x8xf32>
    tpu.vector_store %arg15[%c0_49, %c8], %96 {strides = array<i32>} : memref<128x32xf32, #tpu.memory_space<vmem>>, vector<128x8xf32>,
    %98 = vector.extract_strided_slice %61 {offsets = [0, 16], sizes = [128, 8], strides = [1, 1]} : vector<128x32xbf16> to vector<128x8xbf16>
    %99 = vector.extract_strided_slice %30 {offsets = [0, 16], sizes = [128, 8], strides = [1, 1]} : vector<128x32xbf16> to vector<128x8xbf16>
    %100 = vector.extract_strided_slice %32 {offsets = [0, 16], sizes = [128, 8], strides = [1, 1]} : vector<128x32xbf16> to vector<128x8xbf16>
    %cst_50 = arith.constant dense<0.000000e+00> : vector<128x128xf32>
    %101 = tpu.matmul %98, %99, %cst_50 {dimension_numbers = #tpu.dot_dimension_numbers<[1], [1], [0], [0], [0, 0, 1, 0], [], []>} : vector<128x8xbf16>, vector<128x8xbf16>, vector<128x128xf32> -> vector<128x128xf32>
    %102 = arith.addf %101, %57 : vector<128x128xf32>
    %cst_51 = arith.constant dense<0xFF800000> : vector<128xf32>
    %103 = vector.multi_reduction <maximumf>, %102, %cst_51 [1] : vector<128x128xf32> to vector<128xf32>
    %104 = vector.shape_cast %103 : vector<128xf32> to vector<128x1xf32>
    %105 = vector.broadcast %104 : vector<128x1xf32> to vector<128x128xf32>
    %106 = arith.subf %102, %105 : vector<128x128xf32>
    %107 = math.exp %106 : vector<128x128xf32>
    %cst_52 = arith.constant dense<0.000000e+00> : vector<128xf32>
    %108 = vector.multi_reduction <add>, %107, %cst_52 [1] : vector<128x128xf32> to vector<128xf32>
    %109 = vector.shape_cast %108 : vector<128xf32> to vector<128x1xf32>
    %110 = tpu.reciprocal %109 {approx = true} : vector<128x1xf32> -> vector<128x1xf32>
    %111 = vector.broadcast %110 : vector<128x1xf32> to vector<128x128xf32>
    %112 = arith.mulf %107, %111 : vector<128x128xf32>
    %113 = arith.truncf %112 : vector<128x128xf32> to vector<128x128xbf16>
    %cst_53 = arith.constant dense<0.000000e+00> : vector<128x8xf32>
    %114 = tpu.matmul %113, %100, %cst_53 {dimension_numbers = #tpu.dot_dimension_numbers<[1], [0], [0], [1], [0, 0, 1, 1], [], []>} : vector<128x128xbf16>, vector<128x8xbf16>, vector<128x8xf32> -> vector<128x8xf32>
    %c0_54 = arith.constant 0 : index
    %c16 = arith.constant 16 : index
    %115 = vector.load %arg15[%c0_54, %c16] : memref<128x32xf32, #tpu.memory_space<vmem>>, vector<128x8xf32>
    tpu.vector_store %arg15[%c0_54, %c16], %114 {strides = array<i32>} : memref<128x32xf32, #tpu.memory_space<vmem>>, vector<128x8xf32>,
    %116 = vector.extract_strided_slice %61 {offsets = [0, 24], sizes = [128, 8], strides = [1, 1]} : vector<128x32xbf16> to vector<128x8xbf16>
    %117 = vector.extract_strided_slice %30 {offsets = [0, 24], sizes = [128, 8], strides = [1, 1]} : vector<128x32xbf16> to vector<128x8xbf16>
    %118 = vector.extract_strided_slice %32 {offsets = [0, 24], sizes = [128, 8], strides = [1, 1]} : vector<128x32xbf16> to vector<128x8xbf16>
    %cst_55 = arith.constant dense<0.000000e+00> : vector<128x128xf32>
    %119 = tpu.matmul %116, %117, %cst_55 {dimension_numbers = #tpu.dot_dimension_numbers<[1], [1], [0], [0], [0, 0, 1, 0], [], []>} : vector<128x8xbf16>, vector<128x8xbf16>, vector<128x128xf32> -> vector<128x128xf32>
    %120 = arith.addf %119, %57 : vector<128x128xf32>
    %cst_56 = arith.constant dense<0xFF800000> : vector<128xf32>
    %121 = vector.multi_reduction <maximumf>, %120, %cst_56 [1] : vector<128x128xf32> to vector<128xf32>
    %122 = vector.shape_cast %121 : vector<128xf32> to vector<128x1xf32>
    %123 = vector.broadcast %122 : vector<128x1xf32> to vector<128x128xf32>
    %124 = arith.subf %120, %123 : vector<128x128xf32>
    %125 = math.exp %124 : vector<128x128xf32>
    %cst_57 = arith.constant dense<0.000000e+00> : vector<128xf32>
    %126 = vector.multi_reduction <add>, %125, %cst_57 [1] : vector<128x128xf32> to vector<128xf32>
    %127 = vector.shape_cast %126 : vector<128xf32> to vector<128x1xf32>
    %128 = tpu.reciprocal %127 {approx = true} : vector<128x1xf32> -> vector<128x1xf32>
    %129 = vector.broadcast %128 : vector<128x1xf32> to vector<128x128xf32>
    %130 = arith.mulf %125, %129 : vector<128x128xf32>
    %131 = arith.truncf %130 : vector<128x128xf32> to vector<128x128xbf16>
    %cst_58 = arith.constant dense<0.000000e+00> : vector<128x8xf32>
    %132 = tpu.matmul %131, %118, %cst_58 {dimension_numbers = #tpu.dot_dimension_numbers<[1], [0], [0], [1], [0, 0, 1, 1], [], []>} : vector<128x128xbf16>, vector<128x8xbf16>, vector<128x8xf32> -> vector<128x8xf32>
    %c0_59 = arith.constant 0 : index
    %c24 = arith.constant 24 : index
    %133 = vector.load %arg15[%c0_59, %c24] : memref<128x32xf32, #tpu.memory_space<vmem>>, vector<128x8xf32>
    tpu.vector_store %arg15[%c0_59, %c24], %132 {strides = array<i32>} : memref<128x32xf32, #tpu.memory_space<vmem>>, vector<128x8xf32>,
    %c0_60 = arith.constant 0 : index
    %c0_61 = arith.constant 0 : index
    %134 = vector.load %arg15[%c0_60, %c0_61] : memref<128x32xf32, #tpu.memory_space<vmem>>, vector<128x32xf32>
    %135 = arith.truncf %134 : vector<128x32xf32> to vector<128x32xbf16>
    %cst_62 = arith.constant dense<0.000000e+00> : vector<128x32xf32>
    %136 = tpu.matmul %135, %43, %cst_62 {dimension_numbers = #tpu.dot_dimension_numbers<[1], [0], [0], [1], [0, 0, 1, 1], [], []>} : vector<128x32xbf16>, vector<32x32xbf16>, vector<128x32xf32> -> vector<128x32xf32>
    %137 = arith.addf %25, %136 : vector<128x32xf32>
    %cst_63 = arith.constant dense<0.000000e+00> : vector<128xf32>
    %138 = vector.multi_reduction <add>, %137, %cst_63 [1] : vector<128x32xf32> to vector<128xf32>
    %139 = vector.shape_cast %138 : vector<128xf32> to vector<128x1xf32>
    %cst_64 = arith.constant 3.200000e+01 : f32
    %140 = vector.broadcast %cst_64 : f32 to vector<128x1xf32>
    %141 = arith.divf %139, %140 : vector<128x1xf32>
    %142 = vector.broadcast %141 : vector<128x1xf32> to vector<128x32xf32>
    %143 = arith.subf %137, %142 : vector<128x32xf32>
    %144 = arith.mulf %143, %143 : vector<128x32xf32>
    %cst_65 = arith.constant dense<0.000000e+00> : vector<128xf32>
    %145 = vector.multi_reduction <add>, %144, %cst_65 [1] : vector<128x32xf32> to vector<128xf32>
    %146 = vector.shape_cast %145 : vector<128xf32> to vector<128x1xf32>
    %cst_66 = arith.constant 3.200000e+01 : f32
    %147 = vector.broadcast %cst_66 : f32 to vector<128x1xf32>
    %148 = arith.divf %146, %147 : vector<128x1xf32>
    %149 = vector.broadcast %141 : vector<128x1xf32> to vector<128x32xf32>
    %150 = arith.subf %137, %149 : vector<128x32xf32>
    %cst_67 = arith.constant 9.99999974E-6 : f32
    %151 = vector.broadcast %cst_67 : f32 to vector<128x1xf32>
    %152 = arith.addf %148, %151 : vector<128x1xf32>
    %153 = math.rsqrt %152 : vector<128x1xf32>
    %154 = vector.broadcast %153 : vector<128x1xf32> to vector<128x32xf32>
    %155 = arith.mulf %150, %154 : vector<128x32xf32>
    %156 = vector.broadcast %44 : vector<1x32xf32> to vector<128x32xf32>
    %157 = arith.mulf %155, %156 : vector<128x32xf32>
    %158 = vector.broadcast %45 : vector<1x32xf32> to vector<128x32xf32>
    %159 = arith.addf %157, %158 : vector<128x32xf32>
    %160 = arith.truncf %159 : vector<128x32xf32> to vector<128x32xbf16>
    %cst_68 = arith.constant dense<0.000000e+00> : vector<128x64xf32>
    %161 = tpu.matmul %160, %46, %cst_68 {dimension_numbers = #tpu.dot_dimension_numbers<[1], [0], [0], [1], [0, 0, 1, 1], [], []>} : vector<128x32xbf16>, vector<32x64xbf16>, vector<128x64xf32> -> vector<128x64xf32>
    %162 = vector.broadcast %47 : vector<1x64xf32> to vector<128x64xf32>
    %163 = arith.addf %161, %162 : vector<128x64xf32>
    %cst_69 = arith.constant 5.000000e-01 : f32
    %164 = vector.broadcast %cst_69 : f32 to vector<128x64xf32>
    %165 = arith.mulf %164, %163 : vector<128x64xf32>
    %cst_70 = arith.constant 0.707106769 : f32
    %166 = vector.broadcast %cst_70 : f32 to vector<128x64xf32>
    %167 = arith.mulf %163, %166 : vector<128x64xf32>
    %cst_71 = arith.constant 0.000000e+00 : f32
    %168 = vector.broadcast %cst_71 : f32 to vector<128x64xf32>
    %169 = arith.cmpf oge, %167, %168 : vector<128x64xf32>
    %cst_72 = arith.constant 1.000000e+00 : f32
    %cst_73 = arith.constant -1.000000e+00 : f32
    %170 = vector.broadcast %cst_72 : f32 to vector<128x64xf32>
    %171 = vector.broadcast %cst_73 : f32 to vector<128x64xf32>
    %172 = arith.select %169, %170, %171 : vector<128x64xi1>, vector<128x64xf32>
    %173 = math.absf %167 : vector<128x64xf32>
    %cst_74 = arith.constant 0.327591091 : f32
    %174 = vector.broadcast %cst_74 : f32 to vector<128x64xf32>
    %175 = arith.mulf %174, %173 : vector<128x64xf32>
    %cst_75 = arith.constant 1.000000e+00 : f32
    %176 = vector.broadcast %cst_75 : f32 to vector<128x64xf32>
    %177 = arith.addf %176, %175 : vector<128x64xf32>
    %cst_76 = arith.constant 1.000000e+00 : f32
    %178 = vector.broadcast %cst_76 : f32 to vector<128x64xf32>
    %179 = arith.divf %178, %177 : vector<128x64xf32>
    %cst_77 = arith.constant 1.06140542 : f32
    %180 = vector.broadcast %cst_77 : f32 to vector<128x64xf32>
    %181 = arith.mulf %180, %179 : vector<128x64xf32>
    %cst_78 = arith.constant -1.45315206 : f32
    %182 = vector.broadcast %cst_78 : f32 to vector<128x64xf32>
    %183 = arith.addf %181, %182 : vector<128x64xf32>
    %184 = arith.mulf %183, %179 : vector<128x64xf32>
    %cst_79 = arith.constant 1.42141378 : f32
    %185 = vector.broadcast %cst_79 : f32 to vector<128x64xf32>
    %186 = arith.addf %184, %185 : vector<128x64xf32>
    %187 = arith.mulf %186, %179 : vector<128x64xf32>
    %cst_80 = arith.constant -0.284496725 : f32
    %188 = vector.broadcast %cst_80 : f32 to vector<128x64xf32>
    %189 = arith.addf %187, %188 : vector<128x64xf32>
    %190 = arith.mulf %189, %179 : vector<128x64xf32>
    %cst_81 = arith.constant 0.254829586 : f32
    %191 = vector.broadcast %cst_81 : f32 to vector<128x64xf32>
    %192 = arith.addf %190, %191 : vector<128x64xf32>
    %193 = arith.mulf %192, %179 : vector<128x64xf32>
    %cst_82 = arith.constant 0.000000e+00 : f32
    %194 = vector.broadcast %cst_82 : f32 to vector<128x64xf32>
    %195 = arith.subf %194, %173 : vector<128x64xf32>
    %196 = arith.mulf %195, %173 : vector<128x64xf32>
    %197 = math.exp %196 : vector<128x64xf32>
    %198 = arith.mulf %193, %197 : vector<128x64xf32>
    %cst_83 = arith.constant 1.000000e+00 : f32
    %199 = vector.broadcast %cst_83 : f32 to vector<128x64xf32>
    %200 = arith.subf %199, %198 : vector<128x64xf32>
    %201 = arith.mulf %172, %200 : vector<128x64xf32>
    %cst_84 = arith.constant 1.000000e+00 : f32
    %202 = vector.broadcast %cst_84 : f32 to vector<128x64xf32>
    %203 = arith.addf %202, %201 : vector<128x64xf32>
    %204 = arith.mulf %165, %203 : vector<128x64xf32>
    %205 = arith.truncf %204 : vector<128x64xf32> to vector<128x64xbf16>
    %cst_85 = arith.constant dense<0.000000e+00> : vector<128x32xf32>
    %206 = tpu.matmul %205, %48, %cst_85 {dimension_numbers = #tpu.dot_dimension_numbers<[1], [0], [0], [1], [0, 0, 1, 1], [], []>} : vector<128x64xbf16>, vector<64x32xbf16>, vector<128x32xf32> -> vector<128x32xf32>
    %207 = vector.broadcast %49 : vector<1x32xf32> to vector<128x32xf32>
    %208 = arith.addf %206, %207 : vector<128x32xf32>
    %209 = arith.addf %159, %208 : vector<128x32xf32>
    %c0_86 = arith.constant 0 : index
    %c0_87 = arith.constant 0 : index
    %c0_88 = arith.constant 0 : index
    %210 = vector.load %arg14[%c0_86, %c0_87, %c0_88] : memref<1x128x32xf32, #tpu.memory_space<vmem>>, vector<1x128x32xf32>
    %211 = vector.shape_cast %210 : vector<1x128x32xf32> to vector<128x32xf32>
    %212 = vector.shape_cast %209 : vector<128x32xf32> to vector<1x128x32xf32>
    tpu.vector_store %arg14[%c0_86, %c0_87, %c0_88], %212 {strides = array<i32>} : memref<1x128x32xf32, #tpu.memory_space<vmem>>, vector<1x128x32xf32>,
    return
  }
  func.func @transform_0(%arg0: i32) -> (i32, i32, i32) {
    %c0_i32 = arith.constant 0 : i32
    %c0_i32_0 = arith.constant 0 : i32
    %c0_i32_1 = arith.constant 0 : i32
    return %arg0, %c0_i32, %c0_i32_0 : i32, i32, i32
  }
  func.func @transform_1(%arg0: i32) -> (i32, i32, i32) {
    %c0_i32 = arith.constant 0 : i32
    %c0_i32_0 = arith.constant 0 : i32
    %c0_i32_1 = arith.constant 0 : i32
    return %arg0, %c0_i32, %c0_i32_0 : i32, i32, i32
  }
  func.func @transform_2(%arg0: i32) -> (i32, i32) {
    %c0_i32 = arith.constant 0 : i32
    %c0_i32_0 = arith.constant 0 : i32
    %c0_i32_1 = arith.constant 0 : i32
    return %c0_i32, %c0_i32_0 : i32, i32
  }
  func.func @transform_3(%arg0: i32) -> (i32, i32) {
    %c0_i32 = arith.constant 0 : i32
    %c0_i32_0 = arith.constant 0 : i32
    %c0_i32_1 = arith.constant 0 : i32
    return %c0_i32, %c0_i32_0 : i32, i32
  }
  func.func @transform_4(%arg0: i32) -> (i32, i32) {
    %c0_i32 = arith.constant 0 : i32
    %c0_i32_0 = arith.constant 0 : i32
    %c0_i32_1 = arith.constant 0 : i32
    return %c0_i32, %c0_i32_0 : i32, i32
  }
  func.func @transform_5(%arg0: i32) -> (i32, i32) {
    %c0_i32 = arith.constant 0 : i32
    %c0_i32_0 = arith.constant 0 : i32
    %c0_i32_1 = arith.constant 0 : i32
    return %c0_i32, %c0_i32_0 : i32, i32
  }
  func.func @transform_6(%arg0: i32) -> (i32, i32) {
    %c0_i32 = arith.constant 0 : i32
    %c0_i32_0 = arith.constant 0 : i32
    %c0_i32_1 = arith.constant 0 : i32
    return %c0_i32, %c0_i32_0 : i32, i32
  }
  func.func @transform_7(%arg0: i32) -> (i32, i32) {
    %c0_i32 = arith.constant 0 : i32
    %c0_i32_0 = arith.constant 0 : i32
    %c0_i32_1 = arith.constant 0 : i32
    return %c0_i32, %c0_i32_0 : i32, i32
  }
  func.func @transform_8(%arg0: i32) -> (i32, i32) {
    %c0_i32 = arith.constant 0 : i32
    %c0_i32_0 = arith.constant 0 : i32
    %c0_i32_1 = arith.constant 0 : i32
    return %c0_i32, %c0_i32_0 : i32, i32
  }
  func.func @transform_9(%arg0: i32) -> (i32, i32) {
    %c0_i32 = arith.constant 0 : i32
    %c0_i32_0 = arith.constant 0 : i32
    %c0_i32_1 = arith.constant 0 : i32
    return %c0_i32, %c0_i32_0 : i32, i32
  }
  func.func @transform_10(%arg0: i32) -> (i32, i32) {
    %c0_i32 = arith.constant 0 : i32
    %c0_i32_0 = arith.constant 0 : i32
    %c0_i32_1 = arith.constant 0 : i32
    return %c0_i32, %c0_i32_0 : i32, i32
  }
  func.func @transform_11(%arg0: i32) -> (i32, i32) {
    %c0_i32 = arith.constant 0 : i32
    %c0_i32_0 = arith.constant 0 : i32
    %c0_i32_1 = arith.constant 0 : i32
    return %c0_i32, %c0_i32_0 : i32, i32
  }
  func.func @transform_12(%arg0: i32) -> (i32, i32) {
    %c0_i32 = arith.constant 0 : i32
    %c0_i32_0 = arith.constant 0 : i32
    %c0_i32_1 = arith.constant 0 : i32
    return %c0_i32, %c0_i32_0 : i32, i32
  }
  func.func @transform_13(%arg0: i32) -> (i32, i32, i32) {
    %c0_i32 = arith.constant 0 : i32
    %c0_i32_0 = arith.constant 0 : i32
    %c0_i32_1 = arith.constant 0 : i32
    return %arg0, %c0_i32, %c0_i32_0 : i32, i32, i32
  }
}

module attributes {stable_mosaic.version = 11 : i64} {
  func.func @_encoder_layer_kernel(%arg0: i32, %arg1: memref<1x128x32xf32, #tpu.memory_space<vmem>>, %arg2: memref<1x1x128xf32, #tpu.memory_space<vmem>>, %arg3: memref<1x32xf32, #tpu.memory_space<vmem>>, %arg4: memref<1x32xf32, #tpu.memory_space<vmem>>, %arg5: memref<32x32xbf16, #tpu.memory_space<vmem>>, %arg6: memref<32x64xbf16, #tpu.memory_space<vmem>>, %arg7: memref<32x32xbf16, #tpu.memory_space<vmem>>, %arg8: memref<1x32xf32, #tpu.memory_space<vmem>>, %arg9: memref<1x32xf32, #tpu.memory_space<vmem>>, %arg10: memref<32x64xbf16, #tpu.memory_space<vmem>>, %arg11: memref<1x64xf32, #tpu.memory_space<vmem>>, %arg12: memref<64x32xbf16, #tpu.memory_space<vmem>>, %arg13: memref<1x32xf32, #tpu.memory_space<vmem>>, %arg14: memref<1x128x32xf32, #tpu.memory_space<vmem>>, %arg15: memref<128x32xf32, #tpu.memory_space<vmem>>) attributes {dimension_semantics = [#tpu.dimension_semantics<parallel>], iteration_bounds = array<i64: 2>, scalar_prefetch = 0 : i64, scratch_operands = 1 : i64, tpu.core_type = #tpu.core_type<tc>, window_params = [{transform_indices = @transform_0, window_bounds = array<i64: 1, 128, 32>}, {transform_indices = @transform_1, window_bounds = array<i64: 1, 1, 128>}, {pipeline_mode = #tpu.pipeline_mode<synchronous>, transform_indices = @transform_2, window_bounds = array<i64: 1, 32>}, {pipeline_mode = #tpu.pipeline_mode<synchronous>, transform_indices = @transform_3, window_bounds = array<i64: 1, 32>}, {pipeline_mode = #tpu.pipeline_mode<synchronous>, transform_indices = @transform_4, window_bounds = array<i64: 32, 32>}, {pipeline_mode = #tpu.pipeline_mode<synchronous>, transform_indices = @transform_5, window_bounds = array<i64: 32, 64>}, {pipeline_mode = #tpu.pipeline_mode<synchronous>, transform_indices = @transform_6, window_bounds = array<i64: 32, 32>}, {pipeline_mode = #tpu.pipeline_mode<synchronous>, transform_indices = @transform_7, window_bounds = array<i64: 1, 32>}, {pipeline_mode = #tpu.pipeline_mode<synchronous>, transform_indices = @transform_8, window_bounds = array<i64: 1, 32>}, {pipeline_mode = #tpu.pipeline_mode<synchronous>, transform_indices = @transform_9, window_bounds = array<i64: 32, 64>}, {pipeline_mode = #tpu.pipeline_mode<synchronous>, transform_indices = @transform_10, window_bounds = array<i64: 1, 64>}, {pipeline_mode = #tpu.pipeline_mode<synchronous>, transform_indices = @transform_11, window_bounds = array<i64: 64, 32>}, {pipeline_mode = #tpu.pipeline_mode<synchronous>, transform_indices = @transform_12, window_bounds = array<i64: 1, 32>}, {transform_indices = @transform_13, window_bounds = array<i64: 1, 128, 32>}]} {
    %c0 = arith.constant 0 : index
    %c0_0 = arith.constant 0 : index
    %c0_1 = arith.constant 0 : index
    %0 = vector.load %arg1[%c0, %c0_0, %c0_1] : memref<1x128x32xf32, #tpu.memory_space<vmem>>, vector<1x128x32xf32>
    %1 = vector.shape_cast %0 : vector<1x128x32xf32> to vector<128x32xf32>
    %c0_2 = arith.constant 0 : index
    %c0_3 = arith.constant 0 : index
    %2 = vector.load %arg3[%c0_2, %c0_3] : memref<1x32xf32, #tpu.memory_space<vmem>>, vector<1x32xf32>
    %c0_4 = arith.constant 0 : index
    %c0_5 = arith.constant 0 : index
    %3 = vector.load %arg4[%c0_4, %c0_5] : memref<1x32xf32, #tpu.memory_space<vmem>>, vector<1x32xf32>
    %cst = arith.constant dense<0.000000e+00> : vector<128xf32>
    %4 = vector.multi_reduction <add>, %1, %cst [1] : vector<128x32xf32> to vector<128xf32>
    %5 = vector.shape_cast %4 : vector<128xf32> to vector<128x1xf32>
    %cst_6 = arith.constant 3.200000e+01 : f32
    %6 = vector.broadcast %cst_6 : f32 to vector<128x1xf32>
    %7 = arith.divf %5, %6 : vector<128x1xf32>
    %8 = vector.broadcast %7 : vector<128x1xf32> to vector<128x32xf32>
    %9 = arith.subf %1, %8 : vector<128x32xf32>
    %10 = arith.mulf %9, %9 : vector<128x32xf32>
    %cst_7 = arith.constant dense<0.000000e+00> : vector<128xf32>
    %11 = vector.multi_reduction <add>, %10, %cst_7 [1] : vector<128x32xf32> to vector<128xf32>
    %12 = vector.shape_cast %11 : vector<128xf32> to vector<128x1xf32>
    %cst_8 = arith.constant 3.200000e+01 : f32
    %13 = vector.broadcast %cst_8 : f32 to vector<128x1xf32>
    %14 = arith.divf %12, %13 : vector<128x1xf32>
    %15 = vector.broadcast %7 : vector<128x1xf32> to vector<128x32xf32>
    %16 = arith.subf %1, %15 : vector<128x32xf32>
    %cst_9 = arith.constant 9.99999974E-6 : f32
    %17 = vector.broadcast %cst_9 : f32 to vector<128x1xf32>
    %18 = arith.addf %14, %17 : vector<128x1xf32>
    %19 = math.rsqrt %18 : vector<128x1xf32>
    %20 = vector.broadcast %19 : vector<128x1xf32> to vector<128x32xf32>
    %21 = arith.mulf %16, %20 : vector<128x32xf32>
    %22 = vector.broadcast %2 : vector<1x32xf32> to vector<128x32xf32>
    %23 = arith.mulf %21, %22 : vector<128x32xf32>
    %24 = vector.broadcast %3 : vector<1x32xf32> to vector<128x32xf32>
    %25 = arith.addf %23, %24 : vector<128x32xf32>
    %26 = arith.truncf %25 : vector<128x32xf32> to vector<128x32xbf16>
    %c0_10 = arith.constant 0 : index
    %c0_11 = arith.constant 0 : index
    %27 = vector.load %arg6[%c0_10, %c0_11] : memref<32x64xbf16, #tpu.memory_space<vmem>>, vector<32x64xbf16>
    %cst_12 = arith.constant dense<0.000000e+00> : vector<128x64xf32>
    %28 = tpu.matmul %26, %27, %cst_12 {dimension_numbers = #tpu.dot_dimension_numbers<[1], [0], [0], [1], [0, 0, 1, 1], [], []>} : vector<128x32xbf16>, vector<32x64xbf16>, vector<128x64xf32> -> vector<128x64xf32>
    %29 = vector.extract_strided_slice %28 {offsets = [0, 0], sizes = [128, 32], strides = [1, 1]} : vector<128x64xf32> to vector<128x32xf32>
    %30 = arith.truncf %29 : vector<128x32xf32> to vector<128x32xbf16>
    %31 = vector.extract_strided_slice %28 {offsets = [0, 32], sizes = [128, 32], strides = [1, 1]} : vector<128x64xf32> to vector<128x32xf32>
    %32 = arith.truncf %31 : vector<128x32xf32> to vector<128x32xbf16>
    %c0_13 = arith.constant 0 : index
    %c0_14 = arith.constant 0 : index
    %c0_15 = arith.constant 0 : index
    %33 = vector.load %arg2[%c0_13, %c0_14, %c0_15] : memref<1x1x128xf32, #tpu.memory_space<vmem>>, vector<1x1x128xf32>
    %34 = vector.shape_cast %33 : vector<1x1x128xf32> to vector<1x128xf32>
    %cst_16 = arith.constant 5.000000e-01 : f32
    %35 = vector.broadcast %cst_16 : f32 to vector<1x128xf32>
    %36 = arith.cmpf ogt, %34, %35 : vector<1x128xf32>
    %cst_17 = arith.constant -1.000000e+20 : f32
    %cst_18 = arith.constant 0.000000e+00 : f32
    %37 = vector.broadcast %cst_17 : f32 to vector<1x128xf32>
    %38 = vector.broadcast %cst_18 : f32 to vector<1x128xf32>
    %39 = arith.select %36, %37, %38 : vector<1x128xi1>, vector<1x128xf32>
    %40 = tpu.iota {dimensions = array<i32: 1>} : vector<128x128xi32>
    %41 = tpu.iota {dimensions = array<i32: 0>} : vector<128x128xi32>
    %c0_19 = arith.constant 0 : index
    %c0_20 = arith.constant 0 : index
    %42 = vector.load %arg5[%c0_19, %c0_20] : memref<32x32xbf16, #tpu.memory_space<vmem>>, vector<32x32xbf16>
    %c0_21 = arith.constant 0 : index
    %c0_22 = arith.constant 0 : index
    %43 = vector.load %arg7[%c0_21, %c0_22] : memref<32x32xbf16, #tpu.memory_space<vmem>>, vector<32x32xbf16>
    %c0_23 = arith.constant 0 : index
    %c0_24 = arith.constant 0 : index
    %44 = vector.load %arg8[%c0_23, %c0_24] : memref<1x32xf32, #tpu.memory_space<vmem>>, vector<1x32xf32>
    %c0_25 = arith.constant 0 : index
    %c0_26 = arith.constant 0 : index
    %45 = vector.load %arg9[%c0_25, %c0_26] : memref<1x32xf32, #tpu.memory_space<vmem>>, vector<1x32xf32>
    %c0_27 = arith.constant 0 : index
    %c0_28 = arith.constant 0 : index
    %46 = vector.load %arg10[%c0_27, %c0_28] : memref<32x64xbf16, #tpu.memory_space<vmem>>, vector<32x64xbf16>
    %c0_29 = arith.constant 0 : index
    %c0_30 = arith.constant 0 : index
    %47 = vector.load %arg11[%c0_29, %c0_30] : memref<1x64xf32, #tpu.memory_space<vmem>>, vector<1x64xf32>
    %c0_31 = arith.constant 0 : index
    %c0_32 = arith.constant 0 : index
    %48 = vector.load %arg12[%c0_31, %c0_32] : memref<64x32xbf16, #tpu.memory_space<vmem>>, vector<64x32xbf16>
    %c0_33 = arith.constant 0 : index
    %c0_34 = arith.constant 0 : index
    %49 = vector.load %arg13[%c0_33, %c0_34] : memref<1x32xf32, #tpu.memory_space<vmem>>, vector<1x32xf32>
    %c0_i32 = arith.constant 0 : i32
    %50 = vector.broadcast %c0_i32 : i32 to vector<128x128xi32>
    %51 = arith.addi %41, %50 : vector<128x128xi32>
    %52 = arith.cmpi sgt, %40, %51 : vector<128x128xi32>
    %cst_35 = arith.constant -1.000000e+20 : f32
    %cst_36 = arith.constant 0.000000e+00 : f32
    %53 = vector.broadcast %cst_35 : f32 to vector<128x128xf32>
    %54 = vector.broadcast %cst_36 : f32 to vector<128x128xf32>
    %55 = arith.select %52, %53, %54 : vector<128x128xi1>, vector<128x128xf32>
    %56 = vector.broadcast %39 : vector<1x128xf32> to vector<128x128xf32>
    %57 = arith.addf %56, %55 : vector<128x128xf32>
    %cst_37 = arith.constant dense<0.000000e+00> : vector<128x32xf32>
    %58 = tpu.matmul %26, %42, %cst_37 {dimension_numbers = #tpu.dot_dimension_numbers<[1], [0], [0], [1], [0, 0, 1, 1], [], []>} : vector<128x32xbf16>, vector<32x32xbf16>, vector<128x32xf32> -> vector<128x32xf32>
    %cst_38 = arith.constant 0.176776692 : f32
    %59 = vector.broadcast %cst_38 : f32 to vector<128x32xf32>
    %60 = arith.mulf %58, %59 : vector<128x32xf32>
    %61 = arith.truncf %60 : vector<128x32xf32> to vector<128x32xbf16>
    %62 = vector.extract_strided_slice %61 {offsets = [0, 0], sizes = [128, 8], strides = [1, 1]} : vector<128x32xbf16> to vector<128x8xbf16>
    %63 = vector.extract_strided_slice %30 {offsets = [0, 0], sizes = [128, 8], strides = [1, 1]} : vector<128x32xbf16> to vector<128x8xbf16>
    %64 = vector.extract_strided_slice %32 {offsets = [0, 0], sizes = [128, 8], strides = [1, 1]} : vector<128x32xbf16> to vector<128x8xbf16>
    %cst_39 = arith.constant dense<0.000000e+00> : vector<128x128xf32>
    %65 = tpu.matmul %62, %63, %cst_39 {dimension_numbers = #tpu.dot_dimension_numbers<[1], [1], [0], [0], [0, 0, 1, 0], [], []>} : vector<128x8xbf16>, vector<128x8xbf16>, vector<128x128xf32> -> vector<128x128xf32>
    %66 = arith.addf %65, %57 : vector<128x128xf32>
    %cst_40 = arith.constant dense<0xFF800000> : vector<128xf32>
    %67 = vector.multi_reduction <maximumf>, %66, %cst_40 [1] : vector<128x128xf32> to vector<128xf32>
    %68 = vector.shape_cast %67 : vector<128xf32> to vector<128x1xf32>
    %69 = vector.broadcast %68 : vector<128x1xf32> to vector<128x128xf32>
    %70 = arith.subf %66, %69 : vector<128x128xf32>
    %71 = math.exp %70 : vector<128x128xf32>
    %cst_41 = arith.constant dense<0.000000e+00> : vector<128xf32>
    %72 = vector.multi_reduction <add>, %71, %cst_41 [1] : vector<128x128xf32> to vector<128xf32>
    %73 = vector.shape_cast %72 : vector<128xf32> to vector<128x1xf32>
    %74 = tpu.reciprocal %73 {approx = true} : vector<128x1xf32> -> vector<128x1xf32>
    %75 = vector.broadcast %74 : vector<128x1xf32> to vector<128x128xf32>
    %76 = arith.mulf %71, %75 : vector<128x128xf32>
    %77 = arith.truncf %76 : vector<128x128xf32> to vector<128x128xbf16>
    %cst_42 = arith.constant dense<0.000000e+00> : vector<128x8xf32>
    %78 = tpu.matmul %77, %64, %cst_42 {dimension_numbers = #tpu.dot_dimension_numbers<[1], [0], [0], [1], [0, 0, 1, 1], [], []>} : vector<128x128xbf16>, vector<128x8xbf16>, vector<128x8xf32> -> vector<128x8xf32>
    %c0_43 = arith.constant 0 : index
    %c0_44 = arith.constant 0 : index
    %79 = vector.load %arg15[%c0_43, %c0_44] : memref<128x32xf32, #tpu.memory_space<vmem>>, vector<128x8xf32>
    tpu.vector_store %arg15[%c0_43, %c0_44], %78 {strides = array<i32>} : memref<128x32xf32, #tpu.memory_space<vmem>>, vector<128x8xf32>,
    %80 = vector.extract_strided_slice %61 {offsets = [0, 8], sizes = [128, 8], strides = [1, 1]} : vector<128x32xbf16> to vector<128x8xbf16>
    %81 = vector.extract_strided_slice %30 {offsets = [0, 8], sizes = [128, 8], strides = [1, 1]} : vector<128x32xbf16> to vector<128x8xbf16>
    %82 = vector.extract_strided_slice %32 {offsets = [0, 8], sizes = [128, 8], strides = [1, 1]} : vector<128x32xbf16> to vector<128x8xbf16>
    %cst_45 = arith.constant dense<0.000000e+00> : vector<128x128xf32>
    %83 = tpu.matmul %80, %81, %cst_45 {dimension_numbers = #tpu.dot_dimension_numbers<[1], [1], [0], [0], [0, 0, 1, 0], [], []>} : vector<128x8xbf16>, vector<128x8xbf16>, vector<128x128xf32> -> vector<128x128xf32>
    %84 = arith.addf %83, %57 : vector<128x128xf32>
    %cst_46 = arith.constant dense<0xFF800000> : vector<128xf32>
    %85 = vector.multi_reduction <maximumf>, %84, %cst_46 [1] : vector<128x128xf32> to vector<128xf32>
    %86 = vector.shape_cast %85 : vector<128xf32> to vector<128x1xf32>
    %87 = vector.broadcast %86 : vector<128x1xf32> to vector<128x128xf32>
    %88 = arith.subf %84, %87 : vector<128x128xf32>
    %89 = math.exp %88 : vector<128x128xf32>
    %cst_47 = arith.constant dense<0.000000e+00> : vector<128xf32>
    %90 = vector.multi_reduction <add>, %89, %cst_47 [1] : vector<128x128xf32> to vector<128xf32>
    %91 = vector.shape_cast %90 : vector<128xf32> to vector<128x1xf32>
    %92 = tpu.reciprocal %91 {approx = true} : vector<128x1xf32> -> vector<128x1xf32>
    %93 = vector.broadcast %92 : vector<128x1xf32> to vector<128x128xf32>
    %94 = arith.mulf %89, %93 : vector<128x128xf32>
    %95 = arith.truncf %94 : vector<128x128xf32> to vector<128x128xbf16>
    %cst_48 = arith.constant dense<0.000000e+00> : vector<128x8xf32>
    %96 = tpu.matmul %95, %82, %cst_48 {dimension_numbers = #tpu.dot_dimension_numbers<[1], [0], [0], [1], [0, 0, 1, 1], [], []>} : vector<128x128xbf16>, vector<128x8xbf16>, vector<128x8xf32> -> vector<128x8xf32>
    %c0_49 = arith.constant 0 : index
    %c8 = arith.constant 8 : index
    %97 = vector.load %arg15[%c0_49, %c8] : memref<128x32xf32, #tpu.memory_space<vmem>>, vector<128x8xf32>
    tpu.vector_store %arg15[%c0_49, %c8], %96 {strides = array<i32>} : memref<128x32xf32, #tpu.memory_space<vmem>>, vector<128x8xf32>,
    %98 = vector.extract_strided_slice %61 {offsets = [0, 16], sizes = [128, 8], strides = [1, 1]} : vector<128x32xbf16> to vector<128x8xbf16>
    %99 = vector.extract_strided_slice %30 {offsets = [0, 16], sizes = [128, 8], strides = [1, 1]} : vector<128x32xbf16> to vector<128x8xbf16>
    %100 = vector.extract_strided_slice %32 {offsets = [0, 16], sizes = [128, 8], strides = [1, 1]} : vector<128x32xbf16> to vector<128x8xbf16>
    %cst_50 = arith.constant dense<0.000000e+00> : vector<128x128xf32>
    %101 = tpu.matmul %98, %99, %cst_50 {dimension_numbers = #tpu.dot_dimension_numbers<[1], [1], [0], [0], [0, 0, 1, 0], [], []>} : vector<128x8xbf16>, vector<128x8xbf16>, vector<128x128xf32> -> vector<128x128xf32>
    %102 = arith.addf %101, %57 : vector<128x128xf32>
    %cst_51 = arith.constant dense<0xFF800000> : vector<128xf32>
    %103 = vector.multi_reduction <maximumf>, %102, %cst_51 [1] : vector<128x128xf32> to vector<128xf32>
    %104 = vector.shape_cast %103 : vector<128xf32> to vector<128x1xf32>
    %105 = vector.broadcast %104 : vector<128x1xf32> to vector<128x128xf32>
    %106 = arith.subf %102, %105 : vector<128x128xf32>
    %107 = math.exp %106 : vector<128x128xf32>
    %cst_52 = arith.constant dense<0.000000e+00> : vector<128xf32>
    %108 = vector.multi_reduction <add>, %107, %cst_52 [1] : vector<128x128xf32> to vector<128xf32>
    %109 = vector.shape_cast %108 : vector<128xf32> to vector<128x1xf32>
    %110 = tpu.reciprocal %109 {approx = true} : vector<128x1xf32> -> vector<128x1xf32>
    %111 = vector.broadcast %110 : vector<128x1xf32> to vector<128x128xf32>
    %112 = arith.mulf %107, %111 : vector<128x128xf32>
    %113 = arith.truncf %112 : vector<128x128xf32> to vector<128x128xbf16>
    %cst_53 = arith.constant dense<0.000000e+00> : vector<128x8xf32>
    %114 = tpu.matmul %113, %100, %cst_53 {dimension_numbers = #tpu.dot_dimension_numbers<[1], [0], [0], [1], [0, 0, 1, 1], [], []>} : vector<128x128xbf16>, vector<128x8xbf16>, vector<128x8xf32> -> vector<128x8xf32>
    %c0_54 = arith.constant 0 : index
    %c16 = arith.constant 16 : index
    %115 = vector.load %arg15[%c0_54, %c16] : memref<128x32xf32, #tpu.memory_space<vmem>>, vector<128x8xf32>
    tpu.vector_store %arg15[%c0_54, %c16], %114 {strides = array<i32>} : memref<128x32xf32, #tpu.memory_space<vmem>>, vector<128x8xf32>,
    %116 = vector.extract_strided_slice %61 {offsets = [0, 24], sizes = [128, 8], strides = [1, 1]} : vector<128x32xbf16> to vector<128x8xbf16>
    %117 = vector.extract_strided_slice %30 {offsets = [0, 24], sizes = [128, 8], strides = [1, 1]} : vector<128x32xbf16> to vector<128x8xbf16>
    %118 = vector.extract_strided_slice %32 {offsets = [0, 24], sizes = [128, 8], strides = [1, 1]} : vector<128x32xbf16> to vector<128x8xbf16>
    %cst_55 = arith.constant dense<0.000000e+00> : vector<128x128xf32>
    %119 = tpu.matmul %116, %117, %cst_55 {dimension_numbers = #tpu.dot_dimension_numbers<[1], [1], [0], [0], [0, 0, 1, 0], [], []>} : vector<128x8xbf16>, vector<128x8xbf16>, vector<128x128xf32> -> vector<128x128xf32>
    %120 = arith.addf %119, %57 : vector<128x128xf32>
    %cst_56 = arith.constant dense<0xFF800000> : vector<128xf32>
    %121 = vector.multi_reduction <maximumf>, %120, %cst_56 [1] : vector<128x128xf32> to vector<128xf32>
    %122 = vector.shape_cast %121 : vector<128xf32> to vector<128x1xf32>
    %123 = vector.broadcast %122 : vector<128x1xf32> to vector<128x128xf32>
    %124 = arith.subf %120, %123 : vector<128x128xf32>
    %125 = math.exp %124 : vector<128x128xf32>
    %cst_57 = arith.constant dense<0.000000e+00> : vector<128xf32>
    %126 = vector.multi_reduction <add>, %125, %cst_57 [1] : vector<128x128xf32> to vector<128xf32>
    %127 = vector.shape_cast %126 : vector<128xf32> to vector<128x1xf32>
    %128 = tpu.reciprocal %127 {approx = true} : vector<128x1xf32> -> vector<128x1xf32>
    %129 = vector.broadcast %128 : vector<128x1xf32> to vector<128x128xf32>
    %130 = arith.mulf %125, %129 : vector<128x128xf32>
    %131 = arith.truncf %130 : vector<128x128xf32> to vector<128x128xbf16>
    %cst_58 = arith.constant dense<0.000000e+00> : vector<128x8xf32>
    %132 = tpu.matmul %131, %118, %cst_58 {dimension_numbers = #tpu.dot_dimension_numbers<[1], [0], [0], [1], [0, 0, 1, 1], [], []>} : vector<128x128xbf16>, vector<128x8xbf16>, vector<128x8xf32> -> vector<128x8xf32>
    %c0_59 = arith.constant 0 : index
    %c24 = arith.constant 24 : index
    %133 = vector.load %arg15[%c0_59, %c24] : memref<128x32xf32, #tpu.memory_space<vmem>>, vector<128x8xf32>
    tpu.vector_store %arg15[%c0_59, %c24], %132 {strides = array<i32>} : memref<128x32xf32, #tpu.memory_space<vmem>>, vector<128x8xf32>,
    %c0_60 = arith.constant 0 : index
    %c0_61 = arith.constant 0 : index
    %134 = vector.load %arg15[%c0_60, %c0_61] : memref<128x32xf32, #tpu.memory_space<vmem>>, vector<128x32xf32>
    %135 = arith.truncf %134 : vector<128x32xf32> to vector<128x32xbf16>
    %cst_62 = arith.constant dense<0.000000e+00> : vector<128x32xf32>
    %136 = tpu.matmul %135, %43, %cst_62 {dimension_numbers = #tpu.dot_dimension_numbers<[1], [0], [0], [1], [0, 0, 1, 1], [], []>} : vector<128x32xbf16>, vector<32x32xbf16>, vector<128x32xf32> -> vector<128x32xf32>
    %137 = arith.addf %25, %136 : vector<128x32xf32>
    %cst_63 = arith.constant dense<0.000000e+00> : vector<128xf32>
    %138 = vector.multi_reduction <add>, %137, %cst_63 [1] : vector<128x32xf32> to vector<128xf32>
    %139 = vector.shape_cast %138 : vector<128xf32> to vector<128x1xf32>
    %cst_64 = arith.constant 3.200000e+01 : f32
    %140 = vector.broadcast %cst_64 : f32 to vector<128x1xf32>
    %141 = arith.divf %139, %140 : vector<128x1xf32>
    %142 = vector.broadcast %141 : vector<128x1xf32> to vector<128x32xf32>
    %143 = arith.subf %137, %142 : vector<128x32xf32>
    %144 = arith.mulf %143, %143 : vector<128x32xf32>
    %cst_65 = arith.constant dense<0.000000e+00> : vector<128xf32>
    %145 = vector.multi_reduction <add>, %144, %cst_65 [1] : vector<128x32xf32> to vector<128xf32>
    %146 = vector.shape_cast %145 : vector<128xf32> to vector<128x1xf32>
    %cst_66 = arith.constant 3.200000e+01 : f32
    %147 = vector.broadcast %cst_66 : f32 to vector<128x1xf32>
    %148 = arith.divf %146, %147 : vector<128x1xf32>
    %149 = vector.broadcast %141 : vector<128x1xf32> to vector<128x32xf32>
    %150 = arith.subf %137, %149 : vector<128x32xf32>
    %cst_67 = arith.constant 9.99999974E-6 : f32
    %151 = vector.broadcast %cst_67 : f32 to vector<128x1xf32>
    %152 = arith.addf %148, %151 : vector<128x1xf32>
    %153 = math.rsqrt %152 : vector<128x1xf32>
    %154 = vector.broadcast %153 : vector<128x1xf32> to vector<128x32xf32>
    %155 = arith.mulf %150, %154 : vector<128x32xf32>
    %156 = vector.broadcast %44 : vector<1x32xf32> to vector<128x32xf32>
    %157 = arith.mulf %155, %156 : vector<128x32xf32>
    %158 = vector.broadcast %45 : vector<1x32xf32> to vector<128x32xf32>
    %159 = arith.addf %157, %158 : vector<128x32xf32>
    %160 = arith.truncf %159 : vector<128x32xf32> to vector<128x32xbf16>
    %cst_68 = arith.constant dense<0.000000e+00> : vector<128x64xf32>
    %161 = tpu.matmul %160, %46, %cst_68 {dimension_numbers = #tpu.dot_dimension_numbers<[1], [0], [0], [1], [0, 0, 1, 1], [], []>} : vector<128x32xbf16>, vector<32x64xbf16>, vector<128x64xf32> -> vector<128x64xf32>
    %162 = vector.broadcast %47 : vector<1x64xf32> to vector<128x64xf32>
    %163 = arith.addf %161, %162 : vector<128x64xf32>
    %cst_69 = arith.constant 5.000000e-01 : f32
    %164 = vector.broadcast %cst_69 : f32 to vector<128x64xf32>
    %165 = arith.mulf %164, %163 : vector<128x64xf32>
    %cst_70 = arith.constant 0.707106769 : f32
    %166 = vector.broadcast %cst_70 : f32 to vector<128x64xf32>
    %167 = arith.mulf %163, %166 : vector<128x64xf32>
    %cst_71 = arith.constant 0.000000e+00 : f32
    %168 = vector.broadcast %cst_71 : f32 to vector<128x64xf32>
    %169 = arith.cmpf oge, %167, %168 : vector<128x64xf32>
    %cst_72 = arith.constant 1.000000e+00 : f32
    %cst_73 = arith.constant -1.000000e+00 : f32
    %170 = vector.broadcast %cst_72 : f32 to vector<128x64xf32>
    %171 = vector.broadcast %cst_73 : f32 to vector<128x64xf32>
    %172 = arith.select %169, %170, %171 : vector<128x64xi1>, vector<128x64xf32>
    %173 = math.absf %167 : vector<128x64xf32>
    %cst_74 = arith.constant 0.327591091 : f32
    %174 = vector.broadcast %cst_74 : f32 to vector<128x64xf32>
    %175 = arith.mulf %174, %173 : vector<128x64xf32>
    %cst_75 = arith.constant 1.000000e+00 : f32
    %176 = vector.broadcast %cst_75 : f32 to vector<128x64xf32>
    %177 = arith.addf %176, %175 : vector<128x64xf32>
    %cst_76 = arith.constant 1.000000e+00 : f32
    %178 = vector.broadcast %cst_76 : f32 to vector<128x64xf32>
    %179 = arith.divf %178, %177 : vector<128x64xf32>
    %cst_77 = arith.constant 1.06140542 : f32
    %180 = vector.broadcast %cst_77 : f32 to vector<128x64xf32>
    %181 = arith.mulf %180, %179 : vector<128x64xf32>
    %cst_78 = arith.constant -1.45315206 : f32
    %182 = vector.broadcast %cst_78 : f32 to vector<128x64xf32>
    %183 = arith.addf %181, %182 : vector<128x64xf32>
    %184 = arith.mulf %183, %179 : vector<128x64xf32>
    %cst_79 = arith.constant 1.42141378 : f32
    %185 = vector.broadcast %cst_79 : f32 to vector<128x64xf32>
    %186 = arith.addf %184, %185 : vector<128x64xf32>
    %187 = arith.mulf %186, %179 : vector<128x64xf32>
    %cst_80 = arith.constant -0.284496725 : f32
    %188 = vector.broadcast %cst_80 : f32 to vector<128x64xf32>
    %189 = arith.addf %187, %188 : vector<128x64xf32>
    %190 = arith.mulf %189, %179 : vector<128x64xf32>
    %cst_81 = arith.constant 0.254829586 : f32
    %191 = vector.broadcast %cst_81 : f32 to vector<128x64xf32>
    %192 = arith.addf %190, %191 : vector<128x64xf32>
    %193 = arith.mulf %192, %179 : vector<128x64xf32>
    %cst_82 = arith.constant 0.000000e+00 : f32
    %194 = vector.broadcast %cst_82 : f32 to vector<128x64xf32>
    %195 = arith.subf %194, %173 : vector<128x64xf32>
    %196 = arith.mulf %195, %173 : vector<128x64xf32>
    %197 = math.exp %196 : vector<128x64xf32>
    %198 = arith.mulf %193, %197 : vector<128x64xf32>
    %cst_83 = arith.constant 1.000000e+00 : f32
    %199 = vector.broadcast %cst_83 : f32 to vector<128x64xf32>
    %200 = arith.subf %199, %198 : vector<128x64xf32>
    %201 = arith.mulf %172, %200 : vector<128x64xf32>
    %cst_84 = arith.constant 1.000000e+00 : f32
    %202 = vector.broadcast %cst_84 : f32 to vector<128x64xf32>
    %203 = arith.addf %202, %201 : vector<128x64xf32>
    %204 = arith.mulf %165, %203 : vector<128x64xf32>
    %205 = arith.truncf %204 : vector<128x64xf32> to vector<128x64xbf16>
    %cst_85 = arith.constant dense<0.000000e+00> : vector<128x32xf32>
    %206 = tpu.matmul %205, %48, %cst_85 {dimension_numbers = #tpu.dot_dimension_numbers<[1], [0], [0], [1], [0, 0, 1, 1], [], []>} : vector<128x64xbf16>, vector<64x32xbf16>, vector<128x32xf32> -> vector<128x32xf32>
    %207 = vector.broadcast %49 : vector<1x32xf32> to vector<128x32xf32>
    %208 = arith.addf %206, %207 : vector<128x32xf32>
    %209 = arith.addf %159, %208 : vector<128x32xf32>
    %c0_86 = arith.constant 0 : index
    %c0_87 = arith.constant 0 : index
    %c0_88 = arith.constant 0 : index
    %210 = vector.load %arg14[%c0_86, %c0_87, %c0_88] : memref<1x128x32xf32, #tpu.memory_space<vmem>>, vector<1x128x32xf32>
    %211 = vector.shape_cast %210 : vector<1x128x32xf32> to vector<128x32xf32>
    %212 = vector.shape_cast %209 : vector<128x32xf32> to vector<1x128x32xf32>
    tpu.vector_store %arg14[%c0_86, %c0_87, %c0_88], %212 {strides = array<i32>} : memref<1x128x32xf32, #tpu.memory_space<vmem>>, vector<1x128x32xf32>,
    return
  }
  func.func @transform_0(%arg0: i32) -> (i32, i32, i32) {
    %c0_i32 = arith.constant 0 : i32
    %c0_i32_0 = arith.constant 0 : i32
    %c0_i32_1 = arith.constant 0 : i32
    return %arg0, %c0_i32, %c0_i32_0 : i32, i32, i32
  }
  func.func @transform_1(%arg0: i32) -> (i32, i32, i32) {
    %c0_i32 = arith.constant 0 : i32
    %c0_i32_0 = arith.constant 0 : i32
    %c0_i32_1 = arith.constant 0 : i32
    return %arg0, %c0_i32, %c0_i32_0 : i32, i32, i32
  }
  func.func @transform_2(%arg0: i32) -> (i32, i32) {
    %c0_i32 = arith.constant 0 : i32
    %c0_i32_0 = arith.constant 0 : i32
    %c0_i32_1 = arith.constant 0 : i32
    return %c0_i32, %c0_i32_0 : i32, i32
  }
  func.func @transform_3(%arg0: i32) -> (i32, i32) {
    %c0_i32 = arith.constant 0 : i32
    %c0_i32_0 = arith.constant 0 : i32
    %c0_i32_1 = arith.constant 0 : i32
    return %c0_i32, %c0_i32_0 : i32, i32
  }
  func.func @transform_4(%arg0: i32) -> (i32, i32) {
    %c0_i32 = arith.constant 0 : i32
    %c0_i32_0 = arith.constant 0 : i32
    %c0_i32_1 = arith.constant 0 : i32
    return %c0_i32, %c0_i32_0 : i32, i32
  }
  func.func @transform_5(%arg0: i32) -> (i32, i32) {
    %c0_i32 = arith.constant 0 : i32
    %c0_i32_0 = arith.constant 0 : i32
    %c0_i32_1 = arith.constant 0 : i32
    return %c0_i32, %c0_i32_0 : i32, i32
  }
  func.func @transform_6(%arg0: i32) -> (i32, i32) {
    %c0_i32 = arith.constant 0 : i32
    %c0_i32_0 = arith.constant 0 : i32
    %c0_i32_1 = arith.constant 0 : i32
    return %c0_i32, %c0_i32_0 : i32, i32
  }
  func.func @transform_7(%arg0: i32) -> (i32, i32) {
    %c0_i32 = arith.constant 0 : i32
    %c0_i32_0 = arith.constant 0 : i32
    %c0_i32_1 = arith.constant 0 : i32
    return %c0_i32, %c0_i32_0 : i32, i32
  }
  func.func @transform_8(%arg0: i32) -> (i32, i32) {
    %c0_i32 = arith.constant 0 : i32
    %c0_i32_0 = arith.constant 0 : i32
    %c0_i32_1 = arith.constant 0 : i32
    return %c0_i32, %c0_i32_0 : i32, i32
  }
  func.func @transform_9(%arg0: i32) -> (i32, i32) {
    %c0_i32 = arith.constant 0 : i32
    %c0_i32_0 = arith.constant 0 : i32
    %c0_i32_1 = arith.constant 0 : i32
    return %c0_i32, %c0_i32_0 : i32, i32
  }
  func.func @transform_10(%arg0: i32) -> (i32, i32) {
    %c0_i32 = arith.constant 0 : i32
    %c0_i32_0 = arith.constant 0 : i32
    %c0_i32_1 = arith.constant 0 : i32
    return %c0_i32, %c0_i32_0 : i32, i32
  }
  func.func @transform_11(%arg0: i32) -> (i32, i32) {
    %c0_i32 = arith.constant 0 : i32
    %c0_i32_0 = arith.constant 0 : i32
    %c0_i32_1 = arith.constant 0 : i32
    return %c0_i32, %c0_i32_0 : i32, i32
  }
  func.func @transform_12(%arg0: i32) -> (i32, i32) {
    %c0_i32 = arith.constant 0 : i32
    %c0_i32_0 = arith.constant 0 : i32
    %c0_i32_1 = arith.constant 0 : i32
    return %c0_i32, %c0_i32_0 : i32, i32
  }
  func.func @transform_13(%arg0: i32) -> (i32, i32, i32) {
    %c0_i32 = arith.constant 0 : i32
    %c0_i32_0 = arith.constant 0 : i32
    %c0_i32_1 = arith.constant 0 : i32
    return %arg0, %c0_i32, %c0_i32_0 : i32, i32, i32
  }
}

</mosaic_0001>

<llo_original>
// kernel: tpu_custom_call.1
$region0: #{tpu_custom_call.1}
  #allocation0 [shape = 'u32[]', space=smem, size = 0x4, offset = 0x4, fixed_abs, tag = 'smem constant byte address 0x4 - core index']
  #allocation1 [shape = 'u32[72,128]{1,0:T(1,128)}', space=vmem, size = 0x9000, scoped, tag = 'internal scratch']
  #allocation2 [shape = 'f32[128,32]{1,0:T(8,128)}', space=vmem, size = 0x10000, scoped, tag = 'scratch operand']
  %s0 = inlined_call_operand.vmem [shape: f32[2,128,32], index: 0, kind: input, shape index: {}]
  %s1 = inlined_call_operand.vmem [shape: f32[2,1,128], index: 1, kind: input, shape index: {}]
  %s2 = inlined_call_operand.vmem [shape: f32[1,32], index: 2, kind: input, shape index: {}]
  %s3 = inlined_call_operand.vmem [shape: f32[1,32], index: 3, kind: input, shape index: {}]
  %s4 = inlined_call_operand.vmem [shape: bf16[32,32], index: 4, kind: input, shape index: {}]
  %s5 = inlined_call_operand.vmem [shape: bf16[32,64], index: 5, kind: input, shape index: {}]
  %s6 = inlined_call_operand.vmem [shape: bf16[32,32], index: 6, kind: input, shape index: {}]
  %s7 = inlined_call_operand.vmem [shape: f32[1,32], index: 7, kind: input, shape index: {}]
  %s8 = inlined_call_operand.vmem [shape: f32[1,32], index: 8, kind: input, shape index: {}]
  %s9 = inlined_call_operand.vmem [shape: bf16[32,64], index: 9, kind: input, shape index: {}]
  %s10 = inlined_call_operand.vmem [shape: f32[1,64], index: 10, kind: input, shape index: {}]
  %s11 = inlined_call_operand.vmem [shape: bf16[64,32], index: 11, kind: input, shape index: {}]
  %s12 = inlined_call_operand.vmem [shape: f32[1,32], index: 12, kind: input, shape index: {}]
  %s13 = inlined_call_operand.vmem [shape: f32[2,128,32], index: 13, kind: output, shape index: {}]
  %s14 = sld [smem:[#allocation0]]
  $region85: #{tpu_custom_call.1} parent=0
    _
  %s16 = ssub.s32 1, %s14
  %s17 = scalar_select 0, %s16, %s14
  loop: start=0, step=1, limit=4
  $region2: #{tpu_custom_call.1} parent=0 // loop_pre_header
    _
  $region3: #{tpu_custom_call.1} parent=0 // loop_header
    %s19 = sphi 0, %s23
    %p20 = scmp.ge.s32.totalorder %s19, 4
    %s29 = sphi 0, %s31
    %s32 = sphi 0, %s29
    %s33 = sphi 0, %s32
    %s49 = sphi 0, %s33
    %s55 = sphi 0, %s57
    %s58 = sphi 0, %s55
    %s59 = sphi 0, %s58
    %s75 = sphi 0, %s59
    %s79 = sphi 0, %s79
    %s81 = sphi 0, %s79
    %s82 = sphi 0, %s81
    %s96 = sphi 0, %s82
    %s100 = sphi 0, %s100
    %s102 = sphi 0, %s100
    %s103 = sphi 0, %s102
    %s117 = sphi 0, %s103
    %s121 = sphi 0, %s121
    %s123 = sphi 0, %s121
    %s124 = sphi 0, %s123
    %s138 = sphi 0, %s124
    %s142 = sphi 0, %s142
    %s144 = sphi 0, %s142
    %s145 = sphi 0, %s144
    %s159 = sphi 0, %s145
    %s163 = sphi 0, %s163
    %s165 = sphi 0, %s163
    %s166 = sphi 0, %s165
    %s180 = sphi 0, %s166
    %s184 = sphi 0, %s184
    %s186 = sphi 0, %s184
    %s187 = sphi 0, %s186
    %s201 = sphi 0, %s187
    %s205 = sphi 0, %s205
    %s207 = sphi 0, %s205
    %s208 = sphi 0, %s207
    %s222 = sphi 0, %s208
    %s226 = sphi 0, %s226
    %s228 = sphi 0, %s226
    %s229 = sphi 0, %s228
    %s243 = sphi 0, %s229
    %s247 = sphi 0, %s247
    %s249 = sphi 0, %s247
    %s250 = sphi 0, %s249
    %s264 = sphi 0, %s250
    %s268 = sphi 0, %s268
    %s270 = sphi 0, %s268
    %s271 = sphi 0, %s270
    %s285 = sphi 0, %s271
    %s289 = sphi 0, %s289
    %s291 = sphi 0, %s289
    %s292 = sphi 0, %s291
    %s306 = sphi 0, %s292
    %s312 = sphi 0, %s314
    %s315 = sphi 0, %s312
    %s316 = sphi 0, %s315
    %s332 = sphi 0, %s316
  $region4: #{tpu_custom_call.1} parent=0 // loop_header_branch
    %22 = sbr.rel (%p20) target = $region8
  $region5: #{tpu_custom_call.1} parent=0 // loop_body
    %s24 = ssub.s32 %s19, 1
    %s25 = ssub.s32 %s19, 2
    %s26 = sadd.s32 %s19, 1
    %s27 = ssub.s32 %s19, %s26
    %p28 = scmp.eq.s32.totalorder %s27, 0
    %s30 = sadd.s32 %s29, 1
    %s31 = scalar_select %p28, %s29, %s30
    %p34 = pneg %p28
    %p35 = scmp.eq.s32.totalorder %s19, 1
    %p36 = por %p34, %p35
    %p37 = scmp.ne.s32.totalorder %s29, %s32
    %p38 = scmp.eq.s32.totalorder %s19, 0
    %p39 = por %p37, %p38
    %p40 = scmp.ne.s32.totalorder %s29, %s32
    %p41 = scmp.eq.s32.totalorder %s24, 1
    %p42 = por %p40, %p41
    %p43 = scmp.ne.s32.totalorder %s32, %s33
    %p44 = scmp.eq.s32.totalorder %s24, 0
    %p45 = por %p43, %p44
    %p46 = scmp.ne.s32.totalorder %s32, %s33
    %p47 = scmp.eq.s32.totalorder %s25, 1
    %p48 = por %p46, %p47
    %p50 = scmp.ne.s32.totalorder %s33, %s49
    %p51 = scmp.eq.s32.totalorder %s25, 0
    %p52 = por %p50, %p51
    %s53 = ssub.s32 %s19, %s26
    %p54 = scmp.eq.s32.totalorder %s53, 0
    %s56 = sadd.s32 %s55, 1
    %s57 = scalar_select %p54, %s55, %s56
    %p60 = pneg %p54
    %p61 = scmp.eq.s32.totalorder %s19, 1
    %p62 = por %p60, %p61
    %p63 = scmp.ne.s32.totalorder %s55, %s58
    %p64 = scmp.eq.s32.totalorder %s19, 0
    %p65 = por %p63, %p64
    %p66 = scmp.ne.s32.totalorder %s55, %s58
    %p67 = scmp.eq.s32.totalorder %s24, 1
    %p68 = por %p66, %p67
    %p69 = scmp.ne.s32.totalorder %s58, %s59
    %p70 = scmp.eq.s32.totalorder %s24, 0
    %p71 = por %p69, %p70
    %p72 = scmp.ne.s32.totalorder %s58, %s59
    %p73 = scmp.eq.s32.totalorder %s25, 1
    %p74 = por %p72, %p73
    %p76 = scmp.ne.s32.totalorder %s59, %s75
    %p77 = scmp.eq.s32.totalorder %s25, 0
    %p78 = por %p76, %p77
    %s80 = sadd.s32 %s79, 1
    %p83 = scmp.eq.s32.totalorder %s19, 1
    %p84 = scmp.ne.s32.totalorder %s79, %s81
    %p85 = scmp.eq.s32.totalorder %s19, 0
    %p86 = por %p84, %p85
    %p87 = scmp.ne.s32.totalorder %s79, %s81
    %p88 = scmp.eq.s32.totalorder %s24, 1
    %p89 = por %p87, %p88
    %p90 = scmp.ne.s32.totalorder %s81, %s82
    %p91 = scmp.eq.s32.totalorder %s24, 0
    %p92 = por %p90, %p91
    %p93 = scmp.ne.s32.totalorder %s81, %s82
    %p94 = scmp.eq.s32.totalorder %s25, 1
    %p95 = por %p93, %p94
    %p97 = scmp.ne.s32.totalorder %s82, %s96
    %p98 = scmp.eq.s32.totalorder %s25, 0
    %p99 = por %p97, %p98
    %s101 = sadd.s32 %s100, 1
    %p104 = scmp.eq.s32.totalorder %s19, 1
    %p105 = scmp.ne.s32.totalorder %s100, %s102
    %p106 = scmp.eq.s32.totalorder %s19, 0
    %p107 = por %p105, %p106
    %p108 = scmp.ne.s32.totalorder %s100, %s102
    %p109 = scmp.eq.s32.totalorder %s24, 1
    %p110 = por %p108, %p109
    %p111 = scmp.ne.s32.totalorder %s102, %s103
    %p112 = scmp.eq.s32.totalorder %s24, 0
    %p113 = por %p111, %p112
    %p114 = scmp.ne.s32.totalorder %s102, %s103
    %p115 = scmp.eq.s32.totalorder %s25, 1
    %p116 = por %p114, %p115
    %p118 = scmp.ne.s32.totalorder %s103, %s117
    %p119 = scmp.eq.s32.totalorder %s25, 0
    %p120 = por %p118, %p119
    %s122 = sadd.s32 %s121, 1
    %p125 = scmp.eq.s32.totalorder %s19, 1
    %p126 = scmp.ne.s32.totalorder %s121, %s123
    %p127 = scmp.eq.s32.totalorder %s19, 0
    %p128 = por %p126, %p127
    %p129 = scmp.ne.s32.totalorder %s121, %s123
    %p130 = scmp.eq.s32.totalorder %s24, 1
    %p131 = por %p129, %p130
    %p132 = scmp.ne.s32.totalorder %s123, %s124
    %p133 = scmp.eq.s32.totalorder %s24, 0
    %p134 = por %p132, %p133
    %p135 = scmp.ne.s32.totalorder %s123, %s124
    %p136 = scmp.eq.s32.totalorder %s25, 1
    %p137 = por %p135, %p136
    %p139 = scmp.ne.s32.totalorder %s124, %s138
    %p140 = scmp.eq.s32.totalorder %s25, 0
    %p141 = por %p139, %p140
    %s143 = sadd.s32 %s142, 1
    %p146 = scmp.eq.s32.totalorder %s19, 1
    %p147 = scmp.ne.s32.totalorder %s142, %s144
    %p148 = scmp.eq.s32.totalorder %s19, 0
    %p149 = por %p147, %p148
    %p150 = scmp.ne.s32.totalorder %s142, %s144
    %p151 = scmp.eq.s32.totalorder %s24, 1
    %p152 = por %p150, %p151
    %p153 = scmp.ne.s32.totalorder %s144, %s145
    %p154 = scmp.eq.s32.totalorder %s24, 0
    %p155 = por %p153, %p154
    %p156 = scmp.ne.s32.totalorder %s144, %s145
    %p157 = scmp.eq.s32.totalorder %s25, 1
    %p158 = por %p156, %p157
    %p160 = scmp.ne.s32.totalorder %s145, %s159
    %p161 = scmp.eq.s32.totalorder %s25, 0
    %p162 = por %p160, %p161
    %s164 = sadd.s32 %s163, 1
    %p167 = scmp.eq.s32.totalorder %s19, 1
    %p168 = scmp.ne.s32.totalorder %s163, %s165
    %p169 = scmp.eq.s32.totalorder %s19, 0
    %p170 = por %p168, %p169
    %p171 = scmp.ne.s32.totalorder %s163, %s165
    %p172 = scmp.eq.s32.totalorder %s24, 1
    %p173 = por %p171, %p172
    %p174 = scmp.ne.s32.totalorder %s165, %s166
    %p175 = scmp.eq.s32.totalorder %s24, 0
    %p176 = por %p174, %p175
    %p177 = scmp.ne.s32.totalorder %s165, %s166
    %p178 = scmp.eq.s32.totalorder %s25, 1
    %p179 = por %p177, %p178
    %p181 = scmp.ne.s32.totalorder %s166, %s180
    %p182 = scmp.eq.s32.totalorder %s25, 0
    %p183 = por %p181, %p182
    %s185 = sadd.s32 %s184, 1
    %p188 = scmp.eq.s32.totalorder %s19, 1
    %p189 = scmp.ne.s32.totalorder %s184, %s186
    %p190 = scmp.eq.s32.totalorder %s19, 0
    %p191 = por %p189, %p190
    %p192 = scmp.ne.s32.totalorder %s184, %s186
    %p193 = scmp.eq.s32.totalorder %s24, 1
    %p194 = por %p192, %p193
    %p195 = scmp.ne.s32.totalorder %s186, %s187
    %p196 = scmp.eq.s32.totalorder %s24, 0
    %p197 = por %p195, %p196
    %p198 = scmp.ne.s32.totalorder %s186, %s187
    %p199 = scmp.eq.s32.totalorder %s25, 1
    %p200 = por %p198, %p199
    %p202 = scmp.ne.s32.totalorder %s187, %s201
    %p203 = scmp.eq.s32.totalorder %s25, 0
    %p204 = por %p202, %p203
    %s206 = sadd.s32 %s205, 1
    %p209 = scmp.eq.s32.totalorder %s19, 1
    %p210 = scmp.ne.s32.totalorder %s205, %s207
    %p211 = scmp.eq.s32.totalorder %s19, 0
    %p212 = por %p210, %p211
    %p213 = scmp.ne.s32.totalorder %s205, %s207
    %p214 = scmp.eq.s32.totalorder %s24, 1
    %p215 = por %p213, %p214
    %p216 = scmp.ne.s32.totalorder %s207, %s208
    %p217 = scmp.eq.s32.totalorder %s24, 0
    %p218 = por %p216, %p217
    %p219 = scmp.ne.s32.totalorder %s207, %s208
    %p220 = scmp.eq.s32.totalorder %s25, 1
    %p221 = por %p219, %p220
    %p223 = scmp.ne.s32.totalorder %s208, %s222
    %p224 = scmp.eq.s32.totalorder %s25, 0
    %p225 = por %p223, %p224
    %s227 = sadd.s32 %s226, 1
    %p230 = scmp.eq.s32.totalorder %s19, 1
    %p231 = scmp.ne.s32.totalorder %s226, %s228
    %p232 = scmp.eq.s32.totalorder %s19, 0
    %p233 = por %p231, %p232
    %p234 = scmp.ne.s32.totalorder %s226, %s228
    %p235 = scmp.eq.s32.totalorder %s24, 1
    %p236 = por %p234, %p235
    %p237 = scmp.ne.s32.totalorder %s228, %s229
    %p238 = scmp.eq.s32.totalorder %s24, 0
    %p239 = por %p237, %p238
    %p240 = scmp.ne.s32.totalorder %s228, %s229
    %p241 = scmp.eq.s32.totalorder %s25, 1
    %p242 = por %p240, %p241
    %p244 = scmp.ne.s32.totalorder %s229, %s243
    %p245 = scmp.eq.s32.totalorder %s25, 0
    %p246 = por %p244, %p245
    %s248 = sadd.s32 %s247, 1
    %p251 = scmp.eq.s32.totalorder %s19, 1
    %p252 = scmp.ne.s32.totalorder %s247, %s249
    %p253 = scmp.eq.s32.totalorder %s19, 0
    %p254 = por %p252, %p253
    %p255 = scmp.ne.s32.totalorder %s247, %s249
    %p256 = scmp.eq.s32.totalorder %s24, 1
    %p257 = por %p255, %p256
    %p258 = scmp.ne.s32.totalorder %s249, %s250
    %p259 = scmp.eq.s32.totalorder %s24, 0
    %p260 = por %p258, %p259
    %p261 = scmp.ne.s32.totalorder %s249, %s250
    %p262 = scmp.eq.s32.totalorder %s25, 1
    %p263 = por %p261, %p262
    %p265 = scmp.ne.s32.totalorder %s250, %s264
    %p266 = scmp.eq.s32.totalorder %s25, 0
    %p267 = por %p265, %p266
    %s269 = sadd.s32 %s268, 1
    %p272 = scmp.eq.s32.totalorder %s19, 1
    %p273 = scmp.ne.s32.totalorder %s268, %s270
    %p274 = scmp.eq.s32.totalorder %s19, 0
    %p275 = por %p273, %p274
    %p276 = scmp.ne.s32.totalorder %s268, %s270
    %p277 = scmp.eq.s32.totalorder %s24, 1
    %p278 = por %p276, %p277
    %p279 = scmp.ne.s32.totalorder %s270, %s271
    %p280 = scmp.eq.s32.totalorder %s24, 0
    %p281 = por %p279, %p280
    %p282 = scmp.ne.s32.totalorder %s270, %s271
    %p283 = scmp.eq.s32.totalorder %s25, 1
    %p284 = por %p282, %p283
    %p286 = scmp.ne.s32.totalorder %s271, %s285
    %p287 = scmp.eq.s32.totalorder %s25, 0
    %p288 = por %p286, %p287
    %s290 = sadd.s32 %s289, 1
    %p293 = scmp.eq.s32.totalorder %s19, 1
    %p294 = scmp.ne.s32.totalorder %s289, %s291
    %p295 = scmp.eq.s32.totalorder %s19, 0
    %p296 = por %p294, %p295
    %p297 = scmp.ne.s32.totalorder %s289, %s291
    %p298 = scmp.eq.s32.totalorder %s24, 1
    %p299 = por %p297, %p298
    %p300 = scmp.ne.s32.totalorder %s291, %s292
    %p301 = scmp.eq.s32.totalorder %s24, 0
    %p302 = por %p300, %p301
    %p303 = scmp.ne.s32.totalorder %s291, %s292
    %p304 = scmp.eq.s32.totalorder %s25, 1
    %p305 = por %p303, %p304
    %p307 = scmp.ne.s32.totalorder %s292, %s306
    %p308 = scmp.eq.s32.totalorder %s25, 0
    %p309 = por %p307, %p308
    %s310 = ssub.s32 %s19, %s26
    %p311 = scmp.eq.s32.totalorder %s310, 0
    %s313 = sadd.s32 %s312, 1
    %s314 = scalar_select %p311, %s312, %s313
    %p317 = pneg %p311
    %p318 = scmp.eq.s32.totalorder %s19, 1
    %p319 = por %p317, %p318
    %p320 = scmp.ne.s32.totalorder %s312, %s315
    %p321 = scmp.eq.s32.totalorder %s19, 0
    %p322 = por %p320, %p321
    %p323 = scmp.ne.s32.totalorder %s312, %s315
    %p324 = scmp.eq.s32.totalorder %s24, 1
    %p325 = por %p323, %p324
    %p326 = scmp.ne.s32.totalorder %s315, %s316
    %p327 = scmp.eq.s32.totalorder %s24, 0
    %p328 = por %p326, %p327
    %p329 = scmp.ne.s32.totalorder %s315, %s316
    %p330 = scmp.eq.s32.totalorder %s25, 1
    %p331 = por %p329, %p330
    %p333 = scmp.ne.s32.totalorder %s316, %s332
    %p334 = scmp.eq.s32.totalorder %s25, 0
    %p335 = por %p333, %p334
    %p336 = scmp.le.s32.totalorder 1, %s19
    %p337 = scmp.lt.s32.totalorder %s19, 3
    %p338 = pnand %p336, %p337
    %p339 = pneg %p338
    // Predicated region
    $region9: #{tpu_custom_call.1} parent=5 // pred_check
      _
    $region10: #{tpu_custom_call.1} parent=5 // pred_check_branch
      %341 = sbr.rel (%p338) target = $region12
    $region11: #{tpu_custom_call.1} parent=5 // pred_region
      %s342 = ssub.s32 %s19, 1
      // Predicated region
      $region13: #{tpu_custom_call.1} parent=11 // pred_check
        %p343 = pneg %p92
      $region14: #{tpu_custom_call.1} parent=11 // pred_check_branch
        %345 = sbr.rel (%p343) target = $region16
      $region15: #{tpu_custom_call.1} parent=11 // pred_region
        _
      $region16: #{tpu_custom_call.1} parent=11 // pred_fallthru
        _
      // Predicated region
      $region17: #{tpu_custom_call.1} parent=11 // pred_check
        %p346 = pneg %p113
      $region18: #{tpu_custom_call.1} parent=11 // pred_check_branch
        %348 = sbr.rel (%p346) target = $region20
      $region19: #{tpu_custom_call.1} parent=11 // pred_region
        _
      $region20: #{tpu_custom_call.1} parent=11 // pred_fallthru
        _
      // Predicated region
      $region21: #{tpu_custom_call.1} parent=11 // pred_check
        %p349 = pneg %p134
      $region22: #{tpu_custom_call.1} parent=11 // pred_check_branch
        %351 = sbr.rel (%p349) target = $region24
      $region23: #{tpu_custom_call.1} parent=11 // pred_region
        _
      $region24: #{tpu_custom_call.1} parent=11 // pred_fallthru
        _
      // Predicated region
      $region25: #{tpu_custom_call.1} parent=11 // pred_check
        %p352 = pneg %p155
      $region26: #{tpu_custom_call.1} parent=11 // pred_check_branch
        %354 = sbr.rel (%p352) target = $region28
      $region27: #{tpu_custom_call.1} parent=11 // pred_region
        _
      $region28: #{tpu_custom_call.1} parent=11 // pred_fallthru
        _
      // Predicated region
      $region29: #{tpu_custom_call.1} parent=11 // pred_check
        %p355 = pneg %p176
      $region30: #{tpu_custom_call.1} parent=11 // pred_check_branch
        %357 = sbr.rel (%p355) target = $region32
      $region31: #{tpu_custom_call.1} parent=11 // pred_region
        _
      $region32: #{tpu_custom_call.1} parent=11 // pred_fallthru
        _
      // Predicated region
      $region33: #{tpu_custom_call.1} parent=11 // pred_check
        %p358 = pneg %p197
      $region34: #{tpu_custom_call.1} parent=11 // pred_check_branch
        %360 = sbr.rel (%p358) target = $region36
      $region35: #{tpu_custom_call.1} parent=11 // pred_region
        _
      $region36: #{tpu_custom_call.1} parent=11 // pred_fallthru
        _
      // Predicated region
      $region37: #{tpu_custom_call.1} parent=11 // pred_check
        %p361 = pneg %p218
      $region38: #{tpu_custom_call.1} parent=11 // pred_check_branch
        %363 = sbr.rel (%p361) target = $region40
      $region39: #{tpu_custom_call.1} parent=11 // pred_region
        _
      $region40: #{tpu_custom_call.1} parent=11 // pred_fallthru
        _
      // Predicated region
      $region41: #{tpu_custom_call.1} parent=11 // pred_check
        %p364 = pneg %p239
      $region42: #{tpu_custom_call.1} parent=11 // pred_check_branch
        %366 = sbr.rel (%p364) target = $region44
      $region43: #{tpu_custom_call.1} parent=11 // pred_region
        _
      $region44: #{tpu_custom_call.1} parent=11 // pred_fallthru
        _
      // Predicated region
      $region45: #{tpu_custom_call.1} parent=11 // pred_check
        %p367 = pneg %p260
      $region46: #{tpu_custom_call.1} parent=11 // pred_check_branch
        %369 = sbr.rel (%p367) target = $region48
      $region47: #{tpu_custom_call.1} parent=11 // pred_region
        _
      $region48: #{tpu_custom_call.1} parent=11 // pred_fallthru
        _
      // Predicated region
      $region49: #{tpu_custom_call.1} parent=11 // pred_check
        %p370 = pneg %p281
      $region50: #{tpu_custom_call.1} parent=11 // pred_check_branch
        %372 = sbr.rel (%p370) target = $region52
      $region51: #{tpu_custom_call.1} parent=11 // pred_region
        _
      $region52: #{tpu_custom_call.1} parent=11 // pred_fallthru
        _
      // Predicated region
      $region53: #{tpu_custom_call.1} parent=11 // pred_check
        %p373 = pneg %p302
      $region54: #{tpu_custom_call.1} parent=11 // pred_check_branch
        %375 = sbr.rel (%p373) target = $region56
      $region55: #{tpu_custom_call.1} parent=11 // pred_region
        _
      $region56: #{tpu_custom_call.1} parent=11 // pred_fallthru
        _
    $region12: #{tpu_custom_call.1} parent=5 // pred_fallthru
      _
    %p376 = scmp.lt.s32.totalorder %s19, 2
    // Predicated region
    $region57: #{tpu_custom_call.1} parent=5 // pred_check
      %p377 = pneg %p376
    $region58: #{tpu_custom_call.1} parent=5 // pred_check_branch
      %379 = sbr.rel (%p377) target = $region60
    $region59: #{tpu_custom_call.1} parent=5 // pred_region
      // Predicated region
      $region61: #{tpu_custom_call.1} parent=59 // pred_check
        %p380 = pneg %p39
      $region62: #{tpu_custom_call.1} parent=59 // pred_check_branch
        %382 = sbr.rel (%p380) target = $region64
      $region63: #{tpu_custom_call.1} parent=59 // pred_region
        %p383 = scmp.lt.s32.totalorder %s19, 1
        %s384 = scalar_select %p383, %s19, 1
        %s385 = smul.addr %s384, 16
        %s386 = smul.addr %s385, 8
        %s387 = scalar_lea.vmem %s0, %s386
      $region64: #{tpu_custom_call.1} parent=59 // pred_fallthru
        _
      // Predicated region
      $region65: #{tpu_custom_call.1} parent=59 // pred_check
        %p388 = pneg %p65
      $region66: #{tpu_custom_call.1} parent=59 // pred_check_branch
        %390 = sbr.rel (%p388) target = $region68
      $region67: #{tpu_custom_call.1} parent=59 // pred_region
        %p391 = scmp.lt.s32.totalorder %s19, 1
        %s392 = scalar_select %p391, %s19, 1
        %s393 = scalar_lea.vmem %s1, %s392
      $region68: #{tpu_custom_call.1} parent=59 // pred_fallthru
        _
    $region60: #{tpu_custom_call.1} parent=5 // pred_fallthru
      _
    %p394 = scmp.le.s32.totalorder 1, %s19
    %p395 = scmp.lt.s32.totalorder %s19, 3
    %p396 = pnand %p394, %p395
    %p397 = pneg %p396
    // Predicated region
    $region69: #{tpu_custom_call.1} parent=5 // pred_check
      _
    $region70: #{tpu_custom_call.1} parent=5 // pred_check_branch
      %399 = sbr.rel (%p396) target = $region72
    $region71: #{tpu_custom_call.1} parent=5 // pred_region
      %s400 = ssub.s32 %s19, 1
      %p401 = scmp.lt.s32.totalorder %s24, 1
      %s402 = scalar_select %p401, %s24, 1
      %s403 = smul.addr %s402, 16
      %s404 = smul.addr %s403, 8
      %s405 = scalar_lea.vmem %s0, %s404
      %p406 = pneg %p45
      %p407 = pneg %p42
      %p408 = scmp.lt.s32.totalorder %s24, 1
      %s409 = scalar_select %p408, %s24, 1
      %s410 = scalar_lea.vmem %s1, %s409
      %p411 = pneg %p71
      %p412 = pneg %p68
      %p413 = pneg %p92
      %p414 = pneg %p89
      %p415 = pneg %p113
      %p416 = pneg %p110
      %p417 = pneg %p134
      %p418 = pneg %p131
      %p419 = pneg %p155
      %p420 = pneg %p152
      %p421 = pneg %p176
      %p422 = pneg %p173
      %p423 = pneg %p197
      %p424 = pneg %p194
      %p425 = pneg %p218
      %p426 = pneg %p215
      %p427 = pneg %p239
      %p428 = pneg %p236
      %p429 = pneg %p260
      %p430 = pneg %p257
      %p431 = pneg %p281
      %p432 = pneg %p278
      %p433 = pneg %p302
      %p434 = pneg %p299
      %p435 = pneg %p328
      %p436 = pneg %p325
      %p437 = scmp.lt.s32.totalorder %s24, 1
      %s438 = scalar_select %p437, %s24, 1
      %s439 = smul.addr %s438, 16
      %s440 = smul.addr %s439, 8
      %s441 = scalar_lea.vmem %s13, %s440
      %p442 = scmp.lt.s32.totalorder %s24, 1
      %s443 = scalar_select %p442, %s24, 1
      %s444 = smul.addr %s443, 16
      %s445 = smul.addr %s444, 8
      %s446 = scalar_lea.vmem %s0, %s445
      %p447 = scmp.lt.s32.totalorder %s24, 1
      %s448 = scalar_select %p447, %s24, 1
      %s449 = scalar_lea.vmem %s1, %s448
      %p450 = scmp.lt.s32.totalorder %s24, 1
      %s451 = scalar_select %p450, %s24, 1
      %s452 = smul.addr %s451, 16
      %s453 = smul.addr %s452, 8
      %s454 = scalar_lea.vmem %s13, %s453
      %v456 = vld [vmem:[%s446] sm:$0xff]
      %v457 = vld [vmem:[%s446 + $0x8] sm:$0xff]
      %v458 = vld [vmem:[%s446 + $0x10] sm:$0xff]
      %v459 = vld [vmem:[%s446 + $0x18] sm:$0xff]
      %v460 = vld [vmem:[%s446 + $0x20] sm:$0xff]
      %v461 = vld [vmem:[%s446 + $0x28] sm:$0xff]
      %v462 = vld [vmem:[%s446 + $0x30] sm:$0xff]
      %v463 = vld [vmem:[%s446 + $0x38] sm:$0xff]
      %v464 = vld [vmem:[%s446 + $0x40] sm:$0xff]
      %v465 = vld [vmem:[%s446 + $0x48] sm:$0xff]
      %v466 = vld [vmem:[%s446 + $0x50] sm:$0xff]
      %v467 = vld [vmem:[%s446 + $0x58] sm:$0xff]
      %v468 = vld [vmem:[%s446 + $0x60] sm:$0xff]
      %v469 = vld [vmem:[%s446 + $0x68] sm:$0xff]
      %v470 = vld [vmem:[%s446 + $0x70] sm:$0xff]
      %v471 = vld [vmem:[%s446 + $0x78] sm:$0xff]
      %v472 = vld [vmem:[%s2] sm:$0x1]
      %v473 = vld [vmem:[%s3] sm:$0x1]
      %vm474 = vcmask 261120
      %v475 = vsel %vm474, %v456, 0.0
      %476 = vadd.xlane.f32.xlu0 %v475
      %v477 = vpop.xlane.xlu0 %476
      %v478 = vsel %vm474, %v457, 0.0
      %479 = vadd.xlane.f32.xlu0 %v478
      %v480 = vpop.xlane.xlu0 %479
      %v481 = vsel %vm474, %v458, 0.0
      %482 = vadd.xlane.f32.xlu0 %v481
      %v483 = vpop.xlane.xlu0 %482
      %v484 = vsel %vm474, %v459, 0.0
      %485 = vadd.xlane.f32.xlu0 %v484
      %v486 = vpop.xlane.xlu0 %485
      %v487 = vsel %vm474, %v460, 0.0
      %488 = vadd.xlane.f32.xlu0 %v487
      %v489 = vpop.xlane.xlu0 %488
      %v490 = vsel %vm474, %v461, 0.0
      %491 = vadd.xlane.f32.xlu0 %v490
      %v492 = vpop.xlane.xlu0 %491
      %v493 = vsel %vm474, %v462, 0.0
      %494 = vadd.xlane.f32.xlu0 %v493
      %v495 = vpop.xlane.xlu0 %494
      %v496 = vsel %vm474, %v463, 0.0
      %497 = vadd.xlane.f32.xlu0 %v496
      %v498 = vpop.xlane.xlu0 %497
      %v499 = vsel %vm474, %v464, 0.0
      %500 = vadd.xlane.f32.xlu0 %v499
      %v501 = vpop.xlane.xlu0 %500
      %v502 = vsel %vm474, %v465, 0.0
      %503 = vadd.xlane.f32.xlu0 %v502
      %v504 = vpop.xlane.xlu0 %503
      %v505 = vsel %vm474, %v466, 0.0
      %506 = vadd.xlane.f32.xlu0 %v505
      %v507 = vpop.xlane.xlu0 %506
      %v508 = vsel %vm474, %v467, 0.0
      %509 = vadd.xlane.f32.xlu0 %v508
      %v510 = vpop.xlane.xlu0 %509
      %v511 = vsel %vm474, %v468, 0.0
      %512 = vadd.xlane.f32.xlu0 %v511
      %v513 = vpop.xlane.xlu0 %512
      %v514 = vsel %vm474, %v469, 0.0
      %515 = vadd.xlane.f32.xlu0 %v514
      %v516 = vpop.xlane.xlu0 %515
      %v517 = vsel %vm474, %v470, 0.0
      %518 = vadd.xlane.f32.xlu0 %v517
      %v519 = vpop.xlane.xlu0 %518
      %v520 = vsel %vm474, %v471, 0.0
      %521 = vadd.xlane.f32.xlu0 %v520
      %v522 = vpop.xlane.xlu0 %521
      %v523 = vrcp.pop 32.0
      %v524 = vmul.f32 32.0, %v523
      %v525 = vsub.f32 1.0, %v524
      %v526 = vmul.f32 %v523, %v525
      %v527 = vadd.f32 %v523, %v526
      %vm528 = vweird.f32 %v523
      %v529 = vsel %vm528, %v523, %v527
      %v530 = vmul.f32 %v477, %v529
      %v531 = vmul.f32 %v480, %v529
      %v532 = vmul.f32 %v483, %v529
      %v533 = vmul.f32 %v486, %v529
      %v534 = vmul.f32 %v489, %v529
      %v535 = vmul.f32 %v492, %v529
      %v536 = vmul.f32 %v495, %v529
      %v537 = vmul.f32 %v498, %v529
      %v538 = vmul.f32 %v501, %v529
      %v539 = vmul.f32 %v504, %v529
      %v540 = vmul.f32 %v507, %v529
      %v541 = vmul.f32 %v510, %v529
      %v542 = vmul.f32 %v513, %v529
      %v543 = vmul.f32 %v516, %v529
      %v544 = vmul.f32 %v519, %v529
      %v545 = vmul.f32 %v522, %v529
      %v546 = vsub.f32 %v456, %v530
      %v547 = vsub.f32 %v457, %v531
      %v548 = vsub.f32 %v458, %v532
      %v549 = vsub.f32 %v459, %v533
      %v550 = vsub.f32 %v460, %v534
      %v551 = vsub.f32 %v461, %v535
      %v552 = vsub.f32 %v462, %v536
      %v553 = vsub.f32 %v463, %v537
      %v554 = vsub.f32 %v464, %v538
      %v555 = vsub.f32 %v465, %v539
      %v556 = vsub.f32 %v466, %v540
      %v557 = vsub.f32 %v467, %v541
      %v558 = vsub.f32 %v468, %v542
      %v559 = vsub.f32 %v469, %v543
      %v560 = vsub.f32 %v470, %v544
      %v561 = vsub.f32 %v471, %v545
      %v562 = vmul.f32 %v546, %v546
      %v563 = vmul.f32 %v547, %v547
      %v564 = vmul.f32 %v548, %v548
      %v565 = vmul.f32 %v549, %v549
      %v566 = vmul.f32 %v550, %v550
      %v567 = vmul.f32 %v551, %v551
      %v568 = vmul.f32 %v552, %v552
      %v569 = vmul.f32 %v553, %v553
      %v570 = vmul.f32 %v554, %v554
      %v571 = vmul.f32 %v555, %v555
      %v572 = vmul.f32 %v556, %v556
      %v573 = vmul.f32 %v557, %v557
      %v574 = vmul.f32 %v558, %v558
      %v575 = vmul.f32 %v559, %v559
      %v576 = vmul.f32 %v560, %v560
      %v577 = vmul.f32 %v561, %v561
      %v578 = vsel %vm474, %v562, 0.0
      %579 = vadd.xlane.f32.xlu0 %v578
      %v580 = vpop.xlane.xlu0 %579
      %v581 = vsel %vm474, %v563, 0.0
      %582 = vadd.xlane.f32.xlu0 %v581
      %v583 = vpop.xlane.xlu0 %582
      %v584 = vsel %vm474, %v564, 0.0
      %585 = vadd.xlane.f32.xlu0 %v584
      %v586 = vpop.xlane.xlu0 %585
      %v587 = vsel %vm474, %v565, 0.0
      %588 = vadd.xlane.f32.xlu0 %v587
      %v589 = vpop.xlane.xlu0 %588
      %v590 = vsel %vm474, %v566, 0.0
      %591 = vadd.xlane.f32.xlu0 %v590
      %v592 = vpop.xlane.xlu0 %591
      %v593 = vsel %vm474, %v567, 0.0
      %594 = vadd.xlane.f32.xlu0 %v593
      %v595 = vpop.xlane.xlu0 %594
      %v596 = vsel %vm474, %v568, 0.0
      %597 = vadd.xlane.f32.xlu0 %v596
      %v598 = vpop.xlane.xlu0 %597
      %v599 = vsel %vm474, %v569, 0.0
      %600 = vadd.xlane.f32.xlu0 %v599
      %v601 = vpop.xlane.xlu0 %600
      %v602 = vsel %vm474, %v570, 0.0
      %603 = vadd.xlane.f32.xlu0 %v602
      %v604 = vpop.xlane.xlu0 %603
      %v605 = vsel %vm474, %v571, 0.0
      %606 = vadd.xlane.f32.xlu0 %v605
      %v607 = vpop.xlane.xlu0 %606
      %v608 = vsel %vm474, %v572, 0.0
      %609 = vadd.xlane.f32.xlu0 %v608
      %v610 = vpop.xlane.xlu0 %609
      %v611 = vsel %vm474, %v573, 0.0
      %612 = vadd.xlane.f32.xlu0 %v611
      %v613 = vpop.xlane.xlu0 %612
      %v614 = vsel %vm474, %v574, 0.0
      %615 = vadd.xlane.f32.xlu0 %v614
      %v616 = vpop.xlane.xlu0 %615
      %v617 = vsel %vm474, %v575, 0.0
      %618 = vadd.xlane.f32.xlu0 %v617
      %v619 = vpop.xlane.xlu0 %618
      %v620 = vsel %vm474, %v576, 0.0
      %621 = vadd.xlane.f32.xlu0 %v620
      %v622 = vpop.xlane.xlu0 %621
      %v623 = vsel %vm474, %v577, 0.0
      %624 = vadd.xlane.f32.xlu0 %v623
      %v625 = vpop.xlane.xlu0 %624
      %v626 = vmul.f32 %v580, %v529
      %v627 = vmul.f32 %v583, %v529
      %v628 = vmul.f32 %v586, %v529
      %v629 = vmul.f32 %v589, %v529
      %v630 = vmul.f32 %v592, %v529
      %v631 = vmul.f32 %v595, %v529
      %v632 = vmul.f32 %v598, %v529
      %v633 = vmul.f32 %v601, %v529
      %v634 = vmul.f32 %v604, %v529
      %v635 = vmul.f32 %v607, %v529
      %v636 = vmul.f32 %v610, %v529
      %v637 = vmul.f32 %v613, %v529
      %v638 = vmul.f32 %v616, %v529
      %v639 = vmul.f32 %v619, %v529
      %v640 = vmul.f32 %v622, %v529
      %v641 = vmul.f32 %v625, %v529
      %v642 = vadd.f32 %v626, 1e-05
      %v643 = vadd.f32 %v627, 1e-05
      %v644 = vadd.f32 %v628, 1e-05
      %v645 = vadd.f32 %v629, 1e-05
      %v646 = vadd.f32 %v630, 1e-05
      %v647 = vadd.f32 %v631, 1e-05
      %v648 = vadd.f32 %v632, 1e-05
      %v649 = vadd.f32 %v633, 1e-05
      %v650 = vadd.f32 %v634, 1e-05
      %v651 = vadd.f32 %v635, 1e-05
      %v652 = vadd.f32 %v636, 1e-05
      %v653 = vadd.f32 %v637, 1e-05
      %v654 = vadd.f32 %v638, 1e-05
      %v655 = vadd.f32 %v639, 1e-05
      %v656 = vadd.f32 %v640, 1e-05
      %v657 = vadd.f32 %v641, 1e-05
      %v658 = vrsqrt.pop %v642
      %v659 = vmul.f32 %v658, %v642
      %v660 = vmul.f32 %v659, %v658
      %v661 = vmul.f32 0.5, %v660
      %v662 = vsub.f32 1.5, %v661
      %v663 = vmul.f32 %v658, %v662
      %vm664 = vweird.f32 %v642
      %vm665 = vweird.f32 %v658
      %vm666 = vmor %vm664, %vm665
      %v667 = vsel %vm666, %v658, %v663
      %v668 = vrsqrt.pop %v643
      %v669 = vmul.f32 %v668, %v643
      %v670 = vmul.f32 %v669, %v668
      %v671 = vmul.f32 0.5, %v670
      %v672 = vsub.f32 1.5, %v671
      %v673 = vmul.f32 %v668, %v672
      %vm674 = vweird.f32 %v643
      %vm675 = vweird.f32 %v668
      %vm676 = vmor %vm674, %vm675
      %v677 = vsel %vm676, %v668, %v673
      %v678 = vrsqrt.pop %v644
      %v679 = vmul.f32 %v678, %v644
      %v680 = vmul.f32 %v679, %v678
      %v681 = vmul.f32 0.5, %v680
      %v682 = vsub.f32 1.5, %v681
      %v683 = vmul.f32 %v678, %v682
      %vm684 = vweird.f32 %v644
      %vm685 = vweird.f32 %v678
      %vm686 = vmor %vm684, %vm685
      %v687 = vsel %vm686, %v678, %v683
      %v688 = vrsqrt.pop %v645
      %v689 = vmul.f32 %v688, %v645
      %v690 = vmul.f32 %v689, %v688
      %v691 = vmul.f32 0.5, %v690
      %v692 = vsub.f32 1.5, %v691
      %v693 = vmul.f32 %v688, %v692
      %vm694 = vweird.f32 %v645
      %vm695 = vweird.f32 %v688
      %vm696 = vmor %vm694, %vm695
      %v697 = vsel %vm696, %v688, %v693
      %v698 = vrsqrt.pop %v646
      %v699 = vmul.f32 %v698, %v646
      %v700 = vmul.f32 %v699, %v698
      %v701 = vmul.f32 0.5, %v700
      %v702 = vsub.f32 1.5, %v701
      %v703 = vmul.f32 %v698, %v702
      %vm704 = vweird.f32 %v646
      %vm705 = vweird.f32 %v698
      %vm706 = vmor %vm704, %vm705
      %v707 = vsel %vm706, %v698, %v703
      %v708 = vrsqrt.pop %v647
      %v709 = vmul.f32 %v708, %v647
      %v710 = vmul.f32 %v709, %v708
      %v711 = vmul.f32 0.5, %v710
      %v712 = vsub.f32 1.5, %v711
      %v713 = vmul.f32 %v708, %v712
      %vm714 = vweird.f32 %v647
      %vm715 = vweird.f32 %v708
      %vm716 = vmor %vm714, %vm715
      %v717 = vsel %vm716, %v708, %v713
      %v718 = vrsqrt.pop %v648
      %v719 = vmul.f32 %v718, %v648
      %v720 = vmul.f32 %v719, %v718
      %v721 = vmul.f32 0.5, %v720
      %v722 = vsub.f32 1.5, %v721
      %v723 = vmul.f32 %v718, %v722
      %vm724 = vweird.f32 %v648
      %vm725 = vweird.f32 %v718
      %vm726 = vmor %vm724, %vm725
      %v727 = vsel %vm726, %v718, %v723
      %v728 = vrsqrt.pop %v649
      %v729 = vmul.f32 %v728, %v649
      %v730 = vmul.f32 %v729, %v728
      %v731 = vmul.f32 0.5, %v730
      %v732 = vsub.f32 1.5, %v731
      %v733 = vmul.f32 %v728, %v732
      %vm734 = vweird.f32 %v649
      %vm735 = vweird.f32 %v728
      %vm736 = vmor %vm734, %vm735
      %v737 = vsel %vm736, %v728, %v733
      %v738 = vrsqrt.pop %v650
      %v739 = vmul.f32 %v738, %v650
      %v740 = vmul.f32 %v739, %v738
      %v741 = vmul.f32 0.5, %v740
      %v742 = vsub.f32 1.5, %v741
      %v743 = vmul.f32 %v738, %v742
      %vm744 = vweird.f32 %v650
      %vm745 = vweird.f32 %v738
      %vm746 = vmor %vm744, %vm745
      %v747 = vsel %vm746, %v738, %v743
      %v748 = vrsqrt.pop %v651
      %v749 = vmul.f32 %v748, %v651
      %v750 = vmul.f32 %v749, %v748
      %v751 = vmul.f32 0.5, %v750
      %v752 = vsub.f32 1.5, %v751
      %v753 = vmul.f32 %v748, %v752
      %vm754 = vweird.f32 %v651
      %vm755 = vweird.f32 %v748
      %vm756 = vmor %vm754, %vm755
      %v757 = vsel %vm756, %v748, %v753
      %v758 = vrsqrt.pop %v652
      %v759 = vmul.f32 %v758, %v652
      %v760 = vmul.f32 %v759, %v758
      %v761 = vmul.f32 0.5, %v760
      %v762 = vsub.f32 1.5, %v761
      %v763 = vmul.f32 %v758, %v762
      %vm764 = vweird.f32 %v652
      %vm765 = vweird.f32 %v758
      %vm766 = vmor %vm764, %vm765
      %v767 = vsel %vm766, %v758, %v763
      %v768 = vrsqrt.pop %v653
      %v769 = vmul.f32 %v768, %v653
      %v770 = vmul.f32 %v769, %v768
      %v771 = vmul.f32 0.5, %v770
      %v772 = vsub.f32 1.5, %v771
      %v773 = vmul.f32 %v768, %v772
      %vm774 = vweird.f32 %v653
      %vm775 = vweird.f32 %v768
      %vm776 = vmor %vm774, %vm775
      %v777 = vsel %vm776, %v768, %v773
      %v778 = vrsqrt.pop %v654
      %v779 = vmul.f32 %v778, %v654
      %v780 = vmul.f32 %v779, %v778
      %v781 = vmul.f32 0.5, %v780
      %v782 = vsub.f32 1.5, %v781
      %v783 = vmul.f32 %v778, %v782
      %vm784 = vweird.f32 %v654
      %vm785 = vweird.f32 %v778
      %vm786 = vmor %vm784, %vm785
      %v787 = vsel %vm786, %v778, %v783
      %v788 = vrsqrt.pop %v655
      %v789 = vmul.f32 %v788, %v655
      %v790 = vmul.f32 %v789, %v788
      %v791 = vmul.f32 0.5, %v790
      %v792 = vsub.f32 1.5, %v791
      %v793 = vmul.f32 %v788, %v792
      %vm794 = vweird.f32 %v655
      %vm795 = vweird.f32 %v788
      %vm796 = vmor %vm794, %vm795
      %v797 = vsel %vm796, %v788, %v793
      %v798 = vrsqrt.pop %v656
      %v799 = vmul.f32 %v798, %v656
      %v800 = vmul.f32 %v799, %v798
      %v801 = vmul.f32 0.5, %v800
      %v802 = vsub.f32 1.5, %v801
      %v803 = vmul.f32 %v798, %v802
      %vm804 = vweird.f32 %v656
      %vm805 = vweird.f32 %v798
      %vm806 = vmor %vm804, %vm805
      %v807 = vsel %vm806, %v798, %v803
      %v808 = vrsqrt.pop %v657
      %v809 = vmul.f32 %v808, %v657
      %v810 = vmul.f32 %v809, %v808
      %v811 = vmul.f32 0.5, %v810
      %v812 = vsub.f32 1.5, %v811
      %v813 = vmul.f32 %v808, %v812
      %vm814 = vweird.f32 %v657
      %vm815 = vweird.f32 %v808
      %vm816 = vmor %vm814, %vm815
      %v817 = vsel %vm816, %v808, %v813
      %v818 = vmul.f32 %v546, %v667
      %v819 = vmul.f32 %v547, %v677
      %v820 = vmul.f32 %v548, %v687
      %v821 = vmul.f32 %v549, %v697
      %v822 = vmul.f32 %v550, %v707
      %v823 = vmul.f32 %v551, %v717
      %v824 = vmul.f32 %v552, %v727
      %v825 = vmul.f32 %v553, %v737
      %v826 = vmul.f32 %v554, %v747
      %v827 = vmul.f32 %v555, %v757
      %v828 = vmul.f32 %v556, %v767
      %v829 = vmul.f32 %v557, %v777
      %v830 = vmul.f32 %v558, %v787
      %v831 = vmul.f32 %v559, %v797
      %v832 = vmul.f32 %v560, %v807
      %v833 = vmul.f32 %v561, %v817
      %v835 = vperm.slane %v472, 0
      %v837 = vmul.f32 %v818, %v835
      %v838 = vmul.f32 %v819, %v835
      %v839 = vmul.f32 %v820, %v835
      %v840 = vmul.f32 %v821, %v835
      %v841 = vmul.f32 %v822, %v835
      %v842 = vmul.f32 %v823, %v835
      %v843 = vmul.f32 %v824, %v835
      %v844 = vmul.f32 %v825, %v835
      %v845 = vmul.f32 %v826, %v835
      %v846 = vmul.f32 %v827, %v835
      %v847 = vmul.f32 %v828, %v835
      %v848 = vmul.f32 %v829, %v835
      %v849 = vmul.f32 %v830, %v835
      %v850 = vmul.f32 %v831, %v835
      %v851 = vmul.f32 %v832, %v835
      %v852 = vmul.f32 %v833, %v835
      %v854 = vperm.slane %v473, 0
      %v856 = vadd.f32 %v837, %v854
      %v857 = vadd.f32 %v838, %v854
      %v858 = vadd.f32 %v839, %v854
      %v859 = vadd.f32 %v840, %v854
      %v860 = vadd.f32 %v841, %v854
      %v861 = vadd.f32 %v842, %v854
      %v862 = vadd.f32 %v843, %v854
      %v863 = vadd.f32 %v844, %v854
      %v864 = vadd.f32 %v845, %v854
      %v865 = vadd.f32 %v846, %v854
      %v866 = vadd.f32 %v847, %v854
      %v867 = vadd.f32 %v848, %v854
      %v868 = vadd.f32 %v849, %v854
      %v869 = vadd.f32 %v850, %v854
      %v870 = vadd.f32 %v851, %v854
      %v871 = vadd.f32 %v852, %v854
      %v872 = vpack.c.bf16 %v857, %v856
      %v873 = vpack.c.bf16 %v859, %v858
      %v874 = vpack.c.bf16 %v861, %v860
      %v875 = vpack.c.bf16 %v863, %v862
      %v876 = vpack.c.bf16 %v865, %v864
      %v877 = vpack.c.bf16 %v867, %v866
      %v878 = vpack.c.bf16 %v869, %v868
      %v879 = vpack.c.bf16 %v871, %v870
      %v880 = vld [vmem:[%s5] sm:$0xf]
      %v881 = vld [vmem:[%s5 + $0x4] sm:$0xf]
      %v882 = vld [vmem:[%s5 + $0x8] sm:$0xf]
      %v883 = vld [vmem:[%s5 + $0xc] sm:$0xf]
      %v888 = vunpack.c.l.b16 %v880
      %v889 = vunpack.c.l.b16 %v881
      %v890 = vunpack.c.l.b16 %v882
      %v891 = vunpack.c.l.b16 %v883
      %v892 = vpack.c.b16 %v889, %v888
      %v893 = vpack.c.b16 %v891, %v890
      %v897 = vsel %vm474, %v872, 0
      %v900 = vsel %vm474, %v873, 0
      %v903 = vsel %vm474, %v874, 0
      %v906 = vsel %vm474, %v875, 0
      %v909 = vsel %vm474, %v876, 0
      %v912 = vsel %vm474, %v877, 0
      %v915 = vsel %vm474, %v878, 0
      %v918 = vsel %vm474, %v879, 0
      %920 = vmatpush.bf16.msra.mxu0 0
      %921 = vmatpush.bf16.msra.mxu0 0
      %922 = vmatpush.bf16.msra.mxu0 0
      %923 = vmatpush.bf16.msra.mxu0 0
      %924 = vmatpush.bf16.msra.mxu0 0
      %925 = vmatpush.bf16.msra.mxu0 0
      %926 = vmatpush.bf16.msra.mxu0 %v893
      %927 = vmatpush.bf16.msra.mxu0 %v892
      %928 = vmatmul.bf16.gmra.mxu0 %v897
      %v929 = vpop.f32.mrf.mxu0
      %v930 = vadd.f32 0.0, %v929
      %v931 = vpop.f32.mrf.mxu0
      %v932 = vadd.f32 0.0, %v931
      %933 = vmatmul.bf16.gmra.mxu0 %v900
      %v934 = vpop.f32.mrf.mxu0
      %v935 = vadd.f32 0.0, %v934
      %v936 = vpop.f32.mrf.mxu0
      %v937 = vadd.f32 0.0, %v936
      %938 = vmatmul.bf16.gmra.mxu0 %v903
      %v939 = vpop.f32.mrf.mxu0
      %v940 = vadd.f32 0.0, %v939
      %v941 = vpop.f32.mrf.mxu0
      %v942 = vadd.f32 0.0, %v941
      %943 = vmatmul.bf16.gmra.mxu0 %v906
      %v944 = vpop.f32.mrf.mxu0
      %v945 = vadd.f32 0.0, %v944
      %v946 = vpop.f32.mrf.mxu0
      %v947 = vadd.f32 0.0, %v946
      %948 = vmatmul.bf16.gmra.mxu0 %v909
      %v949 = vpop.f32.mrf.mxu0
      %v950 = vadd.f32 0.0, %v949
      %v951 = vpop.f32.mrf.mxu0
      %v952 = vadd.f32 0.0, %v951
      %953 = vmatmul.bf16.gmra.mxu0 %v912
      %v954 = vpop.f32.mrf.mxu0
      %v955 = vadd.f32 0.0, %v954
      %v956 = vpop.f32.mrf.mxu0
      %v957 = vadd.f32 0.0, %v956
      %958 = vmatmul.bf16.gmra.mxu0 %v915
      %v959 = vpop.f32.mrf.mxu0
      %v960 = vadd.f32 0.0, %v959
      %v961 = vpop.f32.mrf.mxu0
      %v962 = vadd.f32 0.0, %v961
      %963 = vmatmul.bf16.gmra.mxu0 %v918
      %v964 = vpop.f32.mrf.mxu0
      %v965 = vadd.f32 0.0, %v964
      %v966 = vpop.f32.mrf.mxu0
      %v967 = vadd.f32 0.0, %v966
      %968 = vdwg.mxu0
      %v969 = vpack.c.bf16 %v930, %v930
      %v970 = vpack.c.bf16 %v932, %v932
      %v971 = vpack.c.bf16 %v935, %v935
      %v972 = vpack.c.bf16 %v937, %v937
      %v973 = vpack.c.bf16 %v940, %v940
      %v974 = vpack.c.bf16 %v942, %v942
      %v975 = vpack.c.bf16 %v945, %v945
      %v976 = vpack.c.bf16 %v947, %v947
      %v977 = vpack.c.bf16 %v950, %v950
      %v978 = vpack.c.bf16 %v952, %v952
      %v979 = vpack.c.bf16 %v955, %v955
      %v980 = vpack.c.bf16 %v957, %v957
      %v981 = vpack.c.bf16 %v960, %v960
      %v982 = vpack.c.bf16 %v962, %v962
      %v983 = vpack.c.bf16 %v965, %v965
      %v984 = vpack.c.bf16 %v967, %v967
      %v985 = vld [vmem:[%s449] sm:$0x1]
      %vm986 = vcmp.gt.f32.partialorder %v985, 0.5
      %v987 = vsel %vm986, -1e+20, 0.0
      %v988 = vlaneseq
      %v989 = vand.u32 %v988, 127
      %v990 = vlaneseq
      %v991 = vshrl.u32 %v990, 7
      %v992 = vadd.s32 %v991, 8
      %v993 = vadd.s32 %v991, 16
      %v994 = vadd.s32 %v991, 24
      %v995 = vadd.s32 %v991, 32
      %v996 = vadd.s32 %v991, 40
      %v997 = vadd.s32 %v991, 48
      %v998 = vadd.s32 %v991, 56
      %v999 = vadd.s32 %v991, 64
      %v1000 = vadd.s32 %v991, 72
      %v1001 = vadd.s32 %v991, 80
      %v1002 = vadd.s32 %v991, 88
      %v1003 = vadd.s32 %v991, 96
      %v1004 = vadd.s32 %v991, 104
      %v1005 = vadd.s32 %v991, 112
      %v1006 = vadd.s32 %v991, 120
      %v1007 = vld [vmem:[%s4] sm:$0xf]
      %v1008 = vld [vmem:[%s4 + $0x4] sm:$0xf]
      %v1009 = vld [vmem:[%s4 + $0x8] sm:$0xf]
      %v1010 = vld [vmem:[%s4 + $0xc] sm:$0xf]
      %v1011 = vld [vmem:[%s6] sm:$0xf]
      %v1012 = vld [vmem:[%s6 + $0x4] sm:$0xf]
      %v1013 = vld [vmem:[%s6 + $0x8] sm:$0xf]
      %v1014 = vld [vmem:[%s6 + $0xc] sm:$0xf]
      %v1015 = vld [vmem:[%s7] sm:$0x1]
      %v1016 = vld [vmem:[%s8] sm:$0x1]
      %v1017 = vld [vmem:[%s9] sm:$0xf]
      %v1018 = vld [vmem:[%s9 + $0x4] sm:$0xf]
      %v1019 = vld [vmem:[%s9 + $0x8] sm:$0xf]
      %v1020 = vld [vmem:[%s9 + $0xc] sm:$0xf]
      %v1021 = vld [vmem:[%s10] sm:$0x1]
      %v1022 = vld [vmem:[%s11] sm:$0xf]
      %v1023 = vld [vmem:[%s11 + $0x4] sm:$0xf]
      %v1024 = vld [vmem:[%s11 + $0x8] sm:$0xf]
      %v1025 = vld [vmem:[%s11 + $0xc] sm:$0xf]
      %v1026 = vld [vmem:[%s11 + $0x10] sm:$0xf]
      %v1027 = vld [vmem:[%s11 + $0x14] sm:$0xf]
      %v1028 = vld [vmem:[%s11 + $0x18] sm:$0xf]
      %v1029 = vld [vmem:[%s11 + $0x1c] sm:$0xf]
      %v1030 = vld [vmem:[%s12] sm:$0x1]
      %vm1031 = vcmp.gt.s32.totalorder %v989, %v991
      %vm1032 = vcmp.gt.s32.totalorder %v989, %v992
      %vm1033 = vcmp.gt.s32.totalorder %v989, %v993
      %vm1034 = vcmp.gt.s32.totalorder %v989, %v994
      %vm1035 = vcmp.gt.s32.totalorder %v989, %v995
      %vm1036 = vcmp.gt.s32.totalorder %v989, %v996
      %vm1037 = vcmp.gt.s32.totalorder %v989, %v997
      %vm1038 = vcmp.gt.s32.totalorder %v989, %v998
      %vm1039 = vcmp.gt.s32.totalorder %v989, %v999
      %vm1040 = vcmp.gt.s32.totalorder %v989, %v1000
      %vm1041 = vcmp.gt.s32.totalorder %v989, %v1001
      %vm1042 = vcmp.gt.s32.totalorder %v989, %v1002
      %vm1043 = vcmp.gt.s32.totalorder %v989, %v1003
      %vm1044 = vcmp.gt.s32.totalorder %v989, %v1004
      %vm1045 = vcmp.gt.s32.totalorder %v989, %v1005
      %vm1046 = vcmp.gt.s32.totalorder %v989, %v1006
      %v1047 = vsel %vm1031, -1e+20, 0.0
      %v1048 = vsel %vm1032, -1e+20, 0.0
      %v1049 = vsel %vm1033, -1e+20, 0.0
      %v1050 = vsel %vm1034, -1e+20, 0.0
      %v1051 = vsel %vm1035, -1e+20, 0.0
      %v1052 = vsel %vm1036, -1e+20, 0.0
      %v1053 = vsel %vm1037, -1e+20, 0.0
      %v1054 = vsel %vm1038, -1e+20, 0.0
      %v1055 = vsel %vm1039, -1e+20, 0.0
      %v1056 = vsel %vm1040, -1e+20, 0.0
      %v1057 = vsel %vm1041, -1e+20, 0.0
      %v1058 = vsel %vm1042, -1e+20, 0.0
      %v1059 = vsel %vm1043, -1e+20, 0.0
      %v1060 = vsel %vm1044, -1e+20, 0.0
      %v1061 = vsel %vm1045, -1e+20, 0.0
      %v1062 = vsel %vm1046, -1e+20, 0.0
      %v1064 = vperm.slane %v987, 0
      %v1066 = vadd.f32 %v1064, %v1047
      %v1067 = vadd.f32 %v1064, %v1048
      %v1068 = vadd.f32 %v1064, %v1049
      %v1069 = vadd.f32 %v1064, %v1050
      %v1070 = vadd.f32 %v1064, %v1051
      %v1071 = vadd.f32 %v1064, %v1052
      %v1072 = vadd.f32 %v1064, %v1053
      %v1073 = vadd.f32 %v1064, %v1054
      %v1074 = vadd.f32 %v1064, %v1055
      %v1075 = vadd.f32 %v1064, %v1056
      %v1076 = vadd.f32 %v1064, %v1057
      %v1077 = vadd.f32 %v1064, %v1058
      %v1078 = vadd.f32 %v1064, %v1059
      %v1079 = vadd.f32 %v1064, %v1060
      %v1080 = vadd.f32 %v1064, %v1061
      %v1081 = vadd.f32 %v1064, %v1062
      %v1086 = vunpack.c.l.b16 %v1007
      %v1087 = vunpack.c.l.b16 %v1008
      %v1088 = vunpack.c.l.b16 %v1009
      %v1089 = vunpack.c.l.b16 %v1010
      %v1090 = vpack.c.b16 %v1087, %v1086
      %v1091 = vpack.c.b16 %v1089, %v1088
      %1094 = vmatpush.bf16.msra.mxu0 0
      %1095 = vmatpush.bf16.msra.mxu0 0
      %1096 = vmatpush.bf16.msra.mxu0 0
      %1097 = vmatpush.bf16.msra.mxu0 0
      %1098 = vmatpush.bf16.msra.mxu0 0
      %1099 = vmatpush.bf16.msra.mxu0 0
      %1100 = vmatpush.bf16.msra.mxu0 %v1091
      %1101 = vmatpush.bf16.msra.mxu0 %v1090
      %1102 = vmatmul.bf16.gmra.mxu0 %v897
      %v1103 = vpop.f32.mrf.mxu0
      %v1104 = vadd.f32 0.0, %v1103
      %v1105 = vpop.f32.mrf.mxu0
      %v1106 = vadd.f32 0.0, %v1105
      %1107 = vmatmul.bf16.gmra.mxu0 %v900
      %v1108 = vpop.f32.mrf.mxu0
      %v1109 = vadd.f32 0.0, %v1108
      %v1110 = vpop.f32.mrf.mxu0
      %v1111 = vadd.f32 0.0, %v1110
      %1112 = vmatmul.bf16.gmra.mxu0 %v903
      %v1113 = vpop.f32.mrf.mxu0
      %v1114 = vadd.f32 0.0, %v1113
      %v1115 = vpop.f32.mrf.mxu0
      %v1116 = vadd.f32 0.0, %v1115
      %1117 = vmatmul.bf16.gmra.mxu0 %v906
      %v1118 = vpop.f32.mrf.mxu0
      %v1119 = vadd.f32 0.0, %v1118
      %v1120 = vpop.f32.mrf.mxu0
      %v1121 = vadd.f32 0.0, %v1120
      %1122 = vmatmul.bf16.gmra.mxu0 %v909
      %v1123 = vpop.f32.mrf.mxu0
      %v1124 = vadd.f32 0.0, %v1123
      %v1125 = vpop.f32.mrf.mxu0
      %v1126 = vadd.f32 0.0, %v1125
      %1127 = vmatmul.bf16.gmra.mxu0 %v912
      %v1128 = vpop.f32.mrf.mxu0
      %v1129 = vadd.f32 0.0, %v1128
      %v1130 = vpop.f32.mrf.mxu0
      %v1131 = vadd.f32 0.0, %v1130
      %1132 = vmatmul.bf16.gmra.mxu0 %v915
      %v1133 = vpop.f32.mrf.mxu0
      %v1134 = vadd.f32 0.0, %v1133
      %v1135 = vpop.f32.mrf.mxu0
      %v1136 = vadd.f32 0.0, %v1135
      %1137 = vmatmul.bf16.gmra.mxu0 %v918
      %v1138 = vpop.f32.mrf.mxu0
      %v1139 = vadd.f32 0.0, %v1138
      %v1140 = vpop.f32.mrf.mxu0
      %v1141 = vadd.f32 0.0, %v1140
      %1142 = vdwg.mxu0
      %v1143 = vmul.f32 %v1104, 0.17677669
      %v1144 = vmul.f32 %v1106, 0.17677669
      %v1145 = vmul.f32 %v1109, 0.17677669
      %v1146 = vmul.f32 %v1111, 0.17677669
      %v1147 = vmul.f32 %v1114, 0.17677669
      %v1148 = vmul.f32 %v1116, 0.17677669
      %v1149 = vmul.f32 %v1119, 0.17677669
      %v1150 = vmul.f32 %v1121, 0.17677669
      %v1151 = vmul.f32 %v1124, 0.17677669
      %v1152 = vmul.f32 %v1126, 0.17677669
      %v1153 = vmul.f32 %v1129, 0.17677669
      %v1154 = vmul.f32 %v1131, 0.17677669
      %v1155 = vmul.f32 %v1134, 0.17677669
      %v1156 = vmul.f32 %v1136, 0.17677669
      %v1157 = vmul.f32 %v1139, 0.17677669
      %v1158 = vmul.f32 %v1141, 0.17677669
      %v1159 = vpack.c.bf16 %v1143, %v1143
      %v1160 = vpack.c.bf16 %v1144, %v1144
      %v1161 = vpack.c.bf16 %v1145, %v1145
      %v1162 = vpack.c.bf16 %v1146, %v1146
      %v1163 = vpack.c.bf16 %v1147, %v1147
      %v1164 = vpack.c.bf16 %v1148, %v1148
      %v1165 = vpack.c.bf16 %v1149, %v1149
      %v1166 = vpack.c.bf16 %v1150, %v1150
      %v1167 = vpack.c.bf16 %v1151, %v1151
      %v1168 = vpack.c.bf16 %v1152, %v1152
      %v1169 = vpack.c.bf16 %v1153, %v1153
      %v1170 = vpack.c.bf16 %v1154, %v1154
      %v1171 = vpack.c.bf16 %v1155, %v1155
      %v1172 = vpack.c.bf16 %v1156, %v1156
      %v1173 = vpack.c.bf16 %v1157, %v1157
      %v1174 = vpack.c.bf16 %v1158, %v1158
      %v1191 = vunpack.c.l.b16 %v1159
      %v1192 = vunpack.c.l.b16 %v1160
      %v1193 = vunpack.c.l.b16 %v1161
      %v1194 = vunpack.c.l.b16 %v1162
      %v1195 = vunpack.c.l.b16 %v1163
      %v1196 = vunpack.c.l.b16 %v1164
      %v1197 = vunpack.c.l.b16 %v1165
      %v1198 = vunpack.c.l.b16 %v1166
      %v1199 = vunpack.c.l.b16 %v1167
      %v1200 = vunpack.c.l.b16 %v1168
      %v1201 = vunpack.c.l.b16 %v1169
      %v1202 = vunpack.c.l.b16 %v1170
      %v1203 = vunpack.c.l.b16 %v1171
      %v1204 = vunpack.c.l.b16 %v1172
      %v1205 = vunpack.c.l.b16 %v1173
      %v1206 = vunpack.c.l.b16 %v1174
      %v1207 = vpack.c.b16 %v1192, %v1191
      %v1208 = vpack.c.b16 %v1194, %v1193
      %v1209 = vpack.c.b16 %v1196, %v1195
      %v1210 = vpack.c.b16 %v1198, %v1197
      %v1211 = vpack.c.b16 %v1200, %v1199
      %v1212 = vpack.c.b16 %v1202, %v1201
      %v1213 = vpack.c.b16 %v1204, %v1203
      %v1214 = vpack.c.b16 %v1206, %v1205
      %v1231 = vunpack.c.l.b16 %v969
      %v1232 = vunpack.c.l.b16 %v970
      %v1233 = vunpack.c.l.b16 %v971
      %v1234 = vunpack.c.l.b16 %v972
      %v1235 = vunpack.c.l.b16 %v973
      %v1236 = vunpack.c.l.b16 %v974
      %v1237 = vunpack.c.l.b16 %v975
      %v1238 = vunpack.c.l.b16 %v976
      %v1239 = vunpack.c.l.b16 %v977
      %v1240 = vunpack.c.l.b16 %v978
      %v1241 = vunpack.c.l.b16 %v979
      %v1242 = vunpack.c.l.b16 %v980
      %v1243 = vunpack.c.l.b16 %v981
      %v1244 = vunpack.c.l.b16 %v982
      %v1245 = vunpack.c.l.b16 %v983
      %v1246 = vunpack.c.l.b16 %v984
      %v1247 = vpack.c.b16 %v1232, %v1231
      %v1248 = vpack.c.b16 %v1234, %v1233
      %v1249 = vpack.c.b16 %v1236, %v1235
      %v1250 = vpack.c.b16 %v1238, %v1237
      %v1251 = vpack.c.b16 %v1240, %v1239
      %v1252 = vpack.c.b16 %v1242, %v1241
      %v1253 = vpack.c.b16 %v1244, %v1243
      %v1254 = vpack.c.b16 %v1246, %v1245
      %vm1255 = vcmask 64512
      %v1257 = vsel %vm1255, %v1207, 0
      %v1260 = vsel %vm1255, %v1208, 0
      %v1263 = vsel %vm1255, %v1209, 0
      %v1266 = vsel %vm1255, %v1210, 0
      %v1269 = vsel %vm1255, %v1211, 0
      %v1272 = vsel %vm1255, %v1212, 0
      %v1275 = vsel %vm1255, %v1213, 0
      %v1278 = vsel %vm1255, %v1214, 0
      %v1281 = vsel %vm1255, %v1247, 0
      %v1284 = vsel %vm1255, %v1248, 0
      %v1287 = vsel %vm1255, %v1249, 0
      %v1290 = vsel %vm1255, %v1250, 0
      %v1293 = vsel %vm1255, %v1251, 0
      %v1296 = vsel %vm1255, %v1252, 0
      %v1299 = vsel %vm1255, %v1253, 0
      %v1302 = vsel %vm1255, %v1254, 0
      %1304 = vmatpush.bf16.xpose.msra.mxu0 %v1302
      %1305 = vmatpush.bf16.xpose.msra.mxu0 %v1299
      %1306 = vmatpush.bf16.xpose.msra.mxu0 %v1296
      %1307 = vmatpush.bf16.xpose.msra.mxu0 %v1293
      %1308 = vmatpush.bf16.xpose.msra.mxu0 %v1290
      %1309 = vmatpush.bf16.xpose.msra.mxu0 %v1287
      %1310 = vmatpush.bf16.xpose.msra.mxu0 %v1284
      %1311 = vmatpush.bf16.xpose.msra.mxu0 %v1281
      %1312 = vmatmul.bf16.gmra.mxu0 %v1257
      %v1313 = vpop.f32.mrf.mxu0
      %v1314 = vadd.f32 %v1066, %v1313
      %v1315 = vpop.f32.mrf.mxu0
      %v1316 = vadd.f32 %v1067, %v1315
      %1317 = vmatmul.bf16.gmra.mxu0 %v1260
      %v1318 = vpop.f32.mrf.mxu0
      %v1319 = vadd.f32 %v1068, %v1318
      %v1320 = vpop.f32.mrf.mxu0
      %v1321 = vadd.f32 %v1069, %v1320
      %1322 = vmatmul.bf16.gmra.mxu0 %v1263
      %v1323 = vpop.f32.mrf.mxu0
      %v1324 = vadd.f32 %v1070, %v1323
      %v1325 = vpop.f32.mrf.mxu0
      %v1326 = vadd.f32 %v1071, %v1325
      %1327 = vmatmul.bf16.gmra.mxu0 %v1266
      %v1328 = vpop.f32.mrf.mxu0
      %v1329 = vadd.f32 %v1072, %v1328
      %v1330 = vpop.f32.mrf.mxu0
      %v1331 = vadd.f32 %v1073, %v1330
      %1332 = vmatmul.bf16.gmra.mxu0 %v1269
      %v1333 = vpop.f32.mrf.mxu0
      %v1334 = vadd.f32 %v1074, %v1333
      %v1335 = vpop.f32.mrf.mxu0
      %v1336 = vadd.f32 %v1075, %v1335
      %1337 = vmatmul.bf16.gmra.mxu0 %v1272
      %v1338 = vpop.f32.mrf.mxu0
      %v1339 = vadd.f32 %v1076, %v1338
      %v1340 = vpop.f32.mrf.mxu0
      %v1341 = vadd.f32 %v1077, %v1340
      %1342 = vmatmul.bf16.gmra.mxu0 %v1275
      %v1343 = vpop.f32.mrf.mxu0
      %v1344 = vadd.f32 %v1078, %v1343
      %v1345 = vpop.f32.mrf.mxu0
      %v1346 = vadd.f32 %v1079, %v1345
      %1347 = vmatmul.bf16.gmra.mxu0 %v1278
      %v1348 = vpop.f32.mrf.mxu0
      %v1349 = vadd.f32 %v1080, %v1348
      %v1350 = vpop.f32.mrf.mxu0
      %v1351 = vadd.f32 %v1081, %v1350
      %1352 = vdwg.mxu0
      %1353 = vmax.xlane.f32.xlu0 %v1314
      %v1354 = vpop.xlane.xlu0 %1353
      %1355 = vmax.xlane.f32.xlu0 %v1316
      %v1356 = vpop.xlane.xlu0 %1355
      %1357 = vmax.xlane.f32.xlu0 %v1319
      %v1358 = vpop.xlane.xlu0 %1357
      %1359 = vmax.xlane.f32.xlu0 %v1321
      %v1360 = vpop.xlane.xlu0 %1359
      %1361 = vmax.xlane.f32.xlu0 %v1324
      %v1362 = vpop.xlane.xlu0 %1361
      %1363 = vmax.xlane.f32.xlu0 %v1326
      %v1364 = vpop.xlane.xlu0 %1363
      %1365 = vmax.xlane.f32.xlu0 %v1329
      %v1366 = vpop.xlane.xlu0 %1365
      %1367 = vmax.xlane.f32.xlu0 %v1331
      %v1368 = vpop.xlane.xlu0 %1367
      %1369 = vmax.xlane.f32.xlu0 %v1334
      %v1370 = vpop.xlane.xlu0 %1369
      %1371 = vmax.xlane.f32.xlu0 %v1336
      %v1372 = vpop.xlane.xlu0 %1371
      %1373 = vmax.xlane.f32.xlu0 %v1339
      %v1374 = vpop.xlane.xlu0 %1373
      %1375 = vmax.xlane.f32.xlu0 %v1341
      %v1376 = vpop.xlane.xlu0 %1375
      %1377 = vmax.xlane.f32.xlu0 %v1344
      %v1378 = vpop.xlane.xlu0 %1377
      %1379 = vmax.xlane.f32.xlu0 %v1346
      %v1380 = vpop.xlane.xlu0 %1379
      %1381 = vmax.xlane.f32.xlu0 %v1349
      %v1382 = vpop.xlane.xlu0 %1381
      %1383 = vmax.xlane.f32.xlu0 %v1351
      %v1384 = vpop.xlane.xlu0 %1383
      %v1385 = vsub.f32 %v1314, %v1354
      %v1386 = vsub.f32 %v1316, %v1356
      %v1387 = vsub.f32 %v1319, %v1358
      %v1388 = vsub.f32 %v1321, %v1360
      %v1389 = vsub.f32 %v1324, %v1362
      %v1390 = vsub.f32 %v1326, %v1364
      %v1391 = vsub.f32 %v1329, %v1366
      %v1392 = vsub.f32 %v1331, %v1368
      %v1393 = vsub.f32 %v1334, %v1370
      %v1394 = vsub.f32 %v1336, %v1372
      %v1395 = vsub.f32 %v1339, %v1374
      %v1396 = vsub.f32 %v1341, %v1376
      %v1397 = vsub.f32 %v1344, %v1378
      %v1398 = vsub.f32 %v1346, %v1380
      %v1399 = vsub.f32 %v1349, %v1382
      %v1400 = vsub.f32 %v1351, %v1384
      %v1401 = vmul.f32 %v1385, 1.442695
      %v1402 = vpow.pop %v1401
      %v1403 = vmul.f32 %v1386, 1.442695
      %v1404 = vpow.pop %v1403
      %v1405 = vmul.f32 %v1387, 1.442695
      %v1406 = vpow.pop %v1405
      %v1407 = vmul.f32 %v1388, 1.442695
      %v1408 = vpow.pop %v1407
      %v1409 = vmul.f32 %v1389, 1.442695
      %v1410 = vpow.pop %v1409
      %v1411 = vmul.f32 %v1390, 1.442695
      %v1412 = vpow.pop %v1411
      %v1413 = vmul.f32 %v1391, 1.442695
      %v1414 = vpow.pop %v1413
      %v1415 = vmul.f32 %v1392, 1.442695
      %v1416 = vpow.pop %v1415
      %v1417 = vmul.f32 %v1393, 1.442695
      %v1418 = vpow.pop %v1417
      %v1419 = vmul.f32 %v1394, 1.442695
      %v1420 = vpow.pop %v1419
      %v1421 = vmul.f32 %v1395, 1.442695
      %v1422 = vpow.pop %v1421
      %v1423 = vmul.f32 %v1396, 1.442695
      %v1424 = vpow.pop %v1423
      %v1425 = vmul.f32 %v1397, 1.442695
      %v1426 = vpow.pop %v1425
      %v1427 = vmul.f32 %v1398, 1.442695
      %v1428 = vpow.pop %v1427
      %v1429 = vmul.f32 %v1399, 1.442695
      %v1430 = vpow.pop %v1429
      %v1431 = vmul.f32 %v1400, 1.442695
      %v1432 = vpow.pop %v1431
      %1433 = vadd.xlane.f32.xlu0 %v1402
      %v1434 = vpop.xlane.xlu0 %1433
      %1435 = vadd.xlane.f32.xlu0 %v1404
      %v1436 = vpop.xlane.xlu0 %1435
      %1437 = vadd.xlane.f32.xlu0 %v1406
      %v1438 = vpop.xlane.xlu0 %1437
      %1439 = vadd.xlane.f32.xlu0 %v1408
      %v1440 = vpop.xlane.xlu0 %1439
      %1441 = vadd.xlane.f32.xlu0 %v1410
      %v1442 = vpop.xlane.xlu0 %1441
      %1443 = vadd.xlane.f32.xlu0 %v1412
      %v1444 = vpop.xlane.xlu0 %1443
      %1445 = vadd.xlane.f32.xlu0 %v1414
      %v1446 = vpop.xlane.xlu0 %1445
      %1447 = vadd.xlane.f32.xlu0 %v1416
      %v1448 = vpop.xlane.xlu0 %1447
      %1449 = vadd.xlane.f32.xlu0 %v1418
      %v1450 = vpop.xlane.xlu0 %1449
      %1451 = vadd.xlane.f32.xlu0 %v1420
      %v1452 = vpop.xlane.xlu0 %1451
      %1453 = vadd.xlane.f32.xlu0 %v1422
      %v1454 = vpop.xlane.xlu0 %1453
      %1455 = vadd.xlane.f32.xlu0 %v1424
      %v1456 = vpop.xlane.xlu0 %1455
      %1457 = vadd.xlane.f32.xlu0 %v1426
      %v1458 = vpop.xlane.xlu0 %1457
      %1459 = vadd.xlane.f32.xlu0 %v1428
      %v1460 = vpop.xlane.xlu0 %1459
      %1461 = vadd.xlane.f32.xlu0 %v1430
      %v1462 = vpop.xlane.xlu0 %1461
      %1463 = vadd.xlane.f32.xlu0 %v1432
      %v1464 = vpop.xlane.xlu0 %1463
      %v1465 = vrcp.pop %v1434
      %v1466 = vrcp.pop %v1436
      %v1467 = vrcp.pop %v1438
      %v1468 = vrcp.pop %v1440
      %v1469 = vrcp.pop %v1442
      %v1470 = vrcp.pop %v1444
      %v1471 = vrcp.pop %v1446
      %v1472 = vrcp.pop %v1448
      %v1473 = vrcp.pop %v1450
      %v1474 = vrcp.pop %v1452
      %v1475 = vrcp.pop %v1454
      %v1476 = vrcp.pop %v1456
      %v1477 = vrcp.pop %v1458
      %v1478 = vrcp.pop %v1460
      %v1479 = vrcp.pop %v1462
      %v1480 = vrcp.pop %v1464
      %v1481 = vmul.f32 %v1402, %v1465
      %v1482 = vmul.f32 %v1404, %v1466
      %v1483 = vmul.f32 %v1406, %v1467
      %v1484 = vmul.f32 %v1408, %v1468
      %v1485 = vmul.f32 %v1410, %v1469
      %v1486 = vmul.f32 %v1412, %v1470
      %v1487 = vmul.f32 %v1414, %v1471
      %v1488 = vmul.f32 %v1416, %v1472
      %v1489 = vmul.f32 %v1418, %v1473
      %v1490 = vmul.f32 %v1420, %v1474
      %v1491 = vmul.f32 %v1422, %v1475
      %v1492 = vmul.f32 %v1424, %v1476
      %v1493 = vmul.f32 %v1426, %v1477
      %v1494 = vmul.f32 %v1428, %v1478
      %v1495 = vmul.f32 %v1430, %v1479
      %v1496 = vmul.f32 %v1432, %v1480
      %v1497 = vpack.c.bf16 %v1482, %v1481
      %v1498 = vpack.c.bf16 %v1484, %v1483
      %v1499 = vpack.c.bf16 %v1486, %v1485
      %v1500 = vpack.c.bf16 %v1488, %v1487
      %v1501 = vpack.c.bf16 %v1490, %v1489
      %v1502 = vpack.c.bf16 %v1492, %v1491
      %v1503 = vpack.c.bf16 %v1494, %v1493
      %v1504 = vpack.c.bf16 %v1496, %v1495
      %1505 = vrot.lane.b32.xlu0 %v1247, 96
      %v1506 = vpop.permute.xlu0 %1505
      %1507 = vrot.lane.b32.xlu0 %v1248, 96
      %v1508 = vpop.permute.xlu0 %1507
      %1509 = vrot.lane.b32.xlu0 %v1249, 96
      %v1510 = vpop.permute.xlu0 %1509
      %1511 = vrot.lane.b32.xlu0 %v1250, 96
      %v1512 = vpop.permute.xlu0 %1511
      %1513 = vrot.lane.b32.xlu0 %v1251, 96
      %v1514 = vpop.permute.xlu0 %1513
      %1515 = vrot.lane.b32.xlu0 %v1252, 96
      %v1516 = vpop.permute.xlu0 %1515
      %1517 = vrot.lane.b32.xlu0 %v1253, 96
      %v1518 = vpop.permute.xlu0 %1517
      %1519 = vrot.lane.b32.xlu0 %v1254, 96
      %v1520 = vpop.permute.xlu0 %1519
      %1529 = vmatpush.bf16.msra.mxu0 %v1520
      %1530 = vmatpush.bf16.msra.mxu0 %v1518
      %1531 = vmatpush.bf16.msra.mxu0 %v1516
      %1532 = vmatpush.bf16.msra.mxu0 %v1514
      %1533 = vmatpush.bf16.msra.mxu0 %v1512
      %1534 = vmatpush.bf16.msra.mxu0 %v1510
      %1535 = vmatpush.bf16.msra.mxu0 %v1508
      %1536 = vmatpush.bf16.msra.mxu0 %v1506
      %1537 = vmatmul.bf16.gmra.mxu0 %v1497
      %v1538 = vpop.f32.mrf.mxu0
      %v1539 = vadd.f32 0.0, %v1538
      %v1540 = vpop.f32.mrf.mxu0
      %v1541 = vadd.f32 0.0, %v1540
      %1542 = vmatmul.bf16.gmra.mxu0 %v1498
      %v1543 = vpop.f32.mrf.mxu0
      %v1544 = vadd.f32 0.0, %v1543
      %v1545 = vpop.f32.mrf.mxu0
      %v1546 = vadd.f32 0.0, %v1545
      %1547 = vmatmul.bf16.gmra.mxu0 %v1499
      %v1548 = vpop.f32.mrf.mxu0
      %v1549 = vadd.f32 0.0, %v1548
      %v1550 = vpop.f32.mrf.mxu0
      %v1551 = vadd.f32 0.0, %v1550
      %1552 = vmatmul.bf16.gmra.mxu0 %v1500
      %v1553 = vpop.f32.mrf.mxu0
      %v1554 = vadd.f32 0.0, %v1553
      %v1555 = vpop.f32.mrf.mxu0
      %v1556 = vadd.f32 0.0, %v1555
      %1557 = vmatmul.bf16.gmra.mxu0 %v1501
      %v1558 = vpop.f32.mrf.mxu0
      %v1559 = vadd.f32 0.0, %v1558
      %v1560 = vpop.f32.mrf.mxu0
      %v1561 = vadd.f32 0.0, %v1560
      %1562 = vmatmul.bf16.gmra.mxu0 %v1502
      %v1563 = vpop.f32.mrf.mxu0
      %v1564 = vadd.f32 0.0, %v1563
      %v1565 = vpop.f32.mrf.mxu0
      %v1566 = vadd.f32 0.0, %v1565
      %1567 = vmatmul.bf16.gmra.mxu0 %v1503
      %v1568 = vpop.f32.mrf.mxu0
      %v1569 = vadd.f32 0.0, %v1568
      %v1570 = vpop.f32.mrf.mxu0
      %v1571 = vadd.f32 0.0, %v1570
      %1572 = vmatmul.bf16.gmra.mxu0 %v1504
      %v1573 = vpop.f32.mrf.mxu0
      %v1574 = vadd.f32 0.0, %v1573
      %v1575 = vpop.f32.mrf.mxu0
      %v1576 = vadd.f32 0.0, %v1575
      %1577 = vdwg.mxu0
      %1578 = vst.msk [vmem:[#allocation2] sm:$0xff] %vm1255, %v1539
      %1579 = vst.msk [vmem:[#allocation2 + $0x8] sm:$0xff] %vm1255, %v1541
      %1580 = vst.msk [vmem:[#allocation2 + $0x10] sm:$0xff] %vm1255, %v1544
      %1581 = vst.msk [vmem:[#allocation2 + $0x18] sm:$0xff] %vm1255, %v1546
      %1582 = vst.msk [vmem:[#allocation2 + $0x20] sm:$0xff] %vm1255, %v1549
      %1583 = vst.msk [vmem:[#allocation2 + $0x28] sm:$0xff] %vm1255, %v1551
      %1584 = vst.msk [vmem:[#allocation2 + $0x30] sm:$0xff] %vm1255, %v1554
      %1585 = vst.msk [vmem:[#allocation2 + $0x38] sm:$0xff] %vm1255, %v1556
      %1586 = vst.msk [vmem:[#allocation2 + $0x40] sm:$0xff] %vm1255, %v1559
      %1587 = vst.msk [vmem:[#allocation2 + $0x48] sm:$0xff] %vm1255, %v1561
      %1588 = vst.msk [vmem:[#allocation2 + $0x50] sm:$0xff] %vm1255, %v1564
      %1589 = vst.msk [vmem:[#allocation2 + $0x58] sm:$0xff] %vm1255, %v1566
      %1590 = vst.msk [vmem:[#allocation2 + $0x60] sm:$0xff] %vm1255, %v1569
      %1591 = vst.msk [vmem:[#allocation2 + $0x68] sm:$0xff] %vm1255, %v1571
      %1592 = vst.msk [vmem:[#allocation2 + $0x70] sm:$0xff] %vm1255, %v1574
      %1593 = vst.msk [vmem:[#allocation2 + $0x78] sm:$0xff] %vm1255, %v1576
      %1594 = vrot.lane.b32.xlu0 %v1207, 120
      %v1595 = vpop.permute.xlu0 %1594
      %1596 = vrot.lane.b32.xlu0 %v1208, 120
      %v1597 = vpop.permute.xlu0 %1596
      %1598 = vrot.lane.b32.xlu0 %v1209, 120
      %v1599 = vpop.permute.xlu0 %1598
      %1600 = vrot.lane.b32.xlu0 %v1210, 120
      %v1601 = vpop.permute.xlu0 %1600
      %1602 = vrot.lane.b32.xlu0 %v1211, 120
      %v1603 = vpop.permute.xlu0 %1602
      %1604 = vrot.lane.b32.xlu0 %v1212, 120
      %v1605 = vpop.permute.xlu0 %1604
      %1606 = vrot.lane.b32.xlu0 %v1213, 120
      %v1607 = vpop.permute.xlu0 %1606
      %1608 = vrot.lane.b32.xlu0 %v1214, 120
      %v1609 = vpop.permute.xlu0 %1608
      %1610 = vrot.lane.b32.xlu0 %v1247, 120
      %v1611 = vpop.permute.xlu0 %1610
      %1612 = vrot.lane.b32.xlu0 %v1248, 120
      %v1613 = vpop.permute.xlu0 %1612
      %1614 = vrot.lane.b32.xlu0 %v1249, 120
      %v1615 = vpop.permute.xlu0 %1614
      %1616 = vrot.lane.b32.xlu0 %v1250, 120
      %v1617 = vpop.permute.xlu0 %1616
      %1618 = vrot.lane.b32.xlu0 %v1251, 120
      %v1619 = vpop.permute.xlu0 %1618
      %1620 = vrot.lane.b32.xlu0 %v1252, 120
      %v1621 = vpop.permute.xlu0 %1620
      %1622 = vrot.lane.b32.xlu0 %v1253, 120
      %v1623 = vpop.permute.xlu0 %1622
      %1624 = vrot.lane.b32.xlu0 %v1254, 120
      %v1625 = vpop.permute.xlu0 %1624
      %v1627 = vsel %vm1255, %v1595, 0
      %v1630 = vsel %vm1255, %v1597, 0
      %v1633 = vsel %vm1255, %v1599, 0
      %v1636 = vsel %vm1255, %v1601, 0
      %v1639 = vsel %vm1255, %v1603, 0
      %v1642 = vsel %vm1255, %v1605, 0
      %v1645 = vsel %vm1255, %v1607, 0
      %v1648 = vsel %vm1255, %v1609, 0
      %v1651 = vsel %vm1255, %v1611, 0
      %v1654 = vsel %vm1255, %v1613, 0
      %v1657 = vsel %vm1255, %v1615, 0
      %v1660 = vsel %vm1255, %v1617, 0
      %v1663 = vsel %vm1255, %v1619, 0
      %v1666 = vsel %vm1255, %v1621, 0
      %v1669 = vsel %vm1255, %v1623, 0
      %v1672 = vsel %vm1255, %v1625, 0
      %1674 = vmatpush.bf16.xpose.msra.mxu0 %v1672
      %1675 = vmatpush.bf16.xpose.msra.mxu0 %v1669
      %1676 = vmatpush.bf16.xpose.msra.mxu0 %v1666
      %1677 = vmatpush.bf16.xpose.msra.mxu0 %v1663
      %1678 = vmatpush.bf16.xpose.msra.mxu0 %v1660
      %1679 = vmatpush.bf16.xpose.msra.mxu0 %v1657
      %1680 = vmatpush.bf16.xpose.msra.mxu0 %v1654
      %1681 = vmatpush.bf16.xpose.msra.mxu0 %v1651
      %1682 = vmatmul.bf16.gmra.mxu0 %v1627
      %v1683 = vpop.f32.mrf.mxu0
      %v1684 = vadd.f32 %v1066, %v1683
      %v1685 = vpop.f32.mrf.mxu0
      %v1686 = vadd.f32 %v1067, %v1685
      %1687 = vmatmul.bf16.gmra.mxu0 %v1630
      %v1688 = vpop.f32.mrf.mxu0
      %v1689 = vadd.f32 %v1068, %v1688
      %v1690 = vpop.f32.mrf.mxu0
      %v1691 = vadd.f32 %v1069, %v1690
      %1692 = vmatmul.bf16.gmra.mxu0 %v1633
      %v1693 = vpop.f32.mrf.mxu0
      %v1694 = vadd.f32 %v1070, %v1693
      %v1695 = vpop.f32.mrf.mxu0
      %v1696 = vadd.f32 %v1071, %v1695
      %1697 = vmatmul.bf16.gmra.mxu0 %v1636
      %v1698 = vpop.f32.mrf.mxu0
      %v1699 = vadd.f32 %v1072, %v1698
      %v1700 = vpop.f32.mrf.mxu0
      %v1701 = vadd.f32 %v1073, %v1700
      %1702 = vmatmul.bf16.gmra.mxu0 %v1639
      %v1703 = vpop.f32.mrf.mxu0
      %v1704 = vadd.f32 %v1074, %v1703
      %v1705 = vpop.f32.mrf.mxu0
      %v1706 = vadd.f32 %v1075, %v1705
      %1707 = vmatmul.bf16.gmra.mxu0 %v1642
      %v1708 = vpop.f32.mrf.mxu0
      %v1709 = vadd.f32 %v1076, %v1708
      %v1710 = vpop.f32.mrf.mxu0
      %v1711 = vadd.f32 %v1077, %v1710
      %1712 = vmatmul.bf16.gmra.mxu0 %v1645
      %v1713 = vpop.f32.mrf.mxu0
      %v1714 = vadd.f32 %v1078, %v1713
      %v1715 = vpop.f32.mrf.mxu0
      %v1716 = vadd.f32 %v1079, %v1715
      %1717 = vmatmul.bf16.gmra.mxu0 %v1648
      %v1718 = vpop.f32.mrf.mxu0
      %v1719 = vadd.f32 %v1080, %v1718
      %v1720 = vpop.f32.mrf.mxu0
      %v1721 = vadd.f32 %v1081, %v1720
      %1722 = vdwg.mxu0
      %1723 = vmax.xlane.f32.xlu0 %v1684
      %v1724 = vpop.xlane.xlu0 %1723
      %1725 = vmax.xlane.f32.xlu0 %v1686
      %v1726 = vpop.xlane.xlu0 %1725
      %1727 = vmax.xlane.f32.xlu0 %v1689
      %v1728 = vpop.xlane.xlu0 %1727
      %1729 = vmax.xlane.f32.xlu0 %v1691
      %v1730 = vpop.xlane.xlu0 %1729
      %1731 = vmax.xlane.f32.xlu0 %v1694
      %v1732 = vpop.xlane.xlu0 %1731
      %1733 = vmax.xlane.f32.xlu0 %v1696
      %v1734 = vpop.xlane.xlu0 %1733
      %1735 = vmax.xlane.f32.xlu0 %v1699
      %v1736 = vpop.xlane.xlu0 %1735
      %1737 = vmax.xlane.f32.xlu0 %v1701
      %v1738 = vpop.xlane.xlu0 %1737
      %1739 = vmax.xlane.f32.xlu0 %v1704
      %v1740 = vpop.xlane.xlu0 %1739
      %1741 = vmax.xlane.f32.xlu0 %v1706
      %v1742 = vpop.xlane.xlu0 %1741
      %1743 = vmax.xlane.f32.xlu0 %v1709
      %v1744 = vpop.xlane.xlu0 %1743
      %1745 = vmax.xlane.f32.xlu0 %v1711
      %v1746 = vpop.xlane.xlu0 %1745
      %1747 = vmax.xlane.f32.xlu0 %v1714
      %v1748 = vpop.xlane.xlu0 %1747
      %1749 = vmax.xlane.f32.xlu0 %v1716
      %v1750 = vpop.xlane.xlu0 %1749
      %1751 = vmax.xlane.f32.xlu0 %v1719
      %v1752 = vpop.xlane.xlu0 %1751
      %1753 = vmax.xlane.f32.xlu0 %v1721
      %v1754 = vpop.xlane.xlu0 %1753
      %v1755 = vsub.f32 %v1684, %v1724
      %v1756 = vsub.f32 %v1686, %v1726
      %v1757 = vsub.f32 %v1689, %v1728
      %v1758 = vsub.f32 %v1691, %v1730
      %v1759 = vsub.f32 %v1694, %v1732
      %v1760 = vsub.f32 %v1696, %v1734
      %v1761 = vsub.f32 %v1699, %v1736
      %v1762 = vsub.f32 %v1701, %v1738
      %v1763 = vsub.f32 %v1704, %v1740
      %v1764 = vsub.f32 %v1706, %v1742
      %v1765 = vsub.f32 %v1709, %v1744
      %v1766 = vsub.f32 %v1711, %v1746
      %v1767 = vsub.f32 %v1714, %v1748
      %v1768 = vsub.f32 %v1716, %v1750
      %v1769 = vsub.f32 %v1719, %v1752
      %v1770 = vsub.f32 %v1721, %v1754
      %v1771 = vmul.f32 %v1755, 1.442695
      %v1772 = vpow.pop %v1771
      %v1773 = vmul.f32 %v1756, 1.442695
      %v1774 = vpow.pop %v1773
      %v1775 = vmul.f32 %v1757, 1.442695
      %v1776 = vpow.pop %v1775
      %v1777 = vmul.f32 %v1758, 1.442695
      %v1778 = vpow.pop %v1777
      %v1779 = vmul.f32 %v1759, 1.442695
      %v1780 = vpow.pop %v1779
      %v1781 = vmul.f32 %v1760, 1.442695
      %v1782 = vpow.pop %v1781
      %v1783 = vmul.f32 %v1761, 1.442695
      %v1784 = vpow.pop %v1783
      %v1785 = vmul.f32 %v1762, 1.442695
      %v1786 = vpow.pop %v1785
      %v1787 = vmul.f32 %v1763, 1.442695
      %v1788 = vpow.pop %v1787
      %v1789 = vmul.f32 %v1764, 1.442695
      %v1790 = vpow.pop %v1789
      %v1791 = vmul.f32 %v1765, 1.442695
      %v1792 = vpow.pop %v1791
      %v1793 = vmul.f32 %v1766, 1.442695
      %v1794 = vpow.pop %v1793
      %v1795 = vmul.f32 %v1767, 1.442695
      %v1796 = vpow.pop %v1795
      %v1797 = vmul.f32 %v1768, 1.442695
      %v1798 = vpow.pop %v1797
      %v1799 = vmul.f32 %v1769, 1.442695
      %v1800 = vpow.pop %v1799
      %v1801 = vmul.f32 %v1770, 1.442695
      %v1802 = vpow.pop %v1801
      %1803 = vadd.xlane.f32.xlu0 %v1772
      %v1804 = vpop.xlane.xlu0 %1803
      %1805 = vadd.xlane.f32.xlu0 %v1774
      %v1806 = vpop.xlane.xlu0 %1805
      %1807 = vadd.xlane.f32.xlu0 %v1776
      %v1808 = vpop.xlane.xlu0 %1807
      %1809 = vadd.xlane.f32.xlu0 %v1778
      %v1810 = vpop.xlane.xlu0 %1809
      %1811 = vadd.xlane.f32.xlu0 %v1780
      %v1812 = vpop.xlane.xlu0 %1811
      %1813 = vadd.xlane.f32.xlu0 %v1782
      %v1814 = vpop.xlane.xlu0 %1813
      %1815 = vadd.xlane.f32.xlu0 %v1784
      %v1816 = vpop.xlane.xlu0 %1815
      %1817 = vadd.xlane.f32.xlu0 %v1786
      %v1818 = vpop.xlane.xlu0 %1817
      %1819 = vadd.xlane.f32.xlu0 %v1788
      %v1820 = vpop.xlane.xlu0 %1819
      %1821 = vadd.xlane.f32.xlu0 %v1790
      %v1822 = vpop.xlane.xlu0 %1821
      %1823 = vadd.xlane.f32.xlu0 %v1792
      %v1824 = vpop.xlane.xlu0 %1823
      %1825 = vadd.xlane.f32.xlu0 %v1794
      %v1826 = vpop.xlane.xlu0 %1825
      %1827 = vadd.xlane.f32.xlu0 %v1796
      %v1828 = vpop.xlane.xlu0 %1827
      %1829 = vadd.xlane.f32.xlu0 %v1798
      %v1830 = vpop.xlane.xlu0 %1829
      %1831 = vadd.xlane.f32.xlu0 %v1800
      %v1832 = vpop.xlane.xlu0 %1831
      %1833 = vadd.xlane.f32.xlu0 %v1802
      %v1834 = vpop.xlane.xlu0 %1833
      %v1835 = vrcp.pop %v1804
      %v1836 = vrcp.pop %v1806
      %v1837 = vrcp.pop %v1808
      %v1838 = vrcp.pop %v1810
      %v1839 = vrcp.pop %v1812
      %v1840 = vrcp.pop %v1814
      %v1841 = vrcp.pop %v1816
      %v1842 = vrcp.pop %v1818
      %v1843 = vrcp.pop %v1820
      %v1844 = vrcp.pop %v1822
      %v1845 = vrcp.pop %v1824
      %v1846 = vrcp.pop %v1826
      %v1847 = vrcp.pop %v1828
      %v1848 = vrcp.pop %v1830
      %v1849 = vrcp.pop %v1832
      %v1850 = vrcp.pop %v1834
      %v1851 = vmul.f32 %v1772, %v1835
      %v1852 = vmul.f32 %v1774, %v1836
      %v1853 = vmul.f32 %v1776, %v1837
      %v1854 = vmul.f32 %v1778, %v1838
      %v1855 = vmul.f32 %v1780, %v1839
      %v1856 = vmul.f32 %v1782, %v1840
      %v1857 = vmul.f32 %v1784, %v1841
      %v1858 = vmul.f32 %v1786, %v1842
      %v1859 = vmul.f32 %v1788, %v1843
      %v1860 = vmul.f32 %v1790, %v1844
      %v1861 = vmul.f32 %v1792, %v1845
      %v1862 = vmul.f32 %v1794, %v1846
      %v1863 = vmul.f32 %v1796, %v1847
      %v1864 = vmul.f32 %v1798, %v1848
      %v1865 = vmul.f32 %v1800, %v1849
      %v1866 = vmul.f32 %v1802, %v1850
      %v1867 = vpack.c.bf16 %v1852, %v1851
      %v1868 = vpack.c.bf16 %v1854, %v1853
      %v1869 = vpack.c.bf16 %v1856, %v1855
      %v1870 = vpack.c.bf16 %v1858, %v1857
      %v1871 = vpack.c.bf16 %v1860, %v1859
      %v1872 = vpack.c.bf16 %v1862, %v1861
      %v1873 = vpack.c.bf16 %v1864, %v1863
      %v1874 = vpack.c.bf16 %v1866, %v1865
      %1875 = vrot.lane.b32.xlu0 %v1247, 88
      %v1876 = vpop.permute.xlu0 %1875
      %1877 = vrot.lane.b32.xlu0 %v1248, 88
      %v1878 = vpop.permute.xlu0 %1877
      %1879 = vrot.lane.b32.xlu0 %v1249, 88
      %v1880 = vpop.permute.xlu0 %1879
      %1881 = vrot.lane.b32.xlu0 %v1250, 88
      %v1882 = vpop.permute.xlu0 %1881
      %1883 = vrot.lane.b32.xlu0 %v1251, 88
      %v1884 = vpop.permute.xlu0 %1883
      %1885 = vrot.lane.b32.xlu0 %v1252, 88
      %v1886 = vpop.permute.xlu0 %1885
      %1887 = vrot.lane.b32.xlu0 %v1253, 88
      %v1888 = vpop.permute.xlu0 %1887
      %1889 = vrot.lane.b32.xlu0 %v1254, 88
      %v1890 = vpop.permute.xlu0 %1889
      %1899 = vmatpush.bf16.msra.mxu0 %v1890
      %1900 = vmatpush.bf16.msra.mxu0 %v1888
      %1901 = vmatpush.bf16.msra.mxu0 %v1886
      %1902 = vmatpush.bf16.msra.mxu0 %v1884
      %1903 = vmatpush.bf16.msra.mxu0 %v1882
      %1904 = vmatpush.bf16.msra.mxu0 %v1880
      %1905 = vmatpush.bf16.msra.mxu0 %v1878
      %1906 = vmatpush.bf16.msra.mxu0 %v1876
      %1907 = vmatmul.bf16.gmra.mxu0 %v1867
      %v1908 = vpop.f32.mrf.mxu0
      %v1909 = vadd.f32 0.0, %v1908
      %v1910 = vpop.f32.mrf.mxu0
      %v1911 = vadd.f32 0.0, %v1910
      %1912 = vmatmul.bf16.gmra.mxu0 %v1868
      %v1913 = vpop.f32.mrf.mxu0
      %v1914 = vadd.f32 0.0, %v1913
      %v1915 = vpop.f32.mrf.mxu0
      %v1916 = vadd.f32 0.0, %v1915
      %1917 = vmatmul.bf16.gmra.mxu0 %v1869
      %v1918 = vpop.f32.mrf.mxu0
      %v1919 = vadd.f32 0.0, %v1918
      %v1920 = vpop.f32.mrf.mxu0
      %v1921 = vadd.f32 0.0, %v1920
      %1922 = vmatmul.bf16.gmra.mxu0 %v1870
      %v1923 = vpop.f32.mrf.mxu0
      %v1924 = vadd.f32 0.0, %v1923
      %v1925 = vpop.f32.mrf.mxu0
      %v1926 = vadd.f32 0.0, %v1925
      %1927 = vmatmul.bf16.gmra.mxu0 %v1871
      %v1928 = vpop.f32.mrf.mxu0
      %v1929 = vadd.f32 0.0, %v1928
      %v1930 = vpop.f32.mrf.mxu0
      %v1931 = vadd.f32 0.0, %v1930
      %1932 = vmatmul.bf16.gmra.mxu0 %v1872
      %v1933 = vpop.f32.mrf.mxu0
      %v1934 = vadd.f32 0.0, %v1933
      %v1935 = vpop.f32.mrf.mxu0
      %v1936 = vadd.f32 0.0, %v1935
      %1937 = vmatmul.bf16.gmra.mxu0 %v1873
      %v1938 = vpop.f32.mrf.mxu0
      %v1939 = vadd.f32 0.0, %v1938
      %v1940 = vpop.f32.mrf.mxu0
      %v1941 = vadd.f32 0.0, %v1940
      %1942 = vmatmul.bf16.gmra.mxu0 %v1874
      %v1943 = vpop.f32.mrf.mxu0
      %v1944 = vadd.f32 0.0, %v1943
      %v1945 = vpop.f32.mrf.mxu0
      %v1946 = vadd.f32 0.0, %v1945
      %1947 = vdwg.mxu0
      %1964 = vrot.lane.b32.xlu0 %v1909, 8
      %v1965 = vpop.permute.xlu0 %1964
      %1966 = vrot.lane.b32.xlu0 %v1911, 8
      %v1967 = vpop.permute.xlu0 %1966
      %1968 = vrot.lane.b32.xlu0 %v1914, 8
      %v1969 = vpop.permute.xlu0 %1968
      %1970 = vrot.lane.b32.xlu0 %v1916, 8
      %v1971 = vpop.permute.xlu0 %1970
      %1972 = vrot.lane.b32.xlu0 %v1919, 8
      %v1973 = vpop.permute.xlu0 %1972
      %1974 = vrot.lane.b32.xlu0 %v1921, 8
      %v1975 = vpop.permute.xlu0 %1974
      %1976 = vrot.lane.b32.xlu0 %v1924, 8
      %v1977 = vpop.permute.xlu0 %1976
      %1978 = vrot.lane.b32.xlu0 %v1926, 8
      %v1979 = vpop.permute.xlu0 %1978
      %1980 = vrot.lane.b32.xlu0 %v1929, 8
      %v1981 = vpop.permute.xlu0 %1980
      %1982 = vrot.lane.b32.xlu0 %v1931, 8
      %v1983 = vpop.permute.xlu0 %1982
      %1984 = vrot.lane.b32.xlu0 %v1934, 8
      %v1985 = vpop.permute.xlu0 %1984
      %1986 = vrot.lane.b32.xlu0 %v1936, 8
      %v1987 = vpop.permute.xlu0 %1986
      %1988 = vrot.lane.b32.xlu0 %v1939, 8
      %v1989 = vpop.permute.xlu0 %1988
      %1990 = vrot.lane.b32.xlu0 %v1941, 8
      %v1991 = vpop.permute.xlu0 %1990
      %1992 = vrot.lane.b32.xlu0 %v1944, 8
      %v1993 = vpop.permute.xlu0 %1992
      %1994 = vrot.lane.b32.xlu0 %v1946, 8
      %v1995 = vpop.permute.xlu0 %1994
      %vm2012 = vcmask 130112
      %2013 = vst.msk [vmem:[#allocation2] sm:$0xff] %vm2012, %v1965
      %2014 = vst.msk [vmem:[#allocation2 + $0x8] sm:$0xff] %vm2012, %v1967
      %2015 = vst.msk [vmem:[#allocation2 + $0x10] sm:$0xff] %vm2012, %v1969
      %2016 = vst.msk [vmem:[#allocation2 + $0x18] sm:$0xff] %vm2012, %v1971
      %2017 = vst.msk [vmem:[#allocation2 + $0x20] sm:$0xff] %vm2012, %v1973
      %2018 = vst.msk [vmem:[#allocation2 + $0x28] sm:$0xff] %vm2012, %v1975
      %2019 = vst.msk [vmem:[#allocation2 + $0x30] sm:$0xff] %vm2012, %v1977
      %2020 = vst.msk [vmem:[#allocation2 + $0x38] sm:$0xff] %vm2012, %v1979
      %2021 = vst.msk [vmem:[#allocation2 + $0x40] sm:$0xff] %vm2012, %v1981
      %2022 = vst.msk [vmem:[#allocation2 + $0x48] sm:$0xff] %vm2012, %v1983
      %2023 = vst.msk [vmem:[#allocation2 + $0x50] sm:$0xff] %vm2012, %v1985
      %2024 = vst.msk [vmem:[#allocation2 + $0x58] sm:$0xff] %vm2012, %v1987
      %2025 = vst.msk [vmem:[#allocation2 + $0x60] sm:$0xff] %vm2012, %v1989
      %2026 = vst.msk [vmem:[#allocation2 + $0x68] sm:$0xff] %vm2012, %v1991
      %2027 = vst.msk [vmem:[#allocation2 + $0x70] sm:$0xff] %vm2012, %v1993
      %2028 = vst.msk [vmem:[#allocation2 + $0x78] sm:$0xff] %vm2012, %v1995
      %2029 = vrot.lane.b32.xlu0 %v1207, 112
      %v2030 = vpop.permute.xlu0 %2029
      %2031 = vrot.lane.b32.xlu0 %v1208, 112
      %v2032 = vpop.permute.xlu0 %2031
      %2033 = vrot.lane.b32.xlu0 %v1209, 112
      %v2034 = vpop.permute.xlu0 %2033
      %2035 = vrot.lane.b32.xlu0 %v1210, 112
      %v2036 = vpop.permute.xlu0 %2035
      %2037 = vrot.lane.b32.xlu0 %v1211, 112
      %v2038 = vpop.permute.xlu0 %2037
      %2039 = vrot.lane.b32.xlu0 %v1212, 112
      %v2040 = vpop.permute.xlu0 %2039
      %2041 = vrot.lane.b32.xlu0 %v1213, 112
      %v2042 = vpop.permute.xlu0 %2041
      %2043 = vrot.lane.b32.xlu0 %v1214, 112
      %v2044 = vpop.permute.xlu0 %2043
      %2045 = vrot.lane.b32.xlu0 %v1247, 112
      %v2046 = vpop.permute.xlu0 %2045
      %2047 = vrot.lane.b32.xlu0 %v1248, 112
      %v2048 = vpop.permute.xlu0 %2047
      %2049 = vrot.lane.b32.xlu0 %v1249, 112
      %v2050 = vpop.permute.xlu0 %2049
      %2051 = vrot.lane.b32.xlu0 %v1250, 112
      %v2052 = vpop.permute.xlu0 %2051
      %2053 = vrot.lane.b32.xlu0 %v1251, 112
      %v2054 = vpop.permute.xlu0 %2053
      %2055 = vrot.lane.b32.xlu0 %v1252, 112
      %v2056 = vpop.permute.xlu0 %2055
      %2057 = vrot.lane.b32.xlu0 %v1253, 112
      %v2058 = vpop.permute.xlu0 %2057
      %2059 = vrot.lane.b32.xlu0 %v1254, 112
      %v2060 = vpop.permute.xlu0 %2059
      %v2062 = vsel %vm1255, %v2030, 0
      %v2065 = vsel %vm1255, %v2032, 0
      %v2068 = vsel %vm1255, %v2034, 0
      %v2071 = vsel %vm1255, %v2036, 0
      %v2074 = vsel %vm1255, %v2038, 0
      %v2077 = vsel %vm1255, %v2040, 0
      %v2080 = vsel %vm1255, %v2042, 0
      %v2083 = vsel %vm1255, %v2044, 0
      %v2086 = vsel %vm1255, %v2046, 0
      %v2089 = vsel %vm1255, %v2048, 0
      %v2092 = vsel %vm1255, %v2050, 0
      %v2095 = vsel %vm1255, %v2052, 0
      %v2098 = vsel %vm1255, %v2054, 0
      %v2101 = vsel %vm1255, %v2056, 0
      %v2104 = vsel %vm1255, %v2058, 0
      %v2107 = vsel %vm1255, %v2060, 0
      %2109 = vmatpush.bf16.xpose.msra.mxu0 %v2107
      %2110 = vmatpush.bf16.xpose.msra.mxu0 %v2104
      %2111 = vmatpush.bf16.xpose.msra.mxu0 %v2101
      %2112 = vmatpush.bf16.xpose.msra.mxu0 %v2098
      %2113 = vmatpush.bf16.xpose.msra.mxu0 %v2095
      %2114 = vmatpush.bf16.xpose.msra.mxu0 %v2092
      %2115 = vmatpush.bf16.xpose.msra.mxu0 %v2089
      %2116 = vmatpush.bf16.xpose.msra.mxu0 %v2086
      %2117 = vmatmul.bf16.gmra.mxu0 %v2062
      %v2118 = vpop.f32.mrf.mxu0
      %v2119 = vadd.f32 %v1066, %v2118
      %v2120 = vpop.f32.mrf.mxu0
      %v2121 = vadd.f32 %v1067, %v2120
      %2122 = vmatmul.bf16.gmra.mxu0 %v2065
      %v2123 = vpop.f32.mrf.mxu0
      %v2124 = vadd.f32 %v1068, %v2123
      %v2125 = vpop.f32.mrf.mxu0
      %v2126 = vadd.f32 %v1069, %v2125
      %2127 = vmatmul.bf16.gmra.mxu0 %v2068
      %v2128 = vpop.f32.mrf.mxu0
      %v2129 = vadd.f32 %v1070, %v2128
      %v2130 = vpop.f32.mrf.mxu0
      %v2131 = vadd.f32 %v1071, %v2130
      %2132 = vmatmul.bf16.gmra.mxu0 %v2071
      %v2133 = vpop.f32.mrf.mxu0
      %v2134 = vadd.f32 %v1072, %v2133
      %v2135 = vpop.f32.mrf.mxu0
      %v2136 = vadd.f32 %v1073, %v2135
      %2137 = vmatmul.bf16.gmra.mxu0 %v2074
      %v2138 = vpop.f32.mrf.mxu0
      %v2139 = vadd.f32 %v1074, %v2138
      %v2140 = vpop.f32.mrf.mxu0
      %v2141 = vadd.f32 %v1075, %v2140
      %2142 = vmatmul.bf16.gmra.mxu0 %v2077
      %v2143 = vpop.f32.mrf.mxu0
      %v2144 = vadd.f32 %v1076, %v2143
      %v2145 = vpop.f32.mrf.mxu0
      %v2146 = vadd.f32 %v1077, %v2145
      %2147 = vmatmul.bf16.gmra.mxu0 %v2080
      %v2148 = vpop.f32.mrf.mxu0
      %v2149 = vadd.f32 %v1078, %v2148
      %v2150 = vpop.f32.mrf.mxu0
      %v2151 = vadd.f32 %v1079, %v2150
      %2152 = vmatmul.bf16.gmra.mxu0 %v2083
      %v2153 = vpop.f32.mrf.mxu0
      %v2154 = vadd.f32 %v1080, %v2153
      %v2155 = vpop.f32.mrf.mxu0
      %v2156 = vadd.f32 %v1081, %v2155
      %2157 = vdwg.mxu0
      %2158 = vmax.xlane.f32.xlu0 %v2119
      %v2159 = vpop.xlane.xlu0 %2158
      %2160 = vmax.xlane.f32.xlu0 %v2121
      %v2161 = vpop.xlane.xlu0 %2160
      %2162 = vmax.xlane.f32.xlu0 %v2124
      %v2163 = vpop.xlane.xlu0 %2162
      %2164 = vmax.xlane.f32.xlu0 %v2126
      %v2165 = vpop.xlane.xlu0 %2164
      %2166 = vmax.xlane.f32.xlu0 %v2129
      %v2167 = vpop.xlane.xlu0 %2166
      %2168 = vmax.xlane.f32.xlu0 %v2131
      %v2169 = vpop.xlane.xlu0 %2168
      %2170 = vmax.xlane.f32.xlu0 %v2134
      %v2171 = vpop.xlane.xlu0 %2170
      %2172 = vmax.xlane.f32.xlu0 %v2136
      %v2173 = vpop.xlane.xlu0 %2172
      %2174 = vmax.xlane.f32.xlu0 %v2139
      %v2175 = vpop.xlane.xlu0 %2174
      %2176 = vmax.xlane.f32.xlu0 %v2141
      %v2177 = vpop.xlane.xlu0 %2176
      %2178 = vmax.xlane.f32.xlu0 %v2144
      %v2179 = vpop.xlane.xlu0 %2178
      %2180 = vmax.xlane.f32.xlu0 %v2146
      %v2181 = vpop.xlane.xlu0 %2180
      %2182 = vmax.xlane.f32.xlu0 %v2149
      %v2183 = vpop.xlane.xlu0 %2182
      %2184 = vmax.xlane.f32.xlu0 %v2151
      %v2185 = vpop.xlane.xlu0 %2184
      %2186 = vmax.xlane.f32.xlu0 %v2154
      %v2187 = vpop.xlane.xlu0 %2186
      %2188 = vmax.xlane.f32.xlu0 %v2156
      %v2189 = vpop.xlane.xlu0 %2188
      %v2190 = vsub.f32 %v2119, %v2159
      %v2191 = vsub.f32 %v2121, %v2161
      %v2192 = vsub.f32 %v2124, %v2163
      %v2193 = vsub.f32 %v2126, %v2165
      %v2194 = vsub.f32 %v2129, %v2167
      %v2195 = vsub.f32 %v2131, %v2169
      %v2196 = vsub.f32 %v2134, %v2171
      %v2197 = vsub.f32 %v2136, %v2173
      %v2198 = vsub.f32 %v2139, %v2175
      %v2199 = vsub.f32 %v2141, %v2177
      %v2200 = vsub.f32 %v2144, %v2179
      %v2201 = vsub.f32 %v2146, %v2181
      %v2202 = vsub.f32 %v2149, %v2183
      %v2203 = vsub.f32 %v2151, %v2185
      %v2204 = vsub.f32 %v2154, %v2187
      %v2205 = vsub.f32 %v2156, %v2189
      %v2206 = vmul.f32 %v2190, 1.442695
      %v2207 = vpow.pop %v2206
      %v2208 = vmul.f32 %v2191, 1.442695
      %v2209 = vpow.pop %v2208
      %v2210 = vmul.f32 %v2192, 1.442695
      %v2211 = vpow.pop %v2210
      %v2212 = vmul.f32 %v2193, 1.442695
      %v2213 = vpow.pop %v2212
      %v2214 = vmul.f32 %v2194, 1.442695
      %v2215 = vpow.pop %v2214
      %v2216 = vmul.f32 %v2195, 1.442695
      %v2217 = vpow.pop %v2216
      %v2218 = vmul.f32 %v2196, 1.442695
      %v2219 = vpow.pop %v2218
      %v2220 = vmul.f32 %v2197, 1.442695
      %v2221 = vpow.pop %v2220
      %v2222 = vmul.f32 %v2198, 1.442695
      %v2223 = vpow.pop %v2222
      %v2224 = vmul.f32 %v2199, 1.442695
      %v2225 = vpow.pop %v2224
      %v2226 = vmul.f32 %v2200, 1.442695
      %v2227 = vpow.pop %v2226
      %v2228 = vmul.f32 %v2201, 1.442695
      %v2229 = vpow.pop %v2228
      %v2230 = vmul.f32 %v2202, 1.442695
      %v2231 = vpow.pop %v2230
      %v2232 = vmul.f32 %v2203, 1.442695
      %v2233 = vpow.pop %v2232
      %v2234 = vmul.f32 %v2204, 1.442695
      %v2235 = vpow.pop %v2234
      %v2236 = vmul.f32 %v2205, 1.442695
      %v2237 = vpow.pop %v2236
      %2238 = vadd.xlane.f32.xlu0 %v2207
      %v2239 = vpop.xlane.xlu0 %2238
      %2240 = vadd.xlane.f32.xlu0 %v2209
      %v2241 = vpop.xlane.xlu0 %2240
      %2242 = vadd.xlane.f32.xlu0 %v2211
      %v2243 = vpop.xlane.xlu0 %2242
      %2244 = vadd.xlane.f32.xlu0 %v2213
      %v2245 = vpop.xlane.xlu0 %2244
      %2246 = vadd.xlane.f32.xlu0 %v2215
      %v2247 = vpop.xlane.xlu0 %2246
      %2248 = vadd.xlane.f32.xlu0 %v2217
      %v2249 = vpop.xlane.xlu0 %2248
      %2250 = vadd.xlane.f32.xlu0 %v2219
      %v2251 = vpop.xlane.xlu0 %2250
      %2252 = vadd.xlane.f32.xlu0 %v2221
      %v2253 = vpop.xlane.xlu0 %2252
      %2254 = vadd.xlane.f32.xlu0 %v2223
      %v2255 = vpop.xlane.xlu0 %2254
      %2256 = vadd.xlane.f32.xlu0 %v2225
      %v2257 = vpop.xlane.xlu0 %2256
      %2258 = vadd.xlane.f32.xlu0 %v2227
      %v2259 = vpop.xlane.xlu0 %2258
      %2260 = vadd.xlane.f32.xlu0 %v2229
      %v2261 = vpop.xlane.xlu0 %2260
      %2262 = vadd.xlane.f32.xlu0 %v2231
      %v2263 = vpop.xlane.xlu0 %2262
      %2264 = vadd.xlane.f32.xlu0 %v2233
      %v2265 = vpop.xlane.xlu0 %2264
      %2266 = vadd.xlane.f32.xlu0 %v2235
      %v2267 = vpop.xlane.xlu0 %2266
      %2268 = vadd.xlane.f32.xlu0 %v2237
      %v2269 = vpop.xlane.xlu0 %2268
      %v2270 = vrcp.pop %v2239
      %v2271 = vrcp.pop %v2241
      %v2272 = vrcp.pop %v2243
      %v2273 = vrcp.pop %v2245
      %v2274 = vrcp.pop %v2247
      %v2275 = vrcp.pop %v2249
      %v2276 = vrcp.pop %v2251
      %v2277 = vrcp.pop %v2253
      %v2278 = vrcp.pop %v2255
      %v2279 = vrcp.pop %v2257
      %v2280 = vrcp.pop %v2259
      %v2281 = vrcp.pop %v2261
      %v2282 = vrcp.pop %v2263
      %v2283 = vrcp.pop %v2265
      %v2284 = vrcp.pop %v2267
      %v2285 = vrcp.pop %v2269
      %v2286 = vmul.f32 %v2207, %v2270
      %v2287 = vmul.f32 %v2209, %v2271
      %v2288 = vmul.f32 %v2211, %v2272
      %v2289 = vmul.f32 %v2213, %v2273
      %v2290 = vmul.f32 %v2215, %v2274
      %v2291 = vmul.f32 %v2217, %v2275
      %v2292 = vmul.f32 %v2219, %v2276
      %v2293 = vmul.f32 %v2221, %v2277
      %v2294 = vmul.f32 %v2223, %v2278
      %v2295 = vmul.f32 %v2225, %v2279
      %v2296 = vmul.f32 %v2227, %v2280
      %v2297 = vmul.f32 %v2229, %v2281
      %v2298 = vmul.f32 %v2231, %v2282
      %v2299 = vmul.f32 %v2233, %v2283
      %v2300 = vmul.f32 %v2235, %v2284
      %v2301 = vmul.f32 %v2237, %v2285
      %v2302 = vpack.c.bf16 %v2287, %v2286
      %v2303 = vpack.c.bf16 %v2289, %v2288
      %v2304 = vpack.c.bf16 %v2291, %v2290
      %v2305 = vpack.c.bf16 %v2293, %v2292
      %v2306 = vpack.c.bf16 %v2295, %v2294
      %v2307 = vpack.c.bf16 %v2297, %v2296
      %v2308 = vpack.c.bf16 %v2299, %v2298
      %v2309 = vpack.c.bf16 %v2301, %v2300
      %2310 = vrot.lane.b32.xlu0 %v1247, 80
      %v2311 = vpop.permute.xlu0 %2310
      %2312 = vrot.lane.b32.xlu0 %v1248, 80
      %v2313 = vpop.permute.xlu0 %2312
      %2314 = vrot.lane.b32.xlu0 %v1249, 80
      %v2315 = vpop.permute.xlu0 %2314
      %2316 = vrot.lane.b32.xlu0 %v1250, 80
      %v2317 = vpop.permute.xlu0 %2316
      %2318 = vrot.lane.b32.xlu0 %v1251, 80
      %v2319 = vpop.permute.xlu0 %2318
      %2320 = vrot.lane.b32.xlu0 %v1252, 80
      %v2321 = vpop.permute.xlu0 %2320
      %2322 = vrot.lane.b32.xlu0 %v1253, 80
      %v2323 = vpop.permute.xlu0 %2322
      %2324 = vrot.lane.b32.xlu0 %v1254, 80
      %v2325 = vpop.permute.xlu0 %2324
      %2334 = vmatpush.bf16.msra.mxu0 %v2325
      %2335 = vmatpush.bf16.msra.mxu0 %v2323
      %2336 = vmatpush.bf16.msra.mxu0 %v2321
      %2337 = vmatpush.bf16.msra.mxu0 %v2319
      %2338 = vmatpush.bf16.msra.mxu0 %v2317
      %2339 = vmatpush.bf16.msra.mxu0 %v2315
      %2340 = vmatpush.bf16.msra.mxu0 %v2313
      %2341 = vmatpush.bf16.msra.mxu0 %v2311
      %2342 = vmatmul.bf16.gmra.mxu0 %v2302
      %v2343 = vpop.f32.mrf.mxu0
      %v2344 = vadd.f32 0.0, %v2343
      %v2345 = vpop.f32.mrf.mxu0
      %v2346 = vadd.f32 0.0, %v2345
      %2347 = vmatmul.bf16.gmra.mxu0 %v2303
      %v2348 = vpop.f32.mrf.mxu0
      %v2349 = vadd.f32 0.0, %v2348
      %v2350 = vpop.f32.mrf.mxu0
      %v2351 = vadd.f32 0.0, %v2350
      %2352 = vmatmul.bf16.gmra.mxu0 %v2304
      %v2353 = vpop.f32.mrf.mxu0
      %v2354 = vadd.f32 0.0, %v2353
      %v2355 = vpop.f32.mrf.mxu0
      %v2356 = vadd.f32 0.0, %v2355
      %2357 = vmatmul.bf16.gmra.mxu0 %v2305
      %v2358 = vpop.f32.mrf.mxu0
      %v2359 = vadd.f32 0.0, %v2358
      %v2360 = vpop.f32.mrf.mxu0
      %v2361 = vadd.f32 0.0, %v2360
      %2362 = vmatmul.bf16.gmra.mxu0 %v2306
      %v2363 = vpop.f32.mrf.mxu0
      %v2364 = vadd.f32 0.0, %v2363
      %v2365 = vpop.f32.mrf.mxu0
      %v2366 = vadd.f32 0.0, %v2365
      %2367 = vmatmul.bf16.gmra.mxu0 %v2307
      %v2368 = vpop.f32.mrf.mxu0
      %v2369 = vadd.f32 0.0, %v2368
      %v2370 = vpop.f32.mrf.mxu0
      %v2371 = vadd.f32 0.0, %v2370
      %2372 = vmatmul.bf16.gmra.mxu0 %v2308
      %v2373 = vpop.f32.mrf.mxu0
      %v2374 = vadd.f32 0.0, %v2373
      %v2375 = vpop.f32.mrf.mxu0
      %v2376 = vadd.f32 0.0, %v2375
      %2377 = vmatmul.bf16.gmra.mxu0 %v2309
      %v2378 = vpop.f32.mrf.mxu0
      %v2379 = vadd.f32 0.0, %v2378
      %v2380 = vpop.f32.mrf.mxu0
      %v2381 = vadd.f32 0.0, %v2380
      %2382 = vdwg.mxu0
      %2399 = vrot.lane.b32.xlu0 %v2344, 16
      %v2400 = vpop.permute.xlu0 %2399
      %2401 = vrot.lane.b32.xlu0 %v2346, 16
      %v2402 = vpop.permute.xlu0 %2401
      %2403 = vrot.lane.b32.xlu0 %v2349, 16
      %v2404 = vpop.permute.xlu0 %2403
      %2405 = vrot.lane.b32.xlu0 %v2351, 16
      %v2406 = vpop.permute.xlu0 %2405
      %2407 = vrot.lane.b32.xlu0 %v2354, 16
      %v2408 = vpop.permute.xlu0 %2407
      %2409 = vrot.lane.b32.xlu0 %v2356, 16
      %v2410 = vpop.permute.xlu0 %2409
      %2411 = vrot.lane.b32.xlu0 %v2359, 16
      %v2412 = vpop.permute.xlu0 %2411
      %2413 = vrot.lane.b32.xlu0 %v2361, 16
      %v2414 = vpop.permute.xlu0 %2413
      %2415 = vrot.lane.b32.xlu0 %v2364, 16
      %v2416 = vpop.permute.xlu0 %2415
      %2417 = vrot.lane.b32.xlu0 %v2366, 16
      %v2418 = vpop.permute.xlu0 %2417
      %2419 = vrot.lane.b32.xlu0 %v2369, 16
      %v2420 = vpop.permute.xlu0 %2419
      %2421 = vrot.lane.b32.xlu0 %v2371, 16
      %v2422 = vpop.permute.xlu0 %2421
      %2423 = vrot.lane.b32.xlu0 %v2374, 16
      %v2424 = vpop.permute.xlu0 %2423
      %2425 = vrot.lane.b32.xlu0 %v2376, 16
      %v2426 = vpop.permute.xlu0 %2425
      %2427 = vrot.lane.b32.xlu0 %v2379, 16
      %v2428 = vpop.permute.xlu0 %2427
      %2429 = vrot.lane.b32.xlu0 %v2381, 16
      %v2430 = vpop.permute.xlu0 %2429
      %vm2447 = vcmask 195712
      %2448 = vst.msk [vmem:[#allocation2] sm:$0xff] %vm2447, %v2400
      %2449 = vst.msk [vmem:[#allocation2 + $0x8] sm:$0xff] %vm2447, %v2402
      %2450 = vst.msk [vmem:[#allocation2 + $0x10] sm:$0xff] %vm2447, %v2404
      %2451 = vst.msk [vmem:[#allocation2 + $0x18] sm:$0xff] %vm2447, %v2406
      %2452 = vst.msk [vmem:[#allocation2 + $0x20] sm:$0xff] %vm2447, %v2408
      %2453 = vst.msk [vmem:[#allocation2 + $0x28] sm:$0xff] %vm2447, %v2410
      %2454 = vst.msk [vmem:[#allocation2 + $0x30] sm:$0xff] %vm2447, %v2412
      %2455 = vst.msk [vmem:[#allocation2 + $0x38] sm:$0xff] %vm2447, %v2414
      %2456 = vst.msk [vmem:[#allocation2 + $0x40] sm:$0xff] %vm2447, %v2416
      %2457 = vst.msk [vmem:[#allocation2 + $0x48] sm:$0xff] %vm2447, %v2418
      %2458 = vst.msk [vmem:[#allocation2 + $0x50] sm:$0xff] %vm2447, %v2420
      %2459 = vst.msk [vmem:[#allocation2 + $0x58] sm:$0xff] %vm2447, %v2422
      %2460 = vst.msk [vmem:[#allocation2 + $0x60] sm:$0xff] %vm2447, %v2424
      %2461 = vst.msk [vmem:[#allocation2 + $0x68] sm:$0xff] %vm2447, %v2426
      %2462 = vst.msk [vmem:[#allocation2 + $0x70] sm:$0xff] %vm2447, %v2428
      %2463 = vst.msk [vmem:[#allocation2 + $0x78] sm:$0xff] %vm2447, %v2430
      %2464 = vrot.lane.b32.xlu0 %v1207, 104
      %v2465 = vpop.permute.xlu0 %2464
      %2466 = vrot.lane.b32.xlu0 %v1208, 104
      %v2467 = vpop.permute.xlu0 %2466
      %2468 = vrot.lane.b32.xlu0 %v1209, 104
      %v2469 = vpop.permute.xlu0 %2468
      %2470 = vrot.lane.b32.xlu0 %v1210, 104
      %v2471 = vpop.permute.xlu0 %2470
      %2472 = vrot.lane.b32.xlu0 %v1211, 104
      %v2473 = vpop.permute.xlu0 %2472
      %2474 = vrot.lane.b32.xlu0 %v1212, 104
      %v2475 = vpop.permute.xlu0 %2474
      %2476 = vrot.lane.b32.xlu0 %v1213, 104
      %v2477 = vpop.permute.xlu0 %2476
      %2478 = vrot.lane.b32.xlu0 %v1214, 104
      %v2479 = vpop.permute.xlu0 %2478
      %2480 = vrot.lane.b32.xlu0 %v1247, 104
      %v2481 = vpop.permute.xlu0 %2480
      %2482 = vrot.lane.b32.xlu0 %v1248, 104
      %v2483 = vpop.permute.xlu0 %2482
      %2484 = vrot.lane.b32.xlu0 %v1249, 104
      %v2485 = vpop.permute.xlu0 %2484
      %2486 = vrot.lane.b32.xlu0 %v1250, 104
      %v2487 = vpop.permute.xlu0 %2486
      %2488 = vrot.lane.b32.xlu0 %v1251, 104
      %v2489 = vpop.permute.xlu0 %2488
      %2490 = vrot.lane.b32.xlu0 %v1252, 104
      %v2491 = vpop.permute.xlu0 %2490
      %2492 = vrot.lane.b32.xlu0 %v1253, 104
      %v2493 = vpop.permute.xlu0 %2492
      %2494 = vrot.lane.b32.xlu0 %v1254, 104
      %v2495 = vpop.permute.xlu0 %2494
      %v2497 = vsel %vm1255, %v2465, 0
      %v2500 = vsel %vm1255, %v2467, 0
      %v2503 = vsel %vm1255, %v2469, 0
      %v2506 = vsel %vm1255, %v2471, 0
      %v2509 = vsel %vm1255, %v2473, 0
      %v2512 = vsel %vm1255, %v2475, 0
      %v2515 = vsel %vm1255, %v2477, 0
      %v2518 = vsel %vm1255, %v2479, 0
      %v2521 = vsel %vm1255, %v2481, 0
      %v2524 = vsel %vm1255, %v2483, 0
      %v2527 = vsel %vm1255, %v2485, 0
      %v2530 = vsel %vm1255, %v2487, 0
      %v2533 = vsel %vm1255, %v2489, 0
      %v2536 = vsel %vm1255, %v2491, 0
      %v2539 = vsel %vm1255, %v2493, 0
      %v2542 = vsel %vm1255, %v2495, 0
      %2544 = vmatpush.bf16.xpose.msra.mxu0 %v2542
      %2545 = vmatpush.bf16.xpose.msra.mxu0 %v2539
      %2546 = vmatpush.bf16.xpose.msra.mxu0 %v2536
      %2547 = vmatpush.bf16.xpose.msra.mxu0 %v2533
      %2548 = vmatpush.bf16.xpose.msra.mxu0 %v2530
      %2549 = vmatpush.bf16.xpose.msra.mxu0 %v2527
      %2550 = vmatpush.bf16.xpose.msra.mxu0 %v2524
      %2551 = vmatpush.bf16.xpose.msra.mxu0 %v2521
      %2552 = vmatmul.bf16.gmra.mxu0 %v2497
      %v2553 = vpop.f32.mrf.mxu0
      %v2554 = vadd.f32 %v1066, %v2553
      %v2555 = vpop.f32.mrf.mxu0
      %v2556 = vadd.f32 %v1067, %v2555
      %2557 = vmatmul.bf16.gmra.mxu0 %v2500
      %v2558 = vpop.f32.mrf.mxu0
      %v2559 = vadd.f32 %v1068, %v2558
      %v2560 = vpop.f32.mrf.mxu0
      %v2561 = vadd.f32 %v1069, %v2560
      %2562 = vmatmul.bf16.gmra.mxu0 %v2503
      %v2563 = vpop.f32.mrf.mxu0
      %v2564 = vadd.f32 %v1070, %v2563
      %v2565 = vpop.f32.mrf.mxu0
      %v2566 = vadd.f32 %v1071, %v2565
      %2567 = vmatmul.bf16.gmra.mxu0 %v2506
      %v2568 = vpop.f32.mrf.mxu0
      %v2569 = vadd.f32 %v1072, %v2568
      %v2570 = vpop.f32.mrf.mxu0
      %v2571 = vadd.f32 %v1073, %v2570
      %2572 = vmatmul.bf16.gmra.mxu0 %v2509
      %v2573 = vpop.f32.mrf.mxu0
      %v2574 = vadd.f32 %v1074, %v2573
      %v2575 = vpop.f32.mrf.mxu0
      %v2576 = vadd.f32 %v1075, %v2575
      %2577 = vmatmul.bf16.gmra.mxu0 %v2512
      %v2578 = vpop.f32.mrf.mxu0
      %v2579 = vadd.f32 %v1076, %v2578
      %v2580 = vpop.f32.mrf.mxu0
      %v2581 = vadd.f32 %v1077, %v2580
      %2582 = vmatmul.bf16.gmra.mxu0 %v2515
      %v2583 = vpop.f32.mrf.mxu0
      %v2584 = vadd.f32 %v1078, %v2583
      %v2585 = vpop.f32.mrf.mxu0
      %v2586 = vadd.f32 %v1079, %v2585
      %2587 = vmatmul.bf16.gmra.mxu0 %v2518
      %v2588 = vpop.f32.mrf.mxu0
      %v2589 = vadd.f32 %v1080, %v2588
      %v2590 = vpop.f32.mrf.mxu0
      %v2591 = vadd.f32 %v1081, %v2590
      %2592 = vdwg.mxu0
      %2593 = vmax.xlane.f32.xlu0 %v2554
      %v2594 = vpop.xlane.xlu0 %2593
      %2595 = vmax.xlane.f32.xlu0 %v2556
      %v2596 = vpop.xlane.xlu0 %2595
      %2597 = vmax.xlane.f32.xlu0 %v2559
      %v2598 = vpop.xlane.xlu0 %2597
      %2599 = vmax.xlane.f32.xlu0 %v2561
      %v2600 = vpop.xlane.xlu0 %2599
      %2601 = vmax.xlane.f32.xlu0 %v2564
      %v2602 = vpop.xlane.xlu0 %2601
      %2603 = vmax.xlane.f32.xlu0 %v2566
      %v2604 = vpop.xlane.xlu0 %2603
      %2605 = vmax.xlane.f32.xlu0 %v2569
      %v2606 = vpop.xlane.xlu0 %2605
      %2607 = vmax.xlane.f32.xlu0 %v2571
      %v2608 = vpop.xlane.xlu0 %2607
      %2609 = vmax.xlane.f32.xlu0 %v2574
      %v2610 = vpop.xlane.xlu0 %2609
      %2611 = vmax.xlane.f32.xlu0 %v2576
      %v2612 = vpop.xlane.xlu0 %2611
      %2613 = vmax.xlane.f32.xlu0 %v2579
      %v2614 = vpop.xlane.xlu0 %2613
      %2615 = vmax.xlane.f32.xlu0 %v2581
      %v2616 = vpop.xlane.xlu0 %2615
      %2617 = vmax.xlane.f32.xlu0 %v2584
      %v2618 = vpop.xlane.xlu0 %2617
      %2619 = vmax.xlane.f32.xlu0 %v2586
      %v2620 = vpop.xlane.xlu0 %2619
      %2621 = vmax.xlane.f32.xlu0 %v2589
      %v2622 = vpop.xlane.xlu0 %2621
      %2623 = vmax.xlane.f32.xlu0 %v2591
      %v2624 = vpop.xlane.xlu0 %2623
      %v2625 = vsub.f32 %v2554, %v2594
      %v2626 = vsub.f32 %v2556, %v2596
      %v2627 = vsub.f32 %v2559, %v2598
      %v2628 = vsub.f32 %v2561, %v2600
      %v2629 = vsub.f32 %v2564, %v2602
      %v2630 = vsub.f32 %v2566, %v2604
      %v2631 = vsub.f32 %v2569, %v2606
      %v2632 = vsub.f32 %v2571, %v2608
      %v2633 = vsub.f32 %v2574, %v2610
      %v2634 = vsub.f32 %v2576, %v2612
      %v2635 = vsub.f32 %v2579, %v2614
      %v2636 = vsub.f32 %v2581, %v2616
      %v2637 = vsub.f32 %v2584, %v2618
      %v2638 = vsub.f32 %v2586, %v2620
      %v2639 = vsub.f32 %v2589, %v2622
      %v2640 = vsub.f32 %v2591, %v2624
      %v2641 = vmul.f32 %v2625, 1.442695
      %v2642 = vpow.pop %v2641
      %v2643 = vmul.f32 %v2626, 1.442695
      %v2644 = vpow.pop %v2643
      %v2645 = vmul.f32 %v2627, 1.442695
      %v2646 = vpow.pop %v2645
      %v2647 = vmul.f32 %v2628, 1.442695
      %v2648 = vpow.pop %v2647
      %v2649 = vmul.f32 %v2629, 1.442695
      %v2650 = vpow.pop %v2649
      %v2651 = vmul.f32 %v2630, 1.442695
      %v2652 = vpow.pop %v2651
      %v2653 = vmul.f32 %v2631, 1.442695
      %v2654 = vpow.pop %v2653
      %v2655 = vmul.f32 %v2632, 1.442695
      %v2656 = vpow.pop %v2655
      %v2657 = vmul.f32 %v2633, 1.442695
      %v2658 = vpow.pop %v2657
      %v2659 = vmul.f32 %v2634, 1.442695
      %v2660 = vpow.pop %v2659
      %v2661 = vmul.f32 %v2635, 1.442695
      %v2662 = vpow.pop %v2661
      %v2663 = vmul.f32 %v2636, 1.442695
      %v2664 = vpow.pop %v2663
      %v2665 = vmul.f32 %v2637, 1.442695
      %v2666 = vpow.pop %v2665
      %v2667 = vmul.f32 %v2638, 1.442695
      %v2668 = vpow.pop %v2667
      %v2669 = vmul.f32 %v2639, 1.442695
      %v2670 = vpow.pop %v2669
      %v2671 = vmul.f32 %v2640, 1.442695
      %v2672 = vpow.pop %v2671
      %2673 = vadd.xlane.f32.xlu0 %v2642
      %v2674 = vpop.xlane.xlu0 %2673
      %2675 = vadd.xlane.f32.xlu0 %v2644
      %v2676 = vpop.xlane.xlu0 %2675
      %2677 = vadd.xlane.f32.xlu0 %v2646
      %v2678 = vpop.xlane.xlu0 %2677
      %2679 = vadd.xlane.f32.xlu0 %v2648
      %v2680 = vpop.xlane.xlu0 %2679
      %2681 = vadd.xlane.f32.xlu0 %v2650
      %v2682 = vpop.xlane.xlu0 %2681
      %2683 = vadd.xlane.f32.xlu0 %v2652
      %v2684 = vpop.xlane.xlu0 %2683
      %2685 = vadd.xlane.f32.xlu0 %v2654
      %v2686 = vpop.xlane.xlu0 %2685
      %2687 = vadd.xlane.f32.xlu0 %v2656
      %v2688 = vpop.xlane.xlu0 %2687
      %2689 = vadd.xlane.f32.xlu0 %v2658
      %v2690 = vpop.xlane.xlu0 %2689
      %2691 = vadd.xlane.f32.xlu0 %v2660
      %v2692 = vpop.xlane.xlu0 %2691
      %2693 = vadd.xlane.f32.xlu0 %v2662
      %v2694 = vpop.xlane.xlu0 %2693
      %2695 = vadd.xlane.f32.xlu0 %v2664
      %v2696 = vpop.xlane.xlu0 %2695
      %2697 = vadd.xlane.f32.xlu0 %v2666
      %v2698 = vpop.xlane.xlu0 %2697
      %2699 = vadd.xlane.f32.xlu0 %v2668
      %v2700 = vpop.xlane.xlu0 %2699
      %2701 = vadd.xlane.f32.xlu0 %v2670
      %v2702 = vpop.xlane.xlu0 %2701
      %2703 = vadd.xlane.f32.xlu0 %v2672
      %v2704 = vpop.xlane.xlu0 %2703
      %v2705 = vrcp.pop %v2674
      %v2706 = vrcp.pop %v2676
      %v2707 = vrcp.pop %v2678
      %v2708 = vrcp.pop %v2680
      %v2709 = vrcp.pop %v2682
      %v2710 = vrcp.pop %v2684
      %v2711 = vrcp.pop %v2686
      %v2712 = vrcp.pop %v2688
      %v2713 = vrcp.pop %v2690
      %v2714 = vrcp.pop %v2692
      %v2715 = vrcp.pop %v2694
      %v2716 = vrcp.pop %v2696
      %v2717 = vrcp.pop %v2698
      %v2718 = vrcp.pop %v2700
      %v2719 = vrcp.pop %v2702
      %v2720 = vrcp.pop %v2704
      %v2721 = vmul.f32 %v2642, %v2705
      %v2722 = vmul.f32 %v2644, %v2706
      %v2723 = vmul.f32 %v2646, %v2707
      %v2724 = vmul.f32 %v2648, %v2708
      %v2725 = vmul.f32 %v2650, %v2709
      %v2726 = vmul.f32 %v2652, %v2710
      %v2727 = vmul.f32 %v2654, %v2711
      %v2728 = vmul.f32 %v2656, %v2712
      %v2729 = vmul.f32 %v2658, %v2713
      %v2730 = vmul.f32 %v2660, %v2714
      %v2731 = vmul.f32 %v2662, %v2715
      %v2732 = vmul.f32 %v2664, %v2716
      %v2733 = vmul.f32 %v2666, %v2717
      %v2734 = vmul.f32 %v2668, %v2718
      %v2735 = vmul.f32 %v2670, %v2719
      %v2736 = vmul.f32 %v2672, %v2720
      %v2737 = vpack.c.bf16 %v2722, %v2721
      %v2738 = vpack.c.bf16 %v2724, %v2723
      %v2739 = vpack.c.bf16 %v2726, %v2725
      %v2740 = vpack.c.bf16 %v2728, %v2727
      %v2741 = vpack.c.bf16 %v2730, %v2729
      %v2742 = vpack.c.bf16 %v2732, %v2731
      %v2743 = vpack.c.bf16 %v2734, %v2733
      %v2744 = vpack.c.bf16 %v2736, %v2735
      %2745 = vrot.lane.b32.xlu0 %v1247, 72
      %v2746 = vpop.permute.xlu0 %2745
      %2747 = vrot.lane.b32.xlu0 %v1248, 72
      %v2748 = vpop.permute.xlu0 %2747
      %2749 = vrot.lane.b32.xlu0 %v1249, 72
      %v2750 = vpop.permute.xlu0 %2749
      %2751 = vrot.lane.b32.xlu0 %v1250, 72
      %v2752 = vpop.permute.xlu0 %2751
      %2753 = vrot.lane.b32.xlu0 %v1251, 72
      %v2754 = vpop.permute.xlu0 %2753
      %2755 = vrot.lane.b32.xlu0 %v1252, 72
      %v2756 = vpop.permute.xlu0 %2755
      %2757 = vrot.lane.b32.xlu0 %v1253, 72
      %v2758 = vpop.permute.xlu0 %2757
      %2759 = vrot.lane.b32.xlu0 %v1254, 72
      %v2760 = vpop.permute.xlu0 %2759
      %2769 = vmatpush.bf16.msra.mxu0 %v2760
      %2770 = vmatpush.bf16.msra.mxu0 %v2758
      %2771 = vmatpush.bf16.msra.mxu0 %v2756
      %2772 = vmatpush.bf16.msra.mxu0 %v2754
      %2773 = vmatpush.bf16.msra.mxu0 %v2752
      %2774 = vmatpush.bf16.msra.mxu0 %v2750
      %2775 = vmatpush.bf16.msra.mxu0 %v2748
      %2776 = vmatpush.bf16.msra.mxu0 %v2746
      %2777 = vmatmul.bf16.gmra.mxu0 %v2737
      %v2778 = vpop.f32.mrf.mxu0
      %v2779 = vadd.f32 0.0, %v2778
      %v2780 = vpop.f32.mrf.mxu0
      %v2781 = vadd.f32 0.0, %v2780
      %2782 = vmatmul.bf16.gmra.mxu0 %v2738
      %v2783 = vpop.f32.mrf.mxu0
      %v2784 = vadd.f32 0.0, %v2783
      %v2785 = vpop.f32.mrf.mxu0
      %v2786 = vadd.f32 0.0, %v2785
      %2787 = vmatmul.bf16.gmra.mxu0 %v2739
      %v2788 = vpop.f32.mrf.mxu0
      %v2789 = vadd.f32 0.0, %v2788
      %v2790 = vpop.f32.mrf.mxu0
      %v2791 = vadd.f32 0.0, %v2790
      %2792 = vmatmul.bf16.gmra.mxu0 %v2740
      %v2793 = vpop.f32.mrf.mxu0
      %v2794 = vadd.f32 0.0, %v2793
      %v2795 = vpop.f32.mrf.mxu0
      %v2796 = vadd.f32 0.0, %v2795
      %2797 = vmatmul.bf16.gmra.mxu0 %v2741
      %v2798 = vpop.f32.mrf.mxu0
      %v2799 = vadd.f32 0.0, %v2798
      %v2800 = vpop.f32.mrf.mxu0
      %v2801 = vadd.f32 0.0, %v2800
      %2802 = vmatmul.bf16.gmra.mxu0 %v2742
      %v2803 = vpop.f32.mrf.mxu0
      %v2804 = vadd.f32 0.0, %v2803
      %v2805 = vpop.f32.mrf.mxu0
      %v2806 = vadd.f32 0.0, %v2805
      %2807 = vmatmul.bf16.gmra.mxu0 %v2743
      %v2808 = vpop.f32.mrf.mxu0
      %v2809 = vadd.f32 0.0, %v2808
      %v2810 = vpop.f32.mrf.mxu0
      %v2811 = vadd.f32 0.0, %v2810
      %2812 = vmatmul.bf16.gmra.mxu0 %v2744
      %v2813 = vpop.f32.mrf.mxu0
      %v2814 = vadd.f32 0.0, %v2813
      %v2815 = vpop.f32.mrf.mxu0
      %v2816 = vadd.f32 0.0, %v2815
      %2817 = vdwg.mxu0
      %2834 = vrot.lane.b32.xlu0 %v2779, 24
      %v2835 = vpop.permute.xlu0 %2834
      %2836 = vrot.lane.b32.xlu0 %v2781, 24
      %v2837 = vpop.permute.xlu0 %2836
      %2838 = vrot.lane.b32.xlu0 %v2784, 24
      %v2839 = vpop.permute.xlu0 %2838
      %2840 = vrot.lane.b32.xlu0 %v2786, 24
      %v2841 = vpop.permute.xlu0 %2840
      %2842 = vrot.lane.b32.xlu0 %v2789, 24
      %v2843 = vpop.permute.xlu0 %2842
      %2844 = vrot.lane.b32.xlu0 %v2791, 24
      %v2845 = vpop.permute.xlu0 %2844
      %2846 = vrot.lane.b32.xlu0 %v2794, 24
      %v2847 = vpop.permute.xlu0 %2846
      %2848 = vrot.lane.b32.xlu0 %v2796, 24
      %v2849 = vpop.permute.xlu0 %2848
      %2850 = vrot.lane.b32.xlu0 %v2799, 24
      %v2851 = vpop.permute.xlu0 %2850
      %2852 = vrot.lane.b32.xlu0 %v2801, 24
      %v2853 = vpop.permute.xlu0 %2852
      %2854 = vrot.lane.b32.xlu0 %v2804, 24
      %v2855 = vpop.permute.xlu0 %2854
      %2856 = vrot.lane.b32.xlu0 %v2806, 24
      %v2857 = vpop.permute.xlu0 %2856
      %2858 = vrot.lane.b32.xlu0 %v2809, 24
      %v2859 = vpop.permute.xlu0 %2858
      %2860 = vrot.lane.b32.xlu0 %v2811, 24
      %v2861 = vpop.permute.xlu0 %2860
      %2862 = vrot.lane.b32.xlu0 %v2814, 24
      %v2863 = vpop.permute.xlu0 %2862
      %2864 = vrot.lane.b32.xlu0 %v2816, 24
      %v2865 = vpop.permute.xlu0 %2864
      %vm2882 = vcmask 261312
      %2883 = vst.msk [vmem:[#allocation2] sm:$0xff] %vm2882, %v2835
      %2884 = vst.msk [vmem:[#allocation2 + $0x8] sm:$0xff] %vm2882, %v2837
      %2885 = vst.msk [vmem:[#allocation2 + $0x10] sm:$0xff] %vm2882, %v2839
      %2886 = vst.msk [vmem:[#allocation2 + $0x18] sm:$0xff] %vm2882, %v2841
      %2887 = vst.msk [vmem:[#allocation2 + $0x20] sm:$0xff] %vm2882, %v2843
      %2888 = vst.msk [vmem:[#allocation2 + $0x28] sm:$0xff] %vm2882, %v2845
      %2889 = vst.msk [vmem:[#allocation2 + $0x30] sm:$0xff] %vm2882, %v2847
      %2890 = vst.msk [vmem:[#allocation2 + $0x38] sm:$0xff] %vm2882, %v2849
      %2891 = vst.msk [vmem:[#allocation2 + $0x40] sm:$0xff] %vm2882, %v2851
      %2892 = vst.msk [vmem:[#allocation2 + $0x48] sm:$0xff] %vm2882, %v2853
      %2893 = vst.msk [vmem:[#allocation2 + $0x50] sm:$0xff] %vm2882, %v2855
      %2894 = vst.msk [vmem:[#allocation2 + $0x58] sm:$0xff] %vm2882, %v2857
      %2895 = vst.msk [vmem:[#allocation2 + $0x60] sm:$0xff] %vm2882, %v2859
      %2896 = vst.msk [vmem:[#allocation2 + $0x68] sm:$0xff] %vm2882, %v2861
      %2897 = vst.msk [vmem:[#allocation2 + $0x70] sm:$0xff] %vm2882, %v2863
      %2898 = vst.msk [vmem:[#allocation2 + $0x78] sm:$0xff] %vm2882, %v2865
      %v2899 = vld [vmem:[#allocation2] sm:$0xff]
      %v2900 = vld [vmem:[#allocation2 + $0x8] sm:$0xff]
      %v2901 = vld [vmem:[#allocation2 + $0x10] sm:$0xff]
      %v2902 = vld [vmem:[#allocation2 + $0x18] sm:$0xff]
      %v2903 = vld [vmem:[#allocation2 + $0x20] sm:$0xff]
      %v2904 = vld [vmem:[#allocation2 + $0x28] sm:$0xff]
      %v2905 = vld [vmem:[#allocation2 + $0x30] sm:$0xff]
      %v2906 = vld [vmem:[#allocation2 + $0x38] sm:$0xff]
      %v2907 = vld [vmem:[#allocation2 + $0x40] sm:$0xff]
      %v2908 = vld [vmem:[#allocation2 + $0x48] sm:$0xff]
      %v2909 = vld [vmem:[#allocation2 + $0x50] sm:$0xff]
      %v2910 = vld [vmem:[#allocation2 + $0x58] sm:$0xff]
      %v2911 = vld [vmem:[#allocation2 + $0x60] sm:$0xff]
      %v2912 = vld [vmem:[#allocation2 + $0x68] sm:$0xff]
      %v2913 = vld [vmem:[#allocation2 + $0x70] sm:$0xff]
      %v2914 = vld [vmem:[#allocation2 + $0x78] sm:$0xff]
      %v2915 = vpack.c.bf16 %v2900, %v2899
      %v2916 = vpack.c.bf16 %v2902, %v2901
      %v2917 = vpack.c.bf16 %v2904, %v2903
      %v2918 = vpack.c.bf16 %v2906, %v2905
      %v2919 = vpack.c.bf16 %v2908, %v2907
      %v2920 = vpack.c.bf16 %v2910, %v2909
      %v2921 = vpack.c.bf16 %v2912, %v2911
      %v2922 = vpack.c.bf16 %v2914, %v2913
      %v2927 = vunpack.c.l.b16 %v1011
      %v2928 = vunpack.c.l.b16 %v1012
      %v2929 = vunpack.c.l.b16 %v1013
      %v2930 = vunpack.c.l.b16 %v1014
      %v2931 = vpack.c.b16 %v2928, %v2927
      %v2932 = vpack.c.b16 %v2930, %v2929
      %v2936 = vsel %vm474, %v2915, 0
      %v2939 = vsel %vm474, %v2916, 0
      %v2942 = vsel %vm474, %v2917, 0
      %v2945 = vsel %vm474, %v2918, 0
      %v2948 = vsel %vm474, %v2919, 0
      %v2951 = vsel %vm474, %v2920, 0
      %v2954 = vsel %vm474, %v2921, 0
      %v2957 = vsel %vm474, %v2922, 0
      %2959 = vmatpush.bf16.msra.mxu0 0
      %2960 = vmatpush.bf16.msra.mxu0 0
      %2961 = vmatpush.bf16.msra.mxu0 0
      %2962 = vmatpush.bf16.msra.mxu0 0
      %2963 = vmatpush.bf16.msra.mxu0 0
      %2964 = vmatpush.bf16.msra.mxu0 0
      %2965 = vmatpush.bf16.msra.mxu0 %v2932
      %2966 = vmatpush.bf16.msra.mxu0 %v2931
      %2967 = vmatmul.bf16.gmra.mxu0 %v2936
      %v2968 = vpop.f32.mrf.mxu0
      %v2969 = vadd.f32 0.0, %v2968
      %v2970 = vpop.f32.mrf.mxu0
      %v2971 = vadd.f32 0.0, %v2970
      %2972 = vmatmul.bf16.gmra.mxu0 %v2939
      %v2973 = vpop.f32.mrf.mxu0
      %v2974 = vadd.f32 0.0, %v2973
      %v2975 = vpop.f32.mrf.mxu0
      %v2976 = vadd.f32 0.0, %v2975
      %2977 = vmatmul.bf16.gmra.mxu0 %v2942
      %v2978 = vpop.f32.mrf.mxu0
      %v2979 = vadd.f32 0.0, %v2978
      %v2980 = vpop.f32.mrf.mxu0
      %v2981 = vadd.f32 0.0, %v2980
      %2982 = vmatmul.bf16.gmra.mxu0 %v2945
      %v2983 = vpop.f32.mrf.mxu0
      %v2984 = vadd.f32 0.0, %v2983
      %v2985 = vpop.f32.mrf.mxu0
      %v2986 = vadd.f32 0.0, %v2985
      %2987 = vmatmul.bf16.gmra.mxu0 %v2948
      %v2988 = vpop.f32.mrf.mxu0
      %v2989 = vadd.f32 0.0, %v2988
      %v2990 = vpop.f32.mrf.mxu0
      %v2991 = vadd.f32 0.0, %v2990
      %2992 = vmatmul.bf16.gmra.mxu0 %v2951
      %v2993 = vpop.f32.mrf.mxu0
      %v2994 = vadd.f32 0.0, %v2993
      %v2995 = vpop.f32.mrf.mxu0
      %v2996 = vadd.f32 0.0, %v2995
      %2997 = vmatmul.bf16.gmra.mxu0 %v2954
      %v2998 = vpop.f32.mrf.mxu0
      %v2999 = vadd.f32 0.0, %v2998
      %v3000 = vpop.f32.mrf.mxu0
      %v3001 = vadd.f32 0.0, %v3000
      %3002 = vmatmul.bf16.gmra.mxu0 %v2957
      %v3003 = vpop.f32.mrf.mxu0
      %v3004 = vadd.f32 0.0, %v3003
      %v3005 = vpop.f32.mrf.mxu0
      %v3006 = vadd.f32 0.0, %v3005
      %3007 = vdwg.mxu0
      %v3008 = vadd.f32 %v856, %v2969
      %v3009 = vadd.f32 %v857, %v2971
      %v3010 = vadd.f32 %v858, %v2974
      %v3011 = vadd.f32 %v859, %v2976
      %v3012 = vadd.f32 %v860, %v2979
      %v3013 = vadd.f32 %v861, %v2981
      %v3014 = vadd.f32 %v862, %v2984
      %v3015 = vadd.f32 %v863, %v2986
      %v3016 = vadd.f32 %v864, %v2989
      %v3017 = vadd.f32 %v865, %v2991
      %v3018 = vadd.f32 %v866, %v2994
      %v3019 = vadd.f32 %v867, %v2996
      %v3020 = vadd.f32 %v868, %v2999
      %v3021 = vadd.f32 %v869, %v3001
      %v3022 = vadd.f32 %v870, %v3004
      %v3023 = vadd.f32 %v871, %v3006
      %v3024 = vsel %vm474, %v3008, 0.0
      %3025 = vadd.xlane.f32.xlu0 %v3024
      %v3026 = vpop.xlane.xlu0 %3025
      %v3027 = vsel %vm474, %v3009, 0.0
      %3028 = vadd.xlane.f32.xlu0 %v3027
      %v3029 = vpop.xlane.xlu0 %3028
      %v3030 = vsel %vm474, %v3010, 0.0
      %3031 = vadd.xlane.f32.xlu0 %v3030
      %v3032 = vpop.xlane.xlu0 %3031
      %v3033 = vsel %vm474, %v3011, 0.0
      %3034 = vadd.xlane.f32.xlu0 %v3033
      %v3035 = vpop.xlane.xlu0 %3034
      %v3036 = vsel %vm474, %v3012, 0.0
      %3037 = vadd.xlane.f32.xlu0 %v3036
      %v3038 = vpop.xlane.xlu0 %3037
      %v3039 = vsel %vm474, %v3013, 0.0
      %3040 = vadd.xlane.f32.xlu0 %v3039
      %v3041 = vpop.xlane.xlu0 %3040
      %v3042 = vsel %vm474, %v3014, 0.0
      %3043 = vadd.xlane.f32.xlu0 %v3042
      %v3044 = vpop.xlane.xlu0 %3043
      %v3045 = vsel %vm474, %v3015, 0.0
      %3046 = vadd.xlane.f32.xlu0 %v3045
      %v3047 = vpop.xlane.xlu0 %3046
      %v3048 = vsel %vm474, %v3016, 0.0
      %3049 = vadd.xlane.f32.xlu0 %v3048
      %v3050 = vpop.xlane.xlu0 %3049
      %v3051 = vsel %vm474, %v3017, 0.0
      %3052 = vadd.xlane.f32.xlu0 %v3051
      %v3053 = vpop.xlane.xlu0 %3052
      %v3054 = vsel %vm474, %v3018, 0.0
      %3055 = vadd.xlane.f32.xlu0 %v3054
      %v3056 = vpop.xlane.xlu0 %3055
      %v3057 = vsel %vm474, %v3019, 0.0
      %3058 = vadd.xlane.f32.xlu0 %v3057
      %v3059 = vpop.xlane.xlu0 %3058
      %v3060 = vsel %vm474, %v3020, 0.0
      %3061 = vadd.xlane.f32.xlu0 %v3060
      %v3062 = vpop.xlane.xlu0 %3061
      %v3063 = vsel %vm474, %v3021, 0.0
      %3064 = vadd.xlane.f32.xlu0 %v3063
      %v3065 = vpop.xlane.xlu0 %3064
      %v3066 = vsel %vm474, %v3022, 0.0
      %3067 = vadd.xlane.f32.xlu0 %v3066
      %v3068 = vpop.xlane.xlu0 %3067
      %v3069 = vsel %vm474, %v3023, 0.0
      %3070 = vadd.xlane.f32.xlu0 %v3069
      %v3071 = vpop.xlane.xlu0 %3070
      %v3072 = vmul.f32 %v3026, %v529
      %v3073 = vmul.f32 %v3029, %v529
      %v3074 = vmul.f32 %v3032, %v529
      %v3075 = vmul.f32 %v3035, %v529
      %v3076 = vmul.f32 %v3038, %v529
      %v3077 = vmul.f32 %v3041, %v529
      %v3078 = vmul.f32 %v3044, %v529
      %v3079 = vmul.f32 %v3047, %v529
      %v3080 = vmul.f32 %v3050, %v529
      %v3081 = vmul.f32 %v3053, %v529
      %v3082 = vmul.f32 %v3056, %v529
      %v3083 = vmul.f32 %v3059, %v529
      %v3084 = vmul.f32 %v3062, %v529
      %v3085 = vmul.f32 %v3065, %v529
      %v3086 = vmul.f32 %v3068, %v529
      %v3087 = vmul.f32 %v3071, %v529
      %v3088 = vsub.f32 %v3008, %v3072
      %v3089 = vsub.f32 %v3009, %v3073
      %v3090 = vsub.f32 %v3010, %v3074
      %v3091 = vsub.f32 %v3011, %v3075
      %v3092 = vsub.f32 %v3012, %v3076
      %v3093 = vsub.f32 %v3013, %v3077
      %v3094 = vsub.f32 %v3014, %v3078
      %v3095 = vsub.f32 %v3015, %v3079
      %v3096 = vsub.f32 %v3016, %v3080
      %v3097 = vsub.f32 %v3017, %v3081
      %v3098 = vsub.f32 %v3018, %v3082
      %v3099 = vsub.f32 %v3019, %v3083
      %v3100 = vsub.f32 %v3020, %v3084
      %v3101 = vsub.f32 %v3021, %v3085
      %v3102 = vsub.f32 %v3022, %v3086
      %v3103 = vsub.f32 %v3023, %v3087
      %v3104 = vmul.f32 %v3088, %v3088
      %v3105 = vmul.f32 %v3089, %v3089
      %v3106 = vmul.f32 %v3090, %v3090
      %v3107 = vmul.f32 %v3091, %v3091
      %v3108 = vmul.f32 %v3092, %v3092
      %v3109 = vmul.f32 %v3093, %v3093
      %v3110 = vmul.f32 %v3094, %v3094
      %v3111 = vmul.f32 %v3095, %v3095
      %v3112 = vmul.f32 %v3096, %v3096
      %v3113 = vmul.f32 %v3097, %v3097
      %v3114 = vmul.f32 %v3098, %v3098
      %v3115 = vmul.f32 %v3099, %v3099
      %v3116 = vmul.f32 %v3100, %v3100
      %v3117 = vmul.f32 %v3101, %v3101
      %v3118 = vmul.f32 %v3102, %v3102
      %v3119 = vmul.f32 %v3103, %v3103
      %v3120 = vsel %vm474, %v3104, 0.0
      %3121 = vadd.xlane.f32.xlu0 %v3120
      %v3122 = vpop.xlane.xlu0 %3121
      %v3123 = vsel %vm474, %v3105, 0.0
      %3124 = vadd.xlane.f32.xlu0 %v3123
      %v3125 = vpop.xlane.xlu0 %3124
      %v3126 = vsel %vm474, %v3106, 0.0
      %3127 = vadd.xlane.f32.xlu0 %v3126
      %v3128 = vpop.xlane.xlu0 %3127
      %v3129 = vsel %vm474, %v3107, 0.0
      %3130 = vadd.xlane.f32.xlu0 %v3129
      %v3131 = vpop.xlane.xlu0 %3130
      %v3132 = vsel %vm474, %v3108, 0.0
      %3133 = vadd.xlane.f32.xlu0 %v3132
      %v3134 = vpop.xlane.xlu0 %3133
      %v3135 = vsel %vm474, %v3109, 0.0
      %3136 = vadd.xlane.f32.xlu0 %v3135
      %v3137 = vpop.xlane.xlu0 %3136
      %v3138 = vsel %vm474, %v3110, 0.0
      %3139 = vadd.xlane.f32.xlu0 %v3138
      %v3140 = vpop.xlane.xlu0 %3139
      %v3141 = vsel %vm474, %v3111, 0.0
      %3142 = vadd.xlane.f32.xlu0 %v3141
      %v3143 = vpop.xlane.xlu0 %3142
      %v3144 = vsel %vm474, %v3112, 0.0
      %3145 = vadd.xlane.f32.xlu0 %v3144
      %v3146 = vpop.xlane.xlu0 %3145
      %v3147 = vsel %vm474, %v3113, 0.0
      %3148 = vadd.xlane.f32.xlu0 %v3147
      %v3149 = vpop.xlane.xlu0 %3148
      %v3150 = vsel %vm474, %v3114, 0.0
      %3151 = vadd.xlane.f32.xlu0 %v3150
      %v3152 = vpop.xlane.xlu0 %3151
      %v3153 = vsel %vm474, %v3115, 0.0
      %3154 = vadd.xlane.f32.xlu0 %v3153
      %v3155 = vpop.xlane.xlu0 %3154
      %v3156 = vsel %vm474, %v3116, 0.0
      %3157 = vadd.xlane.f32.xlu0 %v3156
      %v3158 = vpop.xlane.xlu0 %3157
      %v3159 = vsel %vm474, %v3117, 0.0
      %3160 = vadd.xlane.f32.xlu0 %v3159
      %v3161 = vpop.xlane.xlu0 %3160
      %v3162 = vsel %vm474, %v3118, 0.0
      %3163 = vadd.xlane.f32.xlu0 %v3162
      %v3164 = vpop.xlane.xlu0 %3163
      %v3165 = vsel %vm474, %v3119, 0.0
      %3166 = vadd.xlane.f32.xlu0 %v3165
      %v3167 = vpop.xlane.xlu0 %3166
      %v3168 = vmul.f32 %v3122, %v529
      %v3169 = vmul.f32 %v3125, %v529
      %v3170 = vmul.f32 %v3128, %v529
      %v3171 = vmul.f32 %v3131, %v529
      %v3172 = vmul.f32 %v3134, %v529
      %v3173 = vmul.f32 %v3137, %v529
      %v3174 = vmul.f32 %v3140, %v529
      %v3175 = vmul.f32 %v3143, %v529
      %v3176 = vmul.f32 %v3146, %v529
      %v3177 = vmul.f32 %v3149, %v529
      %v3178 = vmul.f32 %v3152, %v529
      %v3179 = vmul.f32 %v3155, %v529
      %v3180 = vmul.f32 %v3158, %v529
      %v3181 = vmul.f32 %v3161, %v529
      %v3182 = vmul.f32 %v3164, %v529
      %v3183 = vmul.f32 %v3167, %v529
      %v3184 = vadd.f32 %v3168, 1e-05
      %v3185 = vadd.f32 %v3169, 1e-05
      %v3186 = vadd.f32 %v3170, 1e-05
      %v3187 = vadd.f32 %v3171, 1e-05
      %v3188 = vadd.f32 %v3172, 1e-05
      %v3189 = vadd.f32 %v3173, 1e-05
      %v3190 = vadd.f32 %v3174, 1e-05
      %v3191 = vadd.f32 %v3175, 1e-05
      %v3192 = vadd.f32 %v3176, 1e-05
      %v3193 = vadd.f32 %v3177, 1e-05
      %v3194 = vadd.f32 %v3178, 1e-05
      %v3195 = vadd.f32 %v3179, 1e-05
      %v3196 = vadd.f32 %v3180, 1e-05
      %v3197 = vadd.f32 %v3181, 1e-05
      %v3198 = vadd.f32 %v3182, 1e-05
      %v3199 = vadd.f32 %v3183, 1e-05
      %v3200 = vrsqrt.pop %v3184
      %v3201 = vmul.f32 %v3200, %v3184
      %v3202 = vmul.f32 %v3201, %v3200
      %v3203 = vmul.f32 0.5, %v3202
      %v3204 = vsub.f32 1.5, %v3203
      %v3205 = vmul.f32 %v3200, %v3204
      %vm3206 = vweird.f32 %v3184
      %vm3207 = vweird.f32 %v3200
      %vm3208 = vmor %vm3206, %vm3207
      %v3209 = vsel %vm3208, %v3200, %v3205
      %v3210 = vrsqrt.pop %v3185
      %v3211 = vmul.f32 %v3210, %v3185
      %v3212 = vmul.f32 %v3211, %v3210
      %v3213 = vmul.f32 0.5, %v3212
      %v3214 = vsub.f32 1.5, %v3213
      %v3215 = vmul.f32 %v3210, %v3214
      %vm3216 = vweird.f32 %v3185
      %vm3217 = vweird.f32 %v3210
      %vm3218 = vmor %vm3216, %vm3217
      %v3219 = vsel %vm3218, %v3210, %v3215
      %v3220 = vrsqrt.pop %v3186
      %v3221 = vmul.f32 %v3220, %v3186
      %v3222 = vmul.f32 %v3221, %v3220
      %v3223 = vmul.f32 0.5, %v3222
      %v3224 = vsub.f32 1.5, %v3223
      %v3225 = vmul.f32 %v3220, %v3224
      %vm3226 = vweird.f32 %v3186
      %vm3227 = vweird.f32 %v3220
      %vm3228 = vmor %vm3226, %vm3227
      %v3229 = vsel %vm3228, %v3220, %v3225
      %v3230 = vrsqrt.pop %v3187
      %v3231 = vmul.f32 %v3230, %v3187
      %v3232 = vmul.f32 %v3231, %v3230
      %v3233 = vmul.f32 0.5, %v3232
      %v3234 = vsub.f32 1.5, %v3233
      %v3235 = vmul.f32 %v3230, %v3234
      %vm3236 = vweird.f32 %v3187
      %vm3237 = vweird.f32 %v3230
      %vm3238 = vmor %vm3236, %vm3237
      %v3239 = vsel %vm3238, %v3230, %v3235
      %v3240 = vrsqrt.pop %v3188
      %v3241 = vmul.f32 %v3240, %v3188
      %v3242 = vmul.f32 %v3241, %v3240
      %v3243 = vmul.f32 0.5, %v3242
      %v3244 = vsub.f32 1.5, %v3243
      %v3245 = vmul.f32 %v3240, %v3244
      %vm3246 = vweird.f32 %v3188
      %vm3247 = vweird.f32 %v3240
      %vm3248 = vmor %vm3246, %vm3247
      %v3249 = vsel %vm3248, %v3240, %v3245
      %v3250 = vrsqrt.pop %v3189
      %v3251 = vmul.f32 %v3250, %v3189
      %v3252 = vmul.f32 %v3251, %v3250
      %v3253 = vmul.f32 0.5, %v3252
      %v3254 = vsub.f32 1.5, %v3253
      %v3255 = vmul.f32 %v3250, %v3254
      %vm3256 = vweird.f32 %v3189
      %vm3257 = vweird.f32 %v3250
      %vm3258 = vmor %vm3256, %vm3257
      %v3259 = vsel %vm3258, %v3250, %v3255
      %v3260 = vrsqrt.pop %v3190
      %v3261 = vmul.f32 %v3260, %v3190
      %v3262 = vmul.f32 %v3261, %v3260
      %v3263 = vmul.f32 0.5, %v3262
      %v3264 = vsub.f32 1.5, %v3263
      %v3265 = vmul.f32 %v3260, %v3264
      %vm3266 = vweird.f32 %v3190
      %vm3267 = vweird.f32 %v3260
      %vm3268 = vmor %vm3266, %vm3267
      %v3269 = vsel %vm3268, %v3260, %v3265
      %v3270 = vrsqrt.pop %v3191
      %v3271 = vmul.f32 %v3270, %v3191
      %v3272 = vmul.f32 %v3271, %v3270
      %v3273 = vmul.f32 0.5, %v3272
      %v3274 = vsub.f32 1.5, %v3273
      %v3275 = vmul.f32 %v3270, %v3274
      %vm3276 = vweird.f32 %v3191
      %vm3277 = vweird.f32 %v3270
      %vm3278 = vmor %vm3276, %vm3277
      %v3279 = vsel %vm3278, %v3270, %v3275
      %v3280 = vrsqrt.pop %v3192
      %v3281 = vmul.f32 %v3280, %v3192
      %v3282 = vmul.f32 %v3281, %v3280
      %v3283 = vmul.f32 0.5, %v3282
      %v3284 = vsub.f32 1.5, %v3283
      %v3285 = vmul.f32 %v3280, %v3284
      %vm3286 = vweird.f32 %v3192
      %vm3287 = vweird.f32 %v3280
      %vm3288 = vmor %vm3286, %vm3287
      %v3289 = vsel %vm3288, %v3280, %v3285
      %v3290 = vrsqrt.pop %v3193
      %v3291 = vmul.f32 %v3290, %v3193
      %v3292 = vmul.f32 %v3291, %v3290
      %v3293 = vmul.f32 0.5, %v3292
      %v3294 = vsub.f32 1.5, %v3293
      %v3295 = vmul.f32 %v3290, %v3294
      %vm3296 = vweird.f32 %v3193
      %vm3297 = vweird.f32 %v3290
      %vm3298 = vmor %vm3296, %vm3297
      %v3299 = vsel %vm3298, %v3290, %v3295
      %v3300 = vrsqrt.pop %v3194
      %v3301 = vmul.f32 %v3300, %v3194
      %v3302 = vmul.f32 %v3301, %v3300
      %v3303 = vmul.f32 0.5, %v3302
      %v3304 = vsub.f32 1.5, %v3303
      %v3305 = vmul.f32 %v3300, %v3304
      %vm3306 = vweird.f32 %v3194
      %vm3307 = vweird.f32 %v3300
      %vm3308 = vmor %vm3306, %vm3307
      %v3309 = vsel %vm3308, %v3300, %v3305
      %v3310 = vrsqrt.pop %v3195
      %v3311 = vmul.f32 %v3310, %v3195
      %v3312 = vmul.f32 %v3311, %v3310
      %v3313 = vmul.f32 0.5, %v3312
      %v3314 = vsub.f32 1.5, %v3313
      %v3315 = vmul.f32 %v3310, %v3314
      %vm3316 = vweird.f32 %v3195
      %vm3317 = vweird.f32 %v3310
      %vm3318 = vmor %vm3316, %vm3317
      %v3319 = vsel %vm3318, %v3310, %v3315
      %v3320 = vrsqrt.pop %v3196
      %v3321 = vmul.f32 %v3320, %v3196
      %v3322 = vmul.f32 %v3321, %v3320
      %v3323 = vmul.f32 0.5, %v3322
      %v3324 = vsub.f32 1.5, %v3323
      %v3325 = vmul.f32 %v3320, %v3324
      %vm3326 = vweird.f32 %v3196
      %vm3327 = vweird.f32 %v3320
      %vm3328 = vmor %vm3326, %vm3327
      %v3329 = vsel %vm3328, %v3320, %v3325
      %v3330 = vrsqrt.pop %v3197
      %v3331 = vmul.f32 %v3330, %v3197
      %v3332 = vmul.f32 %v3331, %v3330
      %v3333 = vmul.f32 0.5, %v3332
      %v3334 = vsub.f32 1.5, %v3333
      %v3335 = vmul.f32 %v3330, %v3334
      %vm3336 = vweird.f32 %v3197
      %vm3337 = vweird.f32 %v3330
      %vm3338 = vmor %vm3336, %vm3337
      %v3339 = vsel %vm3338, %v3330, %v3335
      %v3340 = vrsqrt.pop %v3198
      %v3341 = vmul.f32 %v3340, %v3198
      %v3342 = vmul.f32 %v3341, %v3340
      %v3343 = vmul.f32 0.5, %v3342
      %v3344 = vsub.f32 1.5, %v3343
      %v3345 = vmul.f32 %v3340, %v3344
      %vm3346 = vweird.f32 %v3198
      %vm3347 = vweird.f32 %v3340
      %vm3348 = vmor %vm3346, %vm3347
      %v3349 = vsel %vm3348, %v3340, %v3345
      %v3350 = vrsqrt.pop %v3199
      %v3351 = vmul.f32 %v3350, %v3199
      %v3352 = vmul.f32 %v3351, %v3350
      %v3353 = vmul.f32 0.5, %v3352
      %v3354 = vsub.f32 1.5, %v3353
      %v3355 = vmul.f32 %v3350, %v3354
      %vm3356 = vweird.f32 %v3199
      %vm3357 = vweird.f32 %v3350
      %vm3358 = vmor %vm3356, %vm3357
      %v3359 = vsel %vm3358, %v3350, %v3355
      %v3360 = vmul.f32 %v3088, %v3209
      %v3361 = vmul.f32 %v3089, %v3219
      %v3362 = vmul.f32 %v3090, %v3229
      %v3363 = vmul.f32 %v3091, %v3239
      %v3364 = vmul.f32 %v3092, %v3249
      %v3365 = vmul.f32 %v3093, %v3259
      %v3366 = vmul.f32 %v3094, %v3269
      %v3367 = vmul.f32 %v3095, %v3279
      %v3368 = vmul.f32 %v3096, %v3289
      %v3369 = vmul.f32 %v3097, %v3299
      %v3370 = vmul.f32 %v3098, %v3309
      %v3371 = vmul.f32 %v3099, %v3319
      %v3372 = vmul.f32 %v3100, %v3329
      %v3373 = vmul.f32 %v3101, %v3339
      %v3374 = vmul.f32 %v3102, %v3349
      %v3375 = vmul.f32 %v3103, %v3359
      %v3377 = vperm.slane %v1015, 0
      %v3379 = vmul.f32 %v3360, %v3377
      %v3380 = vmul.f32 %v3361, %v3377
      %v3381 = vmul.f32 %v3362, %v3377
      %v3382 = vmul.f32 %v3363, %v3377
      %v3383 = vmul.f32 %v3364, %v3377
      %v3384 = vmul.f32 %v3365, %v3377
      %v3385 = vmul.f32 %v3366, %v3377
      %v3386 = vmul.f32 %v3367, %v3377
      %v3387 = vmul.f32 %v3368, %v3377
      %v3388 = vmul.f32 %v3369, %v3377
      %v3389 = vmul.f32 %v3370, %v3377
      %v3390 = vmul.f32 %v3371, %v3377
      %v3391 = vmul.f32 %v3372, %v3377
      %v3392 = vmul.f32 %v3373, %v3377
      %v3393 = vmul.f32 %v3374, %v3377
      %v3394 = vmul.f32 %v3375, %v3377
      %v3396 = vperm.slane %v1016, 0
      %v3398 = vadd.f32 %v3379, %v3396
      %v3399 = vadd.f32 %v3380, %v3396
      %v3400 = vadd.f32 %v3381, %v3396
      %v3401 = vadd.f32 %v3382, %v3396
      %v3402 = vadd.f32 %v3383, %v3396
      %v3403 = vadd.f32 %v3384, %v3396
      %v3404 = vadd.f32 %v3385, %v3396
      %v3405 = vadd.f32 %v3386, %v3396
      %v3406 = vadd.f32 %v3387, %v3396
      %v3407 = vadd.f32 %v3388, %v3396
      %v3408 = vadd.f32 %v3389, %v3396
      %v3409 = vadd.f32 %v3390, %v3396
      %v3410 = vadd.f32 %v3391, %v3396
      %v3411 = vadd.f32 %v3392, %v3396
      %v3412 = vadd.f32 %v3393, %v3396
      %v3413 = vadd.f32 %v3394, %v3396
      %v3414 = vpack.c.bf16 %v3399, %v3398
      %v3415 = vpack.c.bf16 %v3401, %v3400
      %v3416 = vpack.c.bf16 %v3403, %v3402
      %v3417 = vpack.c.bf16 %v3405, %v3404
      %v3418 = vpack.c.bf16 %v3407, %v3406
      %v3419 = vpack.c.bf16 %v3409, %v3408
      %v3420 = vpack.c.bf16 %v3411, %v3410
      %v3421 = vpack.c.bf16 %v3413, %v3412
      %v3423 = vperm.slane %v1021, 0
      %v3429 = vunpack.c.l.b16 %v1017
      %v3430 = vunpack.c.l.b16 %v1018
      %v3431 = vunpack.c.l.b16 %v1019
      %v3432 = vunpack.c.l.b16 %v1020
      %v3433 = vpack.c.b16 %v3430, %v3429
      %v3434 = vpack.c.b16 %v3432, %v3431
      %v3438 = vsel %vm474, %v3414, 0
      %v3441 = vsel %vm474, %v3415, 0
      %v3444 = vsel %vm474, %v3416, 0
      %v3447 = vsel %vm474, %v3417, 0
      %v3450 = vsel %vm474, %v3418, 0
      %v3453 = vsel %vm474, %v3419, 0
      %v3456 = vsel %vm474, %v3420, 0
      %v3459 = vsel %vm474, %v3421, 0
      %3461 = vmatpush.bf16.msra.mxu0 0
      %3462 = vmatpush.bf16.msra.mxu0 0
      %3463 = vmatpush.bf16.msra.mxu0 0
      %3464 = vmatpush.bf16.msra.mxu0 0
      %3465 = vmatpush.bf16.msra.mxu0 0
      %3466 = vmatpush.bf16.msra.mxu0 0
      %3467 = vmatpush.bf16.msra.mxu0 %v3434
      %3468 = vmatpush.bf16.msra.mxu0 %v3433
      %3469 = vmatmul.bf16.gmra.mxu0 %v3438
      %v3470 = vpop.f32.mrf.mxu0
      %v3471 = vadd.f32 %v3423, %v3470
      %v3472 = vpop.f32.mrf.mxu0
      %v3473 = vadd.f32 %v3423, %v3472
      %3474 = vmatmul.bf16.gmra.mxu0 %v3441
      %v3475 = vpop.f32.mrf.mxu0
      %v3476 = vadd.f32 %v3423, %v3475
      %v3477 = vpop.f32.mrf.mxu0
      %v3478 = vadd.f32 %v3423, %v3477
      %3479 = vmatmul.bf16.gmra.mxu0 %v3444
      %v3480 = vpop.f32.mrf.mxu0
      %v3481 = vadd.f32 %v3423, %v3480
      %v3482 = vpop.f32.mrf.mxu0
      %v3483 = vadd.f32 %v3423, %v3482
      %3484 = vmatmul.bf16.gmra.mxu0 %v3447
      %v3485 = vpop.f32.mrf.mxu0
      %v3486 = vadd.f32 %v3423, %v3485
      %v3487 = vpop.f32.mrf.mxu0
      %v3488 = vadd.f32 %v3423, %v3487
      %3489 = vmatmul.bf16.gmra.mxu0 %v3450
      %v3490 = vpop.f32.mrf.mxu0
      %v3491 = vadd.f32 %v3423, %v3490
      %v3492 = vpop.f32.mrf.mxu0
      %v3493 = vadd.f32 %v3423, %v3492
      %3494 = vmatmul.bf16.gmra.mxu0 %v3453
      %v3495 = vpop.f32.mrf.mxu0
      %v3496 = vadd.f32 %v3423, %v3495
      %v3497 = vpop.f32.mrf.mxu0
      %v3498 = vadd.f32 %v3423, %v3497
      %3499 = vmatmul.bf16.gmra.mxu0 %v3456
      %v3500 = vpop.f32.mrf.mxu0
      %v3501 = vadd.f32 %v3423, %v3500
      %v3502 = vpop.f32.mrf.mxu0
      %v3503 = vadd.f32 %v3423, %v3502
      %3504 = vmatmul.bf16.gmra.mxu0 %v3459
      %v3505 = vpop.f32.mrf.mxu0
      %v3506 = vadd.f32 %v3423, %v3505
      %v3507 = vpop.f32.mrf.mxu0
      %v3508 = vadd.f32 %v3423, %v3507
      %3509 = vdwg.mxu0
      %v3510 = vmul.f32 %v3471, 0.5
      %v3511 = vmul.f32 %v3473, 0.5
      %v3512 = vmul.f32 %v3476, 0.5
      %v3513 = vmul.f32 %v3478, 0.5
      %v3514 = vmul.f32 %v3481, 0.5
      %v3515 = vmul.f32 %v3483, 0.5
      %v3516 = vmul.f32 %v3486, 0.5
      %v3517 = vmul.f32 %v3488, 0.5
      %v3518 = vmul.f32 %v3491, 0.5
      %v3519 = vmul.f32 %v3493, 0.5
      %v3520 = vmul.f32 %v3496, 0.5
      %v3521 = vmul.f32 %v3498, 0.5
      %v3522 = vmul.f32 %v3501, 0.5
      %v3523 = vmul.f32 %v3503, 0.5
      %v3524 = vmul.f32 %v3506, 0.5
      %v3525 = vmul.f32 %v3508, 0.5
      %v3526 = vmul.f32 %v3471, 0.70710677
      %v3527 = vmul.f32 %v3473, 0.70710677
      %v3528 = vmul.f32 %v3476, 0.70710677
      %v3529 = vmul.f32 %v3478, 0.70710677
      %v3530 = vmul.f32 %v3481, 0.70710677
      %v3531 = vmul.f32 %v3483, 0.70710677
      %v3532 = vmul.f32 %v3486, 0.70710677
      %v3533 = vmul.f32 %v3488, 0.70710677
      %v3534 = vmul.f32 %v3491, 0.70710677
      %v3535 = vmul.f32 %v3493, 0.70710677
      %v3536 = vmul.f32 %v3496, 0.70710677
      %v3537 = vmul.f32 %v3498, 0.70710677
      %v3538 = vmul.f32 %v3501, 0.70710677
      %v3539 = vmul.f32 %v3503, 0.70710677
      %v3540 = vmul.f32 %v3506, 0.70710677
      %v3541 = vmul.f32 %v3508, 0.70710677
      %vm3542 = vcmp.ge.f32.partialorder %v3526, 0.0
      %vm3543 = vcmp.ge.f32.partialorder %v3527, 0.0
      %vm3544 = vcmp.ge.f32.partialorder %v3528, 0.0
      %vm3545 = vcmp.ge.f32.partialorder %v3529, 0.0
      %vm3546 = vcmp.ge.f32.partialorder %v3530, 0.0
      %vm3547 = vcmp.ge.f32.partialorder %v3531, 0.0
      %vm3548 = vcmp.ge.f32.partialorder %v3532, 0.0
      %vm3549 = vcmp.ge.f32.partialorder %v3533, 0.0
      %vm3550 = vcmp.ge.f32.partialorder %v3534, 0.0
      %vm3551 = vcmp.ge.f32.partialorder %v3535, 0.0
      %vm3552 = vcmp.ge.f32.partialorder %v3536, 0.0
      %vm3553 = vcmp.ge.f32.partialorder %v3537, 0.0
      %vm3554 = vcmp.ge.f32.partialorder %v3538, 0.0
      %vm3555 = vcmp.ge.f32.partialorder %v3539, 0.0
      %vm3556 = vcmp.ge.f32.partialorder %v3540, 0.0
      %vm3557 = vcmp.ge.f32.partialorder %v3541, 0.0
      %v3558 = vsel %vm3542, 1.0, -1.0
      %v3559 = vsel %vm3543, 1.0, -1.0
      %v3560 = vsel %vm3544, 1.0, -1.0
      %v3561 = vsel %vm3545, 1.0, -1.0
      %v3562 = vsel %vm3546, 1.0, -1.0
      %v3563 = vsel %vm3547, 1.0, -1.0
      %v3564 = vsel %vm3548, 1.0, -1.0
      %v3565 = vsel %vm3549, 1.0, -1.0
      %v3566 = vsel %vm3550, 1.0, -1.0
      %v3567 = vsel %vm3551, 1.0, -1.0
      %v3568 = vsel %vm3552, 1.0, -1.0
      %v3569 = vsel %vm3553, 1.0, -1.0
      %v3570 = vsel %vm3554, 1.0, -1.0
      %v3571 = vsel %vm3555, 1.0, -1.0
      %v3572 = vsel %vm3556, 1.0, -1.0
      %v3573 = vsel %vm3557, 1.0, -1.0
      %v3574 = vand.u32 2147483647, %v3526
      %v3575 = vand.u32 2147483647, %v3527
      %v3576 = vand.u32 2147483647, %v3528
      %v3577 = vand.u32 2147483647, %v3529
      %v3578 = vand.u32 2147483647, %v3530
      %v3579 = vand.u32 2147483647, %v3531
      %v3580 = vand.u32 2147483647, %v3532
      %v3581 = vand.u32 2147483647, %v3533
      %v3582 = vand.u32 2147483647, %v3534
      %v3583 = vand.u32 2147483647, %v3535
      %v3584 = vand.u32 2147483647, %v3536
      %v3585 = vand.u32 2147483647, %v3537
      %v3586 = vand.u32 2147483647, %v3538
      %v3587 = vand.u32 2147483647, %v3539
      %v3588 = vand.u32 2147483647, %v3540
      %v3589 = vand.u32 2147483647, %v3541
      %v3590 = vmul.f32 %v3574, 0.3275911
      %v3591 = vmul.f32 %v3575, 0.3275911
      %v3592 = vmul.f32 %v3576, 0.3275911
      %v3593 = vmul.f32 %v3577, 0.3275911
      %v3594 = vmul.f32 %v3578, 0.3275911
      %v3595 = vmul.f32 %v3579, 0.3275911
      %v3596 = vmul.f32 %v3580, 0.3275911
      %v3597 = vmul.f32 %v3581, 0.3275911
      %v3598 = vmul.f32 %v3582, 0.3275911
      %v3599 = vmul.f32 %v3583, 0.3275911
      %v3600 = vmul.f32 %v3584, 0.3275911
      %v3601 = vmul.f32 %v3585, 0.3275911
      %v3602 = vmul.f32 %v3586, 0.3275911
      %v3603 = vmul.f32 %v3587, 0.3275911
      %v3604 = vmul.f32 %v3588, 0.3275911
      %v3605 = vmul.f32 %v3589, 0.3275911
      %v3606 = vadd.f32 %v3590, 1.0
      %v3607 = vadd.f32 %v3591, 1.0
      %v3608 = vadd.f32 %v3592, 1.0
      %v3609 = vadd.f32 %v3593, 1.0
      %v3610 = vadd.f32 %v3594, 1.0
      %v3611 = vadd.f32 %v3595, 1.0
      %v3612 = vadd.f32 %v3596, 1.0
      %v3613 = vadd.f32 %v3597, 1.0
      %v3614 = vadd.f32 %v3598, 1.0
      %v3615 = vadd.f32 %v3599, 1.0
      %v3616 = vadd.f32 %v3600, 1.0
      %v3617 = vadd.f32 %v3601, 1.0
      %v3618 = vadd.f32 %v3602, 1.0
      %v3619 = vadd.f32 %v3603, 1.0
      %v3620 = vadd.f32 %v3604, 1.0
      %v3621 = vadd.f32 %v3605, 1.0
      %v3622 = vrcp.pop %v3606
      %v3623 = vmul.f32 %v3606, %v3622
      %v3624 = vsub.f32 1.0, %v3623
      %v3625 = vmul.f32 %v3622, %v3624
      %v3626 = vadd.f32 %v3622, %v3625
      %vm3627 = vweird.f32 %v3606
      %vm3628 = vweird.f32 %v3622
      %vm3629 = vmor %vm3627, %vm3628
      %v3630 = vsel %vm3629, %v3622, %v3626
      %v3631 = vand.u32 2147483647, %v3606
      %vm3632 = vcmp.eq.f32.partialorder %v3631, 8.507059e+37
      %v3633 = vand.u32 %v3606, 2147483648
      %v3634 = vor.u32 1.1754944e-38, %v3633
      %v3635 = vsel %vm3632, %v3634, %v3630
      %v3636 = vmul.f32 1.0, %v3635
      %v3637 = vrcp.pop %v3607
      %v3638 = vmul.f32 %v3607, %v3637
      %v3639 = vsub.f32 1.0, %v3638
      %v3640 = vmul.f32 %v3637, %v3639
      %v3641 = vadd.f32 %v3637, %v3640
      %vm3642 = vweird.f32 %v3607
      %vm3643 = vweird.f32 %v3637
      %vm3644 = vmor %vm3642, %vm3643
      %v3645 = vsel %vm3644, %v3637, %v3641
      %v3646 = vand.u32 2147483647, %v3607
      %vm3647 = vcmp.eq.f32.partialorder %v3646, 8.507059e+37
      %v3648 = vand.u32 %v3607, 2147483648
      %v3649 = vor.u32 1.1754944e-38, %v3648
      %v3650 = vsel %vm3647, %v3649, %v3645
      %v3651 = vmul.f32 1.0, %v3650
      %v3652 = vrcp.pop %v3608
      %v3653 = vmul.f32 %v3608, %v3652
      %v3654 = vsub.f32 1.0, %v3653
      %v3655 = vmul.f32 %v3652, %v3654
      %v3656 = vadd.f32 %v3652, %v3655
      %vm3657 = vweird.f32 %v3608
      %vm3658 = vweird.f32 %v3652
      %vm3659 = vmor %vm3657, %vm3658
      %v3660 = vsel %vm3659, %v3652, %v3656
      %v3661 = vand.u32 2147483647, %v3608
      %vm3662 = vcmp.eq.f32.partialorder %v3661, 8.507059e+37
      %v3663 = vand.u32 %v3608, 2147483648
      %v3664 = vor.u32 1.1754944e-38, %v3663
      %v3665 = vsel %vm3662, %v3664, %v3660
      %v3666 = vmul.f32 1.0, %v3665
      %v3667 = vrcp.pop %v3609
      %v3668 = vmul.f32 %v3609, %v3667
      %v3669 = vsub.f32 1.0, %v3668
      %v3670 = vmul.f32 %v3667, %v3669
      %v3671 = vadd.f32 %v3667, %v3670
      %vm3672 = vweird.f32 %v3609
      %vm3673 = vweird.f32 %v3667
      %vm3674 = vmor %vm3672, %vm3673
      %v3675 = vsel %vm3674, %v3667, %v3671
      %v3676 = vand.u32 2147483647, %v3609
      %vm3677 = vcmp.eq.f32.partialorder %v3676, 8.507059e+37
      %v3678 = vand.u32 %v3609, 2147483648
      %v3679 = vor.u32 1.1754944e-38, %v3678
      %v3680 = vsel %vm3677, %v3679, %v3675
      %v3681 = vmul.f32 1.0, %v3680
      %v3682 = vrcp.pop %v3610
      %v3683 = vmul.f32 %v3610, %v3682
      %v3684 = vsub.f32 1.0, %v3683
      %v3685 = vmul.f32 %v3682, %v3684
      %v3686 = vadd.f32 %v3682, %v3685
      %vm3687 = vweird.f32 %v3610
      %vm3688 = vweird.f32 %v3682
      %vm3689 = vmor %vm3687, %vm3688
      %v3690 = vsel %vm3689, %v3682, %v3686
      %v3691 = vand.u32 2147483647, %v3610
      %vm3692 = vcmp.eq.f32.partialorder %v3691, 8.507059e+37
      %v3693 = vand.u32 %v3610, 2147483648
      %v3694 = vor.u32 1.1754944e-38, %v3693
      %v3695 = vsel %vm3692, %v3694, %v3690
      %v3696 = vmul.f32 1.0, %v3695
      %v3697 = vrcp.pop %v3611
      %v3698 = vmul.f32 %v3611, %v3697
      %v3699 = vsub.f32 1.0, %v3698
      %v3700 = vmul.f32 %v3697, %v3699
      %v3701 = vadd.f32 %v3697, %v3700
      %vm3702 = vweird.f32 %v3611
      %vm3703 = vweird.f32 %v3697
      %vm3704 = vmor %vm3702, %vm3703
      %v3705 = vsel %vm3704, %v3697, %v3701
      %v3706 = vand.u32 2147483647, %v3611
      %vm3707 = vcmp.eq.f32.partialorder %v3706, 8.507059e+37
      %v3708 = vand.u32 %v3611, 2147483648
      %v3709 = vor.u32 1.1754944e-38, %v3708
      %v3710 = vsel %vm3707, %v3709, %v3705
      %v3711 = vmul.f32 1.0, %v3710
      %v3712 = vrcp.pop %v3612
      %v3713 = vmul.f32 %v3612, %v3712
      %v3714 = vsub.f32 1.0, %v3713
      %v3715 = vmul.f32 %v3712, %v3714
      %v3716 = vadd.f32 %v3712, %v3715
      %vm3717 = vweird.f32 %v3612
      %vm3718 = vweird.f32 %v3712
      %vm3719 = vmor %vm3717, %vm3718
      %v3720 = vsel %vm3719, %v3712, %v3716
      %v3721 = vand.u32 2147483647, %v3612
      %vm3722 = vcmp.eq.f32.partialorder %v3721, 8.507059e+37
      %v3723 = vand.u32 %v3612, 2147483648
      %v3724 = vor.u32 1.1754944e-38, %v3723
      %v3725 = vsel %vm3722, %v3724, %v3720
      %v3726 = vmul.f32 1.0, %v3725
      %v3727 = vrcp.pop %v3613
      %v3728 = vmul.f32 %v3613, %v3727
      %v3729 = vsub.f32 1.0, %v3728
      %v3730 = vmul.f32 %v3727, %v3729
      %v3731 = vadd.f32 %v3727, %v3730
      %vm3732 = vweird.f32 %v3613
      %vm3733 = vweird.f32 %v3727
      %vm3734 = vmor %vm3732, %vm3733
      %v3735 = vsel %vm3734, %v3727, %v3731
      %v3736 = vand.u32 2147483647, %v3613
      %vm3737 = vcmp.eq.f32.partialorder %v3736, 8.507059e+37
      %v3738 = vand.u32 %v3613, 2147483648
      %v3739 = vor.u32 1.1754944e-38, %v3738
      %v3740 = vsel %vm3737, %v3739, %v3735
      %v3741 = vmul.f32 1.0, %v3740
      %v3742 = vrcp.pop %v3614
      %v3743 = vmul.f32 %v3614, %v3742
      %v3744 = vsub.f32 1.0, %v3743
      %v3745 = vmul.f32 %v3742, %v3744
      %v3746 = vadd.f32 %v3742, %v3745
      %vm3747 = vweird.f32 %v3614
      %vm3748 = vweird.f32 %v3742
      %vm3749 = vmor %vm3747, %vm3748
      %v3750 = vsel %vm3749, %v3742, %v3746
      %v3751 = vand.u32 2147483647, %v3614
      %vm3752 = vcmp.eq.f32.partialorder %v3751, 8.507059e+37
      %v3753 = vand.u32 %v3614, 2147483648
      %v3754 = vor.u32 1.1754944e-38, %v3753
      %v3755 = vsel %vm3752, %v3754, %v3750
      %v3756 = vmul.f32 1.0, %v3755
      %v3757 = vrcp.pop %v3615
      %v3758 = vmul.f32 %v3615, %v3757
      %v3759 = vsub.f32 1.0, %v3758
      %v3760 = vmul.f32 %v3757, %v3759
      %v3761 = vadd.f32 %v3757, %v3760
      %vm3762 = vweird.f32 %v3615
      %vm3763 = vweird.f32 %v3757
      %vm3764 = vmor %vm3762, %vm3763
      %v3765 = vsel %vm3764, %v3757, %v3761
      %v3766 = vand.u32 2147483647, %v3615
      %vm3767 = vcmp.eq.f32.partialorder %v3766, 8.507059e+37
      %v3768 = vand.u32 %v3615, 2147483648
      %v3769 = vor.u32 1.1754944e-38, %v3768
      %v3770 = vsel %vm3767, %v3769, %v3765
      %v3771 = vmul.f32 1.0, %v3770
      %v3772 = vrcp.pop %v3616
      %v3773 = vmul.f32 %v3616, %v3772
      %v3774 = vsub.f32 1.0, %v3773
      %v3775 = vmul.f32 %v3772, %v3774
      %v3776 = vadd.f32 %v3772, %v3775
      %vm3777 = vweird.f32 %v3616
      %vm3778 = vweird.f32 %v3772
      %vm3779 = vmor %vm3777, %vm3778
      %v3780 = vsel %vm3779, %v3772, %v3776
      %v3781 = vand.u32 2147483647, %v3616
      %vm3782 = vcmp.eq.f32.partialorder %v3781, 8.507059e+37
      %v3783 = vand.u32 %v3616, 2147483648
      %v3784 = vor.u32 1.1754944e-38, %v3783
      %v3785 = vsel %vm3782, %v3784, %v3780
      %v3786 = vmul.f32 1.0, %v3785
      %v3787 = vrcp.pop %v3617
      %v3788 = vmul.f32 %v3617, %v3787
      %v3789 = vsub.f32 1.0, %v3788
      %v3790 = vmul.f32 %v3787, %v3789
      %v3791 = vadd.f32 %v3787, %v3790
      %vm3792 = vweird.f32 %v3617
      %vm3793 = vweird.f32 %v3787
      %vm3794 = vmor %vm3792, %vm3793
      %v3795 = vsel %vm3794, %v3787, %v3791
      %v3796 = vand.u32 2147483647, %v3617
      %vm3797 = vcmp.eq.f32.partialorder %v3796, 8.507059e+37
      %v3798 = vand.u32 %v3617, 2147483648
      %v3799 = vor.u32 1.1754944e-38, %v3798
      %v3800 = vsel %vm3797, %v3799, %v3795
      %v3801 = vmul.f32 1.0, %v3800
      %v3802 = vrcp.pop %v3618
      %v3803 = vmul.f32 %v3618, %v3802
      %v3804 = vsub.f32 1.0, %v3803
      %v3805 = vmul.f32 %v3802, %v3804
      %v3806 = vadd.f32 %v3802, %v3805
      %vm3807 = vweird.f32 %v3618
      %vm3808 = vweird.f32 %v3802
      %vm3809 = vmor %vm3807, %vm3808
      %v3810 = vsel %vm3809, %v3802, %v3806
      %v3811 = vand.u32 2147483647, %v3618
      %vm3812 = vcmp.eq.f32.partialorder %v3811, 8.507059e+37
      %v3813 = vand.u32 %v3618, 2147483648
      %v3814 = vor.u32 1.1754944e-38, %v3813
      %v3815 = vsel %vm3812, %v3814, %v3810
      %v3816 = vmul.f32 1.0, %v3815
      %v3817 = vrcp.pop %v3619
      %v3818 = vmul.f32 %v3619, %v3817
      %v3819 = vsub.f32 1.0, %v3818
      %v3820 = vmul.f32 %v3817, %v3819
      %v3821 = vadd.f32 %v3817, %v3820
      %vm3822 = vweird.f32 %v3619
      %vm3823 = vweird.f32 %v3817
      %vm3824 = vmor %vm3822, %vm3823
      %v3825 = vsel %vm3824, %v3817, %v3821
      %v3826 = vand.u32 2147483647, %v3619
      %vm3827 = vcmp.eq.f32.partialorder %v3826, 8.507059e+37
      %v3828 = vand.u32 %v3619, 2147483648
      %v3829 = vor.u32 1.1754944e-38, %v3828
      %v3830 = vsel %vm3827, %v3829, %v3825
      %v3831 = vmul.f32 1.0, %v3830
      %v3832 = vrcp.pop %v3620
      %v3833 = vmul.f32 %v3620, %v3832
      %v3834 = vsub.f32 1.0, %v3833
      %v3835 = vmul.f32 %v3832, %v3834
      %v3836 = vadd.f32 %v3832, %v3835
      %vm3837 = vweird.f32 %v3620
      %vm3838 = vweird.f32 %v3832
      %vm3839 = vmor %vm3837, %vm3838
      %v3840 = vsel %vm3839, %v3832, %v3836
      %v3841 = vand.u32 2147483647, %v3620
      %vm3842 = vcmp.eq.f32.partialorder %v3841, 8.507059e+37
      %v3843 = vand.u32 %v3620, 2147483648
      %v3844 = vor.u32 1.1754944e-38, %v3843
      %v3845 = vsel %vm3842, %v3844, %v3840
      %v3846 = vmul.f32 1.0, %v3845
      %v3847 = vrcp.pop %v3621
      %v3848 = vmul.f32 %v3621, %v3847
      %v3849 = vsub.f32 1.0, %v3848
      %v3850 = vmul.f32 %v3847, %v3849
      %v3851 = vadd.f32 %v3847, %v3850
      %vm3852 = vweird.f32 %v3621
      %vm3853 = vweird.f32 %v3847
      %vm3854 = vmor %vm3852, %vm3853
      %v3855 = vsel %vm3854, %v3847, %v3851
      %v3856 = vand.u32 2147483647, %v3621
      %vm3857 = vcmp.eq.f32.partialorder %v3856, 8.507059e+37
      %v3858 = vand.u32 %v3621, 2147483648
      %v3859 = vor.u32 1.1754944e-38, %v3858
      %v3860 = vsel %vm3857, %v3859, %v3855
      %v3861 = vmul.f32 1.0, %v3860
      %v3862 = vmul.f32 %v3636, 1.0614054
      %v3863 = vmul.f32 %v3651, 1.0614054
      %v3864 = vmul.f32 %v3666, 1.0614054
      %v3865 = vmul.f32 %v3681, 1.0614054
      %v3866 = vmul.f32 %v3696, 1.0614054
      %v3867 = vmul.f32 %v3711, 1.0614054
      %v3868 = vmul.f32 %v3726, 1.0614054
      %v3869 = vmul.f32 %v3741, 1.0614054
      %v3870 = vmul.f32 %v3756, 1.0614054
      %v3871 = vmul.f32 %v3771, 1.0614054
      %v3872 = vmul.f32 %v3786, 1.0614054
      %v3873 = vmul.f32 %v3801, 1.0614054
      %v3874 = vmul.f32 %v3816, 1.0614054
      %v3875 = vmul.f32 %v3831, 1.0614054
      %v3876 = vmul.f32 %v3846, 1.0614054
      %v3877 = vmul.f32 %v3861, 1.0614054
      %v3878 = vadd.f32 %v3862, -1.4531521
      %v3879 = vadd.f32 %v3863, -1.4531521
      %v3880 = vadd.f32 %v3864, -1.4531521
      %v3881 = vadd.f32 %v3865, -1.4531521
      %v3882 = vadd.f32 %v3866, -1.4531521
      %v3883 = vadd.f32 %v3867, -1.4531521
      %v3884 = vadd.f32 %v3868, -1.4531521
      %v3885 = vadd.f32 %v3869, -1.4531521
      %v3886 = vadd.f32 %v3870, -1.4531521
      %v3887 = vadd.f32 %v3871, -1.4531521
      %v3888 = vadd.f32 %v3872, -1.4531521
      %v3889 = vadd.f32 %v3873, -1.4531521
      %v3890 = vadd.f32 %v3874, -1.4531521
      %v3891 = vadd.f32 %v3875, -1.4531521
      %v3892 = vadd.f32 %v3876, -1.4531521
      %v3893 = vadd.f32 %v3877, -1.4531521
      %v3894 = vmul.f32 %v3878, %v3636
      %v3895 = vmul.f32 %v3879, %v3651
      %v3896 = vmul.f32 %v3880, %v3666
      %v3897 = vmul.f32 %v3881, %v3681
      %v3898 = vmul.f32 %v3882, %v3696
      %v3899 = vmul.f32 %v3883, %v3711
      %v3900 = vmul.f32 %v3884, %v3726
      %v3901 = vmul.f32 %v3885, %v3741
      %v3902 = vmul.f32 %v3886, %v3756
      %v3903 = vmul.f32 %v3887, %v3771
      %v3904 = vmul.f32 %v3888, %v3786
      %v3905 = vmul.f32 %v3889, %v3801
      %v3906 = vmul.f32 %v3890, %v3816
      %v3907 = vmul.f32 %v3891, %v3831
      %v3908 = vmul.f32 %v3892, %v3846
      %v3909 = vmul.f32 %v3893, %v3861
      %v3910 = vadd.f32 %v3894, 1.4214138
      %v3911 = vadd.f32 %v3895, 1.4214138
      %v3912 = vadd.f32 %v3896, 1.4214138
      %v3913 = vadd.f32 %v3897, 1.4214138
      %v3914 = vadd.f32 %v3898, 1.4214138
      %v3915 = vadd.f32 %v3899, 1.4214138
      %v3916 = vadd.f32 %v3900, 1.4214138
      %v3917 = vadd.f32 %v3901, 1.4214138
      %v3918 = vadd.f32 %v3902, 1.4214138
      %v3919 = vadd.f32 %v3903, 1.4214138
      %v3920 = vadd.f32 %v3904, 1.4214138
      %v3921 = vadd.f32 %v3905, 1.4214138
      %v3922 = vadd.f32 %v3906, 1.4214138
      %v3923 = vadd.f32 %v3907, 1.4214138
      %v3924 = vadd.f32 %v3908, 1.4214138
      %v3925 = vadd.f32 %v3909, 1.4214138
      %v3926 = vmul.f32 %v3910, %v3636
      %v3927 = vmul.f32 %v3911, %v3651
      %v3928 = vmul.f32 %v3912, %v3666
      %v3929 = vmul.f32 %v3913, %v3681
      %v3930 = vmul.f32 %v3914, %v3696
      %v3931 = vmul.f32 %v3915, %v3711
      %v3932 = vmul.f32 %v3916, %v3726
      %v3933 = vmul.f32 %v3917, %v3741
      %v3934 = vmul.f32 %v3918, %v3756
      %v3935 = vmul.f32 %v3919, %v3771
      %v3936 = vmul.f32 %v3920, %v3786
      %v3937 = vmul.f32 %v3921, %v3801
      %v3938 = vmul.f32 %v3922, %v3816
      %v3939 = vmul.f32 %v3923, %v3831
      %v3940 = vmul.f32 %v3924, %v3846
      %v3941 = vmul.f32 %v3925, %v3861
      %v3942 = vadd.f32 %v3926, -0.28449672
      %v3943 = vadd.f32 %v3927, -0.28449672
      %v3944 = vadd.f32 %v3928, -0.28449672
      %v3945 = vadd.f32 %v3929, -0.28449672
      %v3946 = vadd.f32 %v3930, -0.28449672
      %v3947 = vadd.f32 %v3931, -0.28449672
      %v3948 = vadd.f32 %v3932, -0.28449672
      %v3949 = vadd.f32 %v3933, -0.28449672
      %v3950 = vadd.f32 %v3934, -0.28449672
      %v3951 = vadd.f32 %v3935, -0.28449672
      %v3952 = vadd.f32 %v3936, -0.28449672
      %v3953 = vadd.f32 %v3937, -0.28449672
      %v3954 = vadd.f32 %v3938, -0.28449672
      %v3955 = vadd.f32 %v3939, -0.28449672
      %v3956 = vadd.f32 %v3940, -0.28449672
      %v3957 = vadd.f32 %v3941, -0.28449672
      %v3958 = vmul.f32 %v3942, %v3636
      %v3959 = vmul.f32 %v3943, %v3651
      %v3960 = vmul.f32 %v3944, %v3666
      %v3961 = vmul.f32 %v3945, %v3681
      %v3962 = vmul.f32 %v3946, %v3696
      %v3963 = vmul.f32 %v3947, %v3711
      %v3964 = vmul.f32 %v3948, %v3726
      %v3965 = vmul.f32 %v3949, %v3741
      %v3966 = vmul.f32 %v3950, %v3756
      %v3967 = vmul.f32 %v3951, %v3771
      %v3968 = vmul.f32 %v3952, %v3786
      %v3969 = vmul.f32 %v3953, %v3801
      %v3970 = vmul.f32 %v3954, %v3816
      %v3971 = vmul.f32 %v3955, %v3831
      %v3972 = vmul.f32 %v3956, %v3846
      %v3973 = vmul.f32 %v3957, %v3861
      %v3974 = vadd.f32 %v3958, 0.2548296
      %v3975 = vadd.f32 %v3959, 0.2548296
      %v3976 = vadd.f32 %v3960, 0.2548296
      %v3977 = vadd.f32 %v3961, 0.2548296
      %v3978 = vadd.f32 %v3962, 0.2548296
      %v3979 = vadd.f32 %v3963, 0.2548296
      %v3980 = vadd.f32 %v3964, 0.2548296
      %v3981 = vadd.f32 %v3965, 0.2548296
      %v3982 = vadd.f32 %v3966, 0.2548296
      %v3983 = vadd.f32 %v3967, 0.2548296
      %v3984 = vadd.f32 %v3968, 0.2548296
      %v3985 = vadd.f32 %v3969, 0.2548296
      %v3986 = vadd.f32 %v3970, 0.2548296
      %v3987 = vadd.f32 %v3971, 0.2548296
      %v3988 = vadd.f32 %v3972, 0.2548296
      %v3989 = vadd.f32 %v3973, 0.2548296
      %v3990 = vmul.f32 %v3974, %v3636
      %v3991 = vmul.f32 %v3975, %v3651
      %v3992 = vmul.f32 %v3976, %v3666
      %v3993 = vmul.f32 %v3977, %v3681
      %v3994 = vmul.f32 %v3978, %v3696
      %v3995 = vmul.f32 %v3979, %v3711
      %v3996 = vmul.f32 %v3980, %v3726
      %v3997 = vmul.f32 %v3981, %v3741
      %v3998 = vmul.f32 %v3982, %v3756
      %v3999 = vmul.f32 %v3983, %v3771
      %v4000 = vmul.f32 %v3984, %v3786
      %v4001 = vmul.f32 %v3985, %v3801
      %v4002 = vmul.f32 %v3986, %v3816
      %v4003 = vmul.f32 %v3987, %v3831
      %v4004 = vmul.f32 %v3988, %v3846
      %v4005 = vmul.f32 %v3989, %v3861
      %v4006 = vsub.f32 0.0, %v3574
      %v4007 = vsub.f32 0.0, %v3575
      %v4008 = vsub.f32 0.0, %v3576
      %v4009 = vsub.f32 0.0, %v3577
      %v4010 = vsub.f32 0.0, %v3578
      %v4011 = vsub.f32 0.0, %v3579
      %v4012 = vsub.f32 0.0, %v3580
      %v4013 = vsub.f32 0.0, %v3581
      %v4014 = vsub.f32 0.0, %v3582
      %v4015 = vsub.f32 0.0, %v3583
      %v4016 = vsub.f32 0.0, %v3584
      %v4017 = vsub.f32 0.0, %v3585
      %v4018 = vsub.f32 0.0, %v3586
      %v4019 = vsub.f32 0.0, %v3587
      %v4020 = vsub.f32 0.0, %v3588
      %v4021 = vsub.f32 0.0, %v3589
      %v4022 = vmul.f32 %v4006, %v3574
      %v4023 = vmul.f32 %v4007, %v3575
      %v4024 = vmul.f32 %v4008, %v3576
      %v4025 = vmul.f32 %v4009, %v3577
      %v4026 = vmul.f32 %v4010, %v3578
      %v4027 = vmul.f32 %v4011, %v3579
      %v4028 = vmul.f32 %v4012, %v3580
      %v4029 = vmul.f32 %v4013, %v3581
      %v4030 = vmul.f32 %v4014, %v3582
      %v4031 = vmul.f32 %v4015, %v3583
      %v4032 = vmul.f32 %v4016, %v3584
      %v4033 = vmul.f32 %v4017, %v3585
      %v4034 = vmul.f32 %v4018, %v3586
      %v4035 = vmul.f32 %v4019, %v3587
      %v4036 = vmul.f32 %v4020, %v3588
      %v4037 = vmul.f32 %v4021, %v3589
      %v4038 = vmul.f32 %v4022, 1.442695
      %v4039 = vpow.pop %v4038
      %v4040 = vmul.f32 %v4023, 1.442695
      %v4041 = vpow.pop %v4040
      %v4042 = vmul.f32 %v4024, 1.442695
      %v4043 = vpow.pop %v4042
      %v4044 = vmul.f32 %v4025, 1.442695
      %v4045 = vpow.pop %v4044
      %v4046 = vmul.f32 %v4026, 1.442695
      %v4047 = vpow.pop %v4046
      %v4048 = vmul.f32 %v4027, 1.442695
      %v4049 = vpow.pop %v4048
      %v4050 = vmul.f32 %v4028, 1.442695
      %v4051 = vpow.pop %v4050
      %v4052 = vmul.f32 %v4029, 1.442695
      %v4053 = vpow.pop %v4052
      %v4054 = vmul.f32 %v4030, 1.442695
      %v4055 = vpow.pop %v4054
      %v4056 = vmul.f32 %v4031, 1.442695
      %v4057 = vpow.pop %v4056
      %v4058 = vmul.f32 %v4032, 1.442695
      %v4059 = vpow.pop %v4058
      %v4060 = vmul.f32 %v4033, 1.442695
      %v4061 = vpow.pop %v4060
      %v4062 = vmul.f32 %v4034, 1.442695
      %v4063 = vpow.pop %v4062
      %v4064 = vmul.f32 %v4035, 1.442695
      %v4065 = vpow.pop %v4064
      %v4066 = vmul.f32 %v4036, 1.442695
      %v4067 = vpow.pop %v4066
      %v4068 = vmul.f32 %v4037, 1.442695
      %v4069 = vpow.pop %v4068
      %v4070 = vmul.f32 %v3990, %v4039
      %v4071 = vmul.f32 %v3991, %v4041
      %v4072 = vmul.f32 %v3992, %v4043
      %v4073 = vmul.f32 %v3993, %v4045
      %v4074 = vmul.f32 %v3994, %v4047
      %v4075 = vmul.f32 %v3995, %v4049
      %v4076 = vmul.f32 %v3996, %v4051
      %v4077 = vmul.f32 %v3997, %v4053
      %v4078 = vmul.f32 %v3998, %v4055
      %v4079 = vmul.f32 %v3999, %v4057
      %v4080 = vmul.f32 %v4000, %v4059
      %v4081 = vmul.f32 %v4001, %v4061
      %v4082 = vmul.f32 %v4002, %v4063
      %v4083 = vmul.f32 %v4003, %v4065
      %v4084 = vmul.f32 %v4004, %v4067
      %v4085 = vmul.f32 %v4005, %v4069
      %v4086 = vsub.f32 1.0, %v4070
      %v4087 = vsub.f32 1.0, %v4071
      %v4088 = vsub.f32 1.0, %v4072
      %v4089 = vsub.f32 1.0, %v4073
      %v4090 = vsub.f32 1.0, %v4074
      %v4091 = vsub.f32 1.0, %v4075
      %v4092 = vsub.f32 1.0, %v4076
      %v4093 = vsub.f32 1.0, %v4077
      %v4094 = vsub.f32 1.0, %v4078
      %v4095 = vsub.f32 1.0, %v4079
      %v4096 = vsub.f32 1.0, %v4080
      %v4097 = vsub.f32 1.0, %v4081
      %v4098 = vsub.f32 1.0, %v4082
      %v4099 = vsub.f32 1.0, %v4083
      %v4100 = vsub.f32 1.0, %v4084
      %v4101 = vsub.f32 1.0, %v4085
      %v4102 = vmul.f32 %v3558, %v4086
      %v4103 = vmul.f32 %v3559, %v4087
      %v4104 = vmul.f32 %v3560, %v4088
      %v4105 = vmul.f32 %v3561, %v4089
      %v4106 = vmul.f32 %v3562, %v4090
      %v4107 = vmul.f32 %v3563, %v4091
      %v4108 = vmul.f32 %v3564, %v4092
      %v4109 = vmul.f32 %v3565, %v4093
      %v4110 = vmul.f32 %v3566, %v4094
      %v4111 = vmul.f32 %v3567, %v4095
      %v4112 = vmul.f32 %v3568, %v4096
      %v4113 = vmul.f32 %v3569, %v4097
      %v4114 = vmul.f32 %v3570, %v4098
      %v4115 = vmul.f32 %v3571, %v4099
      %v4116 = vmul.f32 %v3572, %v4100
      %v4117 = vmul.f32 %v3573, %v4101
      %v4118 = vadd.f32 %v4102, 1.0
      %v4119 = vadd.f32 %v4103, 1.0
      %v4120 = vadd.f32 %v4104, 1.0
      %v4121 = vadd.f32 %v4105, 1.0
      %v4122 = vadd.f32 %v4106, 1.0
      %v4123 = vadd.f32 %v4107, 1.0
      %v4124 = vadd.f32 %v4108, 1.0
      %v4125 = vadd.f32 %v4109, 1.0
      %v4126 = vadd.f32 %v4110, 1.0
      %v4127 = vadd.f32 %v4111, 1.0
      %v4128 = vadd.f32 %v4112, 1.0
      %v4129 = vadd.f32 %v4113, 1.0
      %v4130 = vadd.f32 %v4114, 1.0
      %v4131 = vadd.f32 %v4115, 1.0
      %v4132 = vadd.f32 %v4116, 1.0
      %v4133 = vadd.f32 %v4117, 1.0
      %v4134 = vmul.f32 %v3510, %v4118
      %v4135 = vmul.f32 %v3511, %v4119
      %v4136 = vmul.f32 %v3512, %v4120
      %v4137 = vmul.f32 %v3513, %v4121
      %v4138 = vmul.f32 %v3514, %v4122
      %v4139 = vmul.f32 %v3515, %v4123
      %v4140 = vmul.f32 %v3516, %v4124
      %v4141 = vmul.f32 %v3517, %v4125
      %v4142 = vmul.f32 %v3518, %v4126
      %v4143 = vmul.f32 %v3519, %v4127
      %v4144 = vmul.f32 %v3520, %v4128
      %v4145 = vmul.f32 %v3521, %v4129
      %v4146 = vmul.f32 %v3522, %v4130
      %v4147 = vmul.f32 %v3523, %v4131
      %v4148 = vmul.f32 %v3524, %v4132
      %v4149 = vmul.f32 %v3525, %v4133
      %v4150 = vpack.c.bf16 %v4135, %v4134
      %v4151 = vpack.c.bf16 %v4137, %v4136
      %v4152 = vpack.c.bf16 %v4139, %v4138
      %v4153 = vpack.c.bf16 %v4141, %v4140
      %v4154 = vpack.c.bf16 %v4143, %v4142
      %v4155 = vpack.c.bf16 %v4145, %v4144
      %v4156 = vpack.c.bf16 %v4147, %v4146
      %v4157 = vpack.c.bf16 %v4149, %v4148
      %v4159 = vperm.slane %v1030, 0
      %v4169 = vunpack.c.l.b16 %v1022
      %v4170 = vunpack.c.l.b16 %v1023
      %v4171 = vunpack.c.l.b16 %v1024
      %v4172 = vunpack.c.l.b16 %v1025
      %v4173 = vunpack.c.l.b16 %v1026
      %v4174 = vunpack.c.l.b16 %v1027
      %v4175 = vunpack.c.l.b16 %v1028
      %v4176 = vunpack.c.l.b16 %v1029
      %v4177 = vpack.c.b16 %v4170, %v4169
      %v4178 = vpack.c.b16 %v4172, %v4171
      %v4179 = vpack.c.b16 %v4174, %v4173
      %v4180 = vpack.c.b16 %v4176, %v4175
      %vm4185 = vcmask 523264
      %v4187 = vsel %vm4185, %v4150, 0
      %v4190 = vsel %vm4185, %v4151, 0
      %v4193 = vsel %vm4185, %v4152, 0
      %v4196 = vsel %vm4185, %v4153, 0
      %v4199 = vsel %vm4185, %v4154, 0
      %v4202 = vsel %vm4185, %v4155, 0
      %v4205 = vsel %vm4185, %v4156, 0
      %v4208 = vsel %vm4185, %v4157, 0
      %4210 = vmatpush.bf16.msra.mxu0 0
      %4211 = vmatpush.bf16.msra.mxu0 0
      %4212 = vmatpush.bf16.msra.mxu0 0
      %4213 = vmatpush.bf16.msra.mxu0 0
      %4214 = vmatpush.bf16.msra.mxu0 %v4180
      %4215 = vmatpush.bf16.msra.mxu0 %v4179
      %4216 = vmatpush.bf16.msra.mxu0 %v4178
      %4217 = vmatpush.bf16.msra.mxu0 %v4177
      %4218 = vmatmul.bf16.gmra.mxu0 %v4187
      %v4219 = vpop.f32.mrf.mxu0
      %v4220 = vadd.f32 %v4159, %v4219
      %v4221 = vpop.f32.mrf.mxu0
      %v4222 = vadd.f32 %v4159, %v4221
      %4223 = vmatmul.bf16.gmra.mxu0 %v4190
      %v4224 = vpop.f32.mrf.mxu0
      %v4225 = vadd.f32 %v4159, %v4224
      %v4226 = vpop.f32.mrf.mxu0
      %v4227 = vadd.f32 %v4159, %v4226
      %4228 = vmatmul.bf16.gmra.mxu0 %v4193
      %v4229 = vpop.f32.mrf.mxu0
      %v4230 = vadd.f32 %v4159, %v4229
      %v4231 = vpop.f32.mrf.mxu0
      %v4232 = vadd.f32 %v4159, %v4231
      %4233 = vmatmul.bf16.gmra.mxu0 %v4196
      %v4234 = vpop.f32.mrf.mxu0
      %v4235 = vadd.f32 %v4159, %v4234
      %v4236 = vpop.f32.mrf.mxu0
      %v4237 = vadd.f32 %v4159, %v4236
      %4238 = vmatmul.bf16.gmra.mxu0 %v4199
      %v4239 = vpop.f32.mrf.mxu0
      %v4240 = vadd.f32 %v4159, %v4239
      %v4241 = vpop.f32.mrf.mxu0
      %v4242 = vadd.f32 %v4159, %v4241
      %4243 = vmatmul.bf16.gmra.mxu0 %v4202
      %v4244 = vpop.f32.mrf.mxu0
      %v4245 = vadd.f32 %v4159, %v4244
      %v4246 = vpop.f32.mrf.mxu0
      %v4247 = vadd.f32 %v4159, %v4246
      %4248 = vmatmul.bf16.gmra.mxu0 %v4205
      %v4249 = vpop.f32.mrf.mxu0
      %v4250 = vadd.f32 %v4159, %v4249
      %v4251 = vpop.f32.mrf.mxu0
      %v4252 = vadd.f32 %v4159, %v4251
      %4253 = vmatmul.bf16.gmra.mxu0 %v4208
      %v4254 = vpop.f32.mrf.mxu0
      %v4255 = vadd.f32 %v4159, %v4254
      %v4256 = vpop.f32.mrf.mxu0
      %v4257 = vadd.f32 %v4159, %v4256
      %4258 = vdwg.mxu0
      %v4259 = vadd.f32 %v3398, %v4220
      %v4260 = vadd.f32 %v3399, %v4222
      %v4261 = vadd.f32 %v3400, %v4225
      %v4262 = vadd.f32 %v3401, %v4227
      %v4263 = vadd.f32 %v3402, %v4230
      %v4264 = vadd.f32 %v3403, %v4232
      %v4265 = vadd.f32 %v3404, %v4235
      %v4266 = vadd.f32 %v3405, %v4237
      %v4267 = vadd.f32 %v3406, %v4240
      %v4268 = vadd.f32 %v3407, %v4242
      %v4269 = vadd.f32 %v3408, %v4245
      %v4270 = vadd.f32 %v3409, %v4247
      %v4271 = vadd.f32 %v3410, %v4250
      %v4272 = vadd.f32 %v3411, %v4252
      %v4273 = vadd.f32 %v3412, %v4255
      %v4274 = vadd.f32 %v3413, %v4257
      %4275 = vst.msk [vmem:[%s454] sm:$0xff] %vm474, %v4259
      %4276 = vst.msk [vmem:[%s454 + $0x8] sm:$0xff] %vm474, %v4260
      %4277 = vst.msk [vmem:[%s454 + $0x10] sm:$0xff] %vm474, %v4261
      %4278 = vst.msk [vmem:[%s454 + $0x18] sm:$0xff] %vm474, %v4262
      %4279 = vst.msk [vmem:[%s454 + $0x20] sm:$0xff] %vm474, %v4263
      %4280 = vst.msk [vmem:[%s454 + $0x28] sm:$0xff] %vm474, %v4264
      %4281 = vst.msk [vmem:[%s454 + $0x30] sm:$0xff] %vm474, %v4265
      %4282 = vst.msk [vmem:[%s454 + $0x38] sm:$0xff] %vm474, %v4266
      %4283 = vst.msk [vmem:[%s454 + $0x40] sm:$0xff] %vm474, %v4267
      %4284 = vst.msk [vmem:[%s454 + $0x48] sm:$0xff] %vm474, %v4268
      %4285 = vst.msk [vmem:[%s454 + $0x50] sm:$0xff] %vm474, %v4269
      %4286 = vst.msk [vmem:[%s454 + $0x58] sm:$0xff] %vm474, %v4270
      %4287 = vst.msk [vmem:[%s454 + $0x60] sm:$0xff] %vm474, %v4271
      %4288 = vst.msk [vmem:[%s454 + $0x68] sm:$0xff] %vm474, %v4272
      %4289 = vst.msk [vmem:[%s454 + $0x70] sm:$0xff] %vm474, %v4273
      %4290 = vst.msk [vmem:[%s454 + $0x78] sm:$0xff] %vm474, %v4274
      %p4291 = scmp.lt.s32.totalorder %s24, 1
      %s4292 = scalar_select %p4291, %s24, 1
      %s4293 = smul.addr %s4292, 16
      %s4294 = smul.addr %s4293, 8
      %s4295 = scalar_lea.vmem %s13, %s4294
      // Predicated region
      $region73: #{tpu_custom_call.1} parent=71 // pred_check
        %p4296 = pneg %p325
      $region74: #{tpu_custom_call.1} parent=71 // pred_check_branch
        %4298 = sbr.rel (%p4296) target = $region76
      $region75: #{tpu_custom_call.1} parent=71 // pred_region
        _
      $region76: #{tpu_custom_call.1} parent=71 // pred_fallthru
        _
    $region72: #{tpu_custom_call.1} parent=5 // pred_fallthru
      _
    %p4299 = scmp.le.s32.totalorder 2, %s19
    // Predicated region
    $region77: #{tpu_custom_call.1} parent=5 // pred_check
      %p4300 = pneg %p4299
    $region78: #{tpu_custom_call.1} parent=5 // pred_check_branch
      %4302 = sbr.rel (%p4300) target = $region80
    $region79: #{tpu_custom_call.1} parent=5 // pred_region
      %s4303 = ssub.s32 %s19, 2
      // Predicated region
      $region81: #{tpu_custom_call.1} parent=79 // pred_check
        %p4304 = pneg %p331
      $region82: #{tpu_custom_call.1} parent=79 // pred_check_branch
        %4306 = sbr.rel (%p4304) target = $region84
      $region83: #{tpu_custom_call.1} parent=79 // pred_region
        %p4307 = scmp.lt.s32.totalorder %s25, 1
        %s4308 = scalar_select %p4307, %s25, 1
        %s4309 = smul.addr %s4308, 16
        %s4310 = smul.addr %s4309, 8
        %s4311 = scalar_lea.vmem %s13, %s4310
      $region84: #{tpu_custom_call.1} parent=79 // pred_fallthru
        _
    $region80: #{tpu_custom_call.1} parent=5 // pred_fallthru
      _
  $region6: #{tpu_custom_call.1} parent=0 // loop_footer
    %s23 = sadd.s32 1, %s19
  $region7: #{tpu_custom_call.1} parent=0 // loop_footer_branch
    %18 = sbr.rel target = $region3
  $region8: #{tpu_custom_call.1} parent=0 // loop_exit
    _

// kernel: tpu_custom_call.1
$region0: #{tpu_custom_call.1}
  #allocation0 [shape = 'u32[]', space=smem, size = 0x4, offset = 0x4, fixed_abs, tag = 'smem constant byte address 0x4 - core index']
  #allocation1 [shape = 'u32[72,128]{1,0:T(1,128)}', space=vmem, size = 0x9000, scoped, tag = 'internal scratch']
  #allocation2 [shape = 'f32[128,32]{1,0:T(8,128)}', space=vmem, size = 0x10000, scoped, tag = 'scratch operand']
  %s0 = inlined_call_operand.vmem [shape: f32[2,128,32], index: 0, kind: input, shape index: {}]
  %s1 = inlined_call_operand.vmem [shape: f32[2,1,128], index: 1, kind: input, shape index: {}]
  %s2 = inlined_call_operand.vmem [shape: f32[1,32], index: 2, kind: input, shape index: {}]
  %s3 = inlined_call_operand.vmem [shape: f32[1,32], index: 3, kind: input, shape index: {}]
  %s4 = inlined_call_operand.vmem [shape: bf16[32,32], index: 4, kind: input, shape index: {}]
  %s5 = inlined_call_operand.vmem [shape: bf16[32,64], index: 5, kind: input, shape index: {}]
  %s6 = inlined_call_operand.vmem [shape: bf16[32,32], index: 6, kind: input, shape index: {}]
  %s7 = inlined_call_operand.vmem [shape: f32[1,32], index: 7, kind: input, shape index: {}]
  %s8 = inlined_call_operand.vmem [shape: f32[1,32], index: 8, kind: input, shape index: {}]
  %s9 = inlined_call_operand.vmem [shape: bf16[32,64], index: 9, kind: input, shape index: {}]
  %s10 = inlined_call_operand.vmem [shape: f32[1,64], index: 10, kind: input, shape index: {}]
  %s11 = inlined_call_operand.vmem [shape: bf16[64,32], index: 11, kind: input, shape index: {}]
  %s12 = inlined_call_operand.vmem [shape: f32[1,32], index: 12, kind: input, shape index: {}]
  %s13 = inlined_call_operand.vmem [shape: f32[2,128,32], index: 13, kind: output, shape index: {}]
  %s14 = sld [smem:[#allocation0]]
  $region85: #{tpu_custom_call.1} parent=0
    _
  %s16 = ssub.s32 1, %s14
  %s17 = scalar_select 0, %s16, %s14
  loop: start=0, step=1, limit=4
  $region2: #{tpu_custom_call.1} parent=0 // loop_pre_header
    _
  $region3: #{tpu_custom_call.1} parent=0 // loop_header
    %s19 = sphi 0, %s23
    %p20 = scmp.ge.s32.totalorder %s19, 4
    %s29 = sphi 0, %s31
    %s32 = sphi 0, %s29
    %s33 = sphi 0, %s32
    %s49 = sphi 0, %s33
    %s55 = sphi 0, %s57
    %s58 = sphi 0, %s55
    %s59 = sphi 0, %s58
    %s75 = sphi 0, %s59
    %s79 = sphi 0, %s79
    %s81 = sphi 0, %s79
    %s82 = sphi 0, %s81
    %s96 = sphi 0, %s82
    %s100 = sphi 0, %s100
    %s102 = sphi 0, %s100
    %s103 = sphi 0, %s102
    %s117 = sphi 0, %s103
    %s121 = sphi 0, %s121
    %s123 = sphi 0, %s121
    %s124 = sphi 0, %s123
    %s138 = sphi 0, %s124
    %s142 = sphi 0, %s142
    %s144 = sphi 0, %s142
    %s145 = sphi 0, %s144
    %s159 = sphi 0, %s145
    %s163 = sphi 0, %s163
    %s165 = sphi 0, %s163
    %s166 = sphi 0, %s165
    %s180 = sphi 0, %s166
    %s184 = sphi 0, %s184
    %s186 = sphi 0, %s184
    %s187 = sphi 0, %s186
    %s201 = sphi 0, %s187
    %s205 = sphi 0, %s205
    %s207 = sphi 0, %s205
    %s208 = sphi 0, %s207
    %s222 = sphi 0, %s208
    %s226 = sphi 0, %s226
    %s228 = sphi 0, %s226
    %s229 = sphi 0, %s228
    %s243 = sphi 0, %s229
    %s247 = sphi 0, %s247
    %s249 = sphi 0, %s247
    %s250 = sphi 0, %s249
    %s264 = sphi 0, %s250
    %s268 = sphi 0, %s268
    %s270 = sphi 0, %s268
    %s271 = sphi 0, %s270
    %s285 = sphi 0, %s271
    %s289 = sphi 0, %s289
    %s291 = sphi 0, %s289
    %s292 = sphi 0, %s291
    %s306 = sphi 0, %s292
    %s312 = sphi 0, %s314
    %s315 = sphi 0, %s312
    %s316 = sphi 0, %s315
    %s332 = sphi 0, %s316
  $region4: #{tpu_custom_call.1} parent=0 // loop_header_branch
    %22 = sbr.rel (%p20) target = $region8
  $region5: #{tpu_custom_call.1} parent=0 // loop_body
    %s24 = ssub.s32 %s19, 1
    %s25 = ssub.s32 %s19, 2
    %s26 = sadd.s32 %s19, 1
    %s27 = ssub.s32 %s19, %s26
    %p28 = scmp.eq.s32.totalorder %s27, 0
    %s30 = sadd.s32 %s29, 1
    %s31 = scalar_select %p28, %s29, %s30
    %p34 = pneg %p28
    %p35 = scmp.eq.s32.totalorder %s19, 1
    %p36 = por %p34, %p35
    %p37 = scmp.ne.s32.totalorder %s29, %s32
    %p38 = scmp.eq.s32.totalorder %s19, 0
    %p39 = por %p37, %p38
    %p40 = scmp.ne.s32.totalorder %s29, %s32
    %p41 = scmp.eq.s32.totalorder %s24, 1
    %p42 = por %p40, %p41
    %p43 = scmp.ne.s32.totalorder %s32, %s33
    %p44 = scmp.eq.s32.totalorder %s24, 0
    %p45 = por %p43, %p44
    %p46 = scmp.ne.s32.totalorder %s32, %s33
    %p47 = scmp.eq.s32.totalorder %s25, 1
    %p48 = por %p46, %p47
    %p50 = scmp.ne.s32.totalorder %s33, %s49
    %p51 = scmp.eq.s32.totalorder %s25, 0
    %p52 = por %p50, %p51
    %s53 = ssub.s32 %s19, %s26
    %p54 = scmp.eq.s32.totalorder %s53, 0
    %s56 = sadd.s32 %s55, 1
    %s57 = scalar_select %p54, %s55, %s56
    %p60 = pneg %p54
    %p61 = scmp.eq.s32.totalorder %s19, 1
    %p62 = por %p60, %p61
    %p63 = scmp.ne.s32.totalorder %s55, %s58
    %p64 = scmp.eq.s32.totalorder %s19, 0
    %p65 = por %p63, %p64
    %p66 = scmp.ne.s32.totalorder %s55, %s58
    %p67 = scmp.eq.s32.totalorder %s24, 1
    %p68 = por %p66, %p67
    %p69 = scmp.ne.s32.totalorder %s58, %s59
    %p70 = scmp.eq.s32.totalorder %s24, 0
    %p71 = por %p69, %p70
    %p72 = scmp.ne.s32.totalorder %s58, %s59
    %p73 = scmp.eq.s32.totalorder %s25, 1
    %p74 = por %p72, %p73
    %p76 = scmp.ne.s32.totalorder %s59, %s75
    %p77 = scmp.eq.s32.totalorder %s25, 0
    %p78 = por %p76, %p77
    %s80 = sadd.s32 %s79, 1
    %p83 = scmp.eq.s32.totalorder %s19, 1
    %p84 = scmp.ne.s32.totalorder %s79, %s81
    %p85 = scmp.eq.s32.totalorder %s19, 0
    %p86 = por %p84, %p85
    %p87 = scmp.ne.s32.totalorder %s79, %s81
    %p88 = scmp.eq.s32.totalorder %s24, 1
    %p89 = por %p87, %p88
    %p90 = scmp.ne.s32.totalorder %s81, %s82
    %p91 = scmp.eq.s32.totalorder %s24, 0
    %p92 = por %p90, %p91
    %p93 = scmp.ne.s32.totalorder %s81, %s82
    %p94 = scmp.eq.s32.totalorder %s25, 1
    %p95 = por %p93, %p94
    %p97 = scmp.ne.s32.totalorder %s82, %s96
    %p98 = scmp.eq.s32.totalorder %s25, 0
    %p99 = por %p97, %p98
    %s101 = sadd.s32 %s100, 1
    %p104 = scmp.eq.s32.totalorder %s19, 1
    %p105 = scmp.ne.s32.totalorder %s100, %s102
    %p106 = scmp.eq.s32.totalorder %s19, 0
    %p107 = por %p105, %p106
    %p108 = scmp.ne.s32.totalorder %s100, %s102
    %p109 = scmp.eq.s32.totalorder %s24, 1
    %p110 = por %p108, %p109
    %p111 = scmp.ne.s32.totalorder %s102, %s103
    %p112 = scmp.eq.s32.totalorder %s24, 0
    %p113 = por %p111, %p112
    %p114 = scmp.ne.s32.totalorder %s102, %s103
    %p115 = scmp.eq.s32.totalorder %s25, 1
    %p116 = por %p114, %p115
    %p118 = scmp.ne.s32.totalorder %s103, %s117
    %p119 = scmp.eq.s32.totalorder %s25, 0
    %p120 = por %p118, %p119
    %s122 = sadd.s32 %s121, 1
    %p125 = scmp.eq.s32.totalorder %s19, 1
    %p126 = scmp.ne.s32.totalorder %s121, %s123
    %p127 = scmp.eq.s32.totalorder %s19, 0
    %p128 = por %p126, %p127
    %p129 = scmp.ne.s32.totalorder %s121, %s123
    %p130 = scmp.eq.s32.totalorder %s24, 1
    %p131 = por %p129, %p130
    %p132 = scmp.ne.s32.totalorder %s123, %s124
    %p133 = scmp.eq.s32.totalorder %s24, 0
    %p134 = por %p132, %p133
    %p135 = scmp.ne.s32.totalorder %s123, %s124
    %p136 = scmp.eq.s32.totalorder %s25, 1
    %p137 = por %p135, %p136
    %p139 = scmp.ne.s32.totalorder %s124, %s138
    %p140 = scmp.eq.s32.totalorder %s25, 0
    %p141 = por %p139, %p140
    %s143 = sadd.s32 %s142, 1
    %p146 = scmp.eq.s32.totalorder %s19, 1
    %p147 = scmp.ne.s32.totalorder %s142, %s144
    %p148 = scmp.eq.s32.totalorder %s19, 0
    %p149 = por %p147, %p148
    %p150 = scmp.ne.s32.totalorder %s142, %s144
    %p151 = scmp.eq.s32.totalorder %s24, 1
    %p152 = por %p150, %p151
    %p153 = scmp.ne.s32.totalorder %s144, %s145
    %p154 = scmp.eq.s32.totalorder %s24, 0
    %p155 = por %p153, %p154
    %p156 = scmp.ne.s32.totalorder %s144, %s145
    %p157 = scmp.eq.s32.totalorder %s25, 1
    %p158 = por %p156, %p157
    %p160 = scmp.ne.s32.totalorder %s145, %s159
    %p161 = scmp.eq.s32.totalorder %s25, 0
    %p162 = por %p160, %p161
    %s164 = sadd.s32 %s163, 1
    %p167 = scmp.eq.s32.totalorder %s19, 1
    %p168 = scmp.ne.s32.totalorder %s163, %s165
    %p169 = scmp.eq.s32.totalorder %s19, 0
    %p170 = por %p168, %p169
    %p171 = scmp.ne.s32.totalorder %s163, %s165
    %p172 = scmp.eq.s32.totalorder %s24, 1
    %p173 = por %p171, %p172
    %p174 = scmp.ne.s32.totalorder %s165, %s166
    %p175 = scmp.eq.s32.totalorder %s24, 0
    %p176 = por %p174, %p175
    %p177 = scmp.ne.s32.totalorder %s165, %s166
    %p178 = scmp.eq.s32.totalorder %s25, 1
    %p179 = por %p177, %p178
    %p181 = scmp.ne.s32.totalorder %s166, %s180
    %p182 = scmp.eq.s32.totalorder %s25, 0
    %p183 = por %p181, %p182
    %s185 = sadd.s32 %s184, 1
    %p188 = scmp.eq.s32.totalorder %s19, 1
    %p189 = scmp.ne.s32.totalorder %s184, %s186
    %p190 = scmp.eq.s32.totalorder %s19, 0
    %p191 = por %p189, %p190
    %p192 = scmp.ne.s32.totalorder %s184, %s186
    %p193 = scmp.eq.s32.totalorder %s24, 1
    %p194 = por %p192, %p193
    %p195 = scmp.ne.s32.totalorder %s186, %s187
    %p196 = scmp.eq.s32.totalorder %s24, 0
    %p197 = por %p195, %p196
    %p198 = scmp.ne.s32.totalorder %s186, %s187
    %p199 = scmp.eq.s32.totalorder %s25, 1
    %p200 = por %p198, %p199
    %p202 = scmp.ne.s32.totalorder %s187, %s201
    %p203 = scmp.eq.s32.totalorder %s25, 0
    %p204 = por %p202, %p203
    %s206 = sadd.s32 %s205, 1
    %p209 = scmp.eq.s32.totalorder %s19, 1
    %p210 = scmp.ne.s32.totalorder %s205, %s207
    %p211 = scmp.eq.s32.totalorder %s19, 0
    %p212 = por %p210, %p211
    %p213 = scmp.ne.s32.totalorder %s205, %s207
    %p214 = scmp.eq.s32.totalorder %s24, 1
    %p215 = por %p213, %p214
    %p216 = scmp.ne.s32.totalorder %s207, %s208
    %p217 = scmp.eq.s32.totalorder %s24, 0
    %p218 = por %p216, %p217
    %p219 = scmp.ne.s32.totalorder %s207, %s208
    %p220 = scmp.eq.s32.totalorder %s25, 1
    %p221 = por %p219, %p220
    %p223 = scmp.ne.s32.totalorder %s208, %s222
    %p224 = scmp.eq.s32.totalorder %s25, 0
    %p225 = por %p223, %p224
    %s227 = sadd.s32 %s226, 1
    %p230 = scmp.eq.s32.totalorder %s19, 1
    %p231 = scmp.ne.s32.totalorder %s226, %s228
    %p232 = scmp.eq.s32.totalorder %s19, 0
    %p233 = por %p231, %p232
    %p234 = scmp.ne.s32.totalorder %s226, %s228
    %p235 = scmp.eq.s32.totalorder %s24, 1
    %p236 = por %p234, %p235
    %p237 = scmp.ne.s32.totalorder %s228, %s229
    %p238 = scmp.eq.s32.totalorder %s24, 0
    %p239 = por %p237, %p238
    %p240 = scmp.ne.s32.totalorder %s228, %s229
    %p241 = scmp.eq.s32.totalorder %s25, 1
    %p242 = por %p240, %p241
    %p244 = scmp.ne.s32.totalorder %s229, %s243
    %p245 = scmp.eq.s32.totalorder %s25, 0
    %p246 = por %p244, %p245
    %s248 = sadd.s32 %s247, 1
    %p251 = scmp.eq.s32.totalorder %s19, 1
    %p252 = scmp.ne.s32.totalorder %s247, %s249
    %p253 = scmp.eq.s32.totalorder %s19, 0
    %p254 = por %p252, %p253
    %p255 = scmp.ne.s32.totalorder %s247, %s249
    %p256 = scmp.eq.s32.totalorder %s24, 1
    %p257 = por %p255, %p256
    %p258 = scmp.ne.s32.totalorder %s249, %s250
    %p259 = scmp.eq.s32.totalorder %s24, 0
    %p260 = por %p258, %p259
    %p261 = scmp.ne.s32.totalorder %s249, %s250
    %p262 = scmp.eq.s32.totalorder %s25, 1
    %p263 = por %p261, %p262
    %p265 = scmp.ne.s32.totalorder %s250, %s264
    %p266 = scmp.eq.s32.totalorder %s25, 0
    %p267 = por %p265, %p266
    %s269 = sadd.s32 %s268, 1
    %p272 = scmp.eq.s32.totalorder %s19, 1
    %p273 = scmp.ne.s32.totalorder %s268, %s270
    %p274 = scmp.eq.s32.totalorder %s19, 0
    %p275 = por %p273, %p274
    %p276 = scmp.ne.s32.totalorder %s268, %s270
    %p277 = scmp.eq.s32.totalorder %s24, 1
    %p278 = por %p276, %p277
    %p279 = scmp.ne.s32.totalorder %s270, %s271
    %p280 = scmp.eq.s32.totalorder %s24, 0
    %p281 = por %p279, %p280
    %p282 = scmp.ne.s32.totalorder %s270, %s271
    %p283 = scmp.eq.s32.totalorder %s25, 1
    %p284 = por %p282, %p283
    %p286 = scmp.ne.s32.totalorder %s271, %s285
    %p287 = scmp.eq.s32.totalorder %s25, 0
    %p288 = por %p286, %p287
    %s290 = sadd.s32 %s289, 1
    %p293 = scmp.eq.s32.totalorder %s19, 1
    %p294 = scmp.ne.s32.totalorder %s289, %s291
    %p295 = scmp.eq.s32.totalorder %s19, 0
    %p296 = por %p294, %p295
    %p297 = scmp.ne.s32.totalorder %s289, %s291
    %p298 = scmp.eq.s32.totalorder %s24, 1
    %p299 = por %p297, %p298
    %p300 = scmp.ne.s32.totalorder %s291, %s292
    %p301 = scmp.eq.s32.totalorder %s24, 0
    %p302 = por %p300, %p301
    %p303 = scmp.ne.s32.totalorder %s291, %s292
    %p304 = scmp.eq.s32.totalorder %s25, 1
    %p305 = por %p303, %p304
    %p307 = scmp.ne.s32.totalorder %s292, %s306
    %p308 = scmp.eq.s32.totalorder %s25, 0
    %p309 = por %p307, %p308
    %s310 = ssub.s32 %s19, %s26
    %p311 = scmp.eq.s32.totalorder %s310, 0
    %s313 = sadd.s32 %s312, 1
    %s314 = scalar_select %p311, %s312, %s313
    %p317 = pneg %p311
    %p318 = scmp.eq.s32.totalorder %s19, 1
    %p319 = por %p317, %p318
    %p320 = scmp.ne.s32.totalorder %s312, %s315
    %p321 = scmp.eq.s32.totalorder %s19, 0
    %p322 = por %p320, %p321
    %p323 = scmp.ne.s32.totalorder %s312, %s315
    %p324 = scmp.eq.s32.totalorder %s24, 1
    %p325 = por %p323, %p324
    %p326 = scmp.ne.s32.totalorder %s315, %s316
    %p327 = scmp.eq.s32.totalorder %s24, 0
    %p328 = por %p326, %p327
    %p329 = scmp.ne.s32.totalorder %s315, %s316
    %p330 = scmp.eq.s32.totalorder %s25, 1
    %p331 = por %p329, %p330
    %p333 = scmp.ne.s32.totalorder %s316, %s332
    %p334 = scmp.eq.s32.totalorder %s25, 0
    %p335 = por %p333, %p334
    %p336 = scmp.le.s32.totalorder 1, %s19
    %p337 = scmp.lt.s32.totalorder %s19, 3
    %p338 = pnand %p336, %p337
    %p339 = pneg %p338
    // Predicated region
    $region9: #{tpu_custom_call.1} parent=5 // pred_check
      _
    $region10: #{tpu_custom_call.1} parent=5 // pred_check_branch
      %341 = sbr.rel (%p338) target = $region12
    $region11: #{tpu_custom_call.1} parent=5 // pred_region
      %s342 = ssub.s32 %s19, 1
      // Predicated region
      $region13: #{tpu_custom_call.1} parent=11 // pred_check
        %p343 = pneg %p92
      $region14: #{tpu_custom_call.1} parent=11 // pred_check_branch
        %345 = sbr.rel (%p343) target = $region16
      $region15: #{tpu_custom_call.1} parent=11 // pred_region
        _
      $region16: #{tpu_custom_call.1} parent=11 // pred_fallthru
        _
      // Predicated region
      $region17: #{tpu_custom_call.1} parent=11 // pred_check
        %p346 = pneg %p113
      $region18: #{tpu_custom_call.1} parent=11 // pred_check_branch
        %348 = sbr.rel (%p346) target = $region20
      $region19: #{tpu_custom_call.1} parent=11 // pred_region
        _
      $region20: #{tpu_custom_call.1} parent=11 // pred_fallthru
        _
      // Predicated region
      $region21: #{tpu_custom_call.1} parent=11 // pred_check
        %p349 = pneg %p134
      $region22: #{tpu_custom_call.1} parent=11 // pred_check_branch
        %351 = sbr.rel (%p349) target = $region24
      $region23: #{tpu_custom_call.1} parent=11 // pred_region
        _
      $region24: #{tpu_custom_call.1} parent=11 // pred_fallthru
        _
      // Predicated region
      $region25: #{tpu_custom_call.1} parent=11 // pred_check
        %p352 = pneg %p155
      $region26: #{tpu_custom_call.1} parent=11 // pred_check_branch
        %354 = sbr.rel (%p352) target = $region28
      $region27: #{tpu_custom_call.1} parent=11 // pred_region
        _
      $region28: #{tpu_custom_call.1} parent=11 // pred_fallthru
        _
      // Predicated region
      $region29: #{tpu_custom_call.1} parent=11 // pred_check
        %p355 = pneg %p176
      $region30: #{tpu_custom_call.1} parent=11 // pred_check_branch
        %357 = sbr.rel (%p355) target = $region32
      $region31: #{tpu_custom_call.1} parent=11 // pred_region
        _
      $region32: #{tpu_custom_call.1} parent=11 // pred_fallthru
        _
      // Predicated region
      $region33: #{tpu_custom_call.1} parent=11 // pred_check
        %p358 = pneg %p197
      $region34: #{tpu_custom_call.1} parent=11 // pred_check_branch
        %360 = sbr.rel (%p358) target = $region36
      $region35: #{tpu_custom_call.1} parent=11 // pred_region
        _
      $region36: #{tpu_custom_call.1} parent=11 // pred_fallthru
        _
      // Predicated region
      $region37: #{tpu_custom_call.1} parent=11 // pred_check
        %p361 = pneg %p218
      $region38: #{tpu_custom_call.1} parent=11 // pred_check_branch
        %363 = sbr.rel (%p361) target = $region40
      $region39: #{tpu_custom_call.1} parent=11 // pred_region
        _
      $region40: #{tpu_custom_call.1} parent=11 // pred_fallthru
        _
      // Predicated region
      $region41: #{tpu_custom_call.1} parent=11 // pred_check
        %p364 = pneg %p239
      $region42: #{tpu_custom_call.1} parent=11 // pred_check_branch
        %366 = sbr.rel (%p364) target = $region44
      $region43: #{tpu_custom_call.1} parent=11 // pred_region
        _
      $region44: #{tpu_custom_call.1} parent=11 // pred_fallthru
        _
      // Predicated region
      $region45: #{tpu_custom_call.1} parent=11 // pred_check
        %p367 = pneg %p260
      $region46: #{tpu_custom_call.1} parent=11 // pred_check_branch
        %369 = sbr.rel (%p367) target = $region48
      $region47: #{tpu_custom_call.1} parent=11 // pred_region
        _
      $region48: #{tpu_custom_call.1} parent=11 // pred_fallthru
        _
      // Predicated region
      $region49: #{tpu_custom_call.1} parent=11 // pred_check
        %p370 = pneg %p281
      $region50: #{tpu_custom_call.1} parent=11 // pred_check_branch
        %372 = sbr.rel (%p370) target = $region52
      $region51: #{tpu_custom_call.1} parent=11 // pred_region
        _
      $region52: #{tpu_custom_call.1} parent=11 // pred_fallthru
        _
      // Predicated region
      $region53: #{tpu_custom_call.1} parent=11 // pred_check
        %p373 = pneg %p302
      $region54: #{tpu_custom_call.1} parent=11 // pred_check_branch
        %375 = sbr.rel (%p373) target = $region56
      $region55: #{tpu_custom_call.1} parent=11 // pred_region
        _
      $region56: #{tpu_custom_call.1} parent=11 // pred_fallthru
        _
    $region12: #{tpu_custom_call.1} parent=5 // pred_fallthru
      _
    %p376 = scmp.lt.s32.totalorder %s19, 2
    // Predicated region
    $region57: #{tpu_custom_call.1} parent=5 // pred_check
      %p377 = pneg %p376
    $region58: #{tpu_custom_call.1} parent=5 // pred_check_branch
      %379 = sbr.rel (%p377) target = $region60
    $region59: #{tpu_custom_call.1} parent=5 // pred_region
      // Predicated region
      $region61: #{tpu_custom_call.1} parent=59 // pred_check
        %p380 = pneg %p39
      $region62: #{tpu_custom_call.1} parent=59 // pred_check_branch
        %382 = sbr.rel (%p380) target = $region64
      $region63: #{tpu_custom_call.1} parent=59 // pred_region
        %p383 = scmp.lt.s32.totalorder %s19, 1
        %s384 = scalar_select %p383, %s19, 1
        %s385 = smul.addr %s384, 16
        %s386 = smul.addr %s385, 8
        %s387 = scalar_lea.vmem %s0, %s386
      $region64: #{tpu_custom_call.1} parent=59 // pred_fallthru
        _
      // Predicated region
      $region65: #{tpu_custom_call.1} parent=59 // pred_check
        %p388 = pneg %p65
      $region66: #{tpu_custom_call.1} parent=59 // pred_check_branch
        %390 = sbr.rel (%p388) target = $region68
      $region67: #{tpu_custom_call.1} parent=59 // pred_region
        %p391 = scmp.lt.s32.totalorder %s19, 1
        %s392 = scalar_select %p391, %s19, 1
        %s393 = scalar_lea.vmem %s1, %s392
      $region68: #{tpu_custom_call.1} parent=59 // pred_fallthru
        _
    $region60: #{tpu_custom_call.1} parent=5 // pred_fallthru
      _
    %p394 = scmp.le.s32.totalorder 1, %s19
    %p395 = scmp.lt.s32.totalorder %s19, 3
    %p396 = pnand %p394, %p395
    %p397 = pneg %p396
    // Predicated region
    $region69: #{tpu_custom_call.1} parent=5 // pred_check
      _
    $region70: #{tpu_custom_call.1} parent=5 // pred_check_branch
      %399 = sbr.rel (%p396) target = $region72
    $region71: #{tpu_custom_call.1} parent=5 // pred_region
      %s400 = ssub.s32 %s19, 1
      %p401 = scmp.lt.s32.totalorder %s24, 1
      %s402 = scalar_select %p401, %s24, 1
      %s403 = smul.addr %s402, 16
      %s404 = smul.addr %s403, 8
      %s405 = scalar_lea.vmem %s0, %s404
      %p406 = pneg %p45
      %p407 = pneg %p42
      %p408 = scmp.lt.s32.totalorder %s24, 1
      %s409 = scalar_select %p408, %s24, 1
      %s410 = scalar_lea.vmem %s1, %s409
      %p411 = pneg %p71
      %p412 = pneg %p68
      %p413 = pneg %p92
      %p414 = pneg %p89
      %p415 = pneg %p113
      %p416 = pneg %p110
      %p417 = pneg %p134
      %p418 = pneg %p131
      %p419 = pneg %p155
      %p420 = pneg %p152
      %p421 = pneg %p176
      %p422 = pneg %p173
      %p423 = pneg %p197
      %p424 = pneg %p194
      %p425 = pneg %p218
      %p426 = pneg %p215
      %p427 = pneg %p239
      %p428 = pneg %p236
      %p429 = pneg %p260
      %p430 = pneg %p257
      %p431 = pneg %p281
      %p432 = pneg %p278
      %p433 = pneg %p302
      %p434 = pneg %p299
      %p435 = pneg %p328
      %p436 = pneg %p325
      %p437 = scmp.lt.s32.totalorder %s24, 1
      %s438 = scalar_select %p437, %s24, 1
      %s439 = smul.addr %s438, 16
      %s440 = smul.addr %s439, 8
      %s441 = scalar_lea.vmem %s13, %s440
      %p442 = scmp.lt.s32.totalorder %s24, 1
      %s443 = scalar_select %p442, %s24, 1
      %s444 = smul.addr %s443, 16
      %s445 = smul.addr %s444, 8
      %s446 = scalar_lea.vmem %s0, %s445
      %p447 = scmp.lt.s32.totalorder %s24, 1
      %s448 = scalar_select %p447, %s24, 1
      %s449 = scalar_lea.vmem %s1, %s448
      %p450 = scmp.lt.s32.totalorder %s24, 1
      %s451 = scalar_select %p450, %s24, 1
      %s452 = smul.addr %s451, 16
      %s453 = smul.addr %s452, 8
      %s454 = scalar_lea.vmem %s13, %s453
      %v456 = vld [vmem:[%s446] sm:$0xff]
      %v457 = vld [vmem:[%s446 + $0x8] sm:$0xff]
      %v458 = vld [vmem:[%s446 + $0x10] sm:$0xff]
      %v459 = vld [vmem:[%s446 + $0x18] sm:$0xff]
      %v460 = vld [vmem:[%s446 + $0x20] sm:$0xff]
      %v461 = vld [vmem:[%s446 + $0x28] sm:$0xff]
      %v462 = vld [vmem:[%s446 + $0x30] sm:$0xff]
      %v463 = vld [vmem:[%s446 + $0x38] sm:$0xff]
      %v464 = vld [vmem:[%s446 + $0x40] sm:$0xff]
      %v465 = vld [vmem:[%s446 + $0x48] sm:$0xff]
      %v466 = vld [vmem:[%s446 + $0x50] sm:$0xff]
      %v467 = vld [vmem:[%s446 + $0x58] sm:$0xff]
      %v468 = vld [vmem:[%s446 + $0x60] sm:$0xff]
      %v469 = vld [vmem:[%s446 + $0x68] sm:$0xff]
      %v470 = vld [vmem:[%s446 + $0x70] sm:$0xff]
      %v471 = vld [vmem:[%s446 + $0x78] sm:$0xff]
      %v472 = vld [vmem:[%s2] sm:$0x1]
      %v473 = vld [vmem:[%s3] sm:$0x1]
      %vm474 = vcmask 261120
      %v475 = vsel %vm474, %v456, 0.0
      %476 = vadd.xlane.f32.xlu0 %v475
      %v477 = vpop.xlane.xlu0 %476
      %v478 = vsel %vm474, %v457, 0.0
      %479 = vadd.xlane.f32.xlu0 %v478
      %v480 = vpop.xlane.xlu0 %479
      %v481 = vsel %vm474, %v458, 0.0
      %482 = vadd.xlane.f32.xlu0 %v481
      %v483 = vpop.xlane.xlu0 %482
      %v484 = vsel %vm474, %v459, 0.0
      %485 = vadd.xlane.f32.xlu0 %v484
      %v486 = vpop.xlane.xlu0 %485
      %v487 = vsel %vm474, %v460, 0.0
      %488 = vadd.xlane.f32.xlu0 %v487
      %v489 = vpop.xlane.xlu0 %488
      %v490 = vsel %vm474, %v461, 0.0
      %491 = vadd.xlane.f32.xlu0 %v490
      %v492 = vpop.xlane.xlu0 %491
      %v493 = vsel %vm474, %v462, 0.0
      %494 = vadd.xlane.f32.xlu0 %v493
      %v495 = vpop.xlane.xlu0 %494
      %v496 = vsel %vm474, %v463, 0.0
      %497 = vadd.xlane.f32.xlu0 %v496
      %v498 = vpop.xlane.xlu0 %497
      %v499 = vsel %vm474, %v464, 0.0
      %500 = vadd.xlane.f32.xlu0 %v499
      %v501 = vpop.xlane.xlu0 %500
      %v502 = vsel %vm474, %v465, 0.0
      %503 = vadd.xlane.f32.xlu0 %v502
      %v504 = vpop.xlane.xlu0 %503
      %v505 = vsel %vm474, %v466, 0.0
      %506 = vadd.xlane.f32.xlu0 %v505
      %v507 = vpop.xlane.xlu0 %506
      %v508 = vsel %vm474, %v467, 0.0
      %509 = vadd.xlane.f32.xlu0 %v508
      %v510 = vpop.xlane.xlu0 %509
      %v511 = vsel %vm474, %v468, 0.0
      %512 = vadd.xlane.f32.xlu0 %v511
      %v513 = vpop.xlane.xlu0 %512
      %v514 = vsel %vm474, %v469, 0.0
      %515 = vadd.xlane.f32.xlu0 %v514
      %v516 = vpop.xlane.xlu0 %515
      %v517 = vsel %vm474, %v470, 0.0
      %518 = vadd.xlane.f32.xlu0 %v517
      %v519 = vpop.xlane.xlu0 %518
      %v520 = vsel %vm474, %v471, 0.0
      %521 = vadd.xlane.f32.xlu0 %v520
      %v522 = vpop.xlane.xlu0 %521
      %v523 = vrcp.pop 32.0
      %v524 = vmul.f32 32.0, %v523
      %v525 = vsub.f32 1.0, %v524
      %v526 = vmul.f32 %v523, %v525
      %v527 = vadd.f32 %v523, %v526
      %vm528 = vweird.f32 %v523
      %v529 = vsel %vm528, %v523, %v527
      %v530 = vmul.f32 %v477, %v529
      %v531 = vmul.f32 %v480, %v529
      %v532 = vmul.f32 %v483, %v529
      %v533 = vmul.f32 %v486, %v529
      %v534 = vmul.f32 %v489, %v529
      %v535 = vmul.f32 %v492, %v529
      %v536 = vmul.f32 %v495, %v529
      %v537 = vmul.f32 %v498, %v529
      %v538 = vmul.f32 %v501, %v529
      %v539 = vmul.f32 %v504, %v529
      %v540 = vmul.f32 %v507, %v529
      %v541 = vmul.f32 %v510, %v529
      %v542 = vmul.f32 %v513, %v529
      %v543 = vmul.f32 %v516, %v529
      %v544 = vmul.f32 %v519, %v529
      %v545 = vmul.f32 %v522, %v529
      %v546 = vsub.f32 %v456, %v530
      %v547 = vsub.f32 %v457, %v531
      %v548 = vsub.f32 %v458, %v532
      %v549 = vsub.f32 %v459, %v533
      %v550 = vsub.f32 %v460, %v534
      %v551 = vsub.f32 %v461, %v535
      %v552 = vsub.f32 %v462, %v536
      %v553 = vsub.f32 %v463, %v537
      %v554 = vsub.f32 %v464, %v538
      %v555 = vsub.f32 %v465, %v539
      %v556 = vsub.f32 %v466, %v540
      %v557 = vsub.f32 %v467, %v541
      %v558 = vsub.f32 %v468, %v542
      %v559 = vsub.f32 %v469, %v543
      %v560 = vsub.f32 %v470, %v544
      %v561 = vsub.f32 %v471, %v545
      %v562 = vmul.f32 %v546, %v546
      %v563 = vmul.f32 %v547, %v547
      %v564 = vmul.f32 %v548, %v548
      %v565 = vmul.f32 %v549, %v549
      %v566 = vmul.f32 %v550, %v550
      %v567 = vmul.f32 %v551, %v551
      %v568 = vmul.f32 %v552, %v552
      %v569 = vmul.f32 %v553, %v553
      %v570 = vmul.f32 %v554, %v554
      %v571 = vmul.f32 %v555, %v555
      %v572 = vmul.f32 %v556, %v556
      %v573 = vmul.f32 %v557, %v557
      %v574 = vmul.f32 %v558, %v558
      %v575 = vmul.f32 %v559, %v559
      %v576 = vmul.f32 %v560, %v560
      %v577 = vmul.f32 %v561, %v561
      %v578 = vsel %vm474, %v562, 0.0
      %579 = vadd.xlane.f32.xlu0 %v578
      %v580 = vpop.xlane.xlu0 %579
      %v581 = vsel %vm474, %v563, 0.0
      %582 = vadd.xlane.f32.xlu0 %v581
      %v583 = vpop.xlane.xlu0 %582
      %v584 = vsel %vm474, %v564, 0.0
      %585 = vadd.xlane.f32.xlu0 %v584
      %v586 = vpop.xlane.xlu0 %585
      %v587 = vsel %vm474, %v565, 0.0
      %588 = vadd.xlane.f32.xlu0 %v587
      %v589 = vpop.xlane.xlu0 %588
      %v590 = vsel %vm474, %v566, 0.0
      %591 = vadd.xlane.f32.xlu0 %v590
      %v592 = vpop.xlane.xlu0 %591
      %v593 = vsel %vm474, %v567, 0.0
      %594 = vadd.xlane.f32.xlu0 %v593
      %v595 = vpop.xlane.xlu0 %594
      %v596 = vsel %vm474, %v568, 0.0
      %597 = vadd.xlane.f32.xlu0 %v596
      %v598 = vpop.xlane.xlu0 %597
      %v599 = vsel %vm474, %v569, 0.0
      %600 = vadd.xlane.f32.xlu0 %v599
      %v601 = vpop.xlane.xlu0 %600
      %v602 = vsel %vm474, %v570, 0.0
      %603 = vadd.xlane.f32.xlu0 %v602
      %v604 = vpop.xlane.xlu0 %603
      %v605 = vsel %vm474, %v571, 0.0
      %606 = vadd.xlane.f32.xlu0 %v605
      %v607 = vpop.xlane.xlu0 %606
      %v608 = vsel %vm474, %v572, 0.0
      %609 = vadd.xlane.f32.xlu0 %v608
      %v610 = vpop.xlane.xlu0 %609
      %v611 = vsel %vm474, %v573, 0.0
      %612 = vadd.xlane.f32.xlu0 %v611
      %v613 = vpop.xlane.xlu0 %612
      %v614 = vsel %vm474, %v574, 0.0
      %615 = vadd.xlane.f32.xlu0 %v614
      %v616 = vpop.xlane.xlu0 %615
      %v617 = vsel %vm474, %v575, 0.0
      %618 = vadd.xlane.f32.xlu0 %v617
      %v619 = vpop.xlane.xlu0 %618
      %v620 = vsel %vm474, %v576, 0.0
      %621 = vadd.xlane.f32.xlu0 %v620
      %v622 = vpop.xlane.xlu0 %621
      %v623 = vsel %vm474, %v577, 0.0
      %624 = vadd.xlane.f32.xlu0 %v623
      %v625 = vpop.xlane.xlu0 %624
      %v626 = vmul.f32 %v580, %v529
      %v627 = vmul.f32 %v583, %v529
      %v628 = vmul.f32 %v586, %v529
      %v629 = vmul.f32 %v589, %v529
      %v630 = vmul.f32 %v592, %v529
      %v631 = vmul.f32 %v595, %v529
      %v632 = vmul.f32 %v598, %v529
      %v633 = vmul.f32 %v601, %v529
      %v634 = vmul.f32 %v604, %v529
      %v635 = vmul.f32 %v607, %v529
      %v636 = vmul.f32 %v610, %v529
      %v637 = vmul.f32 %v613, %v529
      %v638 = vmul.f32 %v616, %v529
      %v639 = vmul.f32 %v619, %v529
      %v640 = vmul.f32 %v622, %v529
      %v641 = vmul.f32 %v625, %v529
      %v642 = vadd.f32 %v626, 1e-05
      %v643 = vadd.f32 %v627, 1e-05
      %v644 = vadd.f32 %v628, 1e-05
      %v645 = vadd.f32 %v629, 1e-05
      %v646 = vadd.f32 %v630, 1e-05
      %v647 = vadd.f32 %v631, 1e-05
      %v648 = vadd.f32 %v632, 1e-05
      %v649 = vadd.f32 %v633, 1e-05
      %v650 = vadd.f32 %v634, 1e-05
      %v651 = vadd.f32 %v635, 1e-05
      %v652 = vadd.f32 %v636, 1e-05
      %v653 = vadd.f32 %v637, 1e-05
      %v654 = vadd.f32 %v638, 1e-05
      %v655 = vadd.f32 %v639, 1e-05
      %v656 = vadd.f32 %v640, 1e-05
      %v657 = vadd.f32 %v641, 1e-05
      %v658 = vrsqrt.pop %v642
      %v659 = vmul.f32 %v658, %v642
      %v660 = vmul.f32 %v659, %v658
      %v661 = vmul.f32 0.5, %v660
      %v662 = vsub.f32 1.5, %v661
      %v663 = vmul.f32 %v658, %v662
      %vm664 = vweird.f32 %v642
      %vm665 = vweird.f32 %v658
      %vm666 = vmor %vm664, %vm665
      %v667 = vsel %vm666, %v658, %v663
      %v668 = vrsqrt.pop %v643
      %v669 = vmul.f32 %v668, %v643
      %v670 = vmul.f32 %v669, %v668
      %v671 = vmul.f32 0.5, %v670
      %v672 = vsub.f32 1.5, %v671
      %v673 = vmul.f32 %v668, %v672
      %vm674 = vweird.f32 %v643
      %vm675 = vweird.f32 %v668
      %vm676 = vmor %vm674, %vm675
      %v677 = vsel %vm676, %v668, %v673
      %v678 = vrsqrt.pop %v644
      %v679 = vmul.f32 %v678, %v644
      %v680 = vmul.f32 %v679, %v678
      %v681 = vmul.f32 0.5, %v680
      %v682 = vsub.f32 1.5, %v681
      %v683 = vmul.f32 %v678, %v682
      %vm684 = vweird.f32 %v644
      %vm685 = vweird.f32 %v678
      %vm686 = vmor %vm684, %vm685
      %v687 = vsel %vm686, %v678, %v683
      %v688 = vrsqrt.pop %v645
      %v689 = vmul.f32 %v688, %v645
      %v690 = vmul.f32 %v689, %v688
      %v691 = vmul.f32 0.5, %v690
      %v692 = vsub.f32 1.5, %v691
      %v693 = vmul.f32 %v688, %v692
      %vm694 = vweird.f32 %v645
      %vm695 = vweird.f32 %v688
      %vm696 = vmor %vm694, %vm695
      %v697 = vsel %vm696, %v688, %v693
      %v698 = vrsqrt.pop %v646
      %v699 = vmul.f32 %v698, %v646
      %v700 = vmul.f32 %v699, %v698
      %v701 = vmul.f32 0.5, %v700
      %v702 = vsub.f32 1.5, %v701
      %v703 = vmul.f32 %v698, %v702
      %vm704 = vweird.f32 %v646
      %vm705 = vweird.f32 %v698
      %vm706 = vmor %vm704, %vm705
      %v707 = vsel %vm706, %v698, %v703
      %v708 = vrsqrt.pop %v647
      %v709 = vmul.f32 %v708, %v647
      %v710 = vmul.f32 %v709, %v708
      %v711 = vmul.f32 0.5, %v710
      %v712 = vsub.f32 1.5, %v711
      %v713 = vmul.f32 %v708, %v712
      %vm714 = vweird.f32 %v647
      %vm715 = vweird.f32 %v708
      %vm716 = vmor %vm714, %vm715
      %v717 = vsel %vm716, %v708, %v713
      %v718 = vrsqrt.pop %v648
      %v719 = vmul.f32 %v718, %v648
      %v720 = vmul.f32 %v719, %v718
      %v721 = vmul.f32 0.5, %v720
      %v722 = vsub.f32 1.5, %v721
      %v723 = vmul.f32 %v718, %v722
      %vm724 = vweird.f32 %v648
      %vm725 = vweird.f32 %v718
      %vm726 = vmor %vm724, %vm725
      %v727 = vsel %vm726, %v718, %v723
      %v728 = vrsqrt.pop %v649
      %v729 = vmul.f32 %v728, %v649
      %v730 = vmul.f32 %v729, %v728
      %v731 = vmul.f32 0.5, %v730
      %v732 = vsub.f32 1.5, %v731
      %v733 = vmul.f32 %v728, %v732
      %vm734 = vweird.f32 %v649
      %vm735 = vweird.f32 %v728
      %vm736 = vmor %vm734, %vm735
      %v737 = vsel %vm736, %v728, %v733
      %v738 = vrsqrt.pop %v650
      %v739 = vmul.f32 %v738, %v650
      %v740 = vmul.f32 %v739, %v738
      %v741 = vmul.f32 0.5, %v740
      %v742 = vsub.f32 1.5, %v741
      %v743 = vmul.f32 %v738, %v742
      %vm744 = vweird.f32 %v650
      %vm745 = vweird.f32 %v738
      %vm746 = vmor %vm744, %vm745
      %v747 = vsel %vm746, %v738, %v743
      %v748 = vrsqrt.pop %v651
      %v749 = vmul.f32 %v748, %v651
      %v750 = vmul.f32 %v749, %v748
      %v751 = vmul.f32 0.5, %v750
      %v752 = vsub.f32 1.5, %v751
      %v753 = vmul.f32 %v748, %v752
      %vm754 = vweird.f32 %v651
      %vm755 = vweird.f32 %v748
      %vm756 = vmor %vm754, %vm755
      %v757 = vsel %vm756, %v748, %v753
      %v758 = vrsqrt.pop %v652
      %v759 = vmul.f32 %v758, %v652
      %v760 = vmul.f32 %v759, %v758
      %v761 = vmul.f32 0.5, %v760
      %v762 = vsub.f32 1.5, %v761
      %v763 = vmul.f32 %v758, %v762
      %vm764 = vweird.f32 %v652
      %vm765 = vweird.f32 %v758
      %vm766 = vmor %vm764, %vm765
      %v767 = vsel %vm766, %v758, %v763
      %v768 = vrsqrt.pop %v653
      %v769 = vmul.f32 %v768, %v653
      %v770 = vmul.f32 %v769, %v768
      %v771 = vmul.f32 0.5, %v770
      %v772 = vsub.f32 1.5, %v771
      %v773 = vmul.f32 %v768, %v772
      %vm774 = vweird.f32 %v653
      %vm775 = vweird.f32 %v768
      %vm776 = vmor %vm774, %vm775
      %v777 = vsel %vm776, %v768, %v773
      %v778 = vrsqrt.pop %v654
      %v779 = vmul.f32 %v778, %v654
      %v780 = vmul.f32 %v779, %v778
      %v781 = vmul.f32 0.5, %v780
      %v782 = vsub.f32 1.5, %v781
      %v783 = vmul.f32 %v778, %v782
      %vm784 = vweird.f32 %v654
      %vm785 = vweird.f32 %v778
      %vm786 = vmor %vm784, %vm785
      %v787 = vsel %vm786, %v778, %v783
      %v788 = vrsqrt.pop %v655
      %v789 = vmul.f32 %v788, %v655
      %v790 = vmul.f32 %v789, %v788
      %v791 = vmul.f32 0.5, %v790
      %v792 = vsub.f32 1.5, %v791
      %v793 = vmul.f32 %v788, %v792
      %vm794 = vweird.f32 %v655
      %vm795 = vweird.f32 %v788
      %vm796 = vmor %vm794, %vm795
      %v797 = vsel %vm796, %v788, %v793
      %v798 = vrsqrt.pop %v656
      %v799 = vmul.f32 %v798, %v656
      %v800 = vmul.f32 %v799, %v798
      %v801 = vmul.f32 0.5, %v800
      %v802 = vsub.f32 1.5, %v801
      %v803 = vmul.f32 %v798, %v802
      %vm804 = vweird.f32 %v656
      %vm805 = vweird.f32 %v798
      %vm806 = vmor %vm804, %vm805
      %v807 = vsel %vm806, %v798, %v803
      %v808 = vrsqrt.pop %v657
      %v809 = vmul.f32 %v808, %v657
      %v810 = vmul.f32 %v809, %v808
      %v811 = vmul.f32 0.5, %v810
      %v812 = vsub.f32 1.5, %v811
      %v813 = vmul.f32 %v808, %v812
      %vm814 = vweird.f32 %v657
      %vm815 = vweird.f32 %v808
      %vm816 = vmor %vm814, %vm815
      %v817 = vsel %vm816, %v808, %v813
      %v818 = vmul.f32 %v546, %v667
      %v819 = vmul.f32 %v547, %v677
      %v820 = vmul.f32 %v548, %v687
      %v821 = vmul.f32 %v549, %v697
      %v822 = vmul.f32 %v550, %v707
      %v823 = vmul.f32 %v551, %v717
      %v824 = vmul.f32 %v552, %v727
      %v825 = vmul.f32 %v553, %v737
      %v826 = vmul.f32 %v554, %v747
      %v827 = vmul.f32 %v555, %v757
      %v828 = vmul.f32 %v556, %v767
      %v829 = vmul.f32 %v557, %v777
      %v830 = vmul.f32 %v558, %v787
      %v831 = vmul.f32 %v559, %v797
      %v832 = vmul.f32 %v560, %v807
      %v833 = vmul.f32 %v561, %v817
      %v835 = vperm.slane %v472, 0
      %v837 = vmul.f32 %v818, %v835
      %v838 = vmul.f32 %v819, %v835
      %v839 = vmul.f32 %v820, %v835
      %v840 = vmul.f32 %v821, %v835
      %v841 = vmul.f32 %v822, %v835
      %v842 = vmul.f32 %v823, %v835
      %v843 = vmul.f32 %v824, %v835
      %v844 = vmul.f32 %v825, %v835
      %v845 = vmul.f32 %v826, %v835
      %v846 = vmul.f32 %v827, %v835
      %v847 = vmul.f32 %v828, %v835
      %v848 = vmul.f32 %v829, %v835
      %v849 = vmul.f32 %v830, %v835
      %v850 = vmul.f32 %v831, %v835
      %v851 = vmul.f32 %v832, %v835
      %v852 = vmul.f32 %v833, %v835
      %v854 = vperm.slane %v473, 0
      %v856 = vadd.f32 %v837, %v854
      %v857 = vadd.f32 %v838, %v854
      %v858 = vadd.f32 %v839, %v854
      %v859 = vadd.f32 %v840, %v854
      %v860 = vadd.f32 %v841, %v854
      %v861 = vadd.f32 %v842, %v854
      %v862 = vadd.f32 %v843, %v854
      %v863 = vadd.f32 %v844, %v854
      %v864 = vadd.f32 %v845, %v854
      %v865 = vadd.f32 %v846, %v854
      %v866 = vadd.f32 %v847, %v854
      %v867 = vadd.f32 %v848, %v854
      %v868 = vadd.f32 %v849, %v854
      %v869 = vadd.f32 %v850, %v854
      %v870 = vadd.f32 %v851, %v854
      %v871 = vadd.f32 %v852, %v854
      %v872 = vpack.c.bf16 %v857, %v856
      %v873 = vpack.c.bf16 %v859, %v858
      %v874 = vpack.c.bf16 %v861, %v860
      %v875 = vpack.c.bf16 %v863, %v862
      %v876 = vpack.c.bf16 %v865, %v864
      %v877 = vpack.c.bf16 %v867, %v866
      %v878 = vpack.c.bf16 %v869, %v868
      %v879 = vpack.c.bf16 %v871, %v870
      %v880 = vld [vmem:[%s5] sm:$0xf]
      %v881 = vld [vmem:[%s5 + $0x4] sm:$0xf]
      %v882 = vld [vmem:[%s5 + $0x8] sm:$0xf]
      %v883 = vld [vmem:[%s5 + $0xc] sm:$0xf]
      %v888 = vunpack.c.l.b16 %v880
      %v889 = vunpack.c.l.b16 %v881
      %v890 = vunpack.c.l.b16 %v882
      %v891 = vunpack.c.l.b16 %v883
      %v892 = vpack.c.b16 %v889, %v888
      %v893 = vpack.c.b16 %v891, %v890
      %v897 = vsel %vm474, %v872, 0
      %v900 = vsel %vm474, %v873, 0
      %v903 = vsel %vm474, %v874, 0
      %v906 = vsel %vm474, %v875, 0
      %v909 = vsel %vm474, %v876, 0
      %v912 = vsel %vm474, %v877, 0
      %v915 = vsel %vm474, %v878, 0
      %v918 = vsel %vm474, %v879, 0
      %920 = vmatpush.bf16.msra.mxu0 0
      %921 = vmatpush.bf16.msra.mxu0 0
      %922 = vmatpush.bf16.msra.mxu0 0
      %923 = vmatpush.bf16.msra.mxu0 0
      %924 = vmatpush.bf16.msra.mxu0 0
      %925 = vmatpush.bf16.msra.mxu0 0
      %926 = vmatpush.bf16.msra.mxu0 %v893
      %927 = vmatpush.bf16.msra.mxu0 %v892
      %928 = vmatmul.bf16.gmra.mxu0 %v897
      %v929 = vpop.f32.mrf.mxu0
      %v930 = vadd.f32 0.0, %v929
      %v931 = vpop.f32.mrf.mxu0
      %v932 = vadd.f32 0.0, %v931
      %933 = vmatmul.bf16.gmra.mxu0 %v900
      %v934 = vpop.f32.mrf.mxu0
      %v935 = vadd.f32 0.0, %v934
      %v936 = vpop.f32.mrf.mxu0
      %v937 = vadd.f32 0.0, %v936
      %938 = vmatmul.bf16.gmra.mxu0 %v903
      %v939 = vpop.f32.mrf.mxu0
      %v940 = vadd.f32 0.0, %v939
      %v941 = vpop.f32.mrf.mxu0
      %v942 = vadd.f32 0.0, %v941
      %943 = vmatmul.bf16.gmra.mxu0 %v906
      %v944 = vpop.f32.mrf.mxu0
      %v945 = vadd.f32 0.0, %v944
      %v946 = vpop.f32.mrf.mxu0
      %v947 = vadd.f32 0.0, %v946
      %948 = vmatmul.bf16.gmra.mxu0 %v909
      %v949 = vpop.f32.mrf.mxu0
      %v950 = vadd.f32 0.0, %v949
      %v951 = vpop.f32.mrf.mxu0
      %v952 = vadd.f32 0.0, %v951
      %953 = vmatmul.bf16.gmra.mxu0 %v912
      %v954 = vpop.f32.mrf.mxu0
      %v955 = vadd.f32 0.0, %v954
      %v956 = vpop.f32.mrf.mxu0
      %v957 = vadd.f32 0.0, %v956
      %958 = vmatmul.bf16.gmra.mxu0 %v915
      %v959 = vpop.f32.mrf.mxu0
      %v960 = vadd.f32 0.0, %v959
      %v961 = vpop.f32.mrf.mxu0
      %v962 = vadd.f32 0.0, %v961
      %963 = vmatmul.bf16.gmra.mxu0 %v918
      %v964 = vpop.f32.mrf.mxu0
      %v965 = vadd.f32 0.0, %v964
      %v966 = vpop.f32.mrf.mxu0
      %v967 = vadd.f32 0.0, %v966
      %968 = vdwg.mxu0
      %v969 = vpack.c.bf16 %v930, %v930
      %v970 = vpack.c.bf16 %v932, %v932
      %v971 = vpack.c.bf16 %v935, %v935
      %v972 = vpack.c.bf16 %v937, %v937
      %v973 = vpack.c.bf16 %v940, %v940
      %v974 = vpack.c.bf16 %v942, %v942
      %v975 = vpack.c.bf16 %v945, %v945
      %v976 = vpack.c.bf16 %v947, %v947
      %v977 = vpack.c.bf16 %v950, %v950
      %v978 = vpack.c.bf16 %v952, %v952
      %v979 = vpack.c.bf16 %v955, %v955
      %v980 = vpack.c.bf16 %v957, %v957
      %v981 = vpack.c.bf16 %v960, %v960
      %v982 = vpack.c.bf16 %v962, %v962
      %v983 = vpack.c.bf16 %v965, %v965
      %v984 = vpack.c.bf16 %v967, %v967
      %v985 = vld [vmem:[%s449] sm:$0x1]
      %vm986 = vcmp.gt.f32.partialorder %v985, 0.5
      %v987 = vsel %vm986, -1e+20, 0.0
      %v988 = vlaneseq
      %v989 = vand.u32 %v988, 127
      %v990 = vlaneseq
      %v991 = vshrl.u32 %v990, 7
      %v992 = vadd.s32 %v991, 8
      %v993 = vadd.s32 %v991, 16
      %v994 = vadd.s32 %v991, 24
      %v995 = vadd.s32 %v991, 32
      %v996 = vadd.s32 %v991, 40
      %v997 = vadd.s32 %v991, 48
      %v998 = vadd.s32 %v991, 56
      %v999 = vadd.s32 %v991, 64
      %v1000 = vadd.s32 %v991, 72
      %v1001 = vadd.s32 %v991, 80
      %v1002 = vadd.s32 %v991, 88
      %v1003 = vadd.s32 %v991, 96
      %v1004 = vadd.s32 %v991, 104
      %v1005 = vadd.s32 %v991, 112
      %v1006 = vadd.s32 %v991, 120
      %v1007 = vld [vmem:[%s4] sm:$0xf]
      %v1008 = vld [vmem:[%s4 + $0x4] sm:$0xf]
      %v1009 = vld [vmem:[%s4 + $0x8] sm:$0xf]
      %v1010 = vld [vmem:[%s4 + $0xc] sm:$0xf]
      %v1011 = vld [vmem:[%s6] sm:$0xf]
      %v1012 = vld [vmem:[%s6 + $0x4] sm:$0xf]
      %v1013 = vld [vmem:[%s6 + $0x8] sm:$0xf]
      %v1014 = vld [vmem:[%s6 + $0xc] sm:$0xf]
      %v1015 = vld [vmem:[%s7] sm:$0x1]
      %v1016 = vld [vmem:[%s8] sm:$0x1]
      %v1017 = vld [vmem:[%s9] sm:$0xf]
      %v1018 = vld [vmem:[%s9 + $0x4] sm:$0xf]
      %v1019 = vld [vmem:[%s9 + $0x8] sm:$0xf]
      %v1020 = vld [vmem:[%s9 + $0xc] sm:$0xf]
      %v1021 = vld [vmem:[%s10] sm:$0x1]
      %v1022 = vld [vmem:[%s11] sm:$0xf]
      %v1023 = vld [vmem:[%s11 + $0x4] sm:$0xf]
      %v1024 = vld [vmem:[%s11 + $0x8] sm:$0xf]
      %v1025 = vld [vmem:[%s11 + $0xc] sm:$0xf]
      %v1026 = vld [vmem:[%s11 + $0x10] sm:$0xf]
      %v1027 = vld [vmem:[%s11 + $0x14] sm:$0xf]
      %v1028 = vld [vmem:[%s11 + $0x18] sm:$0xf]
      %v1029 = vld [vmem:[%s11 + $0x1c] sm:$0xf]
      %v1030 = vld [vmem:[%s12] sm:$0x1]
      %vm1031 = vcmp.gt.s32.totalorder %v989, %v991
      %vm1032 = vcmp.gt.s32.totalorder %v989, %v992
      %vm1033 = vcmp.gt.s32.totalorder %v989, %v993
      %vm1034 = vcmp.gt.s32.totalorder %v989, %v994
      %vm1035 = vcmp.gt.s32.totalorder %v989, %v995
      %vm1036 = vcmp.gt.s32.totalorder %v989, %v996
      %vm1037 = vcmp.gt.s32.totalorder %v989, %v997
      %vm1038 = vcmp.gt.s32.totalorder %v989, %v998
      %vm1039 = vcmp.gt.s32.totalorder %v989, %v999
      %vm1040 = vcmp.gt.s32.totalorder %v989, %v1000
      %vm1041 = vcmp.gt.s32.totalorder %v989, %v1001
      %vm1042 = vcmp.gt.s32.totalorder %v989, %v1002
      %vm1043 = vcmp.gt.s32.totalorder %v989, %v1003
      %vm1044 = vcmp.gt.s32.totalorder %v989, %v1004
      %vm1045 = vcmp.gt.s32.totalorder %v989, %v1005
      %vm1046 = vcmp.gt.s32.totalorder %v989, %v1006
      %v1047 = vsel %vm1031, -1e+20, 0.0
      %v1048 = vsel %vm1032, -1e+20, 0.0
      %v1049 = vsel %vm1033, -1e+20, 0.0
      %v1050 = vsel %vm1034, -1e+20, 0.0
      %v1051 = vsel %vm1035, -1e+20, 0.0
      %v1052 = vsel %vm1036, -1e+20, 0.0
      %v1053 = vsel %vm1037, -1e+20, 0.0
      %v1054 = vsel %vm1038, -1e+20, 0.0
      %v1055 = vsel %vm1039, -1e+20, 0.0
      %v1056 = vsel %vm1040, -1e+20, 0.0
      %v1057 = vsel %vm1041, -1e+20, 0.0
      %v1058 = vsel %vm1042, -1e+20, 0.0
      %v1059 = vsel %vm1043, -1e+20, 0.0
      %v1060 = vsel %vm1044, -1e+20, 0.0
      %v1061 = vsel %vm1045, -1e+20, 0.0
      %v1062 = vsel %vm1046, -1e+20, 0.0
      %v1064 = vperm.slane %v987, 0
      %v1066 = vadd.f32 %v1064, %v1047
      %v1067 = vadd.f32 %v1064, %v1048
      %v1068 = vadd.f32 %v1064, %v1049
      %v1069 = vadd.f32 %v1064, %v1050
      %v1070 = vadd.f32 %v1064, %v1051
      %v1071 = vadd.f32 %v1064, %v1052
      %v1072 = vadd.f32 %v1064, %v1053
      %v1073 = vadd.f32 %v1064, %v1054
      %v1074 = vadd.f32 %v1064, %v1055
      %v1075 = vadd.f32 %v1064, %v1056
      %v1076 = vadd.f32 %v1064, %v1057
      %v1077 = vadd.f32 %v1064, %v1058
      %v1078 = vadd.f32 %v1064, %v1059
      %v1079 = vadd.f32 %v1064, %v1060
      %v1080 = vadd.f32 %v1064, %v1061
      %v1081 = vadd.f32 %v1064, %v1062
      %v1086 = vunpack.c.l.b16 %v1007
      %v1087 = vunpack.c.l.b16 %v1008
      %v1088 = vunpack.c.l.b16 %v1009
      %v1089 = vunpack.c.l.b16 %v1010
      %v1090 = vpack.c.b16 %v1087, %v1086
      %v1091 = vpack.c.b16 %v1089, %v1088
      %1094 = vmatpush.bf16.msra.mxu0 0
      %1095 = vmatpush.bf16.msra.mxu0 0
      %1096 = vmatpush.bf16.msra.mxu0 0
      %1097 = vmatpush.bf16.msra.mxu0 0
      %1098 = vmatpush.bf16.msra.mxu0 0
      %1099 = vmatpush.bf16.msra.mxu0 0
      %1100 = vmatpush.bf16.msra.mxu0 %v1091
      %1101 = vmatpush.bf16.msra.mxu0 %v1090
      %1102 = vmatmul.bf16.gmra.mxu0 %v897
      %v1103 = vpop.f32.mrf.mxu0
      %v1104 = vadd.f32 0.0, %v1103
      %v1105 = vpop.f32.mrf.mxu0
      %v1106 = vadd.f32 0.0, %v1105
      %1107 = vmatmul.bf16.gmra.mxu0 %v900
      %v1108 = vpop.f32.mrf.mxu0
      %v1109 = vadd.f32 0.0, %v1108
      %v1110 = vpop.f32.mrf.mxu0
      %v1111 = vadd.f32 0.0, %v1110
      %1112 = vmatmul.bf16.gmra.mxu0 %v903
      %v1113 = vpop.f32.mrf.mxu0
      %v1114 = vadd.f32 0.0, %v1113
      %v1115 = vpop.f32.mrf.mxu0
      %v1116 = vadd.f32 0.0, %v1115
      %1117 = vmatmul.bf16.gmra.mxu0 %v906
      %v1118 = vpop.f32.mrf.mxu0
      %v1119 = vadd.f32 0.0, %v1118
      %v1120 = vpop.f32.mrf.mxu0
      %v1121 = vadd.f32 0.0, %v1120
      %1122 = vmatmul.bf16.gmra.mxu0 %v909
      %v1123 = vpop.f32.mrf.mxu0
      %v1124 = vadd.f32 0.0, %v1123
      %v1125 = vpop.f32.mrf.mxu0
      %v1126 = vadd.f32 0.0, %v1125
      %1127 = vmatmul.bf16.gmra.mxu0 %v912
      %v1128 = vpop.f32.mrf.mxu0
      %v1129 = vadd.f32 0.0, %v1128
      %v1130 = vpop.f32.mrf.mxu0
      %v1131 = vadd.f32 0.0, %v1130
      %1132 = vmatmul.bf16.gmra.mxu0 %v915
      %v1133 = vpop.f32.mrf.mxu0
      %v1134 = vadd.f32 0.0, %v1133
      %v1135 = vpop.f32.mrf.mxu0
      %v1136 = vadd.f32 0.0, %v1135
      %1137 = vmatmul.bf16.gmra.mxu0 %v918
      %v1138 = vpop.f32.mrf.mxu0
      %v1139 = vadd.f32 0.0, %v1138
      %v1140 = vpop.f32.mrf.mxu0
      %v1141 = vadd.f32 0.0, %v1140
      %1142 = vdwg.mxu0
      %v1143 = vmul.f32 %v1104, 0.17677669
      %v1144 = vmul.f32 %v1106, 0.17677669
      %v1145 = vmul.f32 %v1109, 0.17677669
      %v1146 = vmul.f32 %v1111, 0.17677669
      %v1147 = vmul.f32 %v1114, 0.17677669
      %v1148 = vmul.f32 %v1116, 0.17677669
      %v1149 = vmul.f32 %v1119, 0.17677669
      %v1150 = vmul.f32 %v1121, 0.17677669
      %v1151 = vmul.f32 %v1124, 0.17677669
      %v1152 = vmul.f32 %v1126, 0.17677669
      %v1153 = vmul.f32 %v1129, 0.17677669
      %v1154 = vmul.f32 %v1131, 0.17677669
      %v1155 = vmul.f32 %v1134, 0.17677669
      %v1156 = vmul.f32 %v1136, 0.17677669
      %v1157 = vmul.f32 %v1139, 0.17677669
      %v1158 = vmul.f32 %v1141, 0.17677669
      %v1159 = vpack.c.bf16 %v1143, %v1143
      %v1160 = vpack.c.bf16 %v1144, %v1144
      %v1161 = vpack.c.bf16 %v1145, %v1145
      %v1162 = vpack.c.bf16 %v1146, %v1146
      %v1163 = vpack.c.bf16 %v1147, %v1147
      %v1164 = vpack.c.bf16 %v1148, %v1148
      %v1165 = vpack.c.bf16 %v1149, %v1149
      %v1166 = vpack.c.bf16 %v1150, %v1150
      %v1167 = vpack.c.bf16 %v1151, %v1151
      %v1168 = vpack.c.bf16 %v1152, %v1152
      %v1169 = vpack.c.bf16 %v1153, %v1153
      %v1170 = vpack.c.bf16 %v1154, %v1154
      %v1171 = vpack.c.bf16 %v1155, %v1155
      %v1172 = vpack.c.bf16 %v1156, %v1156
      %v1173 = vpack.c.bf16 %v1157, %v1157
      %v1174 = vpack.c.bf16 %v1158, %v1158
      %v1191 = vunpack.c.l.b16 %v1159
      %v1192 = vunpack.c.l.b16 %v1160
      %v1193 = vunpack.c.l.b16 %v1161
      %v1194 = vunpack.c.l.b16 %v1162
      %v1195 = vunpack.c.l.b16 %v1163
      %v1196 = vunpack.c.l.b16 %v1164
      %v1197 = vunpack.c.l.b16 %v1165
      %v1198 = vunpack.c.l.b16 %v1166
      %v1199 = vunpack.c.l.b16 %v1167
      %v1200 = vunpack.c.l.b16 %v1168
      %v1201 = vunpack.c.l.b16 %v1169
      %v1202 = vunpack.c.l.b16 %v1170
      %v1203 = vunpack.c.l.b16 %v1171
      %v1204 = vunpack.c.l.b16 %v1172
      %v1205 = vunpack.c.l.b16 %v1173
      %v1206 = vunpack.c.l.b16 %v1174
      %v1207 = vpack.c.b16 %v1192, %v1191
      %v1208 = vpack.c.b16 %v1194, %v1193
      %v1209 = vpack.c.b16 %v1196, %v1195
      %v1210 = vpack.c.b16 %v1198, %v1197
      %v1211 = vpack.c.b16 %v1200, %v1199
      %v1212 = vpack.c.b16 %v1202, %v1201
      %v1213 = vpack.c.b16 %v1204, %v1203
      %v1214 = vpack.c.b16 %v1206, %v1205
      %v1231 = vunpack.c.l.b16 %v969
      %v1232 = vunpack.c.l.b16 %v970
      %v1233 = vunpack.c.l.b16 %v971
      %v1234 = vunpack.c.l.b16 %v972
      %v1235 = vunpack.c.l.b16 %v973
      %v1236 = vunpack.c.l.b16 %v974
      %v1237 = vunpack.c.l.b16 %v975
      %v1238 = vunpack.c.l.b16 %v976
      %v1239 = vunpack.c.l.b16 %v977
      %v1240 = vunpack.c.l.b16 %v978
      %v1241 = vunpack.c.l.b16 %v979
      %v1242 = vunpack.c.l.b16 %v980
      %v1243 = vunpack.c.l.b16 %v981
      %v1244 = vunpack.c.l.b16 %v982
      %v1245 = vunpack.c.l.b16 %v983
      %v1246 = vunpack.c.l.b16 %v984
      %v1247 = vpack.c.b16 %v1232, %v1231
      %v1248 = vpack.c.b16 %v1234, %v1233
      %v1249 = vpack.c.b16 %v1236, %v1235
      %v1250 = vpack.c.b16 %v1238, %v1237
      %v1251 = vpack.c.b16 %v1240, %v1239
      %v1252 = vpack.c.b16 %v1242, %v1241
      %v1253 = vpack.c.b16 %v1244, %v1243
      %v1254 = vpack.c.b16 %v1246, %v1245
      %vm1255 = vcmask 64512
      %v1257 = vsel %vm1255, %v1207, 0
      %v1260 = vsel %vm1255, %v1208, 0
      %v1263 = vsel %vm1255, %v1209, 0
      %v1266 = vsel %vm1255, %v1210, 0
      %v1269 = vsel %vm1255, %v1211, 0
      %v1272 = vsel %vm1255, %v1212, 0
      %v1275 = vsel %vm1255, %v1213, 0
      %v1278 = vsel %vm1255, %v1214, 0
      %v1281 = vsel %vm1255, %v1247, 0
      %v1284 = vsel %vm1255, %v1248, 0
      %v1287 = vsel %vm1255, %v1249, 0
      %v1290 = vsel %vm1255, %v1250, 0
      %v1293 = vsel %vm1255, %v1251, 0
      %v1296 = vsel %vm1255, %v1252, 0
      %v1299 = vsel %vm1255, %v1253, 0
      %v1302 = vsel %vm1255, %v1254, 0
      %1304 = vmatpush.bf16.xpose.msra.mxu0 %v1302
      %1305 = vmatpush.bf16.xpose.msra.mxu0 %v1299
      %1306 = vmatpush.bf16.xpose.msra.mxu0 %v1296
      %1307 = vmatpush.bf16.xpose.msra.mxu0 %v1293
      %1308 = vmatpush.bf16.xpose.msra.mxu0 %v1290
      %1309 = vmatpush.bf16.xpose.msra.mxu0 %v1287
      %1310 = vmatpush.bf16.xpose.msra.mxu0 %v1284
      %1311 = vmatpush.bf16.xpose.msra.mxu0 %v1281
      %1312 = vmatmul.bf16.gmra.mxu0 %v1257
      %v1313 = vpop.f32.mrf.mxu0
      %v1314 = vadd.f32 %v1066, %v1313
      %v1315 = vpop.f32.mrf.mxu0
      %v1316 = vadd.f32 %v1067, %v1315
      %1317 = vmatmul.bf16.gmra.mxu0 %v1260
      %v1318 = vpop.f32.mrf.mxu0
      %v1319 = vadd.f32 %v1068, %v1318
      %v1320 = vpop.f32.mrf.mxu0
      %v1321 = vadd.f32 %v1069, %v1320
      %1322 = vmatmul.bf16.gmra.mxu0 %v1263
      %v1323 = vpop.f32.mrf.mxu0
      %v1324 = vadd.f32 %v1070, %v1323
      %v1325 = vpop.f32.mrf.mxu0
      %v1326 = vadd.f32 %v1071, %v1325
      %1327 = vmatmul.bf16.gmra.mxu0 %v1266
      %v1328 = vpop.f32.mrf.mxu0
      %v1329 = vadd.f32 %v1072, %v1328
      %v1330 = vpop.f32.mrf.mxu0
      %v1331 = vadd.f32 %v1073, %v1330
      %1332 = vmatmul.bf16.gmra.mxu0 %v1269
      %v1333 = vpop.f32.mrf.mxu0
      %v1334 = vadd.f32 %v1074, %v1333
      %v1335 = vpop.f32.mrf.mxu0
      %v1336 = vadd.f32 %v1075, %v1335
      %1337 = vmatmul.bf16.gmra.mxu0 %v1272
      %v1338 = vpop.f32.mrf.mxu0
      %v1339 = vadd.f32 %v1076, %v1338
      %v1340 = vpop.f32.mrf.mxu0
      %v1341 = vadd.f32 %v1077, %v1340
      %1342 = vmatmul.bf16.gmra.mxu0 %v1275
      %v1343 = vpop.f32.mrf.mxu0
      %v1344 = vadd.f32 %v1078, %v1343
      %v1345 = vpop.f32.mrf.mxu0
      %v1346 = vadd.f32 %v1079, %v1345
      %1347 = vmatmul.bf16.gmra.mxu0 %v1278
      %v1348 = vpop.f32.mrf.mxu0
      %v1349 = vadd.f32 %v1080, %v1348
      %v1350 = vpop.f32.mrf.mxu0
      %v1351 = vadd.f32 %v1081, %v1350
      %1352 = vdwg.mxu0
      %1353 = vmax.xlane.f32.xlu0 %v1314
      %v1354 = vpop.xlane.xlu0 %1353
      %1355 = vmax.xlane.f32.xlu0 %v1316
      %v1356 = vpop.xlane.xlu0 %1355
      %1357 = vmax.xlane.f32.xlu0 %v1319
      %v1358 = vpop.xlane.xlu0 %1357
      %1359 = vmax.xlane.f32.xlu0 %v1321
      %v1360 = vpop.xlane.xlu0 %1359
      %1361 = vmax.xlane.f32.xlu0 %v1324
      %v1362 = vpop.xlane.xlu0 %1361
      %1363 = vmax.xlane.f32.xlu0 %v1326
      %v1364 = vpop.xlane.xlu0 %1363
      %1365 = vmax.xlane.f32.xlu0 %v1329
      %v1366 = vpop.xlane.xlu0 %1365
      %1367 = vmax.xlane.f32.xlu0 %v1331
      %v1368 = vpop.xlane.xlu0 %1367
      %1369 = vmax.xlane.f32.xlu0 %v1334
      %v1370 = vpop.xlane.xlu0 %1369
      %1371 = vmax.xlane.f32.xlu0 %v1336
      %v1372 = vpop.xlane.xlu0 %1371
      %1373 = vmax.xlane.f32.xlu0 %v1339
      %v1374 = vpop.xlane.xlu0 %1373
      %1375 = vmax.xlane.f32.xlu0 %v1341
      %v1376 = vpop.xlane.xlu0 %1375
      %1377 = vmax.xlane.f32.xlu0 %v1344
      %v1378 = vpop.xlane.xlu0 %1377
      %1379 = vmax.xlane.f32.xlu0 %v1346
      %v1380 = vpop.xlane.xlu0 %1379
      %1381 = vmax.xlane.f32.xlu0 %v1349
      %v1382 = vpop.xlane.xlu0 %1381
      %1383 = vmax.xlane.f32.xlu0 %v1351
      %v1384 = vpop.xlane.xlu0 %1383
      %v1385 = vsub.f32 %v1314, %v1354
      %v1386 = vsub.f32 %v1316, %v1356
      %v1387 = vsub.f32 %v1319, %v1358
      %v1388 = vsub.f32 %v1321, %v1360
      %v1389 = vsub.f32 %v1324, %v1362
      %v1390 = vsub.f32 %v1326, %v1364
      %v1391 = vsub.f32 %v1329, %v1366
      %v1392 = vsub.f32 %v1331, %v1368
      %v1393 = vsub.f32 %v1334, %v1370
      %v1394 = vsub.f32 %v1336, %v1372
      %v1395 = vsub.f32 %v1339, %v1374
      %v1396 = vsub.f32 %v1341, %v1376
      %v1397 = vsub.f32 %v1344, %v1378
      %v1398 = vsub.f32 %v1346, %v1380
      %v1399 = vsub.f32 %v1349, %v1382
      %v1400 = vsub.f32 %v1351, %v1384
      %v1401 = vmul.f32 %v1385, 1.442695
      %v1402 = vpow.pop %v1401
      %v1403 = vmul.f32 %v1386, 1.442695
      %v1404 = vpow.pop %v1403
      %v1405 = vmul.f32 %v1387, 1.442695
      %v1406 = vpow.pop %v1405
      %v1407 = vmul.f32 %v1388, 1.442695
      %v1408 = vpow.pop %v1407
      %v1409 = vmul.f32 %v1389, 1.442695
      %v1410 = vpow.pop %v1409
      %v1411 = vmul.f32 %v1390, 1.442695
      %v1412 = vpow.pop %v1411
      %v1413 = vmul.f32 %v1391, 1.442695
      %v1414 = vpow.pop %v1413
      %v1415 = vmul.f32 %v1392, 1.442695
      %v1416 = vpow.pop %v1415
      %v1417 = vmul.f32 %v1393, 1.442695
      %v1418 = vpow.pop %v1417
      %v1419 = vmul.f32 %v1394, 1.442695
      %v1420 = vpow.pop %v1419
      %v1421 = vmul.f32 %v1395, 1.442695
      %v1422 = vpow.pop %v1421
      %v1423 = vmul.f32 %v1396, 1.442695
      %v1424 = vpow.pop %v1423
      %v1425 = vmul.f32 %v1397, 1.442695
      %v1426 = vpow.pop %v1425
      %v1427 = vmul.f32 %v1398, 1.442695
      %v1428 = vpow.pop %v1427
      %v1429 = vmul.f32 %v1399, 1.442695
      %v1430 = vpow.pop %v1429
      %v1431 = vmul.f32 %v1400, 1.442695
      %v1432 = vpow.pop %v1431
      %1433 = vadd.xlane.f32.xlu0 %v1402
      %v1434 = vpop.xlane.xlu0 %1433
      %1435 = vadd.xlane.f32.xlu0 %v1404
      %v1436 = vpop.xlane.xlu0 %1435
      %1437 = vadd.xlane.f32.xlu0 %v1406
      %v1438 = vpop.xlane.xlu0 %1437
      %1439 = vadd.xlane.f32.xlu0 %v1408
      %v1440 = vpop.xlane.xlu0 %1439
      %1441 = vadd.xlane.f32.xlu0 %v1410
      %v1442 = vpop.xlane.xlu0 %1441
      %1443 = vadd.xlane.f32.xlu0 %v1412
      %v1444 = vpop.xlane.xlu0 %1443
      %1445 = vadd.xlane.f32.xlu0 %v1414
      %v1446 = vpop.xlane.xlu0 %1445
      %1447 = vadd.xlane.f32.xlu0 %v1416
      %v1448 = vpop.xlane.xlu0 %1447
      %1449 = vadd.xlane.f32.xlu0 %v1418
      %v1450 = vpop.xlane.xlu0 %1449
      %1451 = vadd.xlane.f32.xlu0 %v1420
      %v1452 = vpop.xlane.xlu0 %1451
      %1453 = vadd.xlane.f32.xlu0 %v1422
      %v1454 = vpop.xlane.xlu0 %1453
      %1455 = vadd.xlane.f32.xlu0 %v1424
      %v1456 = vpop.xlane.xlu0 %1455
      %1457 = vadd.xlane.f32.xlu0 %v1426
      %v1458 = vpop.xlane.xlu0 %1457
      %1459 = vadd.xlane.f32.xlu0 %v1428
      %v1460 = vpop.xlane.xlu0 %1459
      %1461 = vadd.xlane.f32.xlu0 %v1430
      %v1462 = vpop.xlane.xlu0 %1461
      %1463 = vadd.xlane.f32.xlu0 %v1432
      %v1464 = vpop.xlane.xlu0 %1463
      %v1465 = vrcp.pop %v1434
      %v1466 = vrcp.pop %v1436
      %v1467 = vrcp.pop %v1438
      %v1468 = vrcp.pop %v1440
      %v1469 = vrcp.pop %v1442
      %v1470 = vrcp.pop %v1444
      %v1471 = vrcp.pop %v1446
      %v1472 = vrcp.pop %v1448
      %v1473 = vrcp.pop %v1450
      %v1474 = vrcp.pop %v1452
      %v1475 = vrcp.pop %v1454
      %v1476 = vrcp.pop %v1456
      %v1477 = vrcp.pop %v1458
      %v1478 = vrcp.pop %v1460
      %v1479 = vrcp.pop %v1462
      %v1480 = vrcp.pop %v1464
      %v1481 = vmul.f32 %v1402, %v1465
      %v1482 = vmul.f32 %v1404, %v1466
      %v1483 = vmul.f32 %v1406, %v1467
      %v1484 = vmul.f32 %v1408, %v1468
      %v1485 = vmul.f32 %v1410, %v1469
      %v1486 = vmul.f32 %v1412, %v1470
      %v1487 = vmul.f32 %v1414, %v1471
      %v1488 = vmul.f32 %v1416, %v1472
      %v1489 = vmul.f32 %v1418, %v1473
      %v1490 = vmul.f32 %v1420, %v1474
      %v1491 = vmul.f32 %v1422, %v1475
      %v1492 = vmul.f32 %v1424, %v1476
      %v1493 = vmul.f32 %v1426, %v1477
      %v1494 = vmul.f32 %v1428, %v1478
      %v1495 = vmul.f32 %v1430, %v1479
      %v1496 = vmul.f32 %v1432, %v1480
      %v1497 = vpack.c.bf16 %v1482, %v1481
      %v1498 = vpack.c.bf16 %v1484, %v1483
      %v1499 = vpack.c.bf16 %v1486, %v1485
      %v1500 = vpack.c.bf16 %v1488, %v1487
      %v1501 = vpack.c.bf16 %v1490, %v1489
      %v1502 = vpack.c.bf16 %v1492, %v1491
      %v1503 = vpack.c.bf16 %v1494, %v1493
      %v1504 = vpack.c.bf16 %v1496, %v1495
      %1505 = vrot.lane.b32.xlu0 %v1247, 96
      %v1506 = vpop.permute.xlu0 %1505
      %1507 = vrot.lane.b32.xlu0 %v1248, 96
      %v1508 = vpop.permute.xlu0 %1507
      %1509 = vrot.lane.b32.xlu0 %v1249, 96
      %v1510 = vpop.permute.xlu0 %1509
      %1511 = vrot.lane.b32.xlu0 %v1250, 96
      %v1512 = vpop.permute.xlu0 %1511
      %1513 = vrot.lane.b32.xlu0 %v1251, 96
      %v1514 = vpop.permute.xlu0 %1513
      %1515 = vrot.lane.b32.xlu0 %v1252, 96
      %v1516 = vpop.permute.xlu0 %1515
      %1517 = vrot.lane.b32.xlu0 %v1253, 96
      %v1518 = vpop.permute.xlu0 %1517
      %1519 = vrot.lane.b32.xlu0 %v1254, 96
      %v1520 = vpop.permute.xlu0 %1519
      %1529 = vmatpush.bf16.msra.mxu0 %v1520
      %1530 = vmatpush.bf16.msra.mxu0 %v1518
      %1531 = vmatpush.bf16.msra.mxu0 %v1516
      %1532 = vmatpush.bf16.msra.mxu0 %v1514
      %1533 = vmatpush.bf16.msra.mxu0 %v1512
      %1534 = vmatpush.bf16.msra.mxu0 %v1510
      %1535 = vmatpush.bf16.msra.mxu0 %v1508
      %1536 = vmatpush.bf16.msra.mxu0 %v1506
      %1537 = vmatmul.bf16.gmra.mxu0 %v1497
      %v1538 = vpop.f32.mrf.mxu0
      %v1539 = vadd.f32 0.0, %v1538
      %v1540 = vpop.f32.mrf.mxu0
      %v1541 = vadd.f32 0.0, %v1540
      %1542 = vmatmul.bf16.gmra.mxu0 %v1498
      %v1543 = vpop.f32.mrf.mxu0
      %v1544 = vadd.f32 0.0, %v1543
      %v1545 = vpop.f32.mrf.mxu0
      %v1546 = vadd.f32 0.0, %v1545
      %1547 = vmatmul.bf16.gmra.mxu0 %v1499
      %v1548 = vpop.f32.mrf.mxu0
      %v1549 = vadd.f32 0.0, %v1548
      %v1550 = vpop.f32.mrf.mxu0
      %v1551 = vadd.f32 0.0, %v1550
      %1552 = vmatmul.bf16.gmra.mxu0 %v1500
      %v1553 = vpop.f32.mrf.mxu0
      %v1554 = vadd.f32 0.0, %v1553
      %v1555 = vpop.f32.mrf.mxu0
      %v1556 = vadd.f32 0.0, %v1555
      %1557 = vmatmul.bf16.gmra.mxu0 %v1501
      %v1558 = vpop.f32.mrf.mxu0
      %v1559 = vadd.f32 0.0, %v1558
      %v1560 = vpop.f32.mrf.mxu0
      %v1561 = vadd.f32 0.0, %v1560
      %1562 = vmatmul.bf16.gmra.mxu0 %v1502
      %v1563 = vpop.f32.mrf.mxu0
      %v1564 = vadd.f32 0.0, %v1563
      %v1565 = vpop.f32.mrf.mxu0
      %v1566 = vadd.f32 0.0, %v1565
      %1567 = vmatmul.bf16.gmra.mxu0 %v1503
      %v1568 = vpop.f32.mrf.mxu0
      %v1569 = vadd.f32 0.0, %v1568
      %v1570 = vpop.f32.mrf.mxu0
      %v1571 = vadd.f32 0.0, %v1570
      %1572 = vmatmul.bf16.gmra.mxu0 %v1504
      %v1573 = vpop.f32.mrf.mxu0
      %v1574 = vadd.f32 0.0, %v1573
      %v1575 = vpop.f32.mrf.mxu0
      %v1576 = vadd.f32 0.0, %v1575
      %1577 = vdwg.mxu0
      %1578 = vst.msk [vmem:[#allocation2] sm:$0xff] %vm1255, %v1539
      %1579 = vst.msk [vmem:[#allocation2 + $0x8] sm:$0xff] %vm1255, %v1541
      %1580 = vst.msk [vmem:[#allocation2 + $0x10] sm:$0xff] %vm1255, %v1544
      %1581 = vst.msk [vmem:[#allocation2 + $0x18] sm:$0xff] %vm1255, %v1546
      %1582 = vst.msk [vmem:[#allocation2 + $0x20] sm:$0xff] %vm1255, %v1549
      %1583 = vst.msk [vmem:[#allocation2 + $0x28] sm:$0xff] %vm1255, %v1551
      %1584 = vst.msk [vmem:[#allocation2 + $0x30] sm:$0xff] %vm1255, %v1554
      %1585 = vst.msk [vmem:[#allocation2 + $0x38] sm:$0xff] %vm1255, %v1556
      %1586 = vst.msk [vmem:[#allocation2 + $0x40] sm:$0xff] %vm1255, %v1559
      %1587 = vst.msk [vmem:[#allocation2 + $0x48] sm:$0xff] %vm1255, %v1561
      %1588 = vst.msk [vmem:[#allocation2 + $0x50] sm:$0xff] %vm1255, %v1564
      %1589 = vst.msk [vmem:[#allocation2 + $0x58] sm:$0xff] %vm1255, %v1566
      %1590 = vst.msk [vmem:[#allocation2 + $0x60] sm:$0xff] %vm1255, %v1569
      %1591 = vst.msk [vmem:[#allocation2 + $0x68] sm:$0xff] %vm1255, %v1571
      %1592 = vst.msk [vmem:[#allocation2 + $0x70] sm:$0xff] %vm1255, %v1574
      %1593 = vst.msk [vmem:[#allocation2 + $0x78] sm:$0xff] %vm1255, %v1576
      %1594 = vrot.lane.b32.xlu0 %v1207, 120
      %v1595 = vpop.permute.xlu0 %1594
      %1596 = vrot.lane.b32.xlu0 %v1208, 120
      %v1597 = vpop.permute.xlu0 %1596
      %1598 = vrot.lane.b32.xlu0 %v1209, 120
      %v1599 = vpop.permute.xlu0 %1598
      %1600 = vrot.lane.b32.xlu0 %v1210, 120
      %v1601 = vpop.permute.xlu0 %1600
      %1602 = vrot.lane.b32.xlu0 %v1211, 120
      %v1603 = vpop.permute.xlu0 %1602
      %1604 = vrot.lane.b32.xlu0 %v1212, 120
      %v1605 = vpop.permute.xlu0 %1604
      %1606 = vrot.lane.b32.xlu0 %v1213, 120
      %v1607 = vpop.permute.xlu0 %1606
      %1608 = vrot.lane.b32.xlu0 %v1214, 120
      %v1609 = vpop.permute.xlu0 %1608
      %1610 = vrot.lane.b32.xlu0 %v1247, 120
      %v1611 = vpop.permute.xlu0 %1610
      %1612 = vrot.lane.b32.xlu0 %v1248, 120
      %v1613 = vpop.permute.xlu0 %1612
      %1614 = vrot.lane.b32.xlu0 %v1249, 120
      %v1615 = vpop.permute.xlu0 %1614
      %1616 = vrot.lane.b32.xlu0 %v1250, 120
      %v1617 = vpop.permute.xlu0 %1616
      %1618 = vrot.lane.b32.xlu0 %v1251, 120
      %v1619 = vpop.permute.xlu0 %1618
      %1620 = vrot.lane.b32.xlu0 %v1252, 120
      %v1621 = vpop.permute.xlu0 %1620
      %1622 = vrot.lane.b32.xlu0 %v1253, 120
      %v1623 = vpop.permute.xlu0 %1622
      %1624 = vrot.lane.b32.xlu0 %v1254, 120
      %v1625 = vpop.permute.xlu0 %1624
      %v1627 = vsel %vm1255, %v1595, 0
      %v1630 = vsel %vm1255, %v1597, 0
      %v1633 = vsel %vm1255, %v1599, 0
      %v1636 = vsel %vm1255, %v1601, 0
      %v1639 = vsel %vm1255, %v1603, 0
      %v1642 = vsel %vm1255, %v1605, 0
      %v1645 = vsel %vm1255, %v1607, 0
      %v1648 = vsel %vm1255, %v1609, 0
      %v1651 = vsel %vm1255, %v1611, 0
      %v1654 = vsel %vm1255, %v1613, 0
      %v1657 = vsel %vm1255, %v1615, 0
      %v1660 = vsel %vm1255, %v1617, 0
      %v1663 = vsel %vm1255, %v1619, 0
      %v1666 = vsel %vm1255, %v1621, 0
      %v1669 = vsel %vm1255, %v1623, 0
      %v1672 = vsel %vm1255, %v1625, 0
      %1674 = vmatpush.bf16.xpose.msra.mxu0 %v1672
      %1675 = vmatpush.bf16.xpose.msra.mxu0 %v1669
      %1676 = vmatpush.bf16.xpose.msra.mxu0 %v1666
      %1677 = vmatpush.bf16.xpose.msra.mxu0 %v1663
      %1678 = vmatpush.bf16.xpose.msra.mxu0 %v1660
      %1679 = vmatpush.bf16.xpose.msra.mxu0 %v1657
      %1680 = vmatpush.bf16.xpose.msra.mxu0 %v1654
      %1681 = vmatpush.bf16.xpose.msra.mxu0 %v1651
      %1682 = vmatmul.bf16.gmra.mxu0 %v1627
      %v1683 = vpop.f32.mrf.mxu0
      %v1684 = vadd.f32 %v1066, %v1683
      %v1685 = vpop.f32.mrf.mxu0
      %v1686 = vadd.f32 %v1067, %v1685
      %1687 = vmatmul.bf16.gmra.mxu0 %v1630
      %v1688 = vpop.f32.mrf.mxu0
      %v1689 = vadd.f32 %v1068, %v1688
      %v1690 = vpop.f32.mrf.mxu0
      %v1691 = vadd.f32 %v1069, %v1690
      %1692 = vmatmul.bf16.gmra.mxu0 %v1633
      %v1693 = vpop.f32.mrf.mxu0
      %v1694 = vadd.f32 %v1070, %v1693
      %v1695 = vpop.f32.mrf.mxu0
      %v1696 = vadd.f32 %v1071, %v1695
      %1697 = vmatmul.bf16.gmra.mxu0 %v1636
      %v1698 = vpop.f32.mrf.mxu0
      %v1699 = vadd.f32 %v1072, %v1698
      %v1700 = vpop.f32.mrf.mxu0
      %v1701 = vadd.f32 %v1073, %v1700
      %1702 = vmatmul.bf16.gmra.mxu0 %v1639
      %v1703 = vpop.f32.mrf.mxu0
      %v1704 = vadd.f32 %v1074, %v1703
      %v1705 = vpop.f32.mrf.mxu0
      %v1706 = vadd.f32 %v1075, %v1705
      %1707 = vmatmul.bf16.gmra.mxu0 %v1642
      %v1708 = vpop.f32.mrf.mxu0
      %v1709 = vadd.f32 %v1076, %v1708
      %v1710 = vpop.f32.mrf.mxu0
      %v1711 = vadd.f32 %v1077, %v1710
      %1712 = vmatmul.bf16.gmra.mxu0 %v1645
      %v1713 = vpop.f32.mrf.mxu0
      %v1714 = vadd.f32 %v1078, %v1713
      %v1715 = vpop.f32.mrf.mxu0
      %v1716 = vadd.f32 %v1079, %v1715
      %1717 = vmatmul.bf16.gmra.mxu0 %v1648
      %v1718 = vpop.f32.mrf.mxu0
      %v1719 = vadd.f32 %v1080, %v1718
      %v1720 = vpop.f32.mrf.mxu0
      %v1721 = vadd.f32 %v1081, %v1720
      %1722 = vdwg.mxu0
      %1723 = vmax.xlane.f32.xlu0 %v1684
      %v1724 = vpop.xlane.xlu0 %1723
      %1725 = vmax.xlane.f32.xlu0 %v1686
      %v1726 = vpop.xlane.xlu0 %1725
      %1727 = vmax.xlane.f32.xlu0 %v1689
      %v1728 = vpop.xlane.xlu0 %1727
      %1729 = vmax.xlane.f32.xlu0 %v1691
      %v1730 = vpop.xlane.xlu0 %1729
      %1731 = vmax.xlane.f32.xlu0 %v1694
      %v1732 = vpop.xlane.xlu0 %1731
      %1733 = vmax.xlane.f32.xlu0 %v1696
      %v1734 = vpop.xlane.xlu0 %1733
      %1735 = vmax.xlane.f32.xlu0 %v1699
      %v1736 = vpop.xlane.xlu0 %1735
      %1737 = vmax.xlane.f32.xlu0 %v1701
      %v1738 = vpop.xlane.xlu0 %1737
      %1739 = vmax.xlane.f32.xlu0 %v1704
      %v1740 = vpop.xlane.xlu0 %1739
      %1741 = vmax.xlane.f32.xlu0 %v1706
      %v1742 = vpop.xlane.xlu0 %1741
      %1743 = vmax.xlane.f32.xlu0 %v1709
      %v1744 = vpop.xlane.xlu0 %1743
      %1745 = vmax.xlane.f32.xlu0 %v1711
      %v1746 = vpop.xlane.xlu0 %1745
      %1747 = vmax.xlane.f32.xlu0 %v1714
      %v1748 = vpop.xlane.xlu0 %1747
      %1749 = vmax.xlane.f32.xlu0 %v1716
      %v1750 = vpop.xlane.xlu0 %1749
      %1751 = vmax.xlane.f32.xlu0 %v1719
      %v1752 = vpop.xlane.xlu0 %1751
      %1753 = vmax.xlane.f32.xlu0 %v1721
      %v1754 = vpop.xlane.xlu0 %1753
      %v1755 = vsub.f32 %v1684, %v1724
      %v1756 = vsub.f32 %v1686, %v1726
      %v1757 = vsub.f32 %v1689, %v1728
      %v1758 = vsub.f32 %v1691, %v1730
      %v1759 = vsub.f32 %v1694, %v1732
      %v1760 = vsub.f32 %v1696, %v1734
      %v1761 = vsub.f32 %v1699, %v1736
      %v1762 = vsub.f32 %v1701, %v1738
      %v1763 = vsub.f32 %v1704, %v1740
      %v1764 = vsub.f32 %v1706, %v1742
      %v1765 = vsub.f32 %v1709, %v1744
      %v1766 = vsub.f32 %v1711, %v1746
      %v1767 = vsub.f32 %v1714, %v1748
      %v1768 = vsub.f32 %v1716, %v1750
      %v1769 = vsub.f32 %v1719, %v1752
      %v1770 = vsub.f32 %v1721, %v1754
      %v1771 = vmul.f32 %v1755, 1.442695
      %v1772 = vpow.pop %v1771
      %v1773 = vmul.f32 %v1756, 1.442695
      %v1774 = vpow.pop %v1773
      %v1775 = vmul.f32 %v1757, 1.442695
      %v1776 = vpow.pop %v1775
      %v1777 = vmul.f32 %v1758, 1.442695
      %v1778 = vpow.pop %v1777
      %v1779 = vmul.f32 %v1759, 1.442695
      %v1780 = vpow.pop %v1779
      %v1781 = vmul.f32 %v1760, 1.442695
      %v1782 = vpow.pop %v1781
      %v1783 = vmul.f32 %v1761, 1.442695
      %v1784 = vpow.pop %v1783
      %v1785 = vmul.f32 %v1762, 1.442695
      %v1786 = vpow.pop %v1785
      %v1787 = vmul.f32 %v1763, 1.442695
      %v1788 = vpow.pop %v1787
      %v1789 = vmul.f32 %v1764, 1.442695
      %v1790 = vpow.pop %v1789
      %v1791 = vmul.f32 %v1765, 1.442695
      %v1792 = vpow.pop %v1791
      %v1793 = vmul.f32 %v1766, 1.442695
      %v1794 = vpow.pop %v1793
      %v1795 = vmul.f32 %v1767, 1.442695
      %v1796 = vpow.pop %v1795
      %v1797 = vmul.f32 %v1768, 1.442695
      %v1798 = vpow.pop %v1797
      %v1799 = vmul.f32 %v1769, 1.442695
      %v1800 = vpow.pop %v1799
      %v1801 = vmul.f32 %v1770, 1.442695
      %v1802 = vpow.pop %v1801
      %1803 = vadd.xlane.f32.xlu0 %v1772
      %v1804 = vpop.xlane.xlu0 %1803
      %1805 = vadd.xlane.f32.xlu0 %v1774
      %v1806 = vpop.xlane.xlu0 %1805
      %1807 = vadd.xlane.f32.xlu0 %v1776
      %v1808 = vpop.xlane.xlu0 %1807
      %1809 = vadd.xlane.f32.xlu0 %v1778
      %v1810 = vpop.xlane.xlu0 %1809
      %1811 = vadd.xlane.f32.xlu0 %v1780
      %v1812 = vpop.xlane.xlu0 %1811
      %1813 = vadd.xlane.f32.xlu0 %v1782
      %v1814 = vpop.xlane.xlu0 %1813
      %1815 = vadd.xlane.f32.xlu0 %v1784
      %v1816 = vpop.xlane.xlu0 %1815
      %1817 = vadd.xlane.f32.xlu0 %v1786
      %v1818 = vpop.xlane.xlu0 %1817
      %1819 = vadd.xlane.f32.xlu0 %v1788
      %v1820 = vpop.xlane.xlu0 %1819
      %1821 = vadd.xlane.f32.xlu0 %v1790
      %v1822 = vpop.xlane.xlu0 %1821
      %1823 = vadd.xlane.f32.xlu0 %v1792
      %v1824 = vpop.xlane.xlu0 %1823
      %1825 = vadd.xlane.f32.xlu0 %v1794
      %v1826 = vpop.xlane.xlu0 %1825
      %1827 = vadd.xlane.f32.xlu0 %v1796
      %v1828 = vpop.xlane.xlu0 %1827
      %1829 = vadd.xlane.f32.xlu0 %v1798
      %v1830 = vpop.xlane.xlu0 %1829
      %1831 = vadd.xlane.f32.xlu0 %v1800
      %v1832 = vpop.xlane.xlu0 %1831
      %1833 = vadd.xlane.f32.xlu0 %v1802
      %v1834 = vpop.xlane.xlu0 %1833
      %v1835 = vrcp.pop %v1804
      %v1836 = vrcp.pop %v1806
      %v1837 = vrcp.pop %v1808
      %v1838 = vrcp.pop %v1810
      %v1839 = vrcp.pop %v1812
      %v1840 = vrcp.pop %v1814
      %v1841 = vrcp.pop %v1816
      %v1842 = vrcp.pop %v1818
      %v1843 = vrcp.pop %v1820
      %v1844 = vrcp.pop %v1822
      %v1845 = vrcp.pop %v1824
      %v1846 = vrcp.pop %v1826
      %v1847 = vrcp.pop %v1828
      %v1848 = vrcp.pop %v1830
      %v1849 = vrcp.pop %v1832
      %v1850 = vrcp.pop %v1834
      %v1851 = vmul.f32 %v1772, %v1835
      %v1852 = vmul.f32 %v1774, %v1836
      %v1853 = vmul.f32 %v1776, %v1837
      %v1854 = vmul.f32 %v1778, %v1838
      %v1855 = vmul.f32 %v1780, %v1839
      %v1856 = vmul.f32 %v1782, %v1840
      %v1857 = vmul.f32 %v1784, %v1841
      %v1858 = vmul.f32 %v1786, %v1842
      %v1859 = vmul.f32 %v1788, %v1843
      %v1860 = vmul.f32 %v1790, %v1844
      %v1861 = vmul.f32 %v1792, %v1845
      %v1862 = vmul.f32 %v1794, %v1846
      %v1863 = vmul.f32 %v1796, %v1847
      %v1864 = vmul.f32 %v1798, %v1848
      %v1865 = vmul.f32 %v1800, %v1849
      %v1866 = vmul.f32 %v1802, %v1850
      %v1867 = vpack.c.bf16 %v1852, %v1851
      %v1868 = vpack.c.bf16 %v1854, %v1853
      %v1869 = vpack.c.bf16 %v1856, %v1855
      %v1870 = vpack.c.bf16 %v1858, %v1857
      %v1871 = vpack.c.bf16 %v1860, %v1859
      %v1872 = vpack.c.bf16 %v1862, %v1861
      %v1873 = vpack.c.bf16 %v1864, %v1863
      %v1874 = vpack.c.bf16 %v1866, %v1865
      %1875 = vrot.lane.b32.xlu0 %v1247, 88
      %v1876 = vpop.permute.xlu0 %1875
      %1877 = vrot.lane.b32.xlu0 %v1248, 88
      %v1878 = vpop.permute.xlu0 %1877
      %1879 = vrot.lane.b32.xlu0 %v1249, 88
      %v1880 = vpop.permute.xlu0 %1879
      %1881 = vrot.lane.b32.xlu0 %v1250, 88
      %v1882 = vpop.permute.xlu0 %1881
      %1883 = vrot.lane.b32.xlu0 %v1251, 88
      %v1884 = vpop.permute.xlu0 %1883
      %1885 = vrot.lane.b32.xlu0 %v1252, 88
      %v1886 = vpop.permute.xlu0 %1885
      %1887 = vrot.lane.b32.xlu0 %v1253, 88
      %v1888 = vpop.permute.xlu0 %1887
      %1889 = vrot.lane.b32.xlu0 %v1254, 88
      %v1890 = vpop.permute.xlu0 %1889
      %1899 = vmatpush.bf16.msra.mxu0 %v1890
      %1900 = vmatpush.bf16.msra.mxu0 %v1888
      %1901 = vmatpush.bf16.msra.mxu0 %v1886
      %1902 = vmatpush.bf16.msra.mxu0 %v1884
      %1903 = vmatpush.bf16.msra.mxu0 %v1882
      %1904 = vmatpush.bf16.msra.mxu0 %v1880
      %1905 = vmatpush.bf16.msra.mxu0 %v1878
      %1906 = vmatpush.bf16.msra.mxu0 %v1876
      %1907 = vmatmul.bf16.gmra.mxu0 %v1867
      %v1908 = vpop.f32.mrf.mxu0
      %v1909 = vadd.f32 0.0, %v1908
      %v1910 = vpop.f32.mrf.mxu0
      %v1911 = vadd.f32 0.0, %v1910
      %1912 = vmatmul.bf16.gmra.mxu0 %v1868
      %v1913 = vpop.f32.mrf.mxu0
      %v1914 = vadd.f32 0.0, %v1913
      %v1915 = vpop.f32.mrf.mxu0
      %v1916 = vadd.f32 0.0, %v1915
      %1917 = vmatmul.bf16.gmra.mxu0 %v1869
      %v1918 = vpop.f32.mrf.mxu0
      %v1919 = vadd.f32 0.0, %v1918
      %v1920 = vpop.f32.mrf.mxu0
      %v1921 = vadd.f32 0.0, %v1920
      %1922 = vmatmul.bf16.gmra.mxu0 %v1870
      %v1923 = vpop.f32.mrf.mxu0
      %v1924 = vadd.f32 0.0, %v1923
      %v1925 = vpop.f32.mrf.mxu0
      %v1926 = vadd.f32 0.0, %v1925
      %1927 = vmatmul.bf16.gmra.mxu0 %v1871
      %v1928 = vpop.f32.mrf.mxu0
      %v1929 = vadd.f32 0.0, %v1928
      %v1930 = vpop.f32.mrf.mxu0
      %v1931 = vadd.f32 0.0, %v1930
      %1932 = vmatmul.bf16.gmra.mxu0 %v1872
      %v1933 = vpop.f32.mrf.mxu0
      %v1934 = vadd.f32 0.0, %v1933
      %v1935 = vpop.f32.mrf.mxu0
      %v1936 = vadd.f32 0.0, %v1935
      %1937 = vmatmul.bf16.gmra.mxu0 %v1873
      %v1938 = vpop.f32.mrf.mxu0
      %v1939 = vadd.f32 0.0, %v1938
      %v1940 = vpop.f32.mrf.mxu0
      %v1941 = vadd.f32 0.0, %v1940
      %1942 = vmatmul.bf16.gmra.mxu0 %v1874
      %v1943 = vpop.f32.mrf.mxu0
      %v1944 = vadd.f32 0.0, %v1943
      %v1945 = vpop.f32.mrf.mxu0
      %v1946 = vadd.f32 0.0, %v1945
      %1947 = vdwg.mxu0
      %1964 = vrot.lane.b32.xlu0 %v1909, 8
      %v1965 = vpop.permute.xlu0 %1964
      %1966 = vrot.lane.b32.xlu0 %v1911, 8
      %v1967 = vpop.permute.xlu0 %1966
      %1968 = vrot.lane.b32.xlu0 %v1914, 8
      %v1969 = vpop.permute.xlu0 %1968
      %1970 = vrot.lane.b32.xlu0 %v1916, 8
      %v1971 = vpop.permute.xlu0 %1970
      %1972 = vrot.lane.b32.xlu0 %v1919, 8
      %v1973 = vpop.permute.xlu0 %1972
      %1974 = vrot.lane.b32.xlu0 %v1921, 8
      %v1975 = vpop.permute.xlu0 %1974
      %1976 = vrot.lane.b32.xlu0 %v1924, 8
      %v1977 = vpop.permute.xlu0 %1976
      %1978 = vrot.lane.b32.xlu0 %v1926, 8
      %v1979 = vpop.permute.xlu0 %1978
      %1980 = vrot.lane.b32.xlu0 %v1929, 8
      %v1981 = vpop.permute.xlu0 %1980
      %1982 = vrot.lane.b32.xlu0 %v1931, 8
      %v1983 = vpop.permute.xlu0 %1982
      %1984 = vrot.lane.b32.xlu0 %v1934, 8
      %v1985 = vpop.permute.xlu0 %1984
      %1986 = vrot.lane.b32.xlu0 %v1936, 8
      %v1987 = vpop.permute.xlu0 %1986
      %1988 = vrot.lane.b32.xlu0 %v1939, 8
      %v1989 = vpop.permute.xlu0 %1988
      %1990 = vrot.lane.b32.xlu0 %v1941, 8
      %v1991 = vpop.permute.xlu0 %1990
      %1992 = vrot.lane.b32.xlu0 %v1944, 8
      %v1993 = vpop.permute.xlu0 %1992
      %1994 = vrot.lane.b32.xlu0 %v1946, 8
      %v1995 = vpop.permute.xlu0 %1994
      %vm2012 = vcmask 130112
      %2013 = vst.msk [vmem:[#allocation2] sm:$0xff] %vm2012, %v1965
      %2014 = vst.msk [vmem:[#allocation2 + $0x8] sm:$0xff] %vm2012, %v1967
      %2015 = vst.msk [vmem:[#allocation2 + $0x10] sm:$0xff] %vm2012, %v1969
      %2016 = vst.msk [vmem:[#allocation2 + $0x18] sm:$0xff] %vm2012, %v1971
      %2017 = vst.msk [vmem:[#allocation2 + $0x20] sm:$0xff] %vm2012, %v1973
      %2018 = vst.msk [vmem:[#allocation2 + $0x28] sm:$0xff] %vm2012, %v1975
      %2019 = vst.msk [vmem:[#allocation2 + $0x30] sm:$0xff] %vm2012, %v1977
      %2020 = vst.msk [vmem:[#allocation2 + $0x38] sm:$0xff] %vm2012, %v1979
      %2021 = vst.msk [vmem:[#allocation2 + $0x40] sm:$0xff] %vm2012, %v1981
      %2022 = vst.msk [vmem:[#allocation2 + $0x48] sm:$0xff] %vm2012, %v1983
      %2023 = vst.msk [vmem:[#allocation2 + $0x50] sm:$0xff] %vm2012, %v1985
      %2024 = vst.msk [vmem:[#allocation2 + $0x58] sm:$0xff] %vm2012, %v1987
      %2025 = vst.msk [vmem:[#allocation2 + $0x60] sm:$0xff] %vm2012, %v1989
      %2026 = vst.msk [vmem:[#allocation2 + $0x68] sm:$0xff] %vm2012, %v1991
      %2027 = vst.msk [vmem:[#allocation2 + $0x70] sm:$0xff] %vm2012, %v1993
      %2028 = vst.msk [vmem:[#allocation2 + $0x78] sm:$0xff] %vm2012, %v1995
      %2029 = vrot.lane.b32.xlu0 %v1207, 112
      %v2030 = vpop.permute.xlu0 %2029
      %2031 = vrot.lane.b32.xlu0 %v1208, 112
      %v2032 = vpop.permute.xlu0 %2031
      %2033 = vrot.lane.b32.xlu0 %v1209, 112
      %v2034 = vpop.permute.xlu0 %2033
      %2035 = vrot.lane.b32.xlu0 %v1210, 112
      %v2036 = vpop.permute.xlu0 %2035
      %2037 = vrot.lane.b32.xlu0 %v1211, 112
      %v2038 = vpop.permute.xlu0 %2037
      %2039 = vrot.lane.b32.xlu0 %v1212, 112
      %v2040 = vpop.permute.xlu0 %2039
      %2041 = vrot.lane.b32.xlu0 %v1213, 112
      %v2042 = vpop.permute.xlu0 %2041
      %2043 = vrot.lane.b32.xlu0 %v1214, 112
      %v2044 = vpop.permute.xlu0 %2043
      %2045 = vrot.lane.b32.xlu0 %v1247, 112
      %v2046 = vpop.permute.xlu0 %2045
      %2047 = vrot.lane.b32.xlu0 %v1248, 112
      %v2048 = vpop.permute.xlu0 %2047
      %2049 = vrot.lane.b32.xlu0 %v1249, 112
      %v2050 = vpop.permute.xlu0 %2049
      %2051 = vrot.lane.b32.xlu0 %v1250, 112
      %v2052 = vpop.permute.xlu0 %2051
      %2053 = vrot.lane.b32.xlu0 %v1251, 112
      %v2054 = vpop.permute.xlu0 %2053
      %2055 = vrot.lane.b32.xlu0 %v1252, 112
      %v2056 = vpop.permute.xlu0 %2055
      %2057 = vrot.lane.b32.xlu0 %v1253, 112
      %v2058 = vpop.permute.xlu0 %2057
      %2059 = vrot.lane.b32.xlu0 %v1254, 112
      %v2060 = vpop.permute.xlu0 %2059
      %v2062 = vsel %vm1255, %v2030, 0
      %v2065 = vsel %vm1255, %v2032, 0
      %v2068 = vsel %vm1255, %v2034, 0
      %v2071 = vsel %vm1255, %v2036, 0
      %v2074 = vsel %vm1255, %v2038, 0
      %v2077 = vsel %vm1255, %v2040, 0
      %v2080 = vsel %vm1255, %v2042, 0
      %v2083 = vsel %vm1255, %v2044, 0
      %v2086 = vsel %vm1255, %v2046, 0
      %v2089 = vsel %vm1255, %v2048, 0
      %v2092 = vsel %vm1255, %v2050, 0
      %v2095 = vsel %vm1255, %v2052, 0
      %v2098 = vsel %vm1255, %v2054, 0
      %v2101 = vsel %vm1255, %v2056, 0
      %v2104 = vsel %vm1255, %v2058, 0
      %v2107 = vsel %vm1255, %v2060, 0
      %2109 = vmatpush.bf16.xpose.msra.mxu0 %v2107
      %2110 = vmatpush.bf16.xpose.msra.mxu0 %v2104
      %2111 = vmatpush.bf16.xpose.msra.mxu0 %v2101
      %2112 = vmatpush.bf16.xpose.msra.mxu0 %v2098
      %2113 = vmatpush.bf16.xpose.msra.mxu0 %v2095
      %2114 = vmatpush.bf16.xpose.msra.mxu0 %v2092
      %2115 = vmatpush.bf16.xpose.msra.mxu0 %v2089
      %2116 = vmatpush.bf16.xpose.msra.mxu0 %v2086
      %2117 = vmatmul.bf16.gmra.mxu0 %v2062
      %v2118 = vpop.f32.mrf.mxu0
      %v2119 = vadd.f32 %v1066, %v2118
      %v2120 = vpop.f32.mrf.mxu0
      %v2121 = vadd.f32 %v1067, %v2120
      %2122 = vmatmul.bf16.gmra.mxu0 %v2065
      %v2123 = vpop.f32.mrf.mxu0
      %v2124 = vadd.f32 %v1068, %v2123
      %v2125 = vpop.f32.mrf.mxu0
      %v2126 = vadd.f32 %v1069, %v2125
      %2127 = vmatmul.bf16.gmra.mxu0 %v2068
      %v2128 = vpop.f32.mrf.mxu0
      %v2129 = vadd.f32 %v1070, %v2128
      %v2130 = vpop.f32.mrf.mxu0
      %v2131 = vadd.f32 %v1071, %v2130
      %2132 = vmatmul.bf16.gmra.mxu0 %v2071
      %v2133 = vpop.f32.mrf.mxu0
      %v2134 = vadd.f32 %v1072, %v2133
      %v2135 = vpop.f32.mrf.mxu0
      %v2136 = vadd.f32 %v1073, %v2135
      %2137 = vmatmul.bf16.gmra.mxu0 %v2074
      %v2138 = vpop.f32.mrf.mxu0
      %v2139 = vadd.f32 %v1074, %v2138
      %v2140 = vpop.f32.mrf.mxu0
      %v2141 = vadd.f32 %v1075, %v2140
      %2142 = vmatmul.bf16.gmra.mxu0 %v2077
      %v2143 = vpop.f32.mrf.mxu0
      %v2144 = vadd.f32 %v1076, %v2143
      %v2145 = vpop.f32.mrf.mxu0
      %v2146 = vadd.f32 %v1077, %v2145
      %2147 = vmatmul.bf16.gmra.mxu0 %v2080
      %v2148 = vpop.f32.mrf.mxu0
      %v2149 = vadd.f32 %v1078, %v2148
      %v2150 = vpop.f32.mrf.mxu0
      %v2151 = vadd.f32 %v1079, %v2150
      %2152 = vmatmul.bf16.gmra.mxu0 %v2083
      %v2153 = vpop.f32.mrf.mxu0
      %v2154 = vadd.f32 %v1080, %v2153
      %v2155 = vpop.f32.mrf.mxu0
      %v2156 = vadd.f32 %v1081, %v2155
      %2157 = vdwg.mxu0
      %2158 = vmax.xlane.f32.xlu0 %v2119
      %v2159 = vpop.xlane.xlu0 %2158
      %2160 = vmax.xlane.f32.xlu0 %v2121
      %v2161 = vpop.xlane.xlu0 %2160
      %2162 = vmax.xlane.f32.xlu0 %v2124
      %v2163 = vpop.xlane.xlu0 %2162
      %2164 = vmax.xlane.f32.xlu0 %v2126
      %v2165 = vpop.xlane.xlu0 %2164
      %2166 = vmax.xlane.f32.xlu0 %v2129
      %v2167 = vpop.xlane.xlu0 %2166
      %2168 = vmax.xlane.f32.xlu0 %v2131
      %v2169 = vpop.xlane.xlu0 %2168
      %2170 = vmax.xlane.f32.xlu0 %v2134
      %v2171 = vpop.xlane.xlu0 %2170
      %2172 = vmax.xlane.f32.xlu0 %v2136
      %v2173 = vpop.xlane.xlu0 %2172
      %2174 = vmax.xlane.f32.xlu0 %v2139
      %v2175 = vpop.xlane.xlu0 %2174
      %2176 = vmax.xlane.f32.xlu0 %v2141
      %v2177 = vpop.xlane.xlu0 %2176
      %2178 = vmax.xlane.f32.xlu0 %v2144
      %v2179 = vpop.xlane.xlu0 %2178
      %2180 = vmax.xlane.f32.xlu0 %v2146
      %v2181 = vpop.xlane.xlu0 %2180
      %2182 = vmax.xlane.f32.xlu0 %v2149
      %v2183 = vpop.xlane.xlu0 %2182
      %2184 = vmax.xlane.f32.xlu0 %v2151
      %v2185 = vpop.xlane.xlu0 %2184
      %2186 = vmax.xlane.f32.xlu0 %v2154
      %v2187 = vpop.xlane.xlu0 %2186
      %2188 = vmax.xlane.f32.xlu0 %v2156
      %v2189 = vpop.xlane.xlu0 %2188
      %v2190 = vsub.f32 %v2119, %v2159
      %v2191 = vsub.f32 %v2121, %v2161
      %v2192 = vsub.f32 %v2124, %v2163
      %v2193 = vsub.f32 %v2126, %v2165
      %v2194 = vsub.f32 %v2129, %v2167
      %v2195 = vsub.f32 %v2131, %v2169
      %v2196 = vsub.f32 %v2134, %v2171
      %v2197 = vsub.f32 %v2136, %v2173
      %v2198 = vsub.f32 %v2139, %v2175
      %v2199 = vsub.f32 %v2141, %v2177
      %v2200 = vsub.f32 %v2144, %v2179
      %v2201 = vsub.f32 %v2146, %v2181
      %v2202 = vsub.f32 %v2149, %v2183
      %v2203 = vsub.f32 %v2151, %v2185
      %v2204 = vsub.f32 %v2154, %v2187
      %v2205 = vsub.f32 %v2156, %v2189
      %v2206 = vmul.f32 %v2190, 1.442695
      %v2207 = vpow.pop %v2206
      %v2208 = vmul.f32 %v2191, 1.442695
      %v2209 = vpow.pop %v2208
      %v2210 = vmul.f32 %v2192, 1.442695
      %v2211 = vpow.pop %v2210
      %v2212 = vmul.f32 %v2193, 1.442695
      %v2213 = vpow.pop %v2212
      %v2214 = vmul.f32 %v2194, 1.442695
      %v2215 = vpow.pop %v2214
      %v2216 = vmul.f32 %v2195, 1.442695
      %v2217 = vpow.pop %v2216
      %v2218 = vmul.f32 %v2196, 1.442695
      %v2219 = vpow.pop %v2218
      %v2220 = vmul.f32 %v2197, 1.442695
      %v2221 = vpow.pop %v2220
      %v2222 = vmul.f32 %v2198, 1.442695
      %v2223 = vpow.pop %v2222
      %v2224 = vmul.f32 %v2199, 1.442695
      %v2225 = vpow.pop %v2224
      %v2226 = vmul.f32 %v2200, 1.442695
      %v2227 = vpow.pop %v2226
      %v2228 = vmul.f32 %v2201, 1.442695
      %v2229 = vpow.pop %v2228
      %v2230 = vmul.f32 %v2202, 1.442695
      %v2231 = vpow.pop %v2230
      %v2232 = vmul.f32 %v2203, 1.442695
      %v2233 = vpow.pop %v2232
      %v2234 = vmul.f32 %v2204, 1.442695
      %v2235 = vpow.pop %v2234
      %v2236 = vmul.f32 %v2205, 1.442695
      %v2237 = vpow.pop %v2236
      %2238 = vadd.xlane.f32.xlu0 %v2207
      %v2239 = vpop.xlane.xlu0 %2238
      %2240 = vadd.xlane.f32.xlu0 %v2209
      %v2241 = vpop.xlane.xlu0 %2240
      %2242 = vadd.xlane.f32.xlu0 %v2211
      %v2243 = vpop.xlane.xlu0 %2242
      %2244 = vadd.xlane.f32.xlu0 %v2213
      %v2245 = vpop.xlane.xlu0 %2244
      %2246 = vadd.xlane.f32.xlu0 %v2215
      %v2247 = vpop.xlane.xlu0 %2246
      %2248 = vadd.xlane.f32.xlu0 %v2217
      %v2249 = vpop.xlane.xlu0 %2248
      %2250 = vadd.xlane.f32.xlu0 %v2219
      %v2251 = vpop.xlane.xlu0 %2250
      %2252 = vadd.xlane.f32.xlu0 %v2221
      %v2253 = vpop.xlane.xlu0 %2252
      %2254 = vadd.xlane.f32.xlu0 %v2223
      %v2255 = vpop.xlane.xlu0 %2254
      %2256 = vadd.xlane.f32.xlu0 %v2225
      %v2257 = vpop.xlane.xlu0 %2256
      %2258 = vadd.xlane.f32.xlu0 %v2227
      %v2259 = vpop.xlane.xlu0 %2258
      %2260 = vadd.xlane.f32.xlu0 %v2229
      %v2261 = vpop.xlane.xlu0 %2260
      %2262 = vadd.xlane.f32.xlu0 %v2231
      %v2263 = vpop.xlane.xlu0 %2262
      %2264 = vadd.xlane.f32.xlu0 %v2233
      %v2265 = vpop.xlane.xlu0 %2264
      %2266 = vadd.xlane.f32.xlu0 %v2235
      %v2267 = vpop.xlane.xlu0 %2266
      %2268 = vadd.xlane.f32.xlu0 %v2237
      %v2269 = vpop.xlane.xlu0 %2268
      %v2270 = vrcp.pop %v2239
      %v2271 = vrcp.pop %v2241
      %v2272 = vrcp.pop %v2243
      %v2273 = vrcp.pop %v2245
      %v2274 = vrcp.pop %v2247
      %v2275 = vrcp.pop %v2249
      %v2276 = vrcp.pop %v2251
      %v2277 = vrcp.pop %v2253
      %v2278 = vrcp.pop %v2255
      %v2279 = vrcp.pop %v2257
      %v2280 = vrcp.pop %v2259
      %v2281 = vrcp.pop %v2261
      %v2282 = vrcp.pop %v2263
      %v2283 = vrcp.pop %v2265
      %v2284 = vrcp.pop %v2267
      %v2285 = vrcp.pop %v2269
      %v2286 = vmul.f32 %v2207, %v2270
      %v2287 = vmul.f32 %v2209, %v2271
      %v2288 = vmul.f32 %v2211, %v2272
      %v2289 = vmul.f32 %v2213, %v2273
      %v2290 = vmul.f32 %v2215, %v2274
      %v2291 = vmul.f32 %v2217, %v2275
      %v2292 = vmul.f32 %v2219, %v2276
      %v2293 = vmul.f32 %v2221, %v2277
      %v2294 = vmul.f32 %v2223, %v2278
      %v2295 = vmul.f32 %v2225, %v2279
      %v2296 = vmul.f32 %v2227, %v2280
      %v2297 = vmul.f32 %v2229, %v2281
      %v2298 = vmul.f32 %v2231, %v2282
      %v2299 = vmul.f32 %v2233, %v2283
      %v2300 = vmul.f32 %v2235, %v2284
      %v2301 = vmul.f32 %v2237, %v2285
      %v2302 = vpack.c.bf16 %v2287, %v2286
      %v2303 = vpack.c.bf16 %v2289, %v2288
      %v2304 = vpack.c.bf16 %v2291, %v2290
      %v2305 = vpack.c.bf16 %v2293, %v2292
      %v2306 = vpack.c.bf16 %v2295, %v2294
      %v2307 = vpack.c.bf16 %v2297, %v2296
      %v2308 = vpack.c.bf16 %v2299, %v2298
      %v2309 = vpack.c.bf16 %v2301, %v2300
      %2310 = vrot.lane.b32.xlu0 %v1247, 80
      %v2311 = vpop.permute.xlu0 %2310
      %2312 = vrot.lane.b32.xlu0 %v1248, 80
      %v2313 = vpop.permute.xlu0 %2312
      %2314 = vrot.lane.b32.xlu0 %v1249, 80
      %v2315 = vpop.permute.xlu0 %2314
      %2316 = vrot.lane.b32.xlu0 %v1250, 80
      %v2317 = vpop.permute.xlu0 %2316
      %2318 = vrot.lane.b32.xlu0 %v1251, 80
      %v2319 = vpop.permute.xlu0 %2318
      %2320 = vrot.lane.b32.xlu0 %v1252, 80
      %v2321 = vpop.permute.xlu0 %2320
      %2322 = vrot.lane.b32.xlu0 %v1253, 80
      %v2323 = vpop.permute.xlu0 %2322
      %2324 = vrot.lane.b32.xlu0 %v1254, 80
      %v2325 = vpop.permute.xlu0 %2324
      %2334 = vmatpush.bf16.msra.mxu0 %v2325
      %2335 = vmatpush.bf16.msra.mxu0 %v2323
      %2336 = vmatpush.bf16.msra.mxu0 %v2321
      %2337 = vmatpush.bf16.msra.mxu0 %v2319
      %2338 = vmatpush.bf16.msra.mxu0 %v2317
      %2339 = vmatpush.bf16.msra.mxu0 %v2315
      %2340 = vmatpush.bf16.msra.mxu0 %v2313
      %2341 = vmatpush.bf16.msra.mxu0 %v2311
      %2342 = vmatmul.bf16.gmra.mxu0 %v2302
      %v2343 = vpop.f32.mrf.mxu0
      %v2344 = vadd.f32 0.0, %v2343
      %v2345 = vpop.f32.mrf.mxu0
      %v2346 = vadd.f32 0.0, %v2345
      %2347 = vmatmul.bf16.gmra.mxu0 %v2303
      %v2348 = vpop.f32.mrf.mxu0
      %v2349 = vadd.f32 0.0, %v2348
      %v2350 = vpop.f32.mrf.mxu0
      %v2351 = vadd.f32 0.0, %v2350
      %2352 = vmatmul.bf16.gmra.mxu0 %v2304
      %v2353 = vpop.f32.mrf.mxu0
      %v2354 = vadd.f32 0.0, %v2353
      %v2355 = vpop.f32.mrf.mxu0
      %v2356 = vadd.f32 0.0, %v2355
      %2357 = vmatmul.bf16.gmra.mxu0 %v2305
      %v2358 = vpop.f32.mrf.mxu0
      %v2359 = vadd.f32 0.0, %v2358
      %v2360 = vpop.f32.mrf.mxu0
      %v2361 = vadd.f32 0.0, %v2360
      %2362 = vmatmul.bf16.gmra.mxu0 %v2306
      %v2363 = vpop.f32.mrf.mxu0
      %v2364 = vadd.f32 0.0, %v2363
      %v2365 = vpop.f32.mrf.mxu0
      %v2366 = vadd.f32 0.0, %v2365
      %2367 = vmatmul.bf16.gmra.mxu0 %v2307
      %v2368 = vpop.f32.mrf.mxu0
      %v2369 = vadd.f32 0.0, %v2368
      %v2370 = vpop.f32.mrf.mxu0
      %v2371 = vadd.f32 0.0, %v2370
      %2372 = vmatmul.bf16.gmra.mxu0 %v2308
      %v2373 = vpop.f32.mrf.mxu0
      %v2374 = vadd.f32 0.0, %v2373
      %v2375 = vpop.f32.mrf.mxu0
      %v2376 = vadd.f32 0.0, %v2375
      %2377 = vmatmul.bf16.gmra.mxu0 %v2309
      %v2378 = vpop.f32.mrf.mxu0
      %v2379 = vadd.f32 0.0, %v2378
      %v2380 = vpop.f32.mrf.mxu0
      %v2381 = vadd.f32 0.0, %v2380
      %2382 = vdwg.mxu0
      %2399 = vrot.lane.b32.xlu0 %v2344, 16
      %v2400 = vpop.permute.xlu0 %2399
      %2401 = vrot.lane.b32.xlu0 %v2346, 16
      %v2402 = vpop.permute.xlu0 %2401
      %2403 = vrot.lane.b32.xlu0 %v2349, 16
      %v2404 = vpop.permute.xlu0 %2403
      %2405 = vrot.lane.b32.xlu0 %v2351, 16
      %v2406 = vpop.permute.xlu0 %2405
      %2407 = vrot.lane.b32.xlu0 %v2354, 16
      %v2408 = vpop.permute.xlu0 %2407
      %2409 = vrot.lane.b32.xlu0 %v2356, 16
      %v2410 = vpop.permute.xlu0 %2409
      %2411 = vrot.lane.b32.xlu0 %v2359, 16
      %v2412 = vpop.permute.xlu0 %2411
      %2413 = vrot.lane.b32.xlu0 %v2361, 16
      %v2414 = vpop.permute.xlu0 %2413
      %2415 = vrot.lane.b32.xlu0 %v2364, 16
      %v2416 = vpop.permute.xlu0 %2415
      %2417 = vrot.lane.b32.xlu0 %v2366, 16
      %v2418 = vpop.permute.xlu0 %2417
      %2419 = vrot.lane.b32.xlu0 %v2369, 16
      %v2420 = vpop.permute.xlu0 %2419
      %2421 = vrot.lane.b32.xlu0 %v2371, 16
      %v2422 = vpop.permute.xlu0 %2421
      %2423 = vrot.lane.b32.xlu0 %v2374, 16
      %v2424 = vpop.permute.xlu0 %2423
      %2425 = vrot.lane.b32.xlu0 %v2376, 16
      %v2426 = vpop.permute.xlu0 %2425
      %2427 = vrot.lane.b32.xlu0 %v2379, 16
      %v2428 = vpop.permute.xlu0 %2427
      %2429 = vrot.lane.b32.xlu0 %v2381, 16
      %v2430 = vpop.permute.xlu0 %2429
      %vm2447 = vcmask 195712
      %2448 = vst.msk [vmem:[#allocation2] sm:$0xff] %vm2447, %v2400
      %2449 = vst.msk [vmem:[#allocation2 + $0x8] sm:$0xff] %vm2447, %v2402
      %2450 = vst.msk [vmem:[#allocation2 + $0x10] sm:$0xff] %vm2447, %v2404
      %2451 = vst.msk [vmem:[#allocation2 + $0x18] sm:$0xff] %vm2447, %v2406
      %2452 = vst.msk [vmem:[#allocation2 + $0x20] sm:$0xff] %vm2447, %v2408
      %2453 = vst.msk [vmem:[#allocation2 + $0x28] sm:$0xff] %vm2447, %v2410
      %2454 = vst.msk [vmem:[#allocation2 + $0x30] sm:$0xff] %vm2447, %v2412
      %2455 = vst.msk [vmem:[#allocation2 + $0x38] sm:$0xff] %vm2447, %v2414
      %2456 = vst.msk [vmem:[#allocation2 + $0x40] sm:$0xff] %vm2447, %v2416
      %2457 = vst.msk [vmem:[#allocation2 + $0x48] sm:$0xff] %vm2447, %v2418
      %2458 = vst.msk [vmem:[#allocation2 + $0x50] sm:$0xff] %vm2447, %v2420
      %2459 = vst.msk [vmem:[#allocation2 + $0x58] sm:$0xff] %vm2447, %v2422
      %2460 = vst.msk [vmem:[#allocation2 + $0x60] sm:$0xff] %vm2447, %v2424
      %2461 = vst.msk [vmem:[#allocation2 + $0x68] sm:$0xff] %vm2447, %v2426
      %2462 = vst.msk [vmem:[#allocation2 + $0x70] sm:$0xff] %vm2447, %v2428
      %2463 = vst.msk [vmem:[#allocation2 + $0x78] sm:$0xff] %vm2447, %v2430
      %2464 = vrot.lane.b32.xlu0 %v1207, 104
      %v2465 = vpop.permute.xlu0 %2464
      %2466 = vrot.lane.b32.xlu0 %v1208, 104
      %v2467 = vpop.permute.xlu0 %2466
      %2468 = vrot.lane.b32.xlu0 %v1209, 104
      %v2469 = vpop.permute.xlu0 %2468
      %2470 = vrot.lane.b32.xlu0 %v1210, 104
      %v2471 = vpop.permute.xlu0 %2470
      %2472 = vrot.lane.b32.xlu0 %v1211, 104
      %v2473 = vpop.permute.xlu0 %2472
      %2474 = vrot.lane.b32.xlu0 %v1212, 104
      %v2475 = vpop.permute.xlu0 %2474
      %2476 = vrot.lane.b32.xlu0 %v1213, 104
      %v2477 = vpop.permute.xlu0 %2476
      %2478 = vrot.lane.b32.xlu0 %v1214, 104
      %v2479 = vpop.permute.xlu0 %2478
      %2480 = vrot.lane.b32.xlu0 %v1247, 104
      %v2481 = vpop.permute.xlu0 %2480
      %2482 = vrot.lane.b32.xlu0 %v1248, 104
      %v2483 = vpop.permute.xlu0 %2482
      %2484 = vrot.lane.b32.xlu0 %v1249, 104
      %v2485 = vpop.permute.xlu0 %2484
      %2486 = vrot.lane.b32.xlu0 %v1250, 104
      %v2487 = vpop.permute.xlu0 %2486
      %2488 = vrot.lane.b32.xlu0 %v1251, 104
      %v2489 = vpop.permute.xlu0 %2488
      %2490 = vrot.lane.b32.xlu0 %v1252, 104
      %v2491 = vpop.permute.xlu0 %2490
      %2492 = vrot.lane.b32.xlu0 %v1253, 104
      %v2493 = vpop.permute.xlu0 %2492
      %2494 = vrot.lane.b32.xlu0 %v1254, 104
      %v2495 = vpop.permute.xlu0 %2494
      %v2497 = vsel %vm1255, %v2465, 0
      %v2500 = vsel %vm1255, %v2467, 0
      %v2503 = vsel %vm1255, %v2469, 0
      %v2506 = vsel %vm1255, %v2471, 0
      %v2509 = vsel %vm1255, %v2473, 0
      %v2512 = vsel %vm1255, %v2475, 0
      %v2515 = vsel %vm1255, %v2477, 0
      %v2518 = vsel %vm1255, %v2479, 0
      %v2521 = vsel %vm1255, %v2481, 0
      %v2524 = vsel %vm1255, %v2483, 0
      %v2527 = vsel %vm1255, %v2485, 0
      %v2530 = vsel %vm1255, %v2487, 0
      %v2533 = vsel %vm1255, %v2489, 0
      %v2536 = vsel %vm1255, %v2491, 0
      %v2539 = vsel %vm1255, %v2493, 0
      %v2542 = vsel %vm1255, %v2495, 0
      %2544 = vmatpush.bf16.xpose.msra.mxu0 %v2542
      %2545 = vmatpush.bf16.xpose.msra.mxu0 %v2539
      %2546 = vmatpush.bf16.xpose.msra.mxu0 %v2536
      %2547 = vmatpush.bf16.xpose.msra.mxu0 %v2533
      %2548 = vmatpush.bf16.xpose.msra.mxu0 %v2530
      %2549 = vmatpush.bf16.xpose.msra.mxu0 %v2527
      %2550 = vmatpush.bf16.xpose.msra.mxu0 %v2524
      %2551 = vmatpush.bf16.xpose.msra.mxu0 %v2521
      %2552 = vmatmul.bf16.gmra.mxu0 %v2497
      %v2553 = vpop.f32.mrf.mxu0
      %v2554 = vadd.f32 %v1066, %v2553
      %v2555 = vpop.f32.mrf.mxu0
      %v2556 = vadd.f32 %v1067, %v2555
      %2557 = vmatmul.bf16.gmra.mxu0 %v2500
      %v2558 = vpop.f32.mrf.mxu0
      %v2559 = vadd.f32 %v1068, %v2558
      %v2560 = vpop.f32.mrf.mxu0
      %v2561 = vadd.f32 %v1069, %v2560
      %2562 = vmatmul.bf16.gmra.mxu0 %v2503
      %v2563 = vpop.f32.mrf.mxu0
      %v2564 = vadd.f32 %v1070, %v2563
      %v2565 = vpop.f32.mrf.mxu0
      %v2566 = vadd.f32 %v1071, %v2565
      %2567 = vmatmul.bf16.gmra.mxu0 %v2506
      %v2568 = vpop.f32.mrf.mxu0
      %v2569 = vadd.f32 %v1072, %v2568
      %v2570 = vpop.f32.mrf.mxu0
      %v2571 = vadd.f32 %v1073, %v2570
      %2572 = vmatmul.bf16.gmra.mxu0 %v2509
      %v2573 = vpop.f32.mrf.mxu0
      %v2574 = vadd.f32 %v1074, %v2573
      %v2575 = vpop.f32.mrf.mxu0
      %v2576 = vadd.f32 %v1075, %v2575
      %2577 = vmatmul.bf16.gmra.mxu0 %v2512
      %v2578 = vpop.f32.mrf.mxu0
      %v2579 = vadd.f32 %v1076, %v2578
      %v2580 = vpop.f32.mrf.mxu0
      %v2581 = vadd.f32 %v1077, %v2580
      %2582 = vmatmul.bf16.gmra.mxu0 %v2515
      %v2583 = vpop.f32.mrf.mxu0
      %v2584 = vadd.f32 %v1078, %v2583
      %v2585 = vpop.f32.mrf.mxu0
      %v2586 = vadd.f32 %v1079, %v2585
      %2587 = vmatmul.bf16.gmra.mxu0 %v2518
      %v2588 = vpop.f32.mrf.mxu0
      %v2589 = vadd.f32 %v1080, %v2588
      %v2590 = vpop.f32.mrf.mxu0
      %v2591 = vadd.f32 %v1081, %v2590
      %2592 = vdwg.mxu0
      %2593 = vmax.xlane.f32.xlu0 %v2554
      %v2594 = vpop.xlane.xlu0 %2593
      %2595 = vmax.xlane.f32.xlu0 %v2556
      %v2596 = vpop.xlane.xlu0 %2595
      %2597 = vmax.xlane.f32.xlu0 %v2559
      %v2598 = vpop.xlane.xlu0 %2597
      %2599 = vmax.xlane.f32.xlu0 %v2561
      %v2600 = vpop.xlane.xlu0 %2599
      %2601 = vmax.xlane.f32.xlu0 %v2564
      %v2602 = vpop.xlane.xlu0 %2601
      %2603 = vmax.xlane.f32.xlu0 %v2566
      %v2604 = vpop.xlane.xlu0 %2603
      %2605 = vmax.xlane.f32.xlu0 %v2569
      %v2606 = vpop.xlane.xlu0 %2605
      %2607 = vmax.xlane.f32.xlu0 %v2571
      %v2608 = vpop.xlane.xlu0 %2607
      %2609 = vmax.xlane.f32.xlu0 %v2574
      %v2610 = vpop.xlane.xlu0 %2609
      %2611 = vmax.xlane.f32.xlu0 %v2576
      %v2612 = vpop.xlane.xlu0 %2611
      %2613 = vmax.xlane.f32.xlu0 %v2579
      %v2614 = vpop.xlane.xlu0 %2613
      %2615 = vmax.xlane.f32.xlu0 %v2581
      %v2616 = vpop.xlane.xlu0 %2615
      %2617 = vmax.xlane.f32.xlu0 %v2584
      %v2618 = vpop.xlane.xlu0 %2617
      %2619 = vmax.xlane.f32.xlu0 %v2586
      %v2620 = vpop.xlane.xlu0 %2619
      %2621 = vmax.xlane.f32.xlu0 %v2589
      %v2622 = vpop.xlane.xlu0 %2621
      %2623 = vmax.xlane.f32.xlu0 %v2591
      %v2624 = vpop.xlane.xlu0 %2623
      %v2625 = vsub.f32 %v2554, %v2594
      %v2626 = vsub.f32 %v2556, %v2596
      %v2627 = vsub.f32 %v2559, %v2598
      %v2628 = vsub.f32 %v2561, %v2600
      %v2629 = vsub.f32 %v2564, %v2602
      %v2630 = vsub.f32 %v2566, %v2604
      %v2631 = vsub.f32 %v2569, %v2606
      %v2632 = vsub.f32 %v2571, %v2608
      %v2633 = vsub.f32 %v2574, %v2610
      %v2634 = vsub.f32 %v2576, %v2612
      %v2635 = vsub.f32 %v2579, %v2614
      %v2636 = vsub.f32 %v2581, %v2616
      %v2637 = vsub.f32 %v2584, %v2618
      %v2638 = vsub.f32 %v2586, %v2620
      %v2639 = vsub.f32 %v2589, %v2622
      %v2640 = vsub.f32 %v2591, %v2624
      %v2641 = vmul.f32 %v2625, 1.442695
      %v2642 = vpow.pop %v2641
      %v2643 = vmul.f32 %v2626, 1.442695
      %v2644 = vpow.pop %v2643
      %v2645 = vmul.f32 %v2627, 1.442695
      %v2646 = vpow.pop %v2645
      %v2647 = vmul.f32 %v2628, 1.442695
      %v2648 = vpow.pop %v2647
      %v2649 = vmul.f32 %v2629, 1.442695
      %v2650 = vpow.pop %v2649
      %v2651 = vmul.f32 %v2630, 1.442695
      %v2652 = vpow.pop %v2651
      %v2653 = vmul.f32 %v2631, 1.442695
      %v2654 = vpow.pop %v2653
      %v2655 = vmul.f32 %v2632, 1.442695
      %v2656 = vpow.pop %v2655
      %v2657 = vmul.f32 %v2633, 1.442695
      %v2658 = vpow.pop %v2657
      %v2659 = vmul.f32 %v2634, 1.442695
      %v2660 = vpow.pop %v2659
      %v2661 = vmul.f32 %v2635, 1.442695
      %v2662 = vpow.pop %v2661
      %v2663 = vmul.f32 %v2636, 1.442695
      %v2664 = vpow.pop %v2663
      %v2665 = vmul.f32 %v2637, 1.442695
      %v2666 = vpow.pop %v2665
      %v2667 = vmul.f32 %v2638, 1.442695
      %v2668 = vpow.pop %v2667
      %v2669 = vmul.f32 %v2639, 1.442695
      %v2670 = vpow.pop %v2669
      %v2671 = vmul.f32 %v2640, 1.442695
      %v2672 = vpow.pop %v2671
      %2673 = vadd.xlane.f32.xlu0 %v2642
      %v2674 = vpop.xlane.xlu0 %2673
      %2675 = vadd.xlane.f32.xlu0 %v2644
      %v2676 = vpop.xlane.xlu0 %2675
      %2677 = vadd.xlane.f32.xlu0 %v2646
      %v2678 = vpop.xlane.xlu0 %2677
      %2679 = vadd.xlane.f32.xlu0 %v2648
      %v2680 = vpop.xlane.xlu0 %2679
      %2681 = vadd.xlane.f32.xlu0 %v2650
      %v2682 = vpop.xlane.xlu0 %2681
      %2683 = vadd.xlane.f32.xlu0 %v2652
      %v2684 = vpop.xlane.xlu0 %2683
      %2685 = vadd.xlane.f32.xlu0 %v2654
      %v2686 = vpop.xlane.xlu0 %2685
      %2687 = vadd.xlane.f32.xlu0 %v2656
      %v2688 = vpop.xlane.xlu0 %2687
      %2689 = vadd.xlane.f32.xlu0 %v2658
      %v2690 = vpop.xlane.xlu0 %2689
      %2691 = vadd.xlane.f32.xlu0 %v2660
      %v2692 = vpop.xlane.xlu0 %2691
      %2693 = vadd.xlane.f32.xlu0 %v2662
      %v2694 = vpop.xlane.xlu0 %2693
      %2695 = vadd.xlane.f32.xlu0 %v2664
      %v2696 = vpop.xlane.xlu0 %2695
      %2697 = vadd.xlane.f32.xlu0 %v2666
      %v2698 = vpop.xlane.xlu0 %2697
      %2699 = vadd.xlane.f32.xlu0 %v2668
      %v2700 = vpop.xlane.xlu0 %2699
      %2701 = vadd.xlane.f32.xlu0 %v2670
      %v2702 = vpop.xlane.xlu0 %2701
      %2703 = vadd.xlane.f32.xlu0 %v2672
      %v2704 = vpop.xlane.xlu0 %2703
      %v2705 = vrcp.pop %v2674
      %v2706 = vrcp.pop %v2676
      %v2707 = vrcp.pop %v2678
      %v2708 = vrcp.pop %v2680
      %v2709 = vrcp.pop %v2682
      %v2710 = vrcp.pop %v2684
      %v2711 = vrcp.pop %v2686
      %v2712 = vrcp.pop %v2688
      %v2713 = vrcp.pop %v2690
      %v2714 = vrcp.pop %v2692
      %v2715 = vrcp.pop %v2694
      %v2716 = vrcp.pop %v2696
      %v2717 = vrcp.pop %v2698
      %v2718 = vrcp.pop %v2700
      %v2719 = vrcp.pop %v2702
      %v2720 = vrcp.pop %v2704
      %v2721 = vmul.f32 %v2642, %v2705
      %v2722 = vmul.f32 %v2644, %v2706
      %v2723 = vmul.f32 %v2646, %v2707
      %v2724 = vmul.f32 %v2648, %v2708
      %v2725 = vmul.f32 %v2650, %v2709
      %v2726 = vmul.f32 %v2652, %v2710
      %v2727 = vmul.f32 %v2654, %v2711
      %v2728 = vmul.f32 %v2656, %v2712
      %v2729 = vmul.f32 %v2658, %v2713
      %v2730 = vmul.f32 %v2660, %v2714
      %v2731 = vmul.f32 %v2662, %v2715
      %v2732 = vmul.f32 %v2664, %v2716
      %v2733 = vmul.f32 %v2666, %v2717
      %v2734 = vmul.f32 %v2668, %v2718
      %v2735 = vmul.f32 %v2670, %v2719
      %v2736 = vmul.f32 %v2672, %v2720
      %v2737 = vpack.c.bf16 %v2722, %v2721
      %v2738 = vpack.c.bf16 %v2724, %v2723
      %v2739 = vpack.c.bf16 %v2726, %v2725
      %v2740 = vpack.c.bf16 %v2728, %v2727
      %v2741 = vpack.c.bf16 %v2730, %v2729
      %v2742 = vpack.c.bf16 %v2732, %v2731
      %v2743 = vpack.c.bf16 %v2734, %v2733
      %v2744 = vpack.c.bf16 %v2736, %v2735
      %2745 = vrot.lane.b32.xlu0 %v1247, 72
      %v2746 = vpop.permute.xlu0 %2745
      %2747 = vrot.lane.b32.xlu0 %v1248, 72
      %v2748 = vpop.permute.xlu0 %2747
      %2749 = vrot.lane.b32.xlu0 %v1249, 72
      %v2750 = vpop.permute.xlu0 %2749
      %2751 = vrot.lane.b32.xlu0 %v1250, 72
      %v2752 = vpop.permute.xlu0 %2751
      %2753 = vrot.lane.b32.xlu0 %v1251, 72
      %v2754 = vpop.permute.xlu0 %2753
      %2755 = vrot.lane.b32.xlu0 %v1252, 72
      %v2756 = vpop.permute.xlu0 %2755
      %2757 = vrot.lane.b32.xlu0 %v1253, 72
      %v2758 = vpop.permute.xlu0 %2757
      %2759 = vrot.lane.b32.xlu0 %v1254, 72
      %v2760 = vpop.permute.xlu0 %2759
      %2769 = vmatpush.bf16.msra.mxu0 %v2760
      %2770 = vmatpush.bf16.msra.mxu0 %v2758
      %2771 = vmatpush.bf16.msra.mxu0 %v2756
      %2772 = vmatpush.bf16.msra.mxu0 %v2754
      %2773 = vmatpush.bf16.msra.mxu0 %v2752
      %2774 = vmatpush.bf16.msra.mxu0 %v2750
      %2775 = vmatpush.bf16.msra.mxu0 %v2748
      %2776 = vmatpush.bf16.msra.mxu0 %v2746
      %2777 = vmatmul.bf16.gmra.mxu0 %v2737
      %v2778 = vpop.f32.mrf.mxu0
      %v2779 = vadd.f32 0.0, %v2778
      %v2780 = vpop.f32.mrf.mxu0
      %v2781 = vadd.f32 0.0, %v2780
      %2782 = vmatmul.bf16.gmra.mxu0 %v2738
      %v2783 = vpop.f32.mrf.mxu0
      %v2784 = vadd.f32 0.0, %v2783
      %v2785 = vpop.f32.mrf.mxu0
      %v2786 = vadd.f32 0.0, %v2785
      %2787 = vmatmul.bf16.gmra.mxu0 %v2739
      %v2788 = vpop.f32.mrf.mxu0
      %v2789 = vadd.f32 0.0, %v2788
      %v2790 = vpop.f32.mrf.mxu0
      %v2791 = vadd.f32 0.0, %v2790
      %2792 = vmatmul.bf16.gmra.mxu0 %v2740
      %v2793 = vpop.f32.mrf.mxu0
      %v2794 = vadd.f32 0.0, %v2793
      %v2795 = vpop.f32.mrf.mxu0
      %v2796 = vadd.f32 0.0, %v2795
      %2797 = vmatmul.bf16.gmra.mxu0 %v2741
      %v2798 = vpop.f32.mrf.mxu0
      %v2799 = vadd.f32 0.0, %v2798
      %v2800 = vpop.f32.mrf.mxu0
      %v2801 = vadd.f32 0.0, %v2800
      %2802 = vmatmul.bf16.gmra.mxu0 %v2742
      %v2803 = vpop.f32.mrf.mxu0
      %v2804 = vadd.f32 0.0, %v2803
      %v2805 = vpop.f32.mrf.mxu0
      %v2806 = vadd.f32 0.0, %v2805
      %2807 = vmatmul.bf16.gmra.mxu0 %v2743
      %v2808 = vpop.f32.mrf.mxu0
      %v2809 = vadd.f32 0.0, %v2808
      %v2810 = vpop.f32.mrf.mxu0
      %v2811 = vadd.f32 0.0, %v2810
      %2812 = vmatmul.bf16.gmra.mxu0 %v2744
      %v2813 = vpop.f32.mrf.mxu0
      %v2814 = vadd.f32 0.0, %v2813
      %v2815 = vpop.f32.mrf.mxu0
      %v2816 = vadd.f32 0.0, %v2815
      %2817 = vdwg.mxu0
      %2834 = vrot.lane.b32.xlu0 %v2779, 24
      %v2835 = vpop.permute.xlu0 %2834
      %2836 = vrot.lane.b32.xlu0 %v2781, 24
      %v2837 = vpop.permute.xlu0 %2836
      %2838 = vrot.lane.b32.xlu0 %v2784, 24
      %v2839 = vpop.permute.xlu0 %2838
      %2840 = vrot.lane.b32.xlu0 %v2786, 24
      %v2841 = vpop.permute.xlu0 %2840
      %2842 = vrot.lane.b32.xlu0 %v2789, 24
      %v2843 = vpop.permute.xlu0 %2842
      %2844 = vrot.lane.b32.xlu0 %v2791, 24
      %v2845 = vpop.permute.xlu0 %2844
      %2846 = vrot.lane.b32.xlu0 %v2794, 24
      %v2847 = vpop.permute.xlu0 %2846
      %2848 = vrot.lane.b32.xlu0 %v2796, 24
      %v2849 = vpop.permute.xlu0 %2848
      %2850 = vrot.lane.b32.xlu0 %v2799, 24
      %v2851 = vpop.permute.xlu0 %2850
      %2852 = vrot.lane.b32.xlu0 %v2801, 24
      %v2853 = vpop.permute.xlu0 %2852
      %2854 = vrot.lane.b32.xlu0 %v2804, 24
      %v2855 = vpop.permute.xlu0 %2854
      %2856 = vrot.lane.b32.xlu0 %v2806, 24
      %v2857 = vpop.permute.xlu0 %2856
      %2858 = vrot.lane.b32.xlu0 %v2809, 24
      %v2859 = vpop.permute.xlu0 %2858
      %2860 = vrot.lane.b32.xlu0 %v2811, 24
      %v2861 = vpop.permute.xlu0 %2860
      %2862 = vrot.lane.b32.xlu0 %v2814, 24
      %v2863 = vpop.permute.xlu0 %2862
      %2864 = vrot.lane.b32.xlu0 %v2816, 24
      %v2865 = vpop.permute.xlu0 %2864
      %vm2882 = vcmask 261312
      %2883 = vst.msk [vmem:[#allocation2] sm:$0xff] %vm2882, %v2835
      %2884 = vst.msk [vmem:[#allocation2 + $0x8] sm:$0xff] %vm2882, %v2837
      %2885 = vst.msk [vmem:[#allocation2 + $0x10] sm:$0xff] %vm2882, %v2839
      %2886 = vst.msk [vmem:[#allocation2 + $0x18] sm:$0xff] %vm2882, %v2841
      %2887 = vst.msk [vmem:[#allocation2 + $0x20] sm:$0xff] %vm2882, %v2843
      %2888 = vst.msk [vmem:[#allocation2 + $0x28] sm:$0xff] %vm2882, %v2845
      %2889 = vst.msk [vmem:[#allocation2 + $0x30] sm:$0xff] %vm2882, %v2847
      %2890 = vst.msk [vmem:[#allocation2 + $0x38] sm:$0xff] %vm2882, %v2849
      %2891 = vst.msk [vmem:[#allocation2 + $0x40] sm:$0xff] %vm2882, %v2851
      %2892 = vst.msk [vmem:[#allocation2 + $0x48] sm:$0xff] %vm2882, %v2853
      %2893 = vst.msk [vmem:[#allocation2 + $0x50] sm:$0xff] %vm2882, %v2855
      %2894 = vst.msk [vmem:[#allocation2 + $0x58] sm:$0xff] %vm2882, %v2857
      %2895 = vst.msk [vmem:[#allocation2 + $0x60] sm:$0xff] %vm2882, %v2859
      %2896 = vst.msk [vmem:[#allocation2 + $0x68] sm:$0xff] %vm2882, %v2861
      %2897 = vst.msk [vmem:[#allocation2 + $0x70] sm:$0xff] %vm2882, %v2863
      %2898 = vst.msk [vmem:[#allocation2 + $0x78] sm:$0xff] %vm2882, %v2865
      %v2899 = vld [vmem:[#allocation2] sm:$0xff]
      %v2900 = vld [vmem:[#allocation2 + $0x8] sm:$0xff]
      %v2901 = vld [vmem:[#allocation2 + $0x10] sm:$0xff]
      %v2902 = vld [vmem:[#allocation2 + $0x18] sm:$0xff]
      %v2903 = vld [vmem:[#allocation2 + $0x20] sm:$0xff]
      %v2904 = vld [vmem:[#allocation2 + $0x28] sm:$0xff]
      %v2905 = vld [vmem:[#allocation2 + $0x30] sm:$0xff]
      %v2906 = vld [vmem:[#allocation2 + $0x38] sm:$0xff]
      %v2907 = vld [vmem:[#allocation2 + $0x40] sm:$0xff]
      %v2908 = vld [vmem:[#allocation2 + $0x48] sm:$0xff]
      %v2909 = vld [vmem:[#allocation2 + $0x50] sm:$0xff]
      %v2910 = vld [vmem:[#allocation2 + $0x58] sm:$0xff]
      %v2911 = vld [vmem:[#allocation2 + $0x60] sm:$0xff]
      %v2912 = vld [vmem:[#allocation2 + $0x68] sm:$0xff]
      %v2913 = vld [vmem:[#allocation2 + $0x70] sm:$0xff]
      %v2914 = vld [vmem:[#allocation2 + $0x78] sm:$0xff]
      %v2915 = vpack.c.bf16 %v2900, %v2899
      %v2916 = vpack.c.bf16 %v2902, %v2901
      %v2917 = vpack.c.bf16 %v2904, %v2903
      %v2918 = vpack.c.bf16 %v2906, %v2905
      %v2919 = vpack.c.bf16 %v2908, %v2907
      %v2920 = vpack.c.bf16 %v2910, %v2909
      %v2921 = vpack.c.bf16 %v2912, %v2911
      %v2922 = vpack.c.bf16 %v2914, %v2913
      %v2927 = vunpack.c.l.b16 %v1011
      %v2928 = vunpack.c.l.b16 %v1012
      %v2929 = vunpack.c.l.b16 %v1013
      %v2930 = vunpack.c.l.b16 %v1014
      %v2931 = vpack.c.b16 %v2928, %v2927
      %v2932 = vpack.c.b16 %v2930, %v2929
      %v2936 = vsel %vm474, %v2915, 0
      %v2939 = vsel %vm474, %v2916, 0
      %v2942 = vsel %vm474, %v2917, 0
      %v2945 = vsel %vm474, %v2918, 0
      %v2948 = vsel %vm474, %v2919, 0
      %v2951 = vsel %vm474, %v2920, 0
      %v2954 = vsel %vm474, %v2921, 0
      %v2957 = vsel %vm474, %v2922, 0
      %2959 = vmatpush.bf16.msra.mxu0 0
      %2960 = vmatpush.bf16.msra.mxu0 0
      %2961 = vmatpush.bf16.msra.mxu0 0
      %2962 = vmatpush.bf16.msra.mxu0 0
      %2963 = vmatpush.bf16.msra.mxu0 0
      %2964 = vmatpush.bf16.msra.mxu0 0
      %2965 = vmatpush.bf16.msra.mxu0 %v2932
      %2966 = vmatpush.bf16.msra.mxu0 %v2931
      %2967 = vmatmul.bf16.gmra.mxu0 %v2936
      %v2968 = vpop.f32.mrf.mxu0
      %v2969 = vadd.f32 0.0, %v2968
      %v2970 = vpop.f32.mrf.mxu0
      %v2971 = vadd.f32 0.0, %v2970
      %2972 = vmatmul.bf16.gmra.mxu0 %v2939
      %v2973 = vpop.f32.mrf.mxu0
      %v2974 = vadd.f32 0.0, %v2973
      %v2975 = vpop.f32.mrf.mxu0
      %v2976 = vadd.f32 0.0, %v2975
      %2977 = vmatmul.bf16.gmra.mxu0 %v2942
      %v2978 = vpop.f32.mrf.mxu0
      %v2979 = vadd.f32 0.0, %v2978
      %v2980 = vpop.f32.mrf.mxu0
      %v2981 = vadd.f32 0.0, %v2980
      %2982 = vmatmul.bf16.gmra.mxu0 %v2945
      %v2983 = vpop.f32.mrf.mxu0
      %v2984 = vadd.f32 0.0, %v2983
      %v2985 = vpop.f32.mrf.mxu0
      %v2986 = vadd.f32 0.0, %v2985
      %2987 = vmatmul.bf16.gmra.mxu0 %v2948
      %v2988 = vpop.f32.mrf.mxu0
      %v2989 = vadd.f32 0.0, %v2988
      %v2990 = vpop.f32.mrf.mxu0
      %v2991 = vadd.f32 0.0, %v2990
      %2992 = vmatmul.bf16.gmra.mxu0 %v2951
      %v2993 = vpop.f32.mrf.mxu0
      %v2994 = vadd.f32 0.0, %v2993
      %v2995 = vpop.f32.mrf.mxu0
      %v2996 = vadd.f32 0.0, %v2995
      %2997 = vmatmul.bf16.gmra.mxu0 %v2954
      %v2998 = vpop.f32.mrf.mxu0
      %v2999 = vadd.f32 0.0, %v2998
      %v3000 = vpop.f32.mrf.mxu0
      %v3001 = vadd.f32 0.0, %v3000
      %3002 = vmatmul.bf16.gmra.mxu0 %v2957
      %v3003 = vpop.f32.mrf.mxu0
      %v3004 = vadd.f32 0.0, %v3003
      %v3005 = vpop.f32.mrf.mxu0
      %v3006 = vadd.f32 0.0, %v3005
      %3007 = vdwg.mxu0
      %v3008 = vadd.f32 %v856, %v2969
      %v3009 = vadd.f32 %v857, %v2971
      %v3010 = vadd.f32 %v858, %v2974
      %v3011 = vadd.f32 %v859, %v2976
      %v3012 = vadd.f32 %v860, %v2979
      %v3013 = vadd.f32 %v861, %v2981
      %v3014 = vadd.f32 %v862, %v2984
      %v3015 = vadd.f32 %v863, %v2986
      %v3016 = vadd.f32 %v864, %v2989
      %v3017 = vadd.f32 %v865, %v2991
      %v3018 = vadd.f32 %v866, %v2994
      %v3019 = vadd.f32 %v867, %v2996
      %v3020 = vadd.f32 %v868, %v2999
      %v3021 = vadd.f32 %v869, %v3001
      %v3022 = vadd.f32 %v870, %v3004
      %v3023 = vadd.f32 %v871, %v3006
      %v3024 = vsel %vm474, %v3008, 0.0
      %3025 = vadd.xlane.f32.xlu0 %v3024
      %v3026 = vpop.xlane.xlu0 %3025
      %v3027 = vsel %vm474, %v3009, 0.0
      %3028 = vadd.xlane.f32.xlu0 %v3027
      %v3029 = vpop.xlane.xlu0 %3028
      %v3030 = vsel %vm474, %v3010, 0.0
      %3031 = vadd.xlane.f32.xlu0 %v3030
      %v3032 = vpop.xlane.xlu0 %3031
      %v3033 = vsel %vm474, %v3011, 0.0
      %3034 = vadd.xlane.f32.xlu0 %v3033
      %v3035 = vpop.xlane.xlu0 %3034
      %v3036 = vsel %vm474, %v3012, 0.0
      %3037 = vadd.xlane.f32.xlu0 %v3036
      %v3038 = vpop.xlane.xlu0 %3037
      %v3039 = vsel %vm474, %v3013, 0.0
      %3040 = vadd.xlane.f32.xlu0 %v3039
      %v3041 = vpop.xlane.xlu0 %3040
      %v3042 = vsel %vm474, %v3014, 0.0
      %3043 = vadd.xlane.f32.xlu0 %v3042
      %v3044 = vpop.xlane.xlu0 %3043
      %v3045 = vsel %vm474, %v3015, 0.0
      %3046 = vadd.xlane.f32.xlu0 %v3045
      %v3047 = vpop.xlane.xlu0 %3046
      %v3048 = vsel %vm474, %v3016, 0.0
      %3049 = vadd.xlane.f32.xlu0 %v3048
      %v3050 = vpop.xlane.xlu0 %3049
      %v3051 = vsel %vm474, %v3017, 0.0
      %3052 = vadd.xlane.f32.xlu0 %v3051
      %v3053 = vpop.xlane.xlu0 %3052
      %v3054 = vsel %vm474, %v3018, 0.0
      %3055 = vadd.xlane.f32.xlu0 %v3054
      %v3056 = vpop.xlane.xlu0 %3055
      %v3057 = vsel %vm474, %v3019, 0.0
      %3058 = vadd.xlane.f32.xlu0 %v3057
      %v3059 = vpop.xlane.xlu0 %3058
      %v3060 = vsel %vm474, %v3020, 0.0
      %3061 = vadd.xlane.f32.xlu0 %v3060
      %v3062 = vpop.xlane.xlu0 %3061
      %v3063 = vsel %vm474, %v3021, 0.0
      %3064 = vadd.xlane.f32.xlu0 %v3063
      %v3065 = vpop.xlane.xlu0 %3064
      %v3066 = vsel %vm474, %v3022, 0.0
      %3067 = vadd.xlane.f32.xlu0 %v3066
      %v3068 = vpop.xlane.xlu0 %3067
      %v3069 = vsel %vm474, %v3023, 0.0
      %3070 = vadd.xlane.f32.xlu0 %v3069
      %v3071 = vpop.xlane.xlu0 %3070
      %v3072 = vmul.f32 %v3026, %v529
      %v3073 = vmul.f32 %v3029, %v529
      %v3074 = vmul.f32 %v3032, %v529
      %v3075 = vmul.f32 %v3035, %v529
      %v3076 = vmul.f32 %v3038, %v529
      %v3077 = vmul.f32 %v3041, %v529
      %v3078 = vmul.f32 %v3044, %v529
      %v3079 = vmul.f32 %v3047, %v529
      %v3080 = vmul.f32 %v3050, %v529
      %v3081 = vmul.f32 %v3053, %v529
      %v3082 = vmul.f32 %v3056, %v529
      %v3083 = vmul.f32 %v3059, %v529
      %v3084 = vmul.f32 %v3062, %v529
      %v3085 = vmul.f32 %v3065, %v529
      %v3086 = vmul.f32 %v3068, %v529
      %v3087 = vmul.f32 %v3071, %v529
      %v3088 = vsub.f32 %v3008, %v3072
      %v3089 = vsub.f32 %v3009, %v3073
      %v3090 = vsub.f32 %v3010, %v3074
      %v3091 = vsub.f32 %v3011, %v3075
      %v3092 = vsub.f32 %v3012, %v3076
      %v3093 = vsub.f32 %v3013, %v3077
      %v3094 = vsub.f32 %v3014, %v3078
      %v3095 = vsub.f32 %v3015, %v3079
      %v3096 = vsub.f32 %v3016, %v3080
      %v3097 = vsub.f32 %v3017, %v3081
      %v3098 = vsub.f32 %v3018, %v3082
      %v3099 = vsub.f32 %v3019, %v3083
      %v3100 = vsub.f32 %v3020, %v3084
      %v3101 = vsub.f32 %v3021, %v3085
      %v3102 = vsub.f32 %v3022, %v3086
      %v3103 = vsub.f32 %v3023, %v3087
      %v3104 = vmul.f32 %v3088, %v3088
      %v3105 = vmul.f32 %v3089, %v3089
      %v3106 = vmul.f32 %v3090, %v3090
      %v3107 = vmul.f32 %v3091, %v3091
      %v3108 = vmul.f32 %v3092, %v3092
      %v3109 = vmul.f32 %v3093, %v3093
      %v3110 = vmul.f32 %v3094, %v3094
      %v3111 = vmul.f32 %v3095, %v3095
      %v3112 = vmul.f32 %v3096, %v3096
      %v3113 = vmul.f32 %v3097, %v3097
      %v3114 = vmul.f32 %v3098, %v3098
      %v3115 = vmul.f32 %v3099, %v3099
      %v3116 = vmul.f32 %v3100, %v3100
      %v3117 = vmul.f32 %v3101, %v3101
      %v3118 = vmul.f32 %v3102, %v3102
      %v3119 = vmul.f32 %v3103, %v3103
      %v3120 = vsel %vm474, %v3104, 0.0
      %3121 = vadd.xlane.f32.xlu0 %v3120
      %v3122 = vpop.xlane.xlu0 %3121
      %v3123 = vsel %vm474, %v3105, 0.0
      %3124 = vadd.xlane.f32.xlu0 %v3123
      %v3125 = vpop.xlane.xlu0 %3124
      %v3126 = vsel %vm474, %v3106, 0.0
      %3127 = vadd.xlane.f32.xlu0 %v3126
      %v3128 = vpop.xlane.xlu0 %3127
      %v3129 = vsel %vm474, %v3107, 0.0
      %3130 = vadd.xlane.f32.xlu0 %v3129
      %v3131 = vpop.xlane.xlu0 %3130
      %v3132 = vsel %vm474, %v3108, 0.0
      %3133 = vadd.xlane.f32.xlu0 %v3132
      %v3134 = vpop.xlane.xlu0 %3133
      %v3135 = vsel %vm474, %v3109, 0.0
      %3136 = vadd.xlane.f32.xlu0 %v3135
      %v3137 = vpop.xlane.xlu0 %3136
      %v3138 = vsel %vm474, %v3110, 0.0
      %3139 = vadd.xlane.f32.xlu0 %v3138
      %v3140 = vpop.xlane.xlu0 %3139
      %v3141 = vsel %vm474, %v3111, 0.0
      %3142 = vadd.xlane.f32.xlu0 %v3141
      %v3143 = vpop.xlane.xlu0 %3142
      %v3144 = vsel %vm474, %v3112, 0.0
      %3145 = vadd.xlane.f32.xlu0 %v3144
      %v3146 = vpop.xlane.xlu0 %3145
      %v3147 = vsel %vm474, %v3113, 0.0
      %3148 = vadd.xlane.f32.xlu0 %v3147
      %v3149 = vpop.xlane.xlu0 %3148
      %v3150 = vsel %vm474, %v3114, 0.0
      %3151 = vadd.xlane.f32.xlu0 %v3150
      %v3152 = vpop.xlane.xlu0 %3151
      %v3153 = vsel %vm474, %v3115, 0.0
      %3154 = vadd.xlane.f32.xlu0 %v3153
      %v3155 = vpop.xlane.xlu0 %3154
      %v3156 = vsel %vm474, %v3116, 0.0
      %3157 = vadd.xlane.f32.xlu0 %v3156
      %v3158 = vpop.xlane.xlu0 %3157
      %v3159 = vsel %vm474, %v3117, 0.0
      %3160 = vadd.xlane.f32.xlu0 %v3159
      %v3161 = vpop.xlane.xlu0 %3160
      %v3162 = vsel %vm474, %v3118, 0.0
      %3163 = vadd.xlane.f32.xlu0 %v3162
      %v3164 = vpop.xlane.xlu0 %3163
      %v3165 = vsel %vm474, %v3119, 0.0
      %3166 = vadd.xlane.f32.xlu0 %v3165
      %v3167 = vpop.xlane.xlu0 %3166
      %v3168 = vmul.f32 %v3122, %v529
      %v3169 = vmul.f32 %v3125, %v529
      %v3170 = vmul.f32 %v3128, %v529
      %v3171 = vmul.f32 %v3131, %v529
      %v3172 = vmul.f32 %v3134, %v529
      %v3173 = vmul.f32 %v3137, %v529
      %v3174 = vmul.f32 %v3140, %v529
      %v3175 = vmul.f32 %v3143, %v529
      %v3176 = vmul.f32 %v3146, %v529
      %v3177 = vmul.f32 %v3149, %v529
      %v3178 = vmul.f32 %v3152, %v529
      %v3179 = vmul.f32 %v3155, %v529
      %v3180 = vmul.f32 %v3158, %v529
      %v3181 = vmul.f32 %v3161, %v529
      %v3182 = vmul.f32 %v3164, %v529
      %v3183 = vmul.f32 %v3167, %v529
      %v3184 = vadd.f32 %v3168, 1e-05
      %v3185 = vadd.f32 %v3169, 1e-05
      %v3186 = vadd.f32 %v3170, 1e-05
      %v3187 = vadd.f32 %v3171, 1e-05
      %v3188 = vadd.f32 %v3172, 1e-05
      %v3189 = vadd.f32 %v3173, 1e-05
      %v3190 = vadd.f32 %v3174, 1e-05
      %v3191 = vadd.f32 %v3175, 1e-05
      %v3192 = vadd.f32 %v3176, 1e-05
      %v3193 = vadd.f32 %v3177, 1e-05
      %v3194 = vadd.f32 %v3178, 1e-05
      %v3195 = vadd.f32 %v3179, 1e-05
      %v3196 = vadd.f32 %v3180, 1e-05
      %v3197 = vadd.f32 %v3181, 1e-05
      %v3198 = vadd.f32 %v3182, 1e-05
      %v3199 = vadd.f32 %v3183, 1e-05
      %v3200 = vrsqrt.pop %v3184
      %v3201 = vmul.f32 %v3200, %v3184
      %v3202 = vmul.f32 %v3201, %v3200
      %v3203 = vmul.f32 0.5, %v3202
      %v3204 = vsub.f32 1.5, %v3203
      %v3205 = vmul.f32 %v3200, %v3204
      %vm3206 = vweird.f32 %v3184
      %vm3207 = vweird.f32 %v3200
      %vm3208 = vmor %vm3206, %vm3207
      %v3209 = vsel %vm3208, %v3200, %v3205
      %v3210 = vrsqrt.pop %v3185
      %v3211 = vmul.f32 %v3210, %v3185
      %v3212 = vmul.f32 %v3211, %v3210
      %v3213 = vmul.f32 0.5, %v3212
      %v3214 = vsub.f32 1.5, %v3213
      %v3215 = vmul.f32 %v3210, %v3214
      %vm3216 = vweird.f32 %v3185
      %vm3217 = vweird.f32 %v3210
      %vm3218 = vmor %vm3216, %vm3217
      %v3219 = vsel %vm3218, %v3210, %v3215
      %v3220 = vrsqrt.pop %v3186
      %v3221 = vmul.f32 %v3220, %v3186
      %v3222 = vmul.f32 %v3221, %v3220
      %v3223 = vmul.f32 0.5, %v3222
      %v3224 = vsub.f32 1.5, %v3223
      %v3225 = vmul.f32 %v3220, %v3224
      %vm3226 = vweird.f32 %v3186
      %vm3227 = vweird.f32 %v3220
      %vm3228 = vmor %vm3226, %vm3227
      %v3229 = vsel %vm3228, %v3220, %v3225
      %v3230 = vrsqrt.pop %v3187
      %v3231 = vmul.f32 %v3230, %v3187
      %v3232 = vmul.f32 %v3231, %v3230
      %v3233 = vmul.f32 0.5, %v3232
      %v3234 = vsub.f32 1.5, %v3233
      %v3235 = vmul.f32 %v3230, %v3234
      %vm3236 = vweird.f32 %v3187
      %vm3237 = vweird.f32 %v3230
      %vm3238 = vmor %vm3236, %vm3237
      %v3239 = vsel %vm3238, %v3230, %v3235
      %v3240 = vrsqrt.pop %v3188
      %v3241 = vmul.f32 %v3240, %v3188
      %v3242 = vmul.f32 %v3241, %v3240
      %v3243 = vmul.f32 0.5, %v3242
      %v3244 = vsub.f32 1.5, %v3243
      %v3245 = vmul.f32 %v3240, %v3244
      %vm3246 = vweird.f32 %v3188
      %vm3247 = vweird.f32 %v3240
      %vm3248 = vmor %vm3246, %vm3247
      %v3249 = vsel %vm3248, %v3240, %v3245
      %v3250 = vrsqrt.pop %v3189
      %v3251 = vmul.f32 %v3250, %v3189
      %v3252 = vmul.f32 %v3251, %v3250
      %v3253 = vmul.f32 0.5, %v3252
      %v3254 = vsub.f32 1.5, %v3253
      %v3255 = vmul.f32 %v3250, %v3254
      %vm3256 = vweird.f32 %v3189
      %vm3257 = vweird.f32 %v3250
      %vm3258 = vmor %vm3256, %vm3257
      %v3259 = vsel %vm3258, %v3250, %v3255
      %v3260 = vrsqrt.pop %v3190
      %v3261 = vmul.f32 %v3260, %v3190
      %v3262 = vmul.f32 %v3261, %v3260
      %v3263 = vmul.f32 0.5, %v3262
      %v3264 = vsub.f32 1.5, %v3263
      %v3265 = vmul.f32 %v3260, %v3264
      %vm3266 = vweird.f32 %v3190
      %vm3267 = vweird.f32 %v3260
      %vm3268 = vmor %vm3266, %vm3267
      %v3269 = vsel %vm3268, %v3260, %v3265
      %v3270 = vrsqrt.pop %v3191
      %v3271 = vmul.f32 %v3270, %v3191
      %v3272 = vmul.f32 %v3271, %v3270
      %v3273 = vmul.f32 0.5, %v3272
      %v3274 = vsub.f32 1.5, %v3273
      %v3275 = vmul.f32 %v3270, %v3274
      %vm3276 = vweird.f32 %v3191
      %vm3277 = vweird.f32 %v3270
      %vm3278 = vmor %vm3276, %vm3277
      %v3279 = vsel %vm3278, %v3270, %v3275
      %v3280 = vrsqrt.pop %v3192
      %v3281 = vmul.f32 %v3280, %v3192
      %v3282 = vmul.f32 %v3281, %v3280
      %v3283 = vmul.f32 0.5, %v3282
      %v3284 = vsub.f32 1.5, %v3283
      %v3285 = vmul.f32 %v3280, %v3284
      %vm3286 = vweird.f32 %v3192
      %vm3287 = vweird.f32 %v3280
      %vm3288 = vmor %vm3286, %vm3287
      %v3289 = vsel %vm3288, %v3280, %v3285
      %v3290 = vrsqrt.pop %v3193
      %v3291 = vmul.f32 %v3290, %v3193
      %v3292 = vmul.f32 %v3291, %v3290
      %v3293 = vmul.f32 0.5, %v3292
      %v3294 = vsub.f32 1.5, %v3293
      %v3295 = vmul.f32 %v3290, %v3294
      %vm3296 = vweird.f32 %v3193
      %vm3297 = vweird.f32 %v3290
      %vm3298 = vmor %vm3296, %vm3297
      %v3299 = vsel %vm3298, %v3290, %v3295
      %v3300 = vrsqrt.pop %v3194
      %v3301 = vmul.f32 %v3300, %v3194
      %v3302 = vmul.f32 %v3301, %v3300
      %v3303 = vmul.f32 0.5, %v3302
      %v3304 = vsub.f32 1.5, %v3303
      %v3305 = vmul.f32 %v3300, %v3304
      %vm3306 = vweird.f32 %v3194
      %vm3307 = vweird.f32 %v3300
      %vm3308 = vmor %vm3306, %vm3307
      %v3309 = vsel %vm3308, %v3300, %v3305
      %v3310 = vrsqrt.pop %v3195
      %v3311 = vmul.f32 %v3310, %v3195
      %v3312 = vmul.f32 %v3311, %v3310
      %v3313 = vmul.f32 0.5, %v3312
      %v3314 = vsub.f32 1.5, %v3313
      %v3315 = vmul.f32 %v3310, %v3314
      %vm3316 = vweird.f32 %v3195
      %vm3317 = vweird.f32 %v3310
      %vm3318 = vmor %vm3316, %vm3317
      %v3319 = vsel %vm3318, %v3310, %v3315
      %v3320 = vrsqrt.pop %v3196
      %v3321 = vmul.f32 %v3320, %v3196
      %v3322 = vmul.f32 %v3321, %v3320
      %v3323 = vmul.f32 0.5, %v3322
      %v3324 = vsub.f32 1.5, %v3323
      %v3325 = vmul.f32 %v3320, %v3324
      %vm3326 = vweird.f32 %v3196
      %vm3327 = vweird.f32 %v3320
      %vm3328 = vmor %vm3326, %vm3327
      %v3329 = vsel %vm3328, %v3320, %v3325
      %v3330 = vrsqrt.pop %v3197
      %v3331 = vmul.f32 %v3330, %v3197
      %v3332 = vmul.f32 %v3331, %v3330
      %v3333 = vmul.f32 0.5, %v3332
      %v3334 = vsub.f32 1.5, %v3333
      %v3335 = vmul.f32 %v3330, %v3334
      %vm3336 = vweird.f32 %v3197
      %vm3337 = vweird.f32 %v3330
      %vm3338 = vmor %vm3336, %vm3337
      %v3339 = vsel %vm3338, %v3330, %v3335
      %v3340 = vrsqrt.pop %v3198
      %v3341 = vmul.f32 %v3340, %v3198
      %v3342 = vmul.f32 %v3341, %v3340
      %v3343 = vmul.f32 0.5, %v3342
      %v3344 = vsub.f32 1.5, %v3343
      %v3345 = vmul.f32 %v3340, %v3344
      %vm3346 = vweird.f32 %v3198
      %vm3347 = vweird.f32 %v3340
      %vm3348 = vmor %vm3346, %vm3347
      %v3349 = vsel %vm3348, %v3340, %v3345
      %v3350 = vrsqrt.pop %v3199
      %v3351 = vmul.f32 %v3350, %v3199
      %v3352 = vmul.f32 %v3351, %v3350
      %v3353 = vmul.f32 0.5, %v3352
      %v3354 = vsub.f32 1.5, %v3353
      %v3355 = vmul.f32 %v3350, %v3354
      %vm3356 = vweird.f32 %v3199
      %vm3357 = vweird.f32 %v3350
      %vm3358 = vmor %vm3356, %vm3357
      %v3359 = vsel %vm3358, %v3350, %v3355
      %v3360 = vmul.f32 %v3088, %v3209
      %v3361 = vmul.f32 %v3089, %v3219
      %v3362 = vmul.f32 %v3090, %v3229
      %v3363 = vmul.f32 %v3091, %v3239
      %v3364 = vmul.f32 %v3092, %v3249
      %v3365 = vmul.f32 %v3093, %v3259
      %v3366 = vmul.f32 %v3094, %v3269
      %v3367 = vmul.f32 %v3095, %v3279
      %v3368 = vmul.f32 %v3096, %v3289
      %v3369 = vmul.f32 %v3097, %v3299
      %v3370 = vmul.f32 %v3098, %v3309
      %v3371 = vmul.f32 %v3099, %v3319
      %v3372 = vmul.f32 %v3100, %v3329
      %v3373 = vmul.f32 %v3101, %v3339
      %v3374 = vmul.f32 %v3102, %v3349
      %v3375 = vmul.f32 %v3103, %v3359
      %v3377 = vperm.slane %v1015, 0
      %v3379 = vmul.f32 %v3360, %v3377
      %v3380 = vmul.f32 %v3361, %v3377
      %v3381 = vmul.f32 %v3362, %v3377
      %v3382 = vmul.f32 %v3363, %v3377
      %v3383 = vmul.f32 %v3364, %v3377
      %v3384 = vmul.f32 %v3365, %v3377
      %v3385 = vmul.f32 %v3366, %v3377
      %v3386 = vmul.f32 %v3367, %v3377
      %v3387 = vmul.f32 %v3368, %v3377
      %v3388 = vmul.f32 %v3369, %v3377
      %v3389 = vmul.f32 %v3370, %v3377
      %v3390 = vmul.f32 %v3371, %v3377
      %v3391 = vmul.f32 %v3372, %v3377
      %v3392 = vmul.f32 %v3373, %v3377
      %v3393 = vmul.f32 %v3374, %v3377
      %v3394 = vmul.f32 %v3375, %v3377
      %v3396 = vperm.slane %v1016, 0
      %v3398 = vadd.f32 %v3379, %v3396
      %v3399 = vadd.f32 %v3380, %v3396
      %v3400 = vadd.f32 %v3381, %v3396
      %v3401 = vadd.f32 %v3382, %v3396
      %v3402 = vadd.f32 %v3383, %v3396
      %v3403 = vadd.f32 %v3384, %v3396
      %v3404 = vadd.f32 %v3385, %v3396
      %v3405 = vadd.f32 %v3386, %v3396
      %v3406 = vadd.f32 %v3387, %v3396
      %v3407 = vadd.f32 %v3388, %v3396
      %v3408 = vadd.f32 %v3389, %v3396
      %v3409 = vadd.f32 %v3390, %v3396
      %v3410 = vadd.f32 %v3391, %v3396
      %v3411 = vadd.f32 %v3392, %v3396
      %v3412 = vadd.f32 %v3393, %v3396
      %v3413 = vadd.f32 %v3394, %v3396
      %v3414 = vpack.c.bf16 %v3399, %v3398
      %v3415 = vpack.c.bf16 %v3401, %v3400
      %v3416 = vpack.c.bf16 %v3403, %v3402
      %v3417 = vpack.c.bf16 %v3405, %v3404
      %v3418 = vpack.c.bf16 %v3407, %v3406
      %v3419 = vpack.c.bf16 %v3409, %v3408
      %v3420 = vpack.c.bf16 %v3411, %v3410
      %v3421 = vpack.c.bf16 %v3413, %v3412
      %v3423 = vperm.slane %v1021, 0
      %v3429 = vunpack.c.l.b16 %v1017
      %v3430 = vunpack.c.l.b16 %v1018
      %v3431 = vunpack.c.l.b16 %v1019
      %v3432 = vunpack.c.l.b16 %v1020
      %v3433 = vpack.c.b16 %v3430, %v3429
      %v3434 = vpack.c.b16 %v3432, %v3431
      %v3438 = vsel %vm474, %v3414, 0
      %v3441 = vsel %vm474, %v3415, 0
      %v3444 = vsel %vm474, %v3416, 0
      %v3447 = vsel %vm474, %v3417, 0
      %v3450 = vsel %vm474, %v3418, 0
      %v3453 = vsel %vm474, %v3419, 0
      %v3456 = vsel %vm474, %v3420, 0
      %v3459 = vsel %vm474, %v3421, 0
      %3461 = vmatpush.bf16.msra.mxu0 0
      %3462 = vmatpush.bf16.msra.mxu0 0
      %3463 = vmatpush.bf16.msra.mxu0 0
      %3464 = vmatpush.bf16.msra.mxu0 0
      %3465 = vmatpush.bf16.msra.mxu0 0
      %3466 = vmatpush.bf16.msra.mxu0 0
      %3467 = vmatpush.bf16.msra.mxu0 %v3434
      %3468 = vmatpush.bf16.msra.mxu0 %v3433
      %3469 = vmatmul.bf16.gmra.mxu0 %v3438
      %v3470 = vpop.f32.mrf.mxu0
      %v3471 = vadd.f32 %v3423, %v3470
      %v3472 = vpop.f32.mrf.mxu0
      %v3473 = vadd.f32 %v3423, %v3472
      %3474 = vmatmul.bf16.gmra.mxu0 %v3441
      %v3475 = vpop.f32.mrf.mxu0
      %v3476 = vadd.f32 %v3423, %v3475
      %v3477 = vpop.f32.mrf.mxu0
      %v3478 = vadd.f32 %v3423, %v3477
      %3479 = vmatmul.bf16.gmra.mxu0 %v3444
      %v3480 = vpop.f32.mrf.mxu0
      %v3481 = vadd.f32 %v3423, %v3480
      %v3482 = vpop.f32.mrf.mxu0
      %v3483 = vadd.f32 %v3423, %v3482
      %3484 = vmatmul.bf16.gmra.mxu0 %v3447
      %v3485 = vpop.f32.mrf.mxu0
      %v3486 = vadd.f32 %v3423, %v3485
      %v3487 = vpop.f32.mrf.mxu0
      %v3488 = vadd.f32 %v3423, %v3487
      %3489 = vmatmul.bf16.gmra.mxu0 %v3450
      %v3490 = vpop.f32.mrf.mxu0
      %v3491 = vadd.f32 %v3423, %v3490
      %v3492 = vpop.f32.mrf.mxu0
      %v3493 = vadd.f32 %v3423, %v3492
      %3494 = vmatmul.bf16.gmra.mxu0 %v3453
      %v3495 = vpop.f32.mrf.mxu0
      %v3496 = vadd.f32 %v3423, %v3495
      %v3497 = vpop.f32.mrf.mxu0
      %v3498 = vadd.f32 %v3423, %v3497
      %3499 = vmatmul.bf16.gmra.mxu0 %v3456
      %v3500 = vpop.f32.mrf.mxu0
      %v3501 = vadd.f32 %v3423, %v3500
      %v3502 = vpop.f32.mrf.mxu0
      %v3503 = vadd.f32 %v3423, %v3502
      %3504 = vmatmul.bf16.gmra.mxu0 %v3459
      %v3505 = vpop.f32.mrf.mxu0
      %v3506 = vadd.f32 %v3423, %v3505
      %v3507 = vpop.f32.mrf.mxu0
      %v3508 = vadd.f32 %v3423, %v3507
      %3509 = vdwg.mxu0
      %v3510 = vmul.f32 %v3471, 0.5
      %v3511 = vmul.f32 %v3473, 0.5
      %v3512 = vmul.f32 %v3476, 0.5
      %v3513 = vmul.f32 %v3478, 0.5
      %v3514 = vmul.f32 %v3481, 0.5
      %v3515 = vmul.f32 %v3483, 0.5
      %v3516 = vmul.f32 %v3486, 0.5
      %v3517 = vmul.f32 %v3488, 0.5
      %v3518 = vmul.f32 %v3491, 0.5
      %v3519 = vmul.f32 %v3493, 0.5
      %v3520 = vmul.f32 %v3496, 0.5
      %v3521 = vmul.f32 %v3498, 0.5
      %v3522 = vmul.f32 %v3501, 0.5
      %v3523 = vmul.f32 %v3503, 0.5
      %v3524 = vmul.f32 %v3506, 0.5
      %v3525 = vmul.f32 %v3508, 0.5
      %v3526 = vmul.f32 %v3471, 0.70710677
      %v3527 = vmul.f32 %v3473, 0.70710677
      %v3528 = vmul.f32 %v3476, 0.70710677
      %v3529 = vmul.f32 %v3478, 0.70710677
      %v3530 = vmul.f32 %v3481, 0.70710677
      %v3531 = vmul.f32 %v3483, 0.70710677
      %v3532 = vmul.f32 %v3486, 0.70710677
      %v3533 = vmul.f32 %v3488, 0.70710677
      %v3534 = vmul.f32 %v3491, 0.70710677
      %v3535 = vmul.f32 %v3493, 0.70710677
      %v3536 = vmul.f32 %v3496, 0.70710677
      %v3537 = vmul.f32 %v3498, 0.70710677
      %v3538 = vmul.f32 %v3501, 0.70710677
      %v3539 = vmul.f32 %v3503, 0.70710677
      %v3540 = vmul.f32 %v3506, 0.70710677
      %v3541 = vmul.f32 %v3508, 0.70710677
      %vm3542 = vcmp.ge.f32.partialorder %v3526, 0.0
      %vm3543 = vcmp.ge.f32.partialorder %v3527, 0.0
      %vm3544 = vcmp.ge.f32.partialorder %v3528, 0.0
      %vm3545 = vcmp.ge.f32.partialorder %v3529, 0.0
      %vm3546 = vcmp.ge.f32.partialorder %v3530, 0.0
      %vm3547 = vcmp.ge.f32.partialorder %v3531, 0.0
      %vm3548 = vcmp.ge.f32.partialorder %v3532, 0.0
      %vm3549 = vcmp.ge.f32.partialorder %v3533, 0.0
      %vm3550 = vcmp.ge.f32.partialorder %v3534, 0.0
      %vm3551 = vcmp.ge.f32.partialorder %v3535, 0.0
      %vm3552 = vcmp.ge.f32.partialorder %v3536, 0.0
      %vm3553 = vcmp.ge.f32.partialorder %v3537, 0.0
      %vm3554 = vcmp.ge.f32.partialorder %v3538, 0.0
      %vm3555 = vcmp.ge.f32.partialorder %v3539, 0.0
      %vm3556 = vcmp.ge.f32.partialorder %v3540, 0.0
      %vm3557 = vcmp.ge.f32.partialorder %v3541, 0.0
      %v3558 = vsel %vm3542, 1.0, -1.0
      %v3559 = vsel %vm3543, 1.0, -1.0
      %v3560 = vsel %vm3544, 1.0, -1.0
      %v3561 = vsel %vm3545, 1.0, -1.0
      %v3562 = vsel %vm3546, 1.0, -1.0
      %v3563 = vsel %vm3547, 1.0, -1.0
      %v3564 = vsel %vm3548, 1.0, -1.0
      %v3565 = vsel %vm3549, 1.0, -1.0
      %v3566 = vsel %vm3550, 1.0, -1.0
      %v3567 = vsel %vm3551, 1.0, -1.0
      %v3568 = vsel %vm3552, 1.0, -1.0
      %v3569 = vsel %vm3553, 1.0, -1.0
      %v3570 = vsel %vm3554, 1.0, -1.0
      %v3571 = vsel %vm3555, 1.0, -1.0
      %v3572 = vsel %vm3556, 1.0, -1.0
      %v3573 = vsel %vm3557, 1.0, -1.0
      %v3574 = vand.u32 2147483647, %v3526
      %v3575 = vand.u32 2147483647, %v3527
      %v3576 = vand.u32 2147483647, %v3528
      %v3577 = vand.u32 2147483647, %v3529
      %v3578 = vand.u32 2147483647, %v3530
      %v3579 = vand.u32 2147483647, %v3531
      %v3580 = vand.u32 2147483647, %v3532
      %v3581 = vand.u32 2147483647, %v3533
      %v3582 = vand.u32 2147483647, %v3534
      %v3583 = vand.u32 2147483647, %v3535
      %v3584 = vand.u32 2147483647, %v3536
      %v3585 = vand.u32 2147483647, %v3537
      %v3586 = vand.u32 2147483647, %v3538
      %v3587 = vand.u32 2147483647, %v3539
      %v3588 = vand.u32 2147483647, %v3540
      %v3589 = vand.u32 2147483647, %v3541
      %v3590 = vmul.f32 %v3574, 0.3275911
      %v3591 = vmul.f32 %v3575, 0.3275911
      %v3592 = vmul.f32 %v3576, 0.3275911
      %v3593 = vmul.f32 %v3577, 0.3275911
      %v3594 = vmul.f32 %v3578, 0.3275911
      %v3595 = vmul.f32 %v3579, 0.3275911
      %v3596 = vmul.f32 %v3580, 0.3275911
      %v3597 = vmul.f32 %v3581, 0.3275911
      %v3598 = vmul.f32 %v3582, 0.3275911
      %v3599 = vmul.f32 %v3583, 0.3275911
      %v3600 = vmul.f32 %v3584, 0.3275911
      %v3601 = vmul.f32 %v3585, 0.3275911
      %v3602 = vmul.f32 %v3586, 0.3275911
      %v3603 = vmul.f32 %v3587, 0.3275911
      %v3604 = vmul.f32 %v3588, 0.3275911
      %v3605 = vmul.f32 %v3589, 0.3275911
      %v3606 = vadd.f32 %v3590, 1.0
      %v3607 = vadd.f32 %v3591, 1.0
      %v3608 = vadd.f32 %v3592, 1.0
      %v3609 = vadd.f32 %v3593, 1.0
      %v3610 = vadd.f32 %v3594, 1.0
      %v3611 = vadd.f32 %v3595, 1.0
      %v3612 = vadd.f32 %v3596, 1.0
      %v3613 = vadd.f32 %v3597, 1.0
      %v3614 = vadd.f32 %v3598, 1.0
      %v3615 = vadd.f32 %v3599, 1.0
      %v3616 = vadd.f32 %v3600, 1.0
      %v3617 = vadd.f32 %v3601, 1.0
      %v3618 = vadd.f32 %v3602, 1.0
      %v3619 = vadd.f32 %v3603, 1.0
      %v3620 = vadd.f32 %v3604, 1.0
      %v3621 = vadd.f32 %v3605, 1.0
      %v3622 = vrcp.pop %v3606
      %v3623 = vmul.f32 %v3606, %v3622
      %v3624 = vsub.f32 1.0, %v3623
      %v3625 = vmul.f32 %v3622, %v3624
      %v3626 = vadd.f32 %v3622, %v3625
      %vm3627 = vweird.f32 %v3606
      %vm3628 = vweird.f32 %v3622
      %vm3629 = vmor %vm3627, %vm3628
      %v3630 = vsel %vm3629, %v3622, %v3626
      %v3631 = vand.u32 2147483647, %v3606
      %vm3632 = vcmp.eq.f32.partialorder %v3631, 8.507059e+37
      %v3633 = vand.u32 %v3606, 2147483648
      %v3634 = vor.u32 1.1754944e-38, %v3633
      %v3635 = vsel %vm3632, %v3634, %v3630
      %v3636 = vmul.f32 1.0, %v3635
      %v3637 = vrcp.pop %v3607
      %v3638 = vmul.f32 %v3607, %v3637
      %v3639 = vsub.f32 1.0, %v3638
      %v3640 = vmul.f32 %v3637, %v3639
      %v3641 = vadd.f32 %v3637, %v3640
      %vm3642 = vweird.f32 %v3607
      %vm3643 = vweird.f32 %v3637
      %vm3644 = vmor %vm3642, %vm3643
      %v3645 = vsel %vm3644, %v3637, %v3641
      %v3646 = vand.u32 2147483647, %v3607
      %vm3647 = vcmp.eq.f32.partialorder %v3646, 8.507059e+37
      %v3648 = vand.u32 %v3607, 2147483648
      %v3649 = vor.u32 1.1754944e-38, %v3648
      %v3650 = vsel %vm3647, %v3649, %v3645
      %v3651 = vmul.f32 1.0, %v3650
      %v3652 = vrcp.pop %v3608
      %v3653 = vmul.f32 %v3608, %v3652
      %v3654 = vsub.f32 1.0, %v3653
      %v3655 = vmul.f32 %v3652, %v3654
      %v3656 = vadd.f32 %v3652, %v3655
      %vm3657 = vweird.f32 %v3608
      %vm3658 = vweird.f32 %v3652
      %vm3659 = vmor %vm3657, %vm3658
      %v3660 = vsel %vm3659, %v3652, %v3656
      %v3661 = vand.u32 2147483647, %v3608
      %vm3662 = vcmp.eq.f32.partialorder %v3661, 8.507059e+37
      %v3663 = vand.u32 %v3608, 2147483648
      %v3664 = vor.u32 1.1754944e-38, %v3663
      %v3665 = vsel %vm3662, %v3664, %v3660
      %v3666 = vmul.f32 1.0, %v3665
      %v3667 = vrcp.pop %v3609
      %v3668 = vmul.f32 %v3609, %v3667
      %v3669 = vsub.f32 1.0, %v3668
      %v3670 = vmul.f32 %v3667, %v3669
      %v3671 = vadd.f32 %v3667, %v3670
      %vm3672 = vweird.f32 %v3609
      %vm3673 = vweird.f32 %v3667
      %vm3674 = vmor %vm3672, %vm3673
      %v3675 = vsel %vm3674, %v3667, %v3671
      %v3676 = vand.u32 2147483647, %v3609
      %vm3677 = vcmp.eq.f32.partialorder %v3676, 8.507059e+37
      %v3678 = vand.u32 %v3609, 2147483648
      %v3679 = vor.u32 1.1754944e-38, %v3678
      %v3680 = vsel %vm3677, %v3679, %v3675
      %v3681 = vmul.f32 1.0, %v3680
      %v3682 = vrcp.pop %v3610
      %v3683 = vmul.f32 %v3610, %v3682
      %v3684 = vsub.f32 1.0, %v3683
      %v3685 = vmul.f32 %v3682, %v3684
      %v3686 = vadd.f32 %v3682, %v3685
      %vm3687 = vweird.f32 %v3610
      %vm3688 = vweird.f32 %v3682
      %vm3689 = vmor %vm3687, %vm3688
      %v3690 = vsel %vm3689, %v3682, %v3686
      %v3691 = vand.u32 2147483647, %v3610
      %vm3692 = vcmp.eq.f32.partialorder %v3691, 8.507059e+37
      %v3693 = vand.u32 %v3610, 2147483648
      %v3694 = vor.u32 1.1754944e-38, %v3693
      %v3695 = vsel %vm3692, %v3694, %v3690
      %v3696 = vmul.f32 1.0, %v3695
      %v3697 = vrcp.pop %v3611
      %v3698 = vmul.f32 %v3611, %v3697
      %v3699 = vsub.f32 1.0, %v3698
      %v3700 = vmul.f32 %v3697, %v3699
      %v3701 = vadd.f32 %v3697, %v3700
      %vm3702 = vweird.f32 %v3611
      %vm3703 = vweird.f32 %v3697
      %vm3704 = vmor %vm3702, %vm3703
      %v3705 = vsel %vm3704, %v3697, %v3701
      %v3706 = vand.u32 2147483647, %v3611
      %vm3707 = vcmp.eq.f32.partialorder %v3706, 8.507059e+37
      %v3708 = vand.u32 %v3611, 2147483648
      %v3709 = vor.u32 1.1754944e-38, %v3708
      %v3710 = vsel %vm3707, %v3709, %v3705
      %v3711 = vmul.f32 1.0, %v3710
      %v3712 = vrcp.pop %v3612
      %v3713 = vmul.f32 %v3612, %v3712
      %v3714 = vsub.f32 1.0, %v3713
      %v3715 = vmul.f32 %v3712, %v3714
      %v3716 = vadd.f32 %v3712, %v3715
      %vm3717 = vweird.f32 %v3612
      %vm3718 = vweird.f32 %v3712
      %vm3719 = vmor %vm3717, %vm3718
      %v3720 = vsel %vm3719, %v3712, %v3716
      %v3721 = vand.u32 2147483647, %v3612
      %vm3722 = vcmp.eq.f32.partialorder %v3721, 8.507059e+37
      %v3723 = vand.u32 %v3612, 2147483648
      %v3724 = vor.u32 1.1754944e-38, %v3723
      %v3725 = vsel %vm3722, %v3724, %v3720
      %v3726 = vmul.f32 1.0, %v3725
      %v3727 = vrcp.pop %v3613
      %v3728 = vmul.f32 %v3613, %v3727
      %v3729 = vsub.f32 1.0, %v3728
      %v3730 = vmul.f32 %v3727, %v3729
      %v3731 = vadd.f32 %v3727, %v3730
      %vm3732 = vweird.f32 %v3613
      %vm3733 = vweird.f32 %v3727
      %vm3734 = vmor %vm3732, %vm3733
      %v3735 = vsel %vm3734, %v3727, %v3731
      %v3736 = vand.u32 2147483647, %v3613
      %vm3737 = vcmp.eq.f32.partialorder %v3736, 8.507059e+37
      %v3738 = vand.u32 %v3613, 2147483648
      %v3739 = vor.u32 1.1754944e-38, %v3738
      %v3740 = vsel %vm3737, %v3739, %v3735
      %v3741 = vmul.f32 1.0, %v3740
      %v3742 = vrcp.pop %v3614
      %v3743 = vmul.f32 %v3614, %v3742
      %v3744 = vsub.f32 1.0, %v3743
      %v3745 = vmul.f32 %v3742, %v3744
      %v3746 = vadd.f32 %v3742, %v3745
      %vm3747 = vweird.f32 %v3614
      %vm3748 = vweird.f32 %v3742
      %vm3749 = vmor %vm3747, %vm3748
      %v3750 = vsel %vm3749, %v3742, %v3746
      %v3751 = vand.u32 2147483647, %v3614
      %vm3752 = vcmp.eq.f32.partialorder %v3751, 8.507059e+37
      %v3753 = vand.u32 %v3614, 2147483648
      %v3754 = vor.u32 1.1754944e-38, %v3753
      %v3755 = vsel %vm3752, %v3754, %v3750
      %v3756 = vmul.f32 1.0, %v3755
      %v3757 = vrcp.pop %v3615
      %v3758 = vmul.f32 %v3615, %v3757
      %v3759 = vsub.f32 1.0, %v3758
      %v3760 = vmul.f32 %v3757, %v3759
      %v3761 = vadd.f32 %v3757, %v3760
      %vm3762 = vweird.f32 %v3615
      %vm3763 = vweird.f32 %v3757
      %vm3764 = vmor %vm3762, %vm3763
      %v3765 = vsel %vm3764, %v3757, %v3761
      %v3766 = vand.u32 2147483647, %v3615
      %vm3767 = vcmp.eq.f32.partialorder %v3766, 8.507059e+37
      %v3768 = vand.u32 %v3615, 2147483648
      %v3769 = vor.u32 1.1754944e-38, %v3768
      %v3770 = vsel %vm3767, %v3769, %v3765
      %v3771 = vmul.f32 1.0, %v3770
      %v3772 = vrcp.pop %v3616
      %v3773 = vmul.f32 %v3616, %v3772
      %v3774 = vsub.f32 1.0, %v3773
      %v3775 = vmul.f32 %v3772, %v3774
      %v3776 = vadd.f32 %v3772, %v3775
      %vm3777 = vweird.f32 %v3616
      %vm3778 = vweird.f32 %v3772
      %vm3779 = vmor %vm3777, %vm3778
      %v3780 = vsel %vm3779, %v3772, %v3776
      %v3781 = vand.u32 2147483647, %v3616
      %vm3782 = vcmp.eq.f32.partialorder %v3781, 8.507059e+37
      %v3783 = vand.u32 %v3616, 2147483648
      %v3784 = vor.u32 1.1754944e-38, %v3783
      %v3785 = vsel %vm3782, %v3784, %v3780
      %v3786 = vmul.f32 1.0, %v3785
      %v3787 = vrcp.pop %v3617
      %v3788 = vmul.f32 %v3617, %v3787
      %v3789 = vsub.f32 1.0, %v3788
      %v3790 = vmul.f32 %v3787, %v3789
      %v3791 = vadd.f32 %v3787, %v3790
      %vm3792 = vweird.f32 %v3617
      %vm3793 = vweird.f32 %v3787
      %vm3794 = vmor %vm3792, %vm3793
      %v3795 = vsel %vm3794, %v3787, %v3791
      %v3796 = vand.u32 2147483647, %v3617
      %vm3797 = vcmp.eq.f32.partialorder %v3796, 8.507059e+37
      %v3798 = vand.u32 %v3617, 2147483648
      %v3799 = vor.u32 1.1754944e-38, %v3798
      %v3800 = vsel %vm3797, %v3799, %v3795
      %v3801 = vmul.f32 1.0, %v3800
      %v3802 = vrcp.pop %v3618
      %v3803 = vmul.f32 %v3618, %v3802
      %v3804 = vsub.f32 1.0, %v3803
      %v3805 = vmul.f32 %v3802, %v3804
      %v3806 = vadd.f32 %v3802, %v3805
      %vm3807 = vweird.f32 %v3618
      %vm3808 = vweird.f32 %v3802
      %vm3809 = vmor %vm3807, %vm3808
      %v3810 = vsel %vm3809, %v3802, %v3806
      %v3811 = vand.u32 2147483647, %v3618
      %vm3812 = vcmp.eq.f32.partialorder %v3811, 8.507059e+37
      %v3813 = vand.u32 %v3618, 2147483648
      %v3814 = vor.u32 1.1754944e-38, %v3813
      %v3815 = vsel %vm3812, %v3814, %v3810
      %v3816 = vmul.f32 1.0, %v3815
      %v3817 = vrcp.pop %v3619
      %v3818 = vmul.f32 %v3619, %v3817
      %v3819 = vsub.f32 1.0, %v3818
      %v3820 = vmul.f32 %v3817, %v3819
      %v3821 = vadd.f32 %v3817, %v3820
      %vm3822 = vweird.f32 %v3619
      %vm3823 = vweird.f32 %v3817
      %vm3824 = vmor %vm3822, %vm3823
      %v3825 = vsel %vm3824, %v3817, %v3821
      %v3826 = vand.u32 2147483647, %v3619
      %vm3827 = vcmp.eq.f32.partialorder %v3826, 8.507059e+37
      %v3828 = vand.u32 %v3619, 2147483648
      %v3829 = vor.u32 1.1754944e-38, %v3828
      %v3830 = vsel %vm3827, %v3829, %v3825
      %v3831 = vmul.f32 1.0, %v3830
      %v3832 = vrcp.pop %v3620
      %v3833 = vmul.f32 %v3620, %v3832
      %v3834 = vsub.f32 1.0, %v3833
      %v3835 = vmul.f32 %v3832, %v3834
      %v3836 = vadd.f32 %v3832, %v3835
      %vm3837 = vweird.f32 %v3620
      %vm3838 = vweird.f32 %v3832
      %vm3839 = vmor %vm3837, %vm3838
      %v3840 = vsel %vm3839, %v3832, %v3836
      %v3841 = vand.u32 2147483647, %v3620
      %vm3842 = vcmp.eq.f32.partialorder %v3841, 8.507059e+37
      %v3843 = vand.u32 %v3620, 2147483648
      %v3844 = vor.u32 1.1754944e-38, %v3843
      %v3845 = vsel %vm3842, %v3844, %v3840
      %v3846 = vmul.f32 1.0, %v3845
      %v3847 = vrcp.pop %v3621
      %v3848 = vmul.f32 %v3621, %v3847
      %v3849 = vsub.f32 1.0, %v3848
      %v3850 = vmul.f32 %v3847, %v3849
      %v3851 = vadd.f32 %v3847, %v3850
      %vm3852 = vweird.f32 %v3621
      %vm3853 = vweird.f32 %v3847
      %vm3854 = vmor %vm3852, %vm3853
      %v3855 = vsel %vm3854, %v3847, %v3851
      %v3856 = vand.u32 2147483647, %v3621
      %vm3857 = vcmp.eq.f32.partialorder %v3856, 8.507059e+37
      %v3858 = vand.u32 %v3621, 2147483648
      %v3859 = vor.u32 1.1754944e-38, %v3858
      %v3860 = vsel %vm3857, %v3859, %v3855
      %v3861 = vmul.f32 1.0, %v3860
      %v3862 = vmul.f32 %v3636, 1.0614054
      %v3863 = vmul.f32 %v3651, 1.0614054
      %v3864 = vmul.f32 %v3666, 1.0614054
      %v3865 = vmul.f32 %v3681, 1.0614054
      %v3866 = vmul.f32 %v3696, 1.0614054
      %v3867 = vmul.f32 %v3711, 1.0614054
      %v3868 = vmul.f32 %v3726, 1.0614054
      %v3869 = vmul.f32 %v3741, 1.0614054
      %v3870 = vmul.f32 %v3756, 1.0614054
      %v3871 = vmul.f32 %v3771, 1.0614054
      %v3872 = vmul.f32 %v3786, 1.0614054
      %v3873 = vmul.f32 %v3801, 1.0614054
      %v3874 = vmul.f32 %v3816, 1.0614054
      %v3875 = vmul.f32 %v3831, 1.0614054
      %v3876 = vmul.f32 %v3846, 1.0614054
      %v3877 = vmul.f32 %v3861, 1.0614054
      %v3878 = vadd.f32 %v3862, -1.4531521
      %v3879 = vadd.f32 %v3863, -1.4531521
      %v3880 = vadd.f32 %v3864, -1.4531521
      %v3881 = vadd.f32 %v3865, -1.4531521
      %v3882 = vadd.f32 %v3866, -1.4531521
      %v3883 = vadd.f32 %v3867, -1.4531521
      %v3884 = vadd.f32 %v3868, -1.4531521
      %v3885 = vadd.f32 %v3869, -1.4531521
      %v3886 = vadd.f32 %v3870, -1.4531521
      %v3887 = vadd.f32 %v3871, -1.4531521
      %v3888 = vadd.f32 %v3872, -1.4531521
      %v3889 = vadd.f32 %v3873, -1.4531521
      %v3890 = vadd.f32 %v3874, -1.4531521
      %v3891 = vadd.f32 %v3875, -1.4531521
      %v3892 = vadd.f32 %v3876, -1.4531521
      %v3893 = vadd.f32 %v3877, -1.4531521
      %v3894 = vmul.f32 %v3878, %v3636
      %v3895 = vmul.f32 %v3879, %v3651
      %v3896 = vmul.f32 %v3880, %v3666
      %v3897 = vmul.f32 %v3881, %v3681
      %v3898 = vmul.f32 %v3882, %v3696
      %v3899 = vmul.f32 %v3883, %v3711
      %v3900 = vmul.f32 %v3884, %v3726
      %v3901 = vmul.f32 %v3885, %v3741
      %v3902 = vmul.f32 %v3886, %v3756
      %v3903 = vmul.f32 %v3887, %v3771
      %v3904 = vmul.f32 %v3888, %v3786
      %v3905 = vmul.f32 %v3889, %v3801
      %v3906 = vmul.f32 %v3890, %v3816
      %v3907 = vmul.f32 %v3891, %v3831
      %v3908 = vmul.f32 %v3892, %v3846
      %v3909 = vmul.f32 %v3893, %v3861
      %v3910 = vadd.f32 %v3894, 1.4214138
      %v3911 = vadd.f32 %v3895, 1.4214138
      %v3912 = vadd.f32 %v3896, 1.4214138
      %v3913 = vadd.f32 %v3897, 1.4214138
      %v3914 = vadd.f32 %v3898, 1.4214138
      %v3915 = vadd.f32 %v3899, 1.4214138
      %v3916 = vadd.f32 %v3900, 1.4214138
      %v3917 = vadd.f32 %v3901, 1.4214138
      %v3918 = vadd.f32 %v3902, 1.4214138
      %v3919 = vadd.f32 %v3903, 1.4214138
      %v3920 = vadd.f32 %v3904, 1.4214138
      %v3921 = vadd.f32 %v3905, 1.4214138
      %v3922 = vadd.f32 %v3906, 1.4214138
      %v3923 = vadd.f32 %v3907, 1.4214138
      %v3924 = vadd.f32 %v3908, 1.4214138
      %v3925 = vadd.f32 %v3909, 1.4214138
      %v3926 = vmul.f32 %v3910, %v3636
      %v3927 = vmul.f32 %v3911, %v3651
      %v3928 = vmul.f32 %v3912, %v3666
      %v3929 = vmul.f32 %v3913, %v3681
      %v3930 = vmul.f32 %v3914, %v3696
      %v3931 = vmul.f32 %v3915, %v3711
      %v3932 = vmul.f32 %v3916, %v3726
      %v3933 = vmul.f32 %v3917, %v3741
      %v3934 = vmul.f32 %v3918, %v3756
      %v3935 = vmul.f32 %v3919, %v3771
      %v3936 = vmul.f32 %v3920, %v3786
      %v3937 = vmul.f32 %v3921, %v3801
      %v3938 = vmul.f32 %v3922, %v3816
      %v3939 = vmul.f32 %v3923, %v3831
      %v3940 = vmul.f32 %v3924, %v3846
      %v3941 = vmul.f32 %v3925, %v3861
      %v3942 = vadd.f32 %v3926, -0.28449672
      %v3943 = vadd.f32 %v3927, -0.28449672
      %v3944 = vadd.f32 %v3928, -0.28449672
      %v3945 = vadd.f32 %v3929, -0.28449672
      %v3946 = vadd.f32 %v3930, -0.28449672
      %v3947 = vadd.f32 %v3931, -0.28449672
      %v3948 = vadd.f32 %v3932, -0.28449672
      %v3949 = vadd.f32 %v3933, -0.28449672
      %v3950 = vadd.f32 %v3934, -0.28449672
      %v3951 = vadd.f32 %v3935, -0.28449672
      %v3952 = vadd.f32 %v3936, -0.28449672
      %v3953 = vadd.f32 %v3937, -0.28449672
      %v3954 = vadd.f32 %v3938, -0.28449672
      %v3955 = vadd.f32 %v3939, -0.28449672
      %v3956 = vadd.f32 %v3940, -0.28449672
      %v3957 = vadd.f32 %v3941, -0.28449672
      %v3958 = vmul.f32 %v3942, %v3636
      %v3959 = vmul.f32 %v3943, %v3651
      %v3960 = vmul.f32 %v3944, %v3666
      %v3961 = vmul.f32 %v3945, %v3681
      %v3962 = vmul.f32 %v3946, %v3696
      %v3963 = vmul.f32 %v3947, %v3711
      %v3964 = vmul.f32 %v3948, %v3726
      %v3965 = vmul.f32 %v3949, %v3741
      %v3966 = vmul.f32 %v3950, %v3756
      %v3967 = vmul.f32 %v3951, %v3771
      %v3968 = vmul.f32 %v3952, %v3786
      %v3969 = vmul.f32 %v3953, %v3801
      %v3970 = vmul.f32 %v3954, %v3816
      %v3971 = vmul.f32 %v3955, %v3831
      %v3972 = vmul.f32 %v3956, %v3846
      %v3973 = vmul.f32 %v3957, %v3861
      %v3974 = vadd.f32 %v3958, 0.2548296
      %v3975 = vadd.f32 %v3959, 0.2548296
      %v3976 = vadd.f32 %v3960, 0.2548296
      %v3977 = vadd.f32 %v3961, 0.2548296
      %v3978 = vadd.f32 %v3962, 0.2548296
      %v3979 = vadd.f32 %v3963, 0.2548296
      %v3980 = vadd.f32 %v3964, 0.2548296
      %v3981 = vadd.f32 %v3965, 0.2548296
      %v3982 = vadd.f32 %v3966, 0.2548296
      %v3983 = vadd.f32 %v3967, 0.2548296
      %v3984 = vadd.f32 %v3968, 0.2548296
      %v3985 = vadd.f32 %v3969, 0.2548296
      %v3986 = vadd.f32 %v3970, 0.2548296
      %v3987 = vadd.f32 %v3971, 0.2548296
      %v3988 = vadd.f32 %v3972, 0.2548296
      %v3989 = vadd.f32 %v3973, 0.2548296
      %v3990 = vmul.f32 %v3974, %v3636
      %v3991 = vmul.f32 %v3975, %v3651
      %v3992 = vmul.f32 %v3976, %v3666
      %v3993 = vmul.f32 %v3977, %v3681
      %v3994 = vmul.f32 %v3978, %v3696
      %v3995 = vmul.f32 %v3979, %v3711
      %v3996 = vmul.f32 %v3980, %v3726
      %v3997 = vmul.f32 %v3981, %v3741
      %v3998 = vmul.f32 %v3982, %v3756
      %v3999 = vmul.f32 %v3983, %v3771
      %v4000 = vmul.f32 %v3984, %v3786
      %v4001 = vmul.f32 %v3985, %v3801
      %v4002 = vmul.f32 %v3986, %v3816
      %v4003 = vmul.f32 %v3987, %v3831
      %v4004 = vmul.f32 %v3988, %v3846
      %v4005 = vmul.f32 %v3989, %v3861
      %v4006 = vsub.f32 0.0, %v3574
      %v4007 = vsub.f32 0.0, %v3575
      %v4008 = vsub.f32 0.0, %v3576
      %v4009 = vsub.f32 0.0, %v3577
      %v4010 = vsub.f32 0.0, %v3578
      %v4011 = vsub.f32 0.0, %v3579
      %v4012 = vsub.f32 0.0, %v3580
      %v4013 = vsub.f32 0.0, %v3581
      %v4014 = vsub.f32 0.0, %v3582
      %v4015 = vsub.f32 0.0, %v3583
      %v4016 = vsub.f32 0.0, %v3584
      %v4017 = vsub.f32 0.0, %v3585
      %v4018 = vsub.f32 0.0, %v3586
      %v4019 = vsub.f32 0.0, %v3587
      %v4020 = vsub.f32 0.0, %v3588
      %v4021 = vsub.f32 0.0, %v3589
      %v4022 = vmul.f32 %v4006, %v3574
      %v4023 = vmul.f32 %v4007, %v3575
      %v4024 = vmul.f32 %v4008, %v3576
      %v4025 = vmul.f32 %v4009, %v3577
      %v4026 = vmul.f32 %v4010, %v3578
      %v4027 = vmul.f32 %v4011, %v3579
      %v4028 = vmul.f32 %v4012, %v3580
      %v4029 = vmul.f32 %v4013, %v3581
      %v4030 = vmul.f32 %v4014, %v3582
      %v4031 = vmul.f32 %v4015, %v3583
      %v4032 = vmul.f32 %v4016, %v3584
      %v4033 = vmul.f32 %v4017, %v3585
      %v4034 = vmul.f32 %v4018, %v3586
      %v4035 = vmul.f32 %v4019, %v3587
      %v4036 = vmul.f32 %v4020, %v3588
      %v4037 = vmul.f32 %v4021, %v3589
      %v4038 = vmul.f32 %v4022, 1.442695
      %v4039 = vpow.pop %v4038
      %v4040 = vmul.f32 %v4023, 1.442695
      %v4041 = vpow.pop %v4040
      %v4042 = vmul.f32 %v4024, 1.442695
      %v4043 = vpow.pop %v4042
      %v4044 = vmul.f32 %v4025, 1.442695
      %v4045 = vpow.pop %v4044
      %v4046 = vmul.f32 %v4026, 1.442695
      %v4047 = vpow.pop %v4046
      %v4048 = vmul.f32 %v4027, 1.442695
      %v4049 = vpow.pop %v4048
      %v4050 = vmul.f32 %v4028, 1.442695
      %v4051 = vpow.pop %v4050
      %v4052 = vmul.f32 %v4029, 1.442695
      %v4053 = vpow.pop %v4052
      %v4054 = vmul.f32 %v4030, 1.442695
      %v4055 = vpow.pop %v4054
      %v4056 = vmul.f32 %v4031, 1.442695
      %v4057 = vpow.pop %v4056
      %v4058 = vmul.f32 %v4032, 1.442695
      %v4059 = vpow.pop %v4058
      %v4060 = vmul.f32 %v4033, 1.442695
      %v4061 = vpow.pop %v4060
      %v4062 = vmul.f32 %v4034, 1.442695
      %v4063 = vpow.pop %v4062
      %v4064 = vmul.f32 %v4035, 1.442695
      %v4065 = vpow.pop %v4064
      %v4066 = vmul.f32 %v4036, 1.442695
      %v4067 = vpow.pop %v4066
      %v4068 = vmul.f32 %v4037, 1.442695
      %v4069 = vpow.pop %v4068
      %v4070 = vmul.f32 %v3990, %v4039
      %v4071 = vmul.f32 %v3991, %v4041
      %v4072 = vmul.f32 %v3992, %v4043
      %v4073 = vmul.f32 %v3993, %v4045
      %v4074 = vmul.f32 %v3994, %v4047
      %v4075 = vmul.f32 %v3995, %v4049
      %v4076 = vmul.f32 %v3996, %v4051
      %v4077 = vmul.f32 %v3997, %v4053
      %v4078 = vmul.f32 %v3998, %v4055
      %v4079 = vmul.f32 %v3999, %v4057
      %v4080 = vmul.f32 %v4000, %v4059
      %v4081 = vmul.f32 %v4001, %v4061
      %v4082 = vmul.f32 %v4002, %v4063
      %v4083 = vmul.f32 %v4003, %v4065
      %v4084 = vmul.f32 %v4004, %v4067
      %v4085 = vmul.f32 %v4005, %v4069
      %v4086 = vsub.f32 1.0, %v4070
      %v4087 = vsub.f32 1.0, %v4071
      %v4088 = vsub.f32 1.0, %v4072
      %v4089 = vsub.f32 1.0, %v4073
      %v4090 = vsub.f32 1.0, %v4074
      %v4091 = vsub.f32 1.0, %v4075
      %v4092 = vsub.f32 1.0, %v4076
      %v4093 = vsub.f32 1.0, %v4077
      %v4094 = vsub.f32 1.0, %v4078
      %v4095 = vsub.f32 1.0, %v4079
      %v4096 = vsub.f32 1.0, %v4080
      %v4097 = vsub.f32 1.0, %v4081
      %v4098 = vsub.f32 1.0, %v4082
      %v4099 = vsub.f32 1.0, %v4083
      %v4100 = vsub.f32 1.0, %v4084
      %v4101 = vsub.f32 1.0, %v4085
      %v4102 = vmul.f32 %v3558, %v4086
      %v4103 = vmul.f32 %v3559, %v4087
      %v4104 = vmul.f32 %v3560, %v4088
      %v4105 = vmul.f32 %v3561, %v4089
      %v4106 = vmul.f32 %v3562, %v4090
      %v4107 = vmul.f32 %v3563, %v4091
      %v4108 = vmul.f32 %v3564, %v4092
      %v4109 = vmul.f32 %v3565, %v4093
      %v4110 = vmul.f32 %v3566, %v4094
      %v4111 = vmul.f32 %v3567, %v4095
      %v4112 = vmul.f32 %v3568, %v4096
      %v4113 = vmul.f32 %v3569, %v4097
      %v4114 = vmul.f32 %v3570, %v4098
      %v4115 = vmul.f32 %v3571, %v4099
      %v4116 = vmul.f32 %v3572, %v4100
      %v4117 = vmul.f32 %v3573, %v4101
      %v4118 = vadd.f32 %v4102, 1.0
      %v4119 = vadd.f32 %v4103, 1.0
      %v4120 = vadd.f32 %v4104, 1.0
      %v4121 = vadd.f32 %v4105, 1.0
      %v4122 = vadd.f32 %v4106, 1.0
      %v4123 = vadd.f32 %v4107, 1.0
      %v4124 = vadd.f32 %v4108, 1.0
      %v4125 = vadd.f32 %v4109, 1.0
      %v4126 = vadd.f32 %v4110, 1.0
      %v4127 = vadd.f32 %v4111, 1.0
      %v4128 = vadd.f32 %v4112, 1.0
      %v4129 = vadd.f32 %v4113, 1.0
      %v4130 = vadd.f32 %v4114, 1.0
      %v4131 = vadd.f32 %v4115, 1.0
      %v4132 = vadd.f32 %v4116, 1.0
      %v4133 = vadd.f32 %v4117, 1.0
      %v4134 = vmul.f32 %v3510, %v4118
      %v4135 = vmul.f32 %v3511, %v4119
      %v4136 = vmul.f32 %v3512, %v4120
      %v4137 = vmul.f32 %v3513, %v4121
      %v4138 = vmul.f32 %v3514, %v4122
      %v4139 = vmul.f32 %v3515, %v4123
      %v4140 = vmul.f32 %v3516, %v4124
      %v4141 = vmul.f32 %v3517, %v4125
      %v4142 = vmul.f32 %v3518, %v4126
      %v4143 = vmul.f32 %v3519, %v4127
      %v4144 = vmul.f32 %v3520, %v4128
      %v4145 = vmul.f32 %v3521, %v4129
      %v4146 = vmul.f32 %v3522, %v4130
      %v4147 = vmul.f32 %v3523, %v4131
      %v4148 = vmul.f32 %v3524, %v4132
      %v4149 = vmul.f32 %v3525, %v4133
      %v4150 = vpack.c.bf16 %v4135, %v4134
      %v4151 = vpack.c.bf16 %v4137, %v4136
      %v4152 = vpack.c.bf16 %v4139, %v4138
      %v4153 = vpack.c.bf16 %v4141, %v4140
      %v4154 = vpack.c.bf16 %v4143, %v4142
      %v4155 = vpack.c.bf16 %v4145, %v4144
      %v4156 = vpack.c.bf16 %v4147, %v4146
      %v4157 = vpack.c.bf16 %v4149, %v4148
      %v4159 = vperm.slane %v1030, 0
      %v4169 = vunpack.c.l.b16 %v1022
      %v4170 = vunpack.c.l.b16 %v1023
      %v4171 = vunpack.c.l.b16 %v1024
      %v4172 = vunpack.c.l.b16 %v1025
      %v4173 = vunpack.c.l.b16 %v1026
      %v4174 = vunpack.c.l.b16 %v1027
      %v4175 = vunpack.c.l.b16 %v1028
      %v4176 = vunpack.c.l.b16 %v1029
      %v4177 = vpack.c.b16 %v4170, %v4169
      %v4178 = vpack.c.b16 %v4172, %v4171
      %v4179 = vpack.c.b16 %v4174, %v4173
      %v4180 = vpack.c.b16 %v4176, %v4175
      %vm4185 = vcmask 523264
      %v4187 = vsel %vm4185, %v4150, 0
      %v4190 = vsel %vm4185, %v4151, 0
      %v4193 = vsel %vm4185, %v4152, 0
      %v4196 = vsel %vm4185, %v4153, 0
      %v4199 = vsel %vm4185, %v4154, 0
      %v4202 = vsel %vm4185, %v4155, 0
      %v4205 = vsel %vm4185, %v4156, 0
      %v4208 = vsel %vm4185, %v4157, 0
      %4210 = vmatpush.bf16.msra.mxu0 0
      %4211 = vmatpush.bf16.msra.mxu0 0
      %4212 = vmatpush.bf16.msra.mxu0 0
      %4213 = vmatpush.bf16.msra.mxu0 0
      %4214 = vmatpush.bf16.msra.mxu0 %v4180
      %4215 = vmatpush.bf16.msra.mxu0 %v4179
      %4216 = vmatpush.bf16.msra.mxu0 %v4178
      %4217 = vmatpush.bf16.msra.mxu0 %v4177
      %4218 = vmatmul.bf16.gmra.mxu0 %v4187
      %v4219 = vpop.f32.mrf.mxu0
      %v4220 = vadd.f32 %v4159, %v4219
      %v4221 = vpop.f32.mrf.mxu0
      %v4222 = vadd.f32 %v4159, %v4221
      %4223 = vmatmul.bf16.gmra.mxu0 %v4190
      %v4224 = vpop.f32.mrf.mxu0
      %v4225 = vadd.f32 %v4159, %v4224
      %v4226 = vpop.f32.mrf.mxu0
      %v4227 = vadd.f32 %v4159, %v4226
      %4228 = vmatmul.bf16.gmra.mxu0 %v4193
      %v4229 = vpop.f32.mrf.mxu0
      %v4230 = vadd.f32 %v4159, %v4229
      %v4231 = vpop.f32.mrf.mxu0
      %v4232 = vadd.f32 %v4159, %v4231
      %4233 = vmatmul.bf16.gmra.mxu0 %v4196
      %v4234 = vpop.f32.mrf.mxu0
      %v4235 = vadd.f32 %v4159, %v4234
      %v4236 = vpop.f32.mrf.mxu0
      %v4237 = vadd.f32 %v4159, %v4236
      %4238 = vmatmul.bf16.gmra.mxu0 %v4199
      %v4239 = vpop.f32.mrf.mxu0
      %v4240 = vadd.f32 %v4159, %v4239
      %v4241 = vpop.f32.mrf.mxu0
      %v4242 = vadd.f32 %v4159, %v4241
      %4243 = vmatmul.bf16.gmra.mxu0 %v4202
      %v4244 = vpop.f32.mrf.mxu0
      %v4245 = vadd.f32 %v4159, %v4244
      %v4246 = vpop.f32.mrf.mxu0
      %v4247 = vadd.f32 %v4159, %v4246
      %4248 = vmatmul.bf16.gmra.mxu0 %v4205
      %v4249 = vpop.f32.mrf.mxu0
      %v4250 = vadd.f32 %v4159, %v4249
      %v4251 = vpop.f32.mrf.mxu0
      %v4252 = vadd.f32 %v4159, %v4251
      %4253 = vmatmul.bf16.gmra.mxu0 %v4208
      %v4254 = vpop.f32.mrf.mxu0
      %v4255 = vadd.f32 %v4159, %v4254
      %v4256 = vpop.f32.mrf.mxu0
      %v4257 = vadd.f32 %v4159, %v4256
      %4258 = vdwg.mxu0
      %v4259 = vadd.f32 %v3398, %v4220
      %v4260 = vadd.f32 %v3399, %v4222
      %v4261 = vadd.f32 %v3400, %v4225
      %v4262 = vadd.f32 %v3401, %v4227
      %v4263 = vadd.f32 %v3402, %v4230
      %v4264 = vadd.f32 %v3403, %v4232
      %v4265 = vadd.f32 %v3404, %v4235
      %v4266 = vadd.f32 %v3405, %v4237
      %v4267 = vadd.f32 %v3406, %v4240
      %v4268 = vadd.f32 %v3407, %v4242
      %v4269 = vadd.f32 %v3408, %v4245
      %v4270 = vadd.f32 %v3409, %v4247
      %v4271 = vadd.f32 %v3410, %v4250
      %v4272 = vadd.f32 %v3411, %v4252
      %v4273 = vadd.f32 %v3412, %v4255
      %v4274 = vadd.f32 %v3413, %v4257
      %4275 = vst.msk [vmem:[%s454] sm:$0xff] %vm474, %v4259
      %4276 = vst.msk [vmem:[%s454 + $0x8] sm:$0xff] %vm474, %v4260
      %4277 = vst.msk [vmem:[%s454 + $0x10] sm:$0xff] %vm474, %v4261
      %4278 = vst.msk [vmem:[%s454 + $0x18] sm:$0xff] %vm474, %v4262
      %4279 = vst.msk [vmem:[%s454 + $0x20] sm:$0xff] %vm474, %v4263
      %4280 = vst.msk [vmem:[%s454 + $0x28] sm:$0xff] %vm474, %v4264
      %4281 = vst.msk [vmem:[%s454 + $0x30] sm:$0xff] %vm474, %v4265
      %4282 = vst.msk [vmem:[%s454 + $0x38] sm:$0xff] %vm474, %v4266
      %4283 = vst.msk [vmem:[%s454 + $0x40] sm:$0xff] %vm474, %v4267
      %4284 = vst.msk [vmem:[%s454 + $0x48] sm:$0xff] %vm474, %v4268
      %4285 = vst.msk [vmem:[%s454 + $0x50] sm:$0xff] %vm474, %v4269
      %4286 = vst.msk [vmem:[%s454 + $0x58] sm:$0xff] %vm474, %v4270
      %4287 = vst.msk [vmem:[%s454 + $0x60] sm:$0xff] %vm474, %v4271
      %4288 = vst.msk [vmem:[%s454 + $0x68] sm:$0xff] %vm474, %v4272
      %4289 = vst.msk [vmem:[%s454 + $0x70] sm:$0xff] %vm474, %v4273
      %4290 = vst.msk [vmem:[%s454 + $0x78] sm:$0xff] %vm474, %v4274
      %p4291 = scmp.lt.s32.totalorder %s24, 1
      %s4292 = scalar_select %p4291, %s24, 1
      %s4293 = smul.addr %s4292, 16
      %s4294 = smul.addr %s4293, 8
      %s4295 = scalar_lea.vmem %s13, %s4294
      // Predicated region
      $region73: #{tpu_custom_call.1} parent=71 // pred_check
        %p4296 = pneg %p325
      $region74: #{tpu_custom_call.1} parent=71 // pred_check_branch
        %4298 = sbr.rel (%p4296) target = $region76
      $region75: #{tpu_custom_call.1} parent=71 // pred_region
        _
      $region76: #{tpu_custom_call.1} parent=71 // pred_fallthru
        _
    $region72: #{tpu_custom_call.1} parent=5 // pred_fallthru
      _
    %p4299 = scmp.le.s32.totalorder 2, %s19
    // Predicated region
    $region77: #{tpu_custom_call.1} parent=5 // pred_check
      %p4300 = pneg %p4299
    $region78: #{tpu_custom_call.1} parent=5 // pred_check_branch
      %4302 = sbr.rel (%p4300) target = $region80
    $region79: #{tpu_custom_call.1} parent=5 // pred_region
      %s4303 = ssub.s32 %s19, 2
      // Predicated region
      $region81: #{tpu_custom_call.1} parent=79 // pred_check
        %p4304 = pneg %p331
      $region82: #{tpu_custom_call.1} parent=79 // pred_check_branch
        %4306 = sbr.rel (%p4304) target = $region84
      $region83: #{tpu_custom_call.1} parent=79 // pred_region
        %p4307 = scmp.lt.s32.totalorder %s25, 1
        %s4308 = scalar_select %p4307, %s25, 1
        %s4309 = smul.addr %s4308, 16
        %s4310 = smul.addr %s4309, 8
        %s4311 = scalar_lea.vmem %s13, %s4310
      $region84: #{tpu_custom_call.1} parent=79 // pred_fallthru
        _
    $region80: #{tpu_custom_call.1} parent=5 // pred_fallthru
      _
  $region6: #{tpu_custom_call.1} parent=0 // loop_footer
    %s23 = sadd.s32 1, %s19
  $region7: #{tpu_custom_call.1} parent=0 // loop_footer_branch
    %18 = sbr.rel target = $region3
  $region8: #{tpu_custom_call.1} parent=0 // loop_exit
    _

</llo_original>
